<compile_context>
chip_gen: v7x
topology: tpu7x:2x2x1
jax: 0.10.0
libtpu: 0.0.40
codegen_flags: <defaults>
</compile_context>

<pallas_src>
import functools
import math

import jax
import jax.numpy as jnp
from jax.experimental import pallas as pl
from jax.experimental.pallas import tpu as pltpu

BN_EPS = 1e-5


def _default_vmem_limit():
    cap = 0
    try:
        fn = getattr(pltpu, "get_tpu_info", None)
        if fn is not None:
            cap = int(getattr(fn(), "vmem_capacity_bytes", 0) or 0)
    except Exception:
        cap = 0
    if cap <= 0:
        return 32 * 1024 * 1024
    # Half of physical VMEM, capped at 64 MiB (v5e/v6e: 64 MiB, v7x: 32 MiB).
    return int(min(cap // 2, 64 * 1024 * 1024))


VMEM_LIMIT = _default_vmem_limit()


def _round_up(x, m):
    return ((x + m - 1) // m) * m


def _pad_rows(a, rows):
    if a.shape[0] == rows:
        return a
    return jnp.pad(a, ((0, rows - a.shape[0]), (0, 0)))


# --------------------------------------------------------------------------- #
#  conv1: tiled matmul with BN (+ optional ReLU) epilogue.
# --------------------------------------------------------------------------- #

def _mm_kernel(x_ref, w_ref, s_ref, b_ref, o_ref, *, act):
    y = jnp.dot(x_ref[...], w_ref[...], preferred_element_type=jnp.float32)
    y = y * s_ref[...] + b_ref[...]
    if act == "relu":
        y = jnp.maximum(y, 0.0)
    o_ref[...] = y.astype(o_ref.dtype)


def matmul_affine(x, w, scale, shift, *, act=None, out_dtype=jnp.bfloat16):
    """act((x @ w) * scale + shift), bf16 MXU operands, f32 epilogue."""
    M, K = x.shape
    N = w.shape[1]
    TM = 512 if M >= 512 else _round_up(M, 8)
    Mp = _round_up(M, TM)
    xp = _pad_rows(x.astype(jnp.bfloat16), Mp)
    wb = w.astype(jnp.bfloat16)
    s = scale.reshape(1, N).astype(jnp.float32)
    b = shift.reshape(1, N).astype(jnp.float32)
    out = pl.pallas_call(
        functools.partial(_mm_kernel, act=act),
        out_shape=jax.ShapeDtypeStruct((Mp, N), out_dtype),
        grid=(Mp // TM,),
        in_specs=[pl.BlockSpec((TM, K), lambda i: (i, 0)),
                  pl.BlockSpec((K, N), lambda i: (0, 0)),
                  pl.BlockSpec((1, N), lambda i: (0, 0)),
                  pl.BlockSpec((1, N), lambda i: (0, 0))],
        out_specs=pl.BlockSpec((TM, N), lambda i: (i, 0)),
        compiler_params=pltpu.CompilerParams(
            dimension_semantics=("parallel",),
            vmem_limit_bytes=VMEM_LIMIT),
    )(xp, wb, s, b)
    return out[:M] if Mp != M else out


# --------------------------------------------------------------------------- #
#  Fused LightConv3x3: pointwise 1x1 -> depthwise 3x3 -> BN -> ReLU (+ GAP sum).
# --------------------------------------------------------------------------- #

def _lightconv_kernel(x_ref, wpw_ref, wdw_ref, shift_ref, y_ref, gap_ref,
                      ypad_ref, *, H, W, TH, Cin, Cout):
    h = pl.program_id(1)

    @pl.when(h == 0)
    def _():
        # Zero the padded scratch once per image (borders stay zero), then run
        # the pointwise 1x1 conv of the whole image into the scratch interior.
        ypad_ref[...] = jnp.zeros_like(ypad_ref)
        wpw = wpw_ref[...]
        for c in range(H // TH):
            xc = x_ref[0, c * TH * W:(c + 1) * TH * W, :]               # (TH*W, Cin)
            yc = jnp.dot(xc, wpw, preferred_element_type=jnp.float32)   # (TH*W, Cout)
            ypad_ref[1 + c * TH:1 + (c + 1) * TH, 1:W + 1, :] = (
                yc.reshape(TH, W, Cout))

    # Depthwise 3x3 (BN scale folded into wdw) over this row block.
    r0 = h * TH
    acc = jnp.zeros((TH, W, Cout), jnp.float32)
    for i in range(3):
        for j in range(3):
            tap = ypad_ref[pl.ds(r0 + i, TH), j:j + W, :]               # (TH, W, Cout)
            acc = acc + tap * wdw_ref[3 * i + j:3 * i + j + 1, :]       # (1, Cout)
    y = jnp.maximum(acc + shift_ref[...], 0.0)                          # (TH, W, Cout)

    y_ref[0] = y.astype(y_ref.dtype)

    # Spatial-sum partial (for the channel gate's GAP), accumulated across rows.
    @pl.when(h == 0)
    def _():
        gap_ref[...] = jnp.zeros_like(gap_ref)
    gap_ref[...] += jnp.sum(y, axis=(0, 1), keepdims=True)


def light_conv3x3(x, p):
    """Fused LightConv3x3.  Returns (y bf16 (B,H,W,C), spatial_sum f32 (B,1,C))."""
    B, H, W, Cin = x.shape
    Cout = p["pw_w"].shape[1]
    TH = 8 if H % 8 == 0 else H
    nH = H // TH

    x3d = x.reshape(B, H * W, Cin)
    wpw = p["pw_w"].astype(jnp.bfloat16)
    wdw = (p["dw_w"] * p["scale"]).reshape(9, Cout).astype(jnp.float32)
    shift = p["shift"].reshape(1, 1, Cout).astype(jnp.float32)

    kern = functools.partial(_lightconv_kernel, H=H, W=W, TH=TH,
                             Cin=Cin, Cout=Cout)
    y, gap = pl.pallas_call(
        kern,
        out_shape=(jax.ShapeDtypeStruct((B, H, W, Cout), jnp.bfloat16),
                   jax.ShapeDtypeStruct((B, 1, Cout), jnp.float32)),
        grid=(B, nH),
        in_specs=[
            pl.BlockSpec((1, H * W, Cin), lambda b, h: (b, 0, 0)),
            pl.BlockSpec((Cin, Cout), lambda b, h: (0, 0)),
            pl.BlockSpec((9, Cout), lambda b, h: (0, 0)),
            pl.BlockSpec((1, 1, Cout), lambda b, h: (0, 0, 0)),
        ],
        out_specs=(
            pl.BlockSpec((1, TH, W, Cout), lambda b, h: (b, h, 0, 0)),
            pl.BlockSpec((1, 1, Cout), lambda b, h: (b, 0, 0)),
        ),
        scratch_shapes=[pltpu.VMEM((H + 2, W + 2, Cout), jnp.float32)],
        compiler_params=pltpu.CompilerParams(
            dimension_semantics=("parallel", "arbitrary"),
            vmem_limit_bytes=VMEM_LIMIT),
    )(x3d, wpw, wdw, shift)
    return y, gap


# --------------------------------------------------------------------------- #
#  Shared ChannelGate MLP for all T*B pooled vectors in one launch.
# --------------------------------------------------------------------------- #

def _gate_mlp_kernel(p_ref, w1_ref, b1_ref, w2_ref, b2_ref, o_ref):
    h = jnp.dot(p_ref[...], w1_ref[...],
                preferred_element_type=jnp.float32) + b1_ref[...]
    h = jnp.maximum(h, 0.0)
    g = jnp.dot(h, w2_ref[...],
                preferred_element_type=jnp.float32) + b2_ref[...]
    o_ref[...] = 1.0 / (1.0 + jnp.exp(-g))


def channel_gates(pooled, gp):
    """pooled (P, C) f32 -> sigmoid(fc2(relu(fc1(pooled)))) (P, C) f32."""
    P, C = pooled.shape
    hid = gp["fc1_w"].shape[1]
    HID = max(128, _round_up(hid, 128))          # lane-dense padded hidden width
    w1 = jnp.zeros((C, HID), jnp.float32).at[:, :hid].set(gp["fc1_w"])
    b1 = jnp.zeros((1, HID), jnp.float32).at[:, :hid].set(gp["fc1_b"])
    w2 = jnp.zeros((HID, C), jnp.float32).at[:hid, :].set(gp["fc2_w"])
    b2 = gp["fc2_b"].reshape(1, C).astype(jnp.float32)
    Pp = _round_up(P, 8)
    pp = _pad_rows(pooled.astype(jnp.float32), Pp)
    gates = pl.pallas_call(
        _gate_mlp_kernel,
        out_shape=jax.ShapeDtypeStruct((Pp, C), jnp.float32),
        compiler_params=pltpu.CompilerParams(vmem_limit_bytes=VMEM_LIMIT),
    )(pp, w1, b1, w2, b2)
    return gates[:P] if Pp != P else gates


# --------------------------------------------------------------------------- #
#  Fused gate-multiply + T-stream accumulation: x2 = sum_t y_t * gate_t.
# --------------------------------------------------------------------------- #

def _gate_acc_kernel(*refs, T):
    g_ref = refs[0]
    y_refs = refs[1:1 + T]
    o_ref = refs[1 + T]
    acc = None
    for t in range(T):
        g = g_ref[:, t, :]                                   # (1, C)
        term = y_refs[t][0].astype(jnp.float32) * g
        acc = term if acc is None else acc + term
    o_ref[0] = acc.astype(o_ref.dtype)


def gate_accumulate(ys, gates_bt):
    """ys: list of T (B,H,W,C) bf16; gates_bt: (B,T,C) f32 -> x2 (B,H,W,C) bf16."""
    T = len(ys)
    B, H, W, C = ys[0].shape
    TH = 8 if H % 8 == 0 else H
    nH = H // TH
    y_spec = pl.BlockSpec((1, TH, W, C), lambda b, h: (b, h, 0, 0))
    return pl.pallas_call(
        functools.partial(_gate_acc_kernel, T=T),
        out_shape=jax.ShapeDtypeStruct((B, H, W, C), jnp.bfloat16),
        grid=(B, nH),
        in_specs=[pl.BlockSpec((1, T, C), lambda b, h: (b, 0, 0))] + [y_spec] * T,
        out_specs=y_spec,
        compiler_params=pltpu.CompilerParams(
            dimension_semantics=("parallel", "parallel"),
            vmem_limit_bytes=VMEM_LIMIT),
    )(gates_bt, *ys)


# --------------------------------------------------------------------------- #
#  Fused conv3 (1x1+BN) + downsample (1x1+BN or identity) + add + final ReLU.
# --------------------------------------------------------------------------- #

def _final_ds_kernel(x2_ref, w3_ref, s3_ref, b3_ref, xi_ref, wd_ref, sd_ref,
                     bd_ref, o_ref):
    y = jnp.dot(x2_ref[...], w3_ref[...], preferred_element_type=jnp.float32)
    y = y * s3_ref[...] + b3_ref[...]
    d = jnp.dot(xi_ref[...], wd_ref[...], preferred_element_type=jnp.float32)
    d = d * sd_ref[...] + bd_ref[...]
    o_ref[...] = jnp.maximum(y + d, 0.0).astype(o_ref.dtype)


def _final_id_kernel(x2_ref, w3_ref, s3_ref, b3_ref, xi_ref, o_ref):
    y = jnp.dot(x2_ref[...], w3_ref[...], preferred_element_type=jnp.float32)
    y = y * s3_ref[...] + b3_ref[...]
    o_ref[...] = jnp.maximum(y + xi_ref[...].astype(jnp.float32),
                             0.0).astype(o_ref.dtype)


def conv3_add_residual(x2_flat, xin_flat, p3, pds):
    """relu(BN(x2@w3) + residual); residual = BN(x@wd) or x (identity)."""
    M, mid = x2_flat.shape
    Cin = xin_flat.shape[1]
    N = p3["w"].shape[1]
    TM = 512 if M >= 512 else _round_up(M, 8)
    Mp = _round_up(M, TM)
    x2p = _pad_rows(x2_flat.astype(jnp.bfloat16), Mp)
    xip = _pad_rows(xin_flat.astype(jnp.bfloat16), Mp)
    w3 = p3["w"].astype(jnp.bfloat16)
    s3 = p3["scale"].reshape(1, N).astype(jnp.float32)
    b3 = p3["shift"].reshape(1, N).astype(jnp.float32)

    def row_spec(K):
        return pl.BlockSpec((TM, K), lambda i: (i, 0))

    vec_spec = pl.BlockSpec((1, N), lambda i: (0, 0))

    if pds is not None:
        wd = pds["w"].astype(jnp.bfloat16)
        sd = pds["scale"].reshape(1, N).astype(jnp.float32)
        bd = pds["shift"].reshape(1, N).astype(jnp.float32)
        in_specs = [row_spec(mid), pl.BlockSpec((mid, N), lambda i: (0, 0)),
                    vec_spec, vec_spec,
                    row_spec(Cin), pl.BlockSpec((Cin, N), lambda i: (0, 0)),
                    vec_spec, vec_spec]
        args = (x2p, w3, s3, b3, xip, wd, sd, bd)
        kern = _final_ds_kernel
    else:
        in_specs = [row_spec(mid), pl.BlockSpec((mid, N), lambda i: (0, 0)),
                    vec_spec, vec_spec, row_spec(N)]
        args = (x2p, w3, s3, b3, xip)
        kern = _final_id_kernel

    out = pl.pallas_call(
        kern,
        out_shape=jax.ShapeDtypeStruct((Mp, N), jnp.float32),
        grid=(Mp // TM,),
        in_specs=in_specs,
        out_specs=pl.BlockSpec((TM, N), lambda i: (i, 0)),
        compiler_params=pltpu.CompilerParams(
            dimension_semantics=("parallel",),
            vmem_limit_bytes=VMEM_LIMIT),
    )(*args)
    return out[:M] if Mp != M else out


# --------------------------------------------------------------------------- #
#  OSBlock forward (NCHW boundary, NHWC + bf16 internally).
# --------------------------------------------------------------------------- #

def osblock_forward(params, x_nchw):
    x = jnp.transpose(x_nchw, (0, 2, 3, 1))                 # NHWC
    B, H, W, Cin = x.shape
    xb = x.astype(jnp.bfloat16)                             # cast once, reuse
    xb_flat = xb.reshape(B * H * W, Cin)
    mid = params["conv1"]["w"].shape[1]
    out_ch = params["conv3"]["w"].shape[1]

    # conv1: 1x1 + BN + ReLU
    x1 = matmul_affine(xb_flat, params["conv1"]["w"], params["conv1"]["scale"],
                       params["conv1"]["shift"], act="relu")
    x1 = x1.reshape(B, H, W, mid)

    # T omni-scale streams of fused LightConvs; GAP sums fused into the last one.
    ys, pooled = [], []
    for stream in params["conv2"]:
        y, gap = x1, None
        for lc in stream:
            y, gap = light_conv3x3(y, lc)
        ys.append(y)
        pooled.append(gap.reshape(B, mid) / float(H * W))

    # Shared ChannelGate MLP for all T streams in one tiny kernel.
    T = len(params["conv2"])
    pooled_all = jnp.concatenate(pooled, axis=0)             # (T*B, mid)
    gates = channel_gates(pooled_all, params["gate"])        # (T*B, mid)
    gates_bt = jnp.transpose(gates.reshape(T, B, mid), (1, 0, 2))  # (B, T, mid)

    # Fused gate-multiply + stream accumulation -> x2 (bf16).
    x2 = gate_accumulate(ys, gates_bt)                       # (B, H, W, mid)

    # conv3 + downsample + residual add + final ReLU, all in one kernel.
    out_flat = conv3_add_residual(x2.reshape(B * H * W, mid), xb_flat,
                                  params["conv3"], params["downsample"])
    out = out_flat.reshape(B, H, W, out_ch)
    return jnp.transpose(out, (0, 3, 1, 2))                  # back to NCHW


# --------------------------------------------------------------------------- #
#  Parameter construction (eval-mode BN folded into per-channel scale/shift).
# --------------------------------------------------------------------------- #

class _KeyGen:
    def __init__(self, seed):
        self._k = jax.random.PRNGKey(seed)

    def __call__(self):
        self._k, s = jax.random.split(self._k)
        return s


def _fold_bn(gamma, beta, mean, var):
    scale = gamma / jnp.sqrt(var + BN_EPS)
    shift = beta - mean * scale
    return scale, shift


def _make_bn(kg, c):
    gamma = 1.0 + 0.1 * jax.random.normal(kg(), (c,), jnp.float32)
    beta = 0.1 * jax.random.normal(kg(), (c,), jnp.float32)
    mean = 0.1 * jax.random.normal(kg(), (c,), jnp.float32)
    var = 1.0 + 0.1 * jax.random.uniform(kg(), (c,), jnp.float32)
    return _fold_bn(gamma, beta, mean, var)


def _conv1x1_bn(kg, cin, cout):
    w = math.sqrt(2.0 / cout) * jax.random.normal(kg(), (cin, cout), jnp.float32)
    scale, shift = _make_bn(kg, cout)
    return dict(w=w, scale=scale, shift=shift)


def _light_conv_params(kg, cin, cout):
    pw_w = math.sqrt(2.0 / cout) * jax.random.normal(kg(), (cin, cout), jnp.float32)
    dw_w = math.sqrt(2.0 / (cout * 9)) * jax.random.normal(
        kg(), (3, 3, cout), jnp.float32)
    scale, shift = _make_bn(kg, cout)
    return dict(pw_w=pw_w, dw_w=dw_w, scale=scale, shift=shift)


def init_osblock_params(in_ch, out_ch, reduction=4, T=4, gate_reduction=16, seed=1):
    assert T >= 1 and out_ch >= reduction and out_ch % reduction == 0
    mid = out_ch // reduction
    hid = max(mid // gate_reduction, 1)
    kg = _KeyGen(seed)

    conv2 = []
    for t in range(1, T + 1):                                # stream t has depth t
        conv2.append([_light_conv_params(kg, mid, mid) for _ in range(t)])

    gate = dict(
        fc1_w=0.3 * jax.random.normal(kg(), (mid, hid), jnp.float32),
        fc1_b=0.1 * jax.random.normal(kg(), (hid,), jnp.float32),
        fc2_w=0.3 * jax.random.normal(kg(), (hid, mid), jnp.float32),
        fc2_b=0.1 * jax.random.normal(kg(), (mid,), jnp.float32),
    )

    return dict(
        conv1=_conv1x1_bn(kg, in_ch, mid),
        conv2=conv2,
        gate=gate,
        conv3=_conv1x1_bn(kg, mid, out_ch),
        downsample=_conv1x1_bn(kg, in_ch, out_ch) if in_ch != out_ch else None,
    )


# --------------------------------------------------------------------------- #
#  Pure-JAX f32 reference (mirrors the PyTorch eval-mode forward).
# --------------------------------------------------------------------------- #

def osblock_reference(params, x_nchw):
    x = jnp.transpose(x_nchw, (0, 2, 3, 1)).astype(jnp.float32)
    B, H, W, _ = x.shape

    def c1x1(xx, p, relu):
        y = jnp.einsum("bhwc,cd->bhwd", xx, p["w"].astype(jnp.float32))
        y = y * p["scale"] + p["shift"]
        return jnp.maximum(y, 0.0) if relu else y

    def lconv(xx, p):
        y = jnp.einsum("bhwc,cd->bhwd", xx, p["pw_w"].astype(jnp.float32))
        yp = jnp.pad(y, ((0, 0), (1, 1), (1, 1), (0, 0)))
        acc = jnp.zeros_like(y)
        for i in range(3):
            for j in range(3):
                acc = acc + yp[:, i:i + H, j:j + W, :] * p["dw_w"][i, j]
        return jnp.maximum(acc * p["scale"] + p["shift"], 0.0)

    x1 = c1x1(x, params["conv1"], True)
    gp = params["gate"]
    x2 = jnp.zeros_like(x1)
    for stream in params["conv2"]:
        y = x1
        for lc in stream:
            y = lconv(y, lc)
        pooled = jnp.mean(y, axis=(1, 2))
        hdd = jnp.maximum(pooled @ gp["fc1_w"] + gp["fc1_b"], 0.0)
        g = jax.nn.sigmoid(hdd @ gp["fc2_w"] + gp["fc2_b"])
        x2 = x2 + y * g[:, None, None, :]
    x3 = c1x1(x2, params["conv3"], False)
    if params["downsample"] is not None:
        identity = c1x1(x, params["downsample"], False)
    else:
        identity = x
    out = jnp.maximum(x3 + identity, 0.0)
    return jnp.transpose(out, (0, 3, 1, 2))


# --------------------------------------------------------------------------- #

if __name__ == "__main__":
    in_ch, out_ch = 32, 64            # mid = 16, ChannelGate hidden = 1
    B, H, W = 2, 16, 16

    x = jax.random.normal(jax.random.PRNGKey(0), (B, in_ch, H, W), jnp.float32)
    params = init_osblock_params(in_ch, out_ch, reduction=4, T=4, seed=1)

    fwd = jax.jit(osblock_forward)
    out = fwd(params, x)
    jax.block_until_ready(out)

    assert out.shape == (B, out_ch, H, W)
    assert bool(jnp.all(jnp.isfinite(out)))
    assert float(jnp.min(out)) >= 0.0             # final ReLU

    # Loose-tolerance check against a pure-JAX f32 reference (kernel path uses
    # bf16 activations / MXU operands with f32 accumulation).
    ref = osblock_reference(params, x)
    err = float(jnp.max(jnp.abs(out.astype(jnp.float32) - ref)))
    scale = float(jnp.max(jnp.abs(ref))) + 1e-6
    assert err <= 0.08 * scale + 0.05, f"mismatch: max|err|={err}, max|ref|={scale}"

    print("KERNEL_OK")
</pallas_src>

<mosaic_0001>
module attributes {stable_mosaic.version = 11 : i64} {
  func.func @_mm_kernel(%arg0: i32, %arg1: memref<512x32xbf16, #tpu.memory_space<vmem>>, %arg2: memref<32x16xbf16, #tpu.memory_space<vmem>>, %arg3: memref<1x16xf32, #tpu.memory_space<vmem>>, %arg4: memref<1x16xf32, #tpu.memory_space<vmem>>, %arg5: memref<512x16xbf16, #tpu.memory_space<vmem>>) attributes {dimension_semantics = [#tpu.dimension_semantics<parallel>], iteration_bounds = array<i64: 1>, scalar_prefetch = 0 : i64, scratch_operands = 0 : i64, tpu.core_type = #tpu.core_type<tc>, window_params = [{transform_indices = @transform_0, window_bounds = array<i64: 512, 32>}, {pipeline_mode = #tpu.pipeline_mode<synchronous>, transform_indices = @transform_1, window_bounds = array<i64: 32, 16>}, {pipeline_mode = #tpu.pipeline_mode<synchronous>, transform_indices = @transform_2, window_bounds = array<i64: 1, 16>}, {pipeline_mode = #tpu.pipeline_mode<synchronous>, transform_indices = @transform_3, window_bounds = array<i64: 1, 16>}, {transform_indices = @transform_4, window_bounds = array<i64: 512, 16>}]} {
    %c0 = arith.constant 0 : index
    %c0_0 = arith.constant 0 : index
    %0 = vector.load %arg1[%c0, %c0_0] : memref<512x32xbf16, #tpu.memory_space<vmem>>, vector<512x32xbf16>
    %c0_1 = arith.constant 0 : index
    %c0_2 = arith.constant 0 : index
    %1 = vector.load %arg2[%c0_1, %c0_2] : memref<32x16xbf16, #tpu.memory_space<vmem>>, vector<32x16xbf16>
    %cst = arith.constant dense<0.000000e+00> : vector<512x16xf32>
    %2 = tpu.matmul %0, %1, %cst {dimension_numbers = #tpu.dot_dimension_numbers<[1], [0], [0], [1], [0, 0, 1, 1], [], []>} : vector<512x32xbf16>, vector<32x16xbf16>, vector<512x16xf32> -> vector<512x16xf32>
    %c0_3 = arith.constant 0 : index
    %c0_4 = arith.constant 0 : index
    %3 = vector.load %arg3[%c0_3, %c0_4] : memref<1x16xf32, #tpu.memory_space<vmem>>, vector<1x16xf32>
    %4 = vector.broadcast %3 : vector<1x16xf32> to vector<512x16xf32>
    %5 = arith.mulf %2, %4 : vector<512x16xf32>
    %c0_5 = arith.constant 0 : index
    %c0_6 = arith.constant 0 : index
    %6 = vector.load %arg4[%c0_5, %c0_6] : memref<1x16xf32, #tpu.memory_space<vmem>>, vector<1x16xf32>
    %7 = vector.broadcast %6 : vector<1x16xf32> to vector<512x16xf32>
    %8 = arith.addf %5, %7 : vector<512x16xf32>
    %cst_7 = arith.constant 0.000000e+00 : f32
    %9 = vector.broadcast %cst_7 : f32 to vector<512x16xf32>
    %10 = arith.maximumf %8, %9 : vector<512x16xf32>
    %11 = arith.truncf %10 : vector<512x16xf32> to vector<512x16xbf16>
    %c0_8 = arith.constant 0 : index
    %c0_9 = arith.constant 0 : index
    %12 = vector.load %arg5[%c0_8, %c0_9] : memref<512x16xbf16, #tpu.memory_space<vmem>>, vector<512x16xbf16>
    tpu.vector_store %arg5[%c0_8, %c0_9], %11 {strides = array<i32>} : memref<512x16xbf16, #tpu.memory_space<vmem>>, vector<512x16xbf16>,
    return
  }
  func.func @transform_0(%arg0: i32) -> (i32, i32) {
    %c0_i32 = arith.constant 0 : i32
    %c0_i32_0 = arith.constant 0 : i32
    return %arg0, %c0_i32 : i32, i32
  }
  func.func @transform_1(%arg0: i32) -> (i32, i32) {
    %c0_i32 = arith.constant 0 : i32
    %c0_i32_0 = arith.constant 0 : i32
    %c0_i32_1 = arith.constant 0 : i32
    return %c0_i32, %c0_i32_0 : i32, i32
  }
  func.func @transform_2(%arg0: i32) -> (i32, i32) {
    %c0_i32 = arith.constant 0 : i32
    %c0_i32_0 = arith.constant 0 : i32
    %c0_i32_1 = arith.constant 0 : i32
    return %c0_i32, %c0_i32_0 : i32, i32
  }
  func.func @transform_3(%arg0: i32) -> (i32, i32) {
    %c0_i32 = arith.constant 0 : i32
    %c0_i32_0 = arith.constant 0 : i32
    %c0_i32_1 = arith.constant 0 : i32
    return %c0_i32, %c0_i32_0 : i32, i32
  }
  func.func @transform_4(%arg0: i32) -> (i32, i32) {
    %c0_i32 = arith.constant 0 : i32
    %c0_i32_0 = arith.constant 0 : i32
    return %arg0, %c0_i32 : i32, i32
  }
}

module attributes {stable_mosaic.version = 11 : i64} {
  func.func @_lightconv_kernel(%arg0: i32, %arg1: i32, %arg2: memref<1x256x16xbf16, #tpu.memory_space<vmem>>, %arg3: memref<16x16xbf16, #tpu.memory_space<vmem>>, %arg4: memref<9x16xf32, #tpu.memory_space<vmem>>, %arg5: memref<1x1x16xf32, #tpu.memory_space<vmem>>, %arg6: memref<1x8x16x16xbf16, #tpu.memory_space<vmem>>, %arg7: memref<1x1x16xf32, #tpu.memory_space<vmem>>, %arg8: memref<18x18x16xf32, #tpu.memory_space<vmem>>) attributes {dimension_semantics = [#tpu.dimension_semantics<parallel>, #tpu.dimension_semantics<arbitrary>], iteration_bounds = array<i64: 2, 2>, scalar_prefetch = 0 : i64, scratch_operands = 1 : i64, tpu.core_type = #tpu.core_type<tc>, window_params = [{transform_indices = @transform_0, window_bounds = array<i64: 1, 256, 16>}, {pipeline_mode = #tpu.pipeline_mode<synchronous>, transform_indices = @transform_1, window_bounds = array<i64: 16, 16>}, {pipeline_mode = #tpu.pipeline_mode<synchronous>, transform_indices = @transform_2, window_bounds = array<i64: 9, 16>}, {pipeline_mode = #tpu.pipeline_mode<synchronous>, transform_indices = @transform_3, window_bounds = array<i64: 1, 1, 16>}, {transform_indices = @transform_4, window_bounds = array<i64: 1, 8, 16, 16>}, {transform_indices = @transform_5, window_bounds = array<i64: 1, 1, 16>}]} {
    %c0_i32 = arith.constant 0 : i32
    %0 = arith.cmpi eq, %arg1, %c0_i32 : i32
    %1 = arith.extui %0 : i1 to i32
    %c0_i32_0 = arith.constant 0 : i32
    %2 = arith.cmpi ne, %1, %c0_i32_0 : i32
    scf.if %2 {
      %cst_52 = arith.constant 0.000000e+00 : f32
      %94 = vector.broadcast %cst_52 : f32 to vector<18x18x16xf32>
      %c0_53 = arith.constant 0 : index
      %c0_54 = arith.constant 0 : index
      %c0_55 = arith.constant 0 : index
      %95 = vector.load %arg8[%c0_53, %c0_54, %c0_55] : memref<18x18x16xf32, #tpu.memory_space<vmem>>, vector<18x18x16xf32>
      tpu.vector_store %arg8[%c0_53, %c0_54, %c0_55], %94 {strides = array<i32>} : memref<18x18x16xf32, #tpu.memory_space<vmem>>, vector<18x18x16xf32>,
      %c0_56 = arith.constant 0 : index
      %c0_57 = arith.constant 0 : index
      %96 = vector.load %arg3[%c0_56, %c0_57] : memref<16x16xbf16, #tpu.memory_space<vmem>>, vector<16x16xbf16>
      %c0_58 = arith.constant 0 : index
      %c0_59 = arith.constant 0 : index
      %c0_60 = arith.constant 0 : index
      %97 = vector.load %arg2[%c0_58, %c0_59, %c0_60] : memref<1x256x16xbf16, #tpu.memory_space<vmem>>, vector<1x128x16xbf16>
      %98 = vector.shape_cast %97 : vector<1x128x16xbf16> to vector<128x16xbf16>
      %cst_61 = arith.constant dense<0.000000e+00> : vector<128x16xf32>
      %99 = tpu.matmul %98, %96, %cst_61 {dimension_numbers = #tpu.dot_dimension_numbers<[1], [0], [0], [1], [0, 0, 1, 1], [], []>} : vector<128x16xbf16>, vector<16x16xbf16>, vector<128x16xf32> -> vector<128x16xf32>
      %100 = vector.shape_cast %99 : vector<128x16xf32> to vector<8x16x16xf32>
      %c1_62 = arith.constant 1 : index
      %c1_63 = arith.constant 1 : index
      %c0_64 = arith.constant 0 : index
      %101 = vector.load %arg8[%c1_62, %c1_63, %c0_64] : memref<18x18x16xf32, #tpu.memory_space<vmem>>, vector<8x16x16xf32>
      tpu.vector_store %arg8[%c1_62, %c1_63, %c0_64], %100 {strides = array<i32>} : memref<18x18x16xf32, #tpu.memory_space<vmem>>, vector<8x16x16xf32>,
      %c0_65 = arith.constant 0 : index
      %c128 = arith.constant 128 : index
      %c0_66 = arith.constant 0 : index
      %102 = vector.load %arg2[%c0_65, %c128, %c0_66] : memref<1x256x16xbf16, #tpu.memory_space<vmem>>, vector<1x128x16xbf16>
      %103 = vector.shape_cast %102 : vector<1x128x16xbf16> to vector<128x16xbf16>
      %cst_67 = arith.constant dense<0.000000e+00> : vector<128x16xf32>
      %104 = tpu.matmul %103, %96, %cst_67 {dimension_numbers = #tpu.dot_dimension_numbers<[1], [0], [0], [1], [0, 0, 1, 1], [], []>} : vector<128x16xbf16>, vector<16x16xbf16>, vector<128x16xf32> -> vector<128x16xf32>
      %105 = vector.shape_cast %104 : vector<128x16xf32> to vector<8x16x16xf32>
      %c9 = arith.constant 9 : index
      %c1_68 = arith.constant 1 : index
      %c0_69 = arith.constant 0 : index
      %106 = vector.load %arg8[%c9, %c1_68, %c0_69] : memref<18x18x16xf32, #tpu.memory_space<vmem>>, vector<8x16x16xf32>
      tpu.vector_store %arg8[%c9, %c1_68, %c0_69], %105 {strides = array<i32>} : memref<18x18x16xf32, #tpu.memory_space<vmem>>, vector<8x16x16xf32>,
    } else {
    }
    %c8_i32 = arith.constant 8 : i32
    %3 = arith.muli %arg1, %c8_i32 : i32
    %cst = arith.constant 0.000000e+00 : f32
    %4 = vector.broadcast %cst : f32 to vector<8x16x16xf32>
    %c0_i32_1 = arith.constant 0 : i32
    %5 = arith.addi %3, %c0_i32_1 : i32
    %6 = arith.index_cast %5 : i32 to index
    %c0 = arith.constant 0 : index
    %c0_2 = arith.constant 0 : index
    %7 = vector.load %arg8[%6, %c0, %c0_2] : memref<18x18x16xf32, #tpu.memory_space<vmem>>, vector<8x16x16xf32>
    %c0_3 = arith.constant 0 : index
    %c0_4 = arith.constant 0 : index
    %8 = vector.load %arg4[%c0_3, %c0_4] : memref<9x16xf32, #tpu.memory_space<vmem>>, vector<1x16xf32>
    %9 = vector.shape_cast %8 : vector<1x16xf32> to vector<1x1x16xf32>
    %10 = vector.broadcast %9 : vector<1x1x16xf32> to vector<8x16x16xf32>
    %11 = arith.mulf %7, %10 : vector<8x16x16xf32>
    %12 = arith.addf %4, %11 : vector<8x16x16xf32>
    %c0_i32_5 = arith.constant 0 : i32
    %13 = arith.addi %3, %c0_i32_5 : i32
    %14 = arith.index_cast %13 : i32 to index
    %c1 = arith.constant 1 : index
    %c0_6 = arith.constant 0 : index
    %15 = vector.load %arg8[%14, %c1, %c0_6] : memref<18x18x16xf32, #tpu.memory_space<vmem>>, vector<8x16x16xf32>
    %c1_7 = arith.constant 1 : index
    %c0_8 = arith.constant 0 : index
    %16 = vector.load %arg4[%c1_7, %c0_8] : memref<9x16xf32, #tpu.memory_space<vmem>>, vector<1x16xf32>
    %17 = vector.shape_cast %16 : vector<1x16xf32> to vector<1x1x16xf32>
    %18 = vector.broadcast %17 : vector<1x1x16xf32> to vector<8x16x16xf32>
    %19 = arith.mulf %15, %18 : vector<8x16x16xf32>
    %20 = arith.addf %12, %19 : vector<8x16x16xf32>
    %c0_i32_9 = arith.constant 0 : i32
    %21 = arith.addi %3, %c0_i32_9 : i32
    %22 = arith.index_cast %21 : i32 to index
    %c2 = arith.constant 2 : index
    %c0_10 = arith.constant 0 : index
    %23 = vector.load %arg8[%22, %c2, %c0_10] : memref<18x18x16xf32, #tpu.memory_space<vmem>>, vector<8x16x16xf32>
    %c2_11 = arith.constant 2 : index
    %c0_12 = arith.constant 0 : index
    %24 = vector.load %arg4[%c2_11, %c0_12] : memref<9x16xf32, #tpu.memory_space<vmem>>, vector<1x16xf32>
    %25 = vector.shape_cast %24 : vector<1x16xf32> to vector<1x1x16xf32>
    %26 = vector.broadcast %25 : vector<1x1x16xf32> to vector<8x16x16xf32>
    %27 = arith.mulf %23, %26 : vector<8x16x16xf32>
    %28 = arith.addf %20, %27 : vector<8x16x16xf32>
    %c1_i32 = arith.constant 1 : i32
    %29 = arith.addi %3, %c1_i32 : i32
    %30 = arith.index_cast %29 : i32 to index
    %c0_13 = arith.constant 0 : index
    %c0_14 = arith.constant 0 : index
    %31 = vector.load %arg8[%30, %c0_13, %c0_14] : memref<18x18x16xf32, #tpu.memory_space<vmem>>, vector<8x16x16xf32>
    %c3 = arith.constant 3 : index
    %c0_15 = arith.constant 0 : index
    %32 = vector.load %arg4[%c3, %c0_15] : memref<9x16xf32, #tpu.memory_space<vmem>>, vector<1x16xf32>
    %33 = vector.shape_cast %32 : vector<1x16xf32> to vector<1x1x16xf32>
    %34 = vector.broadcast %33 : vector<1x1x16xf32> to vector<8x16x16xf32>
    %35 = arith.mulf %31, %34 : vector<8x16x16xf32>
    %36 = arith.addf %28, %35 : vector<8x16x16xf32>
    %c1_i32_16 = arith.constant 1 : i32
    %37 = arith.addi %3, %c1_i32_16 : i32
    %38 = arith.index_cast %37 : i32 to index
    %c1_17 = arith.constant 1 : index
    %c0_18 = arith.constant 0 : index
    %39 = vector.load %arg8[%38, %c1_17, %c0_18] : memref<18x18x16xf32, #tpu.memory_space<vmem>>, vector<8x16x16xf32>
    %c4 = arith.constant 4 : index
    %c0_19 = arith.constant 0 : index
    %40 = vector.load %arg4[%c4, %c0_19] : memref<9x16xf32, #tpu.memory_space<vmem>>, vector<1x16xf32>
    %41 = vector.shape_cast %40 : vector<1x16xf32> to vector<1x1x16xf32>
    %42 = vector.broadcast %41 : vector<1x1x16xf32> to vector<8x16x16xf32>
    %43 = arith.mulf %39, %42 : vector<8x16x16xf32>
    %44 = arith.addf %36, %43 : vector<8x16x16xf32>
    %c1_i32_20 = arith.constant 1 : i32
    %45 = arith.addi %3, %c1_i32_20 : i32
    %46 = arith.index_cast %45 : i32 to index
    %c2_21 = arith.constant 2 : index
    %c0_22 = arith.constant 0 : index
    %47 = vector.load %arg8[%46, %c2_21, %c0_22] : memref<18x18x16xf32, #tpu.memory_space<vmem>>, vector<8x16x16xf32>
    %c5 = arith.constant 5 : index
    %c0_23 = arith.constant 0 : index
    %48 = vector.load %arg4[%c5, %c0_23] : memref<9x16xf32, #tpu.memory_space<vmem>>, vector<1x16xf32>
    %49 = vector.shape_cast %48 : vector<1x16xf32> to vector<1x1x16xf32>
    %50 = vector.broadcast %49 : vector<1x1x16xf32> to vector<8x16x16xf32>
    %51 = arith.mulf %47, %50 : vector<8x16x16xf32>
    %52 = arith.addf %44, %51 : vector<8x16x16xf32>
    %c2_i32 = arith.constant 2 : i32
    %53 = arith.addi %3, %c2_i32 : i32
    %54 = arith.index_cast %53 : i32 to index
    %c0_24 = arith.constant 0 : index
    %c0_25 = arith.constant 0 : index
    %55 = vector.load %arg8[%54, %c0_24, %c0_25] : memref<18x18x16xf32, #tpu.memory_space<vmem>>, vector<8x16x16xf32>
    %c6 = arith.constant 6 : index
    %c0_26 = arith.constant 0 : index
    %56 = vector.load %arg4[%c6, %c0_26] : memref<9x16xf32, #tpu.memory_space<vmem>>, vector<1x16xf32>
    %57 = vector.shape_cast %56 : vector<1x16xf32> to vector<1x1x16xf32>
    %58 = vector.broadcast %57 : vector<1x1x16xf32> to vector<8x16x16xf32>
    %59 = arith.mulf %55, %58 : vector<8x16x16xf32>
    %60 = arith.addf %52, %59 : vector<8x16x16xf32>
    %c2_i32_27 = arith.constant 2 : i32
    %61 = arith.addi %3, %c2_i32_27 : i32
    %62 = arith.index_cast %61 : i32 to index
    %c1_28 = arith.constant 1 : index
    %c0_29 = arith.constant 0 : index
    %63 = vector.load %arg8[%62, %c1_28, %c0_29] : memref<18x18x16xf32, #tpu.memory_space<vmem>>, vector<8x16x16xf32>
    %c7 = arith.constant 7 : index
    %c0_30 = arith.constant 0 : index
    %64 = vector.load %arg4[%c7, %c0_30] : memref<9x16xf32, #tpu.memory_space<vmem>>, vector<1x16xf32>
    %65 = vector.shape_cast %64 : vector<1x16xf32> to vector<1x1x16xf32>
    %66 = vector.broadcast %65 : vector<1x1x16xf32> to vector<8x16x16xf32>
    %67 = arith.mulf %63, %66 : vector<8x16x16xf32>
    %68 = arith.addf %60, %67 : vector<8x16x16xf32>
    %c2_i32_31 = arith.constant 2 : i32
    %69 = arith.addi %3, %c2_i32_31 : i32
    %70 = arith.index_cast %69 : i32 to index
    %c2_32 = arith.constant 2 : index
    %c0_33 = arith.constant 0 : index
    %71 = vector.load %arg8[%70, %c2_32, %c0_33] : memref<18x18x16xf32, #tpu.memory_space<vmem>>, vector<8x16x16xf32>
    %c8 = arith.constant 8 : index
    %c0_34 = arith.constant 0 : index
    %72 = vector.load %arg4[%c8, %c0_34] : memref<9x16xf32, #tpu.memory_space<vmem>>, vector<1x16xf32>
    %73 = vector.shape_cast %72 : vector<1x16xf32> to vector<1x1x16xf32>
    %74 = vector.broadcast %73 : vector<1x1x16xf32> to vector<8x16x16xf32>
    %75 = arith.mulf %71, %74 : vector<8x16x16xf32>
    %76 = arith.addf %68, %75 : vector<8x16x16xf32>
    %c0_35 = arith.constant 0 : index
    %c0_36 = arith.constant 0 : index
    %c0_37 = arith.constant 0 : index
    %77 = vector.load %arg5[%c0_35, %c0_36, %c0_37] : memref<1x1x16xf32, #tpu.memory_space<vmem>>, vector<1x1x16xf32>
    %78 = vector.broadcast %77 : vector<1x1x16xf32> to vector<8x16x16xf32>
    %79 = arith.addf %76, %78 : vector<8x16x16xf32>
    %cst_38 = arith.constant 0.000000e+00 : f32
    %80 = vector.broadcast %cst_38 : f32 to vector<8x16x16xf32>
    %81 = arith.maximumf %79, %80 : vector<8x16x16xf32>
    %82 = arith.truncf %81 : vector<8x16x16xf32> to vector<8x16x16xbf16>
    %c0_39 = arith.constant 0 : index
    %c0_40 = arith.constant 0 : index
    %c0_41 = arith.constant 0 : index
    %c0_42 = arith.constant 0 : index
    %83 = vector.load %arg6[%c0_39, %c0_40, %c0_41, %c0_42] : memref<1x8x16x16xbf16, #tpu.memory_space<vmem>>, vector<1x8x16x16xbf16>
    %84 = vector.shape_cast %83 : vector<1x8x16x16xbf16> to vector<8x16x16xbf16>
    %85 = vector.shape_cast %82 : vector<8x16x16xbf16> to vector<1x8x16x16xbf16>
    tpu.vector_store %arg6[%c0_39, %c0_40, %c0_41, %c0_42], %85 {strides = array<i32>} : memref<1x8x16x16xbf16, #tpu.memory_space<vmem>>, vector<1x8x16x16xbf16>,
    %c0_i32_43 = arith.constant 0 : i32
    %86 = arith.cmpi eq, %arg1, %c0_i32_43 : i32
    %87 = arith.extui %86 : i1 to i32
    %c0_i32_44 = arith.constant 0 : i32
    %88 = arith.cmpi ne, %87, %c0_i32_44 : i32
    scf.if %88 {
      %cst_52 = arith.constant 0.000000e+00 : f32
      %94 = vector.broadcast %cst_52 : f32 to vector<1x1x16xf32>
      %c0_53 = arith.constant 0 : index
      %c0_54 = arith.constant 0 : index
      %c0_55 = arith.constant 0 : index
      %95 = vector.load %arg7[%c0_53, %c0_54, %c0_55] : memref<1x1x16xf32, #tpu.memory_space<vmem>>, vector<1x1x16xf32>
      tpu.vector_store %arg7[%c0_53, %c0_54, %c0_55], %94 {strides = array<i32>} : memref<1x1x16xf32, #tpu.memory_space<vmem>>, vector<1x1x16xf32>,
    } else {
    }
    %c0_45 = arith.constant 0 : index
    %c0_46 = arith.constant 0 : index
    %c0_47 = arith.constant 0 : index
    %89 = vector.load %arg7[%c0_45, %c0_46, %c0_47] : memref<1x1x16xf32, #tpu.memory_space<vmem>>, vector<1x1x16xf32>
    %cst_48 = arith.constant dense<0.000000e+00> : vector<16xf32>
    %90 = vector.multi_reduction <add>, %81, %cst_48 [0, 1] : vector<8x16x16xf32> to vector<16xf32>
    %91 = vector.shape_cast %90 : vector<16xf32> to vector<1x1x16xf32>
    %92 = arith.addf %89, %91 : vector<1x1x16xf32>
    %c0_49 = arith.constant 0 : index
    %c0_50 = arith.constant 0 : index
    %c0_51 = arith.constant 0 : index
    %93 = vector.load %arg7[%c0_49, %c0_50, %c0_51] : memref<1x1x16xf32, #tpu.memory_space<vmem>>, vector<1x1x16xf32>
    tpu.vector_store %arg7[%c0_49, %c0_50, %c0_51], %92 {strides = array<i32>} : memref<1x1x16xf32, #tpu.memory_space<vmem>>, vector<1x1x16xf32>,
    return
  }
  func.func @transform_0(%arg0: i32, %arg1: i32) -> (i32, i32, i32) {
    %c0_i32 = arith.constant 0 : i32
    %c0_i32_0 = arith.constant 0 : i32
    %c0_i32_1 = arith.constant 0 : i32
    return %arg0, %c0_i32, %c0_i32_0 : i32, i32, i32
  }
  func.func @transform_1(%arg0: i32, %arg1: i32) -> (i32, i32) {
    %c0_i32 = arith.constant 0 : i32
    %c0_i32_0 = arith.constant 0 : i32
    %c0_i32_1 = arith.constant 0 : i32
    return %c0_i32, %c0_i32_0 : i32, i32
  }
  func.func @transform_2(%arg0: i32, %arg1: i32) -> (i32, i32) {
    %c0_i32 = arith.constant 0 : i32
    %c0_i32_0 = arith.constant 0 : i32
    %c0_i32_1 = arith.constant 0 : i32
    return %c0_i32, %c0_i32_0 : i32, i32
  }
  func.func @transform_3(%arg0: i32, %arg1: i32) -> (i32, i32, i32) {
    %c0_i32 = arith.constant 0 : i32
    %c0_i32_0 = arith.constant 0 : i32
    %c0_i32_1 = arith.constant 0 : i32
    %c0_i32_2 = arith.constant 0 : i32
    return %c0_i32, %c0_i32_0, %c0_i32_1 : i32, i32, i32
  }
  func.func @transform_4(%arg0: i32, %arg1: i32) -> (i32, i32, i32, i32) {
    %c0_i32 = arith.constant 0 : i32
    %c0_i32_0 = arith.constant 0 : i32
    %c0_i32_1 = arith.constant 0 : i32
    return %arg0, %arg1, %c0_i32, %c0_i32_0 : i32, i32, i32, i32
  }
  func.func @transform_5(%arg0: i32, %arg1: i32) -> (i32, i32, i32) {
    %c0_i32 = arith.constant 0 : i32
    %c0_i32_0 = arith.constant 0 : i32
    %c0_i32_1 = arith.constant 0 : i32
    return %arg0, %c0_i32, %c0_i32_0 : i32, i32, i32
  }
}

module attributes {stable_mosaic.version = 11 : i64} {
  func.func @_lightconv_kernel(%arg0: i32, %arg1: i32, %arg2: memref<1x256x16xbf16, #tpu.memory_space<vmem>>, %arg3: memref<16x16xbf16, #tpu.memory_space<vmem>>, %arg4: memref<9x16xf32, #tpu.memory_space<vmem>>, %arg5: memref<1x1x16xf32, #tpu.memory_space<vmem>>, %arg6: memref<1x8x16x16xbf16, #tpu.memory_space<vmem>>, %arg7: memref<1x1x16xf32, #tpu.memory_space<vmem>>, %arg8: memref<18x18x16xf32, #tpu.memory_space<vmem>>) attributes {dimension_semantics = [#tpu.dimension_semantics<parallel>, #tpu.dimension_semantics<arbitrary>], iteration_bounds = array<i64: 2, 2>, scalar_prefetch = 0 : i64, scratch_operands = 1 : i64, tpu.core_type = #tpu.core_type<tc>, window_params = [{transform_indices = @transform_0, window_bounds = array<i64: 1, 256, 16>}, {pipeline_mode = #tpu.pipeline_mode<synchronous>, transform_indices = @transform_1, window_bounds = array<i64: 16, 16>}, {pipeline_mode = #tpu.pipeline_mode<synchronous>, transform_indices = @transform_2, window_bounds = array<i64: 9, 16>}, {pipeline_mode = #tpu.pipeline_mode<synchronous>, transform_indices = @transform_3, window_bounds = array<i64: 1, 1, 16>}, {transform_indices = @transform_4, window_bounds = array<i64: 1, 8, 16, 16>}, {transform_indices = @transform_5, window_bounds = array<i64: 1, 1, 16>}]} {
    %c0_i32 = arith.constant 0 : i32
    %0 = arith.cmpi eq, %arg1, %c0_i32 : i32
    %1 = arith.extui %0 : i1 to i32
    %c0_i32_0 = arith.constant 0 : i32
    %2 = arith.cmpi ne, %1, %c0_i32_0 : i32
    scf.if %2 {
      %cst_52 = arith.constant 0.000000e+00 : f32
      %94 = vector.broadcast %cst_52 : f32 to vector<18x18x16xf32>
      %c0_53 = arith.constant 0 : index
      %c0_54 = arith.constant 0 : index
      %c0_55 = arith.constant 0 : index
      %95 = vector.load %arg8[%c0_53, %c0_54, %c0_55] : memref<18x18x16xf32, #tpu.memory_space<vmem>>, vector<18x18x16xf32>
      tpu.vector_store %arg8[%c0_53, %c0_54, %c0_55], %94 {strides = array<i32>} : memref<18x18x16xf32, #tpu.memory_space<vmem>>, vector<18x18x16xf32>,
      %c0_56 = arith.constant 0 : index
      %c0_57 = arith.constant 0 : index
      %96 = vector.load %arg3[%c0_56, %c0_57] : memref<16x16xbf16, #tpu.memory_space<vmem>>, vector<16x16xbf16>
      %c0_58 = arith.constant 0 : index
      %c0_59 = arith.constant 0 : index
      %c0_60 = arith.constant 0 : index
      %97 = vector.load %arg2[%c0_58, %c0_59, %c0_60] : memref<1x256x16xbf16, #tpu.memory_space<vmem>>, vector<1x128x16xbf16>
      %98 = vector.shape_cast %97 : vector<1x128x16xbf16> to vector<128x16xbf16>
      %cst_61 = arith.constant dense<0.000000e+00> : vector<128x16xf32>
      %99 = tpu.matmul %98, %96, %cst_61 {dimension_numbers = #tpu.dot_dimension_numbers<[1], [0], [0], [1], [0, 0, 1, 1], [], []>} : vector<128x16xbf16>, vector<16x16xbf16>, vector<128x16xf32> -> vector<128x16xf32>
      %100 = vector.shape_cast %99 : vector<128x16xf32> to vector<8x16x16xf32>
      %c1_62 = arith.constant 1 : index
      %c1_63 = arith.constant 1 : index
      %c0_64 = arith.constant 0 : index
      %101 = vector.load %arg8[%c1_62, %c1_63, %c0_64] : memref<18x18x16xf32, #tpu.memory_space<vmem>>, vector<8x16x16xf32>
      tpu.vector_store %arg8[%c1_62, %c1_63, %c0_64], %100 {strides = array<i32>} : memref<18x18x16xf32, #tpu.memory_space<vmem>>, vector<8x16x16xf32>,
      %c0_65 = arith.constant 0 : index
      %c128 = arith.constant 128 : index
      %c0_66 = arith.constant 0 : index
      %102 = vector.load %arg2[%c0_65, %c128, %c0_66] : memref<1x256x16xbf16, #tpu.memory_space<vmem>>, vector<1x128x16xbf16>
      %103 = vector.shape_cast %102 : vector<1x128x16xbf16> to vector<128x16xbf16>
      %cst_67 = arith.constant dense<0.000000e+00> : vector<128x16xf32>
      %104 = tpu.matmul %103, %96, %cst_67 {dimension_numbers = #tpu.dot_dimension_numbers<[1], [0], [0], [1], [0, 0, 1, 1], [], []>} : vector<128x16xbf16>, vector<16x16xbf16>, vector<128x16xf32> -> vector<128x16xf32>
      %105 = vector.shape_cast %104 : vector<128x16xf32> to vector<8x16x16xf32>
      %c9 = arith.constant 9 : index
      %c1_68 = arith.constant 1 : index
      %c0_69 = arith.constant 0 : index
      %106 = vector.load %arg8[%c9, %c1_68, %c0_69] : memref<18x18x16xf32, #tpu.memory_space<vmem>>, vector<8x16x16xf32>
      tpu.vector_store %arg8[%c9, %c1_68, %c0_69], %105 {strides = array<i32>} : memref<18x18x16xf32, #tpu.memory_space<vmem>>, vector<8x16x16xf32>,
    } else {
    }
    %c8_i32 = arith.constant 8 : i32
    %3 = arith.muli %arg1, %c8_i32 : i32
    %cst = arith.constant 0.000000e+00 : f32
    %4 = vector.broadcast %cst : f32 to vector<8x16x16xf32>
    %c0_i32_1 = arith.constant 0 : i32
    %5 = arith.addi %3, %c0_i32_1 : i32
    %6 = arith.index_cast %5 : i32 to index
    %c0 = arith.constant 0 : index
    %c0_2 = arith.constant 0 : index
    %7 = vector.load %arg8[%6, %c0, %c0_2] : memref<18x18x16xf32, #tpu.memory_space<vmem>>, vector<8x16x16xf32>
    %c0_3 = arith.constant 0 : index
    %c0_4 = arith.constant 0 : index
    %8 = vector.load %arg4[%c0_3, %c0_4] : memref<9x16xf32, #tpu.memory_space<vmem>>, vector<1x16xf32>
    %9 = vector.shape_cast %8 : vector<1x16xf32> to vector<1x1x16xf32>
    %10 = vector.broadcast %9 : vector<1x1x16xf32> to vector<8x16x16xf32>
    %11 = arith.mulf %7, %10 : vector<8x16x16xf32>
    %12 = arith.addf %4, %11 : vector<8x16x16xf32>
    %c0_i32_5 = arith.constant 0 : i32
    %13 = arith.addi %3, %c0_i32_5 : i32
    %14 = arith.index_cast %13 : i32 to index
    %c1 = arith.constant 1 : index
    %c0_6 = arith.constant 0 : index
    %15 = vector.load %arg8[%14, %c1, %c0_6] : memref<18x18x16xf32, #tpu.memory_space<vmem>>, vector<8x16x16xf32>
    %c1_7 = arith.constant 1 : index
    %c0_8 = arith.constant 0 : index
    %16 = vector.load %arg4[%c1_7, %c0_8] : memref<9x16xf32, #tpu.memory_space<vmem>>, vector<1x16xf32>
    %17 = vector.shape_cast %16 : vector<1x16xf32> to vector<1x1x16xf32>
    %18 = vector.broadcast %17 : vector<1x1x16xf32> to vector<8x16x16xf32>
    %19 = arith.mulf %15, %18 : vector<8x16x16xf32>
    %20 = arith.addf %12, %19 : vector<8x16x16xf32>
    %c0_i32_9 = arith.constant 0 : i32
    %21 = arith.addi %3, %c0_i32_9 : i32
    %22 = arith.index_cast %21 : i32 to index
    %c2 = arith.constant 2 : index
    %c0_10 = arith.constant 0 : index
    %23 = vector.load %arg8[%22, %c2, %c0_10] : memref<18x18x16xf32, #tpu.memory_space<vmem>>, vector<8x16x16xf32>
    %c2_11 = arith.constant 2 : index
    %c0_12 = arith.constant 0 : index
    %24 = vector.load %arg4[%c2_11, %c0_12] : memref<9x16xf32, #tpu.memory_space<vmem>>, vector<1x16xf32>
    %25 = vector.shape_cast %24 : vector<1x16xf32> to vector<1x1x16xf32>
    %26 = vector.broadcast %25 : vector<1x1x16xf32> to vector<8x16x16xf32>
    %27 = arith.mulf %23, %26 : vector<8x16x16xf32>
    %28 = arith.addf %20, %27 : vector<8x16x16xf32>
    %c1_i32 = arith.constant 1 : i32
    %29 = arith.addi %3, %c1_i32 : i32
    %30 = arith.index_cast %29 : i32 to index
    %c0_13 = arith.constant 0 : index
    %c0_14 = arith.constant 0 : index
    %31 = vector.load %arg8[%30, %c0_13, %c0_14] : memref<18x18x16xf32, #tpu.memory_space<vmem>>, vector<8x16x16xf32>
    %c3 = arith.constant 3 : index
    %c0_15 = arith.constant 0 : index
    %32 = vector.load %arg4[%c3, %c0_15] : memref<9x16xf32, #tpu.memory_space<vmem>>, vector<1x16xf32>
    %33 = vector.shape_cast %32 : vector<1x16xf32> to vector<1x1x16xf32>
    %34 = vector.broadcast %33 : vector<1x1x16xf32> to vector<8x16x16xf32>
    %35 = arith.mulf %31, %34 : vector<8x16x16xf32>
    %36 = arith.addf %28, %35 : vector<8x16x16xf32>
    %c1_i32_16 = arith.constant 1 : i32
    %37 = arith.addi %3, %c1_i32_16 : i32
    %38 = arith.index_cast %37 : i32 to index
    %c1_17 = arith.constant 1 : index
    %c0_18 = arith.constant 0 : index
    %39 = vector.load %arg8[%38, %c1_17, %c0_18] : memref<18x18x16xf32, #tpu.memory_space<vmem>>, vector<8x16x16xf32>
    %c4 = arith.constant 4 : index
    %c0_19 = arith.constant 0 : index
    %40 = vector.load %arg4[%c4, %c0_19] : memref<9x16xf32, #tpu.memory_space<vmem>>, vector<1x16xf32>
    %41 = vector.shape_cast %40 : vector<1x16xf32> to vector<1x1x16xf32>
    %42 = vector.broadcast %41 : vector<1x1x16xf32> to vector<8x16x16xf32>
    %43 = arith.mulf %39, %42 : vector<8x16x16xf32>
    %44 = arith.addf %36, %43 : vector<8x16x16xf32>
    %c1_i32_20 = arith.constant 1 : i32
    %45 = arith.addi %3, %c1_i32_20 : i32
    %46 = arith.index_cast %45 : i32 to index
    %c2_21 = arith.constant 2 : index
    %c0_22 = arith.constant 0 : index
    %47 = vector.load %arg8[%46, %c2_21, %c0_22] : memref<18x18x16xf32, #tpu.memory_space<vmem>>, vector<8x16x16xf32>
    %c5 = arith.constant 5 : index
    %c0_23 = arith.constant 0 : index
    %48 = vector.load %arg4[%c5, %c0_23] : memref<9x16xf32, #tpu.memory_space<vmem>>, vector<1x16xf32>
    %49 = vector.shape_cast %48 : vector<1x16xf32> to vector<1x1x16xf32>
    %50 = vector.broadcast %49 : vector<1x1x16xf32> to vector<8x16x16xf32>
    %51 = arith.mulf %47, %50 : vector<8x16x16xf32>
    %52 = arith.addf %44, %51 : vector<8x16x16xf32>
    %c2_i32 = arith.constant 2 : i32
    %53 = arith.addi %3, %c2_i32 : i32
    %54 = arith.index_cast %53 : i32 to index
    %c0_24 = arith.constant 0 : index
    %c0_25 = arith.constant 0 : index
    %55 = vector.load %arg8[%54, %c0_24, %c0_25] : memref<18x18x16xf32, #tpu.memory_space<vmem>>, vector<8x16x16xf32>
    %c6 = arith.constant 6 : index
    %c0_26 = arith.constant 0 : index
    %56 = vector.load %arg4[%c6, %c0_26] : memref<9x16xf32, #tpu.memory_space<vmem>>, vector<1x16xf32>
    %57 = vector.shape_cast %56 : vector<1x16xf32> to vector<1x1x16xf32>
    %58 = vector.broadcast %57 : vector<1x1x16xf32> to vector<8x16x16xf32>
    %59 = arith.mulf %55, %58 : vector<8x16x16xf32>
    %60 = arith.addf %52, %59 : vector<8x16x16xf32>
    %c2_i32_27 = arith.constant 2 : i32
    %61 = arith.addi %3, %c2_i32_27 : i32
    %62 = arith.index_cast %61 : i32 to index
    %c1_28 = arith.constant 1 : index
    %c0_29 = arith.constant 0 : index
    %63 = vector.load %arg8[%62, %c1_28, %c0_29] : memref<18x18x16xf32, #tpu.memory_space<vmem>>, vector<8x16x16xf32>
    %c7 = arith.constant 7 : index
    %c0_30 = arith.constant 0 : index
    %64 = vector.load %arg4[%c7, %c0_30] : memref<9x16xf32, #tpu.memory_space<vmem>>, vector<1x16xf32>
    %65 = vector.shape_cast %64 : vector<1x16xf32> to vector<1x1x16xf32>
    %66 = vector.broadcast %65 : vector<1x1x16xf32> to vector<8x16x16xf32>
    %67 = arith.mulf %63, %66 : vector<8x16x16xf32>
    %68 = arith.addf %60, %67 : vector<8x16x16xf32>
    %c2_i32_31 = arith.constant 2 : i32
    %69 = arith.addi %3, %c2_i32_31 : i32
    %70 = arith.index_cast %69 : i32 to index
    %c2_32 = arith.constant 2 : index
    %c0_33 = arith.constant 0 : index
    %71 = vector.load %arg8[%70, %c2_32, %c0_33] : memref<18x18x16xf32, #tpu.memory_space<vmem>>, vector<8x16x16xf32>
    %c8 = arith.constant 8 : index
    %c0_34 = arith.constant 0 : index
    %72 = vector.load %arg4[%c8, %c0_34] : memref<9x16xf32, #tpu.memory_space<vmem>>, vector<1x16xf32>
    %73 = vector.shape_cast %72 : vector<1x16xf32> to vector<1x1x16xf32>
    %74 = vector.broadcast %73 : vector<1x1x16xf32> to vector<8x16x16xf32>
    %75 = arith.mulf %71, %74 : vector<8x16x16xf32>
    %76 = arith.addf %68, %75 : vector<8x16x16xf32>
    %c0_35 = arith.constant 0 : index
    %c0_36 = arith.constant 0 : index
    %c0_37 = arith.constant 0 : index
    %77 = vector.load %arg5[%c0_35, %c0_36, %c0_37] : memref<1x1x16xf32, #tpu.memory_space<vmem>>, vector<1x1x16xf32>
    %78 = vector.broadcast %77 : vector<1x1x16xf32> to vector<8x16x16xf32>
    %79 = arith.addf %76, %78 : vector<8x16x16xf32>
    %cst_38 = arith.constant 0.000000e+00 : f32
    %80 = vector.broadcast %cst_38 : f32 to vector<8x16x16xf32>
    %81 = arith.maximumf %79, %80 : vector<8x16x16xf32>
    %82 = arith.truncf %81 : vector<8x16x16xf32> to vector<8x16x16xbf16>
    %c0_39 = arith.constant 0 : index
    %c0_40 = arith.constant 0 : index
    %c0_41 = arith.constant 0 : index
    %c0_42 = arith.constant 0 : index
    %83 = vector.load %arg6[%c0_39, %c0_40, %c0_41, %c0_42] : memref<1x8x16x16xbf16, #tpu.memory_space<vmem>>, vector<1x8x16x16xbf16>
    %84 = vector.shape_cast %83 : vector<1x8x16x16xbf16> to vector<8x16x16xbf16>
    %85 = vector.shape_cast %82 : vector<8x16x16xbf16> to vector<1x8x16x16xbf16>
    tpu.vector_store %arg6[%c0_39, %c0_40, %c0_41, %c0_42], %85 {strides = array<i32>} : memref<1x8x16x16xbf16, #tpu.memory_space<vmem>>, vector<1x8x16x16xbf16>,
    %c0_i32_43 = arith.constant 0 : i32
    %86 = arith.cmpi eq, %arg1, %c0_i32_43 : i32
    %87 = arith.extui %86 : i1 to i32
    %c0_i32_44 = arith.constant 0 : i32
    %88 = arith.cmpi ne, %87, %c0_i32_44 : i32
    scf.if %88 {
      %cst_52 = arith.constant 0.000000e+00 : f32
      %94 = vector.broadcast %cst_52 : f32 to vector<1x1x16xf32>
      %c0_53 = arith.constant 0 : index
      %c0_54 = arith.constant 0 : index
      %c0_55 = arith.constant 0 : index
      %95 = vector.load %arg7[%c0_53, %c0_54, %c0_55] : memref<1x1x16xf32, #tpu.memory_space<vmem>>, vector<1x1x16xf32>
      tpu.vector_store %arg7[%c0_53, %c0_54, %c0_55], %94 {strides = array<i32>} : memref<1x1x16xf32, #tpu.memory_space<vmem>>, vector<1x1x16xf32>,
    } else {
    }
    %c0_45 = arith.constant 0 : index
    %c0_46 = arith.constant 0 : index
    %c0_47 = arith.constant 0 : index
    %89 = vector.load %arg7[%c0_45, %c0_46, %c0_47] : memref<1x1x16xf32, #tpu.memory_space<vmem>>, vector<1x1x16xf32>
    %cst_48 = arith.constant dense<0.000000e+00> : vector<16xf32>
    %90 = vector.multi_reduction <add>, %81, %cst_48 [0, 1] : vector<8x16x16xf32> to vector<16xf32>
    %91 = vector.shape_cast %90 : vector<16xf32> to vector<1x1x16xf32>
    %92 = arith.addf %89, %91 : vector<1x1x16xf32>
    %c0_49 = arith.constant 0 : index
    %c0_50 = arith.constant 0 : index
    %c0_51 = arith.constant 0 : index
    %93 = vector.load %arg7[%c0_49, %c0_50, %c0_51] : memref<1x1x16xf32, #tpu.memory_space<vmem>>, vector<1x1x16xf32>
    tpu.vector_store %arg7[%c0_49, %c0_50, %c0_51], %92 {strides = array<i32>} : memref<1x1x16xf32, #tpu.memory_space<vmem>>, vector<1x1x16xf32>,
    return
  }
  func.func @transform_0(%arg0: i32, %arg1: i32) -> (i32, i32, i32) {
    %c0_i32 = arith.constant 0 : i32
    %c0_i32_0 = arith.constant 0 : i32
    %c0_i32_1 = arith.constant 0 : i32
    return %arg0, %c0_i32, %c0_i32_0 : i32, i32, i32
  }
  func.func @transform_1(%arg0: i32, %arg1: i32) -> (i32, i32) {
    %c0_i32 = arith.constant 0 : i32
    %c0_i32_0 = arith.constant 0 : i32
    %c0_i32_1 = arith.constant 0 : i32
    return %c0_i32, %c0_i32_0 : i32, i32
  }
  func.func @transform_2(%arg0: i32, %arg1: i32) -> (i32, i32) {
    %c0_i32 = arith.constant 0 : i32
    %c0_i32_0 = arith.constant 0 : i32
    %c0_i32_1 = arith.constant 0 : i32
    return %c0_i32, %c0_i32_0 : i32, i32
  }
  func.func @transform_3(%arg0: i32, %arg1: i32) -> (i32, i32, i32) {
    %c0_i32 = arith.constant 0 : i32
    %c0_i32_0 = arith.constant 0 : i32
    %c0_i32_1 = arith.constant 0 : i32
    %c0_i32_2 = arith.constant 0 : i32
    return %c0_i32, %c0_i32_0, %c0_i32_1 : i32, i32, i32
  }
  func.func @transform_4(%arg0: i32, %arg1: i32) -> (i32, i32, i32, i32) {
    %c0_i32 = arith.constant 0 : i32
    %c0_i32_0 = arith.constant 0 : i32
    %c0_i32_1 = arith.constant 0 : i32
    return %arg0, %arg1, %c0_i32, %c0_i32_0 : i32, i32, i32, i32
  }
  func.func @transform_5(%arg0: i32, %arg1: i32) -> (i32, i32, i32) {
    %c0_i32 = arith.constant 0 : i32
    %c0_i32_0 = arith.constant 0 : i32
    %c0_i32_1 = arith.constant 0 : i32
    return %arg0, %c0_i32, %c0_i32_0 : i32, i32, i32
  }
}

module attributes {stable_mosaic.version = 11 : i64} {
  func.func @_gate_mlp_kernel(%arg0: memref<8x16xf32, #tpu.memory_space<vmem>>, %arg1: memref<16x128xf32, #tpu.memory_space<vmem>>, %arg2: memref<1x128xf32, #tpu.memory_space<vmem>>, %arg3: memref<128x16xf32, #tpu.memory_space<vmem>>, %arg4: memref<1x16xf32, #tpu.memory_space<vmem>>, %arg5: memref<8x16xf32, #tpu.memory_space<vmem>>) attributes {dimension_semantics = [], scalar_prefetch = 0 : i64, scratch_operands = 0 : i64, tpu.core_type = #tpu.core_type<tc>} {
    %c0 = arith.constant 0 : index
    %c0_0 = arith.constant 0 : index
    %0 = vector.load %arg0[%c0, %c0_0] : memref<8x16xf32, #tpu.memory_space<vmem>>, vector<8x16xf32>
    %c0_1 = arith.constant 0 : index
    %c0_2 = arith.constant 0 : index
    %1 = vector.load %arg1[%c0_1, %c0_2] : memref<16x128xf32, #tpu.memory_space<vmem>>, vector<16x128xf32>
    %cst = arith.constant dense<0.000000e+00> : vector<8x128xf32>
    %2 = tpu.matmul %0, %1, %cst {dimension_numbers = #tpu.dot_dimension_numbers<[1], [0], [0], [1], [0, 0, 1, 1], [], []>} : vector<8x16xf32>, vector<16x128xf32>, vector<8x128xf32> -> vector<8x128xf32>
    %c0_3 = arith.constant 0 : index
    %c0_4 = arith.constant 0 : index
    %3 = vector.load %arg2[%c0_3, %c0_4] : memref<1x128xf32, #tpu.memory_space<vmem>>, vector<1x128xf32>
    %4 = vector.broadcast %3 : vector<1x128xf32> to vector<8x128xf32>
    %5 = arith.addf %2, %4 : vector<8x128xf32>
    %cst_5 = arith.constant 0.000000e+00 : f32
    %6 = vector.broadcast %cst_5 : f32 to vector<8x128xf32>
    %7 = arith.maximumf %5, %6 : vector<8x128xf32>
    %c0_6 = arith.constant 0 : index
    %c0_7 = arith.constant 0 : index
    %8 = vector.load %arg3[%c0_6, %c0_7] : memref<128x16xf32, #tpu.memory_space<vmem>>, vector<128x16xf32>
    %cst_8 = arith.constant dense<0.000000e+00> : vector<8x16xf32>
    %9 = tpu.matmul %7, %8, %cst_8 {dimension_numbers = #tpu.dot_dimension_numbers<[1], [0], [0], [1], [0, 0, 1, 1], [], []>} : vector<8x128xf32>, vector<128x16xf32>, vector<8x16xf32> -> vector<8x16xf32>
    %c0_9 = arith.constant 0 : index
    %c0_10 = arith.constant 0 : index
    %10 = vector.load %arg4[%c0_9, %c0_10] : memref<1x16xf32, #tpu.memory_space<vmem>>, vector<1x16xf32>
    %11 = vector.broadcast %10 : vector<1x16xf32> to vector<8x16xf32>
    %12 = arith.addf %9, %11 : vector<8x16xf32>
    %cst_11 = arith.constant 0.000000e+00 : f32
    %13 = vector.broadcast %cst_11 : f32 to vector<8x16xf32>
    %14 = arith.subf %13, %12 : vector<8x16xf32>
    %15 = math.exp %14 : vector<8x16xf32>
    %cst_12 = arith.constant 1.000000e+00 : f32
    %16 = vector.broadcast %cst_12 : f32 to vector<8x16xf32>
    %17 = arith.addf %16, %15 : vector<8x16xf32>
    %cst_13 = arith.constant 1.000000e+00 : f32
    %18 = vector.broadcast %cst_13 : f32 to vector<8x16xf32>
    %19 = arith.divf %18, %17 : vector<8x16xf32>
    %c0_14 = arith.constant 0 : index
    %c0_15 = arith.constant 0 : index
    %20 = vector.load %arg5[%c0_14, %c0_15] : memref<8x16xf32, #tpu.memory_space<vmem>>, vector<8x16xf32>
    tpu.vector_store %arg5[%c0_14, %c0_15], %19 {strides = array<i32>} : memref<8x16xf32, #tpu.memory_space<vmem>>, vector<8x16xf32>,
    return
  }
}

module attributes {stable_mosaic.version = 11 : i64} {
  func.func @_gate_acc_kernel(%arg0: i32, %arg1: i32, %arg2: memref<1x4x16xf32, #tpu.memory_space<vmem>>, %arg3: memref<1x8x16x16xbf16, #tpu.memory_space<vmem>>, %arg4: memref<1x8x16x16xbf16, #tpu.memory_space<vmem>>, %arg5: memref<1x8x16x16xbf16, #tpu.memory_space<vmem>>, %arg6: memref<1x8x16x16xbf16, #tpu.memory_space<vmem>>, %arg7: memref<1x8x16x16xbf16, #tpu.memory_space<vmem>>) attributes {dimension_semantics = [#tpu.dimension_semantics<parallel>, #tpu.dimension_semantics<parallel>], iteration_bounds = array<i64: 2, 2>, scalar_prefetch = 0 : i64, scratch_operands = 0 : i64, tpu.core_type = #tpu.core_type<tc>, window_params = [{transform_indices = @transform_0, window_bounds = array<i64: 1, 4, 16>}, {transform_indices = @transform_1, window_bounds = array<i64: 1, 8, 16, 16>}, {transform_indices = @transform_2, window_bounds = array<i64: 1, 8, 16, 16>}, {transform_indices = @transform_3, window_bounds = array<i64: 1, 8, 16, 16>}, {transform_indices = @transform_4, window_bounds = array<i64: 1, 8, 16, 16>}, {transform_indices = @transform_5, window_bounds = array<i64: 1, 8, 16, 16>}]} {
    %c0 = arith.constant 0 : index
    %c0_0 = arith.constant 0 : index
    %c0_1 = arith.constant 0 : index
    %0 = vector.load %arg2[%c0, %c0_0, %c0_1] : memref<1x4x16xf32, #tpu.memory_space<vmem>>, vector<1x1x16xf32>
    %1 = vector.shape_cast %0 : vector<1x1x16xf32> to vector<1x16xf32>
    %c0_2 = arith.constant 0 : index
    %c0_3 = arith.constant 0 : index
    %c0_4 = arith.constant 0 : index
    %c0_5 = arith.constant 0 : index
    %2 = vector.load %arg3[%c0_2, %c0_3, %c0_4, %c0_5] : memref<1x8x16x16xbf16, #tpu.memory_space<vmem>>, vector<1x8x16x16xbf16>
    %3 = vector.shape_cast %2 : vector<1x8x16x16xbf16> to vector<8x16x16xbf16>
    %4 = arith.extf %3 : vector<8x16x16xbf16> to vector<8x16x16xf32>
    %5 = vector.shape_cast %1 : vector<1x16xf32> to vector<1x1x16xf32>
    %6 = vector.broadcast %5 : vector<1x1x16xf32> to vector<8x16x16xf32>
    %7 = arith.mulf %4, %6 : vector<8x16x16xf32>
    %c0_6 = arith.constant 0 : index
    %c1 = arith.constant 1 : index
    %c0_7 = arith.constant 0 : index
    %8 = vector.load %arg2[%c0_6, %c1, %c0_7] : memref<1x4x16xf32, #tpu.memory_space<vmem>>, vector<1x1x16xf32>
    %9 = vector.shape_cast %8 : vector<1x1x16xf32> to vector<1x16xf32>
    %c0_8 = arith.constant 0 : index
    %c0_9 = arith.constant 0 : index
    %c0_10 = arith.constant 0 : index
    %c0_11 = arith.constant 0 : index
    %10 = vector.load %arg4[%c0_8, %c0_9, %c0_10, %c0_11] : memref<1x8x16x16xbf16, #tpu.memory_space<vmem>>, vector<1x8x16x16xbf16>
    %11 = vector.shape_cast %10 : vector<1x8x16x16xbf16> to vector<8x16x16xbf16>
    %12 = arith.extf %11 : vector<8x16x16xbf16> to vector<8x16x16xf32>
    %13 = vector.shape_cast %9 : vector<1x16xf32> to vector<1x1x16xf32>
    %14 = vector.broadcast %13 : vector<1x1x16xf32> to vector<8x16x16xf32>
    %15 = arith.mulf %12, %14 : vector<8x16x16xf32>
    %16 = arith.addf %7, %15 : vector<8x16x16xf32>
    %c0_12 = arith.constant 0 : index
    %c2 = arith.constant 2 : index
    %c0_13 = arith.constant 0 : index
    %17 = vector.load %arg2[%c0_12, %c2, %c0_13] : memref<1x4x16xf32, #tpu.memory_space<vmem>>, vector<1x1x16xf32>
    %18 = vector.shape_cast %17 : vector<1x1x16xf32> to vector<1x16xf32>
    %c0_14 = arith.constant 0 : index
    %c0_15 = arith.constant 0 : index
    %c0_16 = arith.constant 0 : index
    %c0_17 = arith.constant 0 : index
    %19 = vector.load %arg5[%c0_14, %c0_15, %c0_16, %c0_17] : memref<1x8x16x16xbf16, #tpu.memory_space<vmem>>, vector<1x8x16x16xbf16>
    %20 = vector.shape_cast %19 : vector<1x8x16x16xbf16> to vector<8x16x16xbf16>
    %21 = arith.extf %20 : vector<8x16x16xbf16> to vector<8x16x16xf32>
    %22 = vector.shape_cast %18 : vector<1x16xf32> to vector<1x1x16xf32>
    %23 = vector.broadcast %22 : vector<1x1x16xf32> to vector<8x16x16xf32>
    %24 = arith.mulf %21, %23 : vector<8x16x16xf32>
    %25 = arith.addf %16, %24 : vector<8x16x16xf32>
    %c0_18 = arith.constant 0 : index
    %c3 = arith.constant 3 : index
    %c0_19 = arith.constant 0 : index
    %26 = vector.load %arg2[%c0_18, %c3, %c0_19] : memref<1x4x16xf32, #tpu.memory_space<vmem>>, vector<1x1x16xf32>
    %27 = vector.shape_cast %26 : vector<1x1x16xf32> to vector<1x16xf32>
    %c0_20 = arith.constant 0 : index
    %c0_21 = arith.constant 0 : index
    %c0_22 = arith.constant 0 : index
    %c0_23 = arith.constant 0 : index
    %28 = vector.load %arg6[%c0_20, %c0_21, %c0_22, %c0_23] : memref<1x8x16x16xbf16, #tpu.memory_space<vmem>>, vector<1x8x16x16xbf16>
    %29 = vector.shape_cast %28 : vector<1x8x16x16xbf16> to vector<8x16x16xbf16>
    %30 = arith.extf %29 : vector<8x16x16xbf16> to vector<8x16x16xf32>
    %31 = vector.shape_cast %27 : vector<1x16xf32> to vector<1x1x16xf32>
    %32 = vector.broadcast %31 : vector<1x1x16xf32> to vector<8x16x16xf32>
    %33 = arith.mulf %30, %32 : vector<8x16x16xf32>
    %34 = arith.addf %25, %33 : vector<8x16x16xf32>
    %35 = arith.truncf %34 : vector<8x16x16xf32> to vector<8x16x16xbf16>
    %c0_24 = arith.constant 0 : index
    %c0_25 = arith.constant 0 : index
    %c0_26 = arith.constant 0 : index
    %c0_27 = arith.constant 0 : index
    %36 = vector.load %arg7[%c0_24, %c0_25, %c0_26, %c0_27] : memref<1x8x16x16xbf16, #tpu.memory_space<vmem>>, vector<1x8x16x16xbf16>
    %37 = vector.shape_cast %36 : vector<1x8x16x16xbf16> to vector<8x16x16xbf16>
    %38 = vector.shape_cast %35 : vector<8x16x16xbf16> to vector<1x8x16x16xbf16>
    tpu.vector_store %arg7[%c0_24, %c0_25, %c0_26, %c0_27], %38 {strides = array<i32>} : memref<1x8x16x16xbf16, #tpu.memory_space<vmem>>, vector<1x8x16x16xbf16>,
    return
  }
  func.func @transform_0(%arg0: i32, %arg1: i32) -> (i32, i32, i32) {
    %c0_i32 = arith.constant 0 : i32
    %c0_i32_0 = arith.constant 0 : i32
    %c0_i32_1 = arith.constant 0 : i32
    return %arg0, %c0_i32, %c0_i32_0 : i32, i32, i32
  }
  func.func @transform_1(%arg0: i32, %arg1: i32) -> (i32, i32, i32, i32) {
    %c0_i32 = arith.constant 0 : i32
    %c0_i32_0 = arith.constant 0 : i32
    %c0_i32_1 = arith.constant 0 : i32
    return %arg0, %arg1, %c0_i32, %c0_i32_0 : i32, i32, i32, i32
  }
  func.func @transform_2(%arg0: i32, %arg1: i32) -> (i32, i32, i32, i32) {
    %c0_i32 = arith.constant 0 : i32
    %c0_i32_0 = arith.constant 0 : i32
    %c0_i32_1 = arith.constant 0 : i32
    return %arg0, %arg1, %c0_i32, %c0_i32_0 : i32, i32, i32, i32
  }
  func.func @transform_3(%arg0: i32, %arg1: i32) -> (i32, i32, i32, i32) {
    %c0_i32 = arith.constant 0 : i32
    %c0_i32_0 = arith.constant 0 : i32
    %c0_i32_1 = arith.constant 0 : i32
    return %arg0, %arg1, %c0_i32, %c0_i32_0 : i32, i32, i32, i32
  }
  func.func @transform_4(%arg0: i32, %arg1: i32) -> (i32, i32, i32, i32) {
    %c0_i32 = arith.constant 0 : i32
    %c0_i32_0 = arith.constant 0 : i32
    %c0_i32_1 = arith.constant 0 : i32
    return %arg0, %arg1, %c0_i32, %c0_i32_0 : i32, i32, i32, i32
  }
  func.func @transform_5(%arg0: i32, %arg1: i32) -> (i32, i32, i32, i32) {
    %c0_i32 = arith.constant 0 : i32
    %c0_i32_0 = arith.constant 0 : i32
    %c0_i32_1 = arith.constant 0 : i32
    return %arg0, %arg1, %c0_i32, %c0_i32_0 : i32, i32, i32, i32
  }
}

module attributes {stable_mosaic.version = 11 : i64} {
  func.func @_final_ds_kernel(%arg0: i32, %arg1: memref<512x16xbf16, #tpu.memory_space<vmem>>, %arg2: memref<16x64xbf16, #tpu.memory_space<vmem>>, %arg3: memref<1x64xf32, #tpu.memory_space<vmem>>, %arg4: memref<1x64xf32, #tpu.memory_space<vmem>>, %arg5: memref<512x32xbf16, #tpu.memory_space<vmem>>, %arg6: memref<32x64xbf16, #tpu.memory_space<vmem>>, %arg7: memref<1x64xf32, #tpu.memory_space<vmem>>, %arg8: memref<1x64xf32, #tpu.memory_space<vmem>>, %arg9: memref<512x64xf32, #tpu.memory_space<vmem>>) attributes {dimension_semantics = [#tpu.dimension_semantics<parallel>], iteration_bounds = array<i64: 1>, scalar_prefetch = 0 : i64, scratch_operands = 0 : i64, tpu.core_type = #tpu.core_type<tc>, window_params = [{transform_indices = @transform_0, window_bounds = array<i64: 512, 16>}, {pipeline_mode = #tpu.pipeline_mode<synchronous>, transform_indices = @transform_1, window_bounds = array<i64: 16, 64>}, {pipeline_mode = #tpu.pipeline_mode<synchronous>, transform_indices = @transform_2, window_bounds = array<i64: 1, 64>}, {pipeline_mode = #tpu.pipeline_mode<synchronous>, transform_indices = @transform_3, window_bounds = array<i64: 1, 64>}, {transform_indices = @transform_4, window_bounds = array<i64: 512, 32>}, {pipeline_mode = #tpu.pipeline_mode<synchronous>, transform_indices = @transform_5, window_bounds = array<i64: 32, 64>}, {pipeline_mode = #tpu.pipeline_mode<synchronous>, transform_indices = @transform_6, window_bounds = array<i64: 1, 64>}, {pipeline_mode = #tpu.pipeline_mode<synchronous>, transform_indices = @transform_7, window_bounds = array<i64: 1, 64>}, {transform_indices = @transform_8, window_bounds = array<i64: 512, 64>}]} {
    %c0 = arith.constant 0 : index
    %c0_0 = arith.constant 0 : index
    %0 = vector.load %arg1[%c0, %c0_0] : memref<512x16xbf16, #tpu.memory_space<vmem>>, vector<512x16xbf16>
    %c0_1 = arith.constant 0 : index
    %c0_2 = arith.constant 0 : index
    %1 = vector.load %arg2[%c0_1, %c0_2] : memref<16x64xbf16, #tpu.memory_space<vmem>>, vector<16x64xbf16>
    %cst = arith.constant dense<0.000000e+00> : vector<512x64xf32>
    %2 = tpu.matmul %0, %1, %cst {dimension_numbers = #tpu.dot_dimension_numbers<[1], [0], [0], [1], [0, 0, 1, 1], [], []>} : vector<512x16xbf16>, vector<16x64xbf16>, vector<512x64xf32> -> vector<512x64xf32>
    %c0_3 = arith.constant 0 : index
    %c0_4 = arith.constant 0 : index
    %3 = vector.load %arg3[%c0_3, %c0_4] : memref<1x64xf32, #tpu.memory_space<vmem>>, vector<1x64xf32>
    %4 = vector.broadcast %3 : vector<1x64xf32> to vector<512x64xf32>
    %5 = arith.mulf %2, %4 : vector<512x64xf32>
    %c0_5 = arith.constant 0 : index
    %c0_6 = arith.constant 0 : index
    %6 = vector.load %arg4[%c0_5, %c0_6] : memref<1x64xf32, #tpu.memory_space<vmem>>, vector<1x64xf32>
    %7 = vector.broadcast %6 : vector<1x64xf32> to vector<512x64xf32>
    %8 = arith.addf %5, %7 : vector<512x64xf32>
    %c0_7 = arith.constant 0 : index
    %c0_8 = arith.constant 0 : index
    %9 = vector.load %arg5[%c0_7, %c0_8] : memref<512x32xbf16, #tpu.memory_space<vmem>>, vector<512x32xbf16>
    %c0_9 = arith.constant 0 : index
    %c0_10 = arith.constant 0 : index
    %10 = vector.load %arg6[%c0_9, %c0_10] : memref<32x64xbf16, #tpu.memory_space<vmem>>, vector<32x64xbf16>
    %cst_11 = arith.constant dense<0.000000e+00> : vector<512x64xf32>
    %11 = tpu.matmul %9, %10, %cst_11 {dimension_numbers = #tpu.dot_dimension_numbers<[1], [0], [0], [1], [0, 0, 1, 1], [], []>} : vector<512x32xbf16>, vector<32x64xbf16>, vector<512x64xf32> -> vector<512x64xf32>
    %c0_12 = arith.constant 0 : index
    %c0_13 = arith.constant 0 : index
    %12 = vector.load %arg7[%c0_12, %c0_13] : memref<1x64xf32, #tpu.memory_space<vmem>>, vector<1x64xf32>
    %13 = vector.broadcast %12 : vector<1x64xf32> to vector<512x64xf32>
    %14 = arith.mulf %11, %13 : vector<512x64xf32>
    %c0_14 = arith.constant 0 : index
    %c0_15 = arith.constant 0 : index
    %15 = vector.load %arg8[%c0_14, %c0_15] : memref<1x64xf32, #tpu.memory_space<vmem>>, vector<1x64xf32>
    %16 = vector.broadcast %15 : vector<1x64xf32> to vector<512x64xf32>
    %17 = arith.addf %14, %16 : vector<512x64xf32>
    %18 = arith.addf %8, %17 : vector<512x64xf32>
    %cst_16 = arith.constant 0.000000e+00 : f32
    %19 = vector.broadcast %cst_16 : f32 to vector<512x64xf32>
    %20 = arith.maximumf %18, %19 : vector<512x64xf32>
    %c0_17 = arith.constant 0 : index
    %c0_18 = arith.constant 0 : index
    %21 = vector.load %arg9[%c0_17, %c0_18] : memref<512x64xf32, #tpu.memory_space<vmem>>, vector<512x64xf32>
    tpu.vector_store %arg9[%c0_17, %c0_18], %20 {strides = array<i32>} : memref<512x64xf32, #tpu.memory_space<vmem>>, vector<512x64xf32>,
    return
  }
  func.func @transform_0(%arg0: i32) -> (i32, i32) {
    %c0_i32 = arith.constant 0 : i32
    %c0_i32_0 = arith.constant 0 : i32
    return %arg0, %c0_i32 : i32, i32
  }
  func.func @transform_1(%arg0: i32) -> (i32, i32) {
    %c0_i32 = arith.constant 0 : i32
    %c0_i32_0 = arith.constant 0 : i32
    %c0_i32_1 = arith.constant 0 : i32
    return %c0_i32, %c0_i32_0 : i32, i32
  }
  func.func @transform_2(%arg0: i32) -> (i32, i32) {
    %c0_i32 = arith.constant 0 : i32
    %c0_i32_0 = arith.constant 0 : i32
    %c0_i32_1 = arith.constant 0 : i32
    return %c0_i32, %c0_i32_0 : i32, i32
  }
  func.func @transform_3(%arg0: i32) -> (i32, i32) {
    %c0_i32 = arith.constant 0 : i32
    %c0_i32_0 = arith.constant 0 : i32
    %c0_i32_1 = arith.constant 0 : i32
    return %c0_i32, %c0_i32_0 : i32, i32
  }
  func.func @transform_4(%arg0: i32) -> (i32, i32) {
    %c0_i32 = arith.constant 0 : i32
    %c0_i32_0 = arith.constant 0 : i32
    return %arg0, %c0_i32 : i32, i32
  }
  func.func @transform_5(%arg0: i32) -> (i32, i32) {
    %c0_i32 = arith.constant 0 : i32
    %c0_i32_0 = arith.constant 0 : i32
    %c0_i32_1 = arith.constant 0 : i32
    return %c0_i32, %c0_i32_0 : i32, i32
  }
  func.func @transform_6(%arg0: i32) -> (i32, i32) {
    %c0_i32 = arith.constant 0 : i32
    %c0_i32_0 = arith.constant 0 : i32
    %c0_i32_1 = arith.constant 0 : i32
    return %c0_i32, %c0_i32_0 : i32, i32
  }
  func.func @transform_7(%arg0: i32) -> (i32, i32) {
    %c0_i32 = arith.constant 0 : i32
    %c0_i32_0 = arith.constant 0 : i32
    %c0_i32_1 = arith.constant 0 : i32
    return %c0_i32, %c0_i32_0 : i32, i32
  }
  func.func @transform_8(%arg0: i32) -> (i32, i32) {
    %c0_i32 = arith.constant 0 : i32
    %c0_i32_0 = arith.constant 0 : i32
    return %arg0, %c0_i32 : i32, i32
  }
}

</mosaic_0001>

<llo_original>
// kernel: osblock_forward.14
$region0: #{osblock_forward.14}
  #allocation0 [shape = 'u32[]', space=smem, size = 0x4, offset = 0x4, fixed_abs, tag = 'smem constant byte address 0x4 - core index']
  #allocation1 [shape = 'u32[144,128]{1,0:T(1,128)}', space=vmem, size = 0x12000, scoped, tag = 'internal scratch']
  %s0 = inlined_call_operand.vmem [shape: bf16[512,32], index: 0, kind: input, shape index: {}]
  %s1 = inlined_call_operand.vmem [shape: bf16[32,16], index: 1, kind: input, shape index: {}]
  %s2 = inlined_call_operand.vmem [shape: f32[1,16], index: 2, kind: input, shape index: {}]
  %s3 = inlined_call_operand.vmem [shape: f32[1,16], index: 3, kind: input, shape index: {}]
  %s4 = inlined_call_operand.vmem [shape: bf16[512,16], index: 4, kind: output, shape index: {}]
  %s5 = sld [smem:[#allocation0]]
  $region26: #{osblock_forward.14} parent=0
    _
  %s7 = ssub.s32 1, %s5
  %s8 = scalar_select 0, %s7, %s5
  // Predicated region
  $region2: #{osblock_forward.14} parent=0 // pred_check
    _
  $region3: #{osblock_forward.14} parent=0 // pred_check_branch
    %10 = sbr.rel (0) target = $region5
  $region4: #{osblock_forward.14} parent=0 // pred_region
    _
  $region5: #{osblock_forward.14} parent=0 // pred_fallthru
    _
  // Predicated region
  $region6: #{osblock_forward.14} parent=0 // pred_check
    _
  $region7: #{osblock_forward.14} parent=0 // pred_check_branch
    %12 = sbr.rel (0) target = $region9
  $region8: #{osblock_forward.14} parent=0 // pred_region
    _
  $region9: #{osblock_forward.14} parent=0 // pred_fallthru
    _
  // Predicated region
  $region10: #{osblock_forward.14} parent=0 // pred_check
    _
  $region11: #{osblock_forward.14} parent=0 // pred_check_branch
    %14 = sbr.rel (0) target = $region13
  $region12: #{osblock_forward.14} parent=0 // pred_region
    _
  $region13: #{osblock_forward.14} parent=0 // pred_fallthru
    _
  // Predicated region
  $region14: #{osblock_forward.14} parent=0 // pred_check
    _
  $region15: #{osblock_forward.14} parent=0 // pred_check_branch
    %16 = sbr.rel (0) target = $region17
  $region16: #{osblock_forward.14} parent=0 // pred_region
    _
  $region17: #{osblock_forward.14} parent=0 // pred_fallthru
    _
  %v18 = vld [vmem:[%s0] sm:$0xf]
  %v19 = vld [vmem:[%s0 + $0x4] sm:$0xf]
  %v20 = vld [vmem:[%s0 + $0x8] sm:$0xf]
  %v21 = vld [vmem:[%s0 + $0xc] sm:$0xf]
  %v22 = vld [vmem:[%s0 + $0x10] sm:$0xf]
  %v23 = vld [vmem:[%s0 + $0x14] sm:$0xf]
  %v24 = vld [vmem:[%s0 + $0x18] sm:$0xf]
  %v25 = vld [vmem:[%s0 + $0x1c] sm:$0xf]
  %v26 = vld [vmem:[%s0 + $0x20] sm:$0xf]
  %v27 = vld [vmem:[%s0 + $0x24] sm:$0xf]
  %v28 = vld [vmem:[%s0 + $0x28] sm:$0xf]
  %v29 = vld [vmem:[%s0 + $0x2c] sm:$0xf]
  %v30 = vld [vmem:[%s0 + $0x30] sm:$0xf]
  %v31 = vld [vmem:[%s0 + $0x34] sm:$0xf]
  %v32 = vld [vmem:[%s0 + $0x38] sm:$0xf]
  %v33 = vld [vmem:[%s0 + $0x3c] sm:$0xf]
  %v34 = vld [vmem:[%s0 + $0x40] sm:$0xf]
  %v35 = vld [vmem:[%s0 + $0x44] sm:$0xf]
  %v36 = vld [vmem:[%s0 + $0x48] sm:$0xf]
  %v37 = vld [vmem:[%s0 + $0x4c] sm:$0xf]
  %v38 = vld [vmem:[%s0 + $0x50] sm:$0xf]
  %v39 = vld [vmem:[%s0 + $0x54] sm:$0xf]
  %v40 = vld [vmem:[%s0 + $0x58] sm:$0xf]
  %v41 = vld [vmem:[%s0 + $0x5c] sm:$0xf]
  %v42 = vld [vmem:[%s0 + $0x60] sm:$0xf]
  %v43 = vld [vmem:[%s0 + $0x64] sm:$0xf]
  %v44 = vld [vmem:[%s0 + $0x68] sm:$0xf]
  %v45 = vld [vmem:[%s0 + $0x6c] sm:$0xf]
  %v46 = vld [vmem:[%s0 + $0x70] sm:$0xf]
  %v47 = vld [vmem:[%s0 + $0x74] sm:$0xf]
  %v48 = vld [vmem:[%s0 + $0x78] sm:$0xf]
  %v49 = vld [vmem:[%s0 + $0x7c] sm:$0xf]
  %v50 = vld [vmem:[%s0 + $0x80] sm:$0xf]
  %v51 = vld [vmem:[%s0 + $0x84] sm:$0xf]
  %v52 = vld [vmem:[%s0 + $0x88] sm:$0xf]
  %v53 = vld [vmem:[%s0 + $0x8c] sm:$0xf]
  %v54 = vld [vmem:[%s0 + $0x90] sm:$0xf]
  %v55 = vld [vmem:[%s0 + $0x94] sm:$0xf]
  %v56 = vld [vmem:[%s0 + $0x98] sm:$0xf]
  %v57 = vld [vmem:[%s0 + $0x9c] sm:$0xf]
  %v58 = vld [vmem:[%s0 + $0xa0] sm:$0xf]
  %v59 = vld [vmem:[%s0 + $0xa4] sm:$0xf]
  %v60 = vld [vmem:[%s0 + $0xa8] sm:$0xf]
  %v61 = vld [vmem:[%s0 + $0xac] sm:$0xf]
  %v62 = vld [vmem:[%s0 + $0xb0] sm:$0xf]
  %v63 = vld [vmem:[%s0 + $0xb4] sm:$0xf]
  %v64 = vld [vmem:[%s0 + $0xb8] sm:$0xf]
  %v65 = vld [vmem:[%s0 + $0xbc] sm:$0xf]
  %v66 = vld [vmem:[%s0 + $0xc0] sm:$0xf]
  %v67 = vld [vmem:[%s0 + $0xc4] sm:$0xf]
  %v68 = vld [vmem:[%s0 + $0xc8] sm:$0xf]
  %v69 = vld [vmem:[%s0 + $0xcc] sm:$0xf]
  %v70 = vld [vmem:[%s0 + $0xd0] sm:$0xf]
  %v71 = vld [vmem:[%s0 + $0xd4] sm:$0xf]
  %v72 = vld [vmem:[%s0 + $0xd8] sm:$0xf]
  %v73 = vld [vmem:[%s0 + $0xdc] sm:$0xf]
  %v74 = vld [vmem:[%s0 + $0xe0] sm:$0xf]
  %v75 = vld [vmem:[%s0 + $0xe4] sm:$0xf]
  %v76 = vld [vmem:[%s0 + $0xe8] sm:$0xf]
  %v77 = vld [vmem:[%s0 + $0xec] sm:$0xf]
  %v78 = vld [vmem:[%s0 + $0xf0] sm:$0xf]
  %v79 = vld [vmem:[%s0 + $0xf4] sm:$0xf]
  %v80 = vld [vmem:[%s0 + $0xf8] sm:$0xf]
  %v81 = vld [vmem:[%s0 + $0xfc] sm:$0xf]
  %v82 = vld [vmem:[%s1] sm:$0xf]
  %v83 = vld [vmem:[%s1 + $0x4] sm:$0xf]
  %v84 = vld [vmem:[%s1 + $0x8] sm:$0xf]
  %v85 = vld [vmem:[%s1 + $0xc] sm:$0xf]
  %v150 = vunpack.c.l.b16 %v18
  %v151 = vunpack.c.l.b16 %v19
  %v152 = vunpack.c.l.b16 %v20
  %v153 = vunpack.c.l.b16 %v21
  %v154 = vunpack.c.l.b16 %v22
  %v155 = vunpack.c.l.b16 %v23
  %v156 = vunpack.c.l.b16 %v24
  %v157 = vunpack.c.l.b16 %v25
  %v158 = vunpack.c.l.b16 %v26
  %v159 = vunpack.c.l.b16 %v27
  %v160 = vunpack.c.l.b16 %v28
  %v161 = vunpack.c.l.b16 %v29
  %v162 = vunpack.c.l.b16 %v30
  %v163 = vunpack.c.l.b16 %v31
  %v164 = vunpack.c.l.b16 %v32
  %v165 = vunpack.c.l.b16 %v33
  %v166 = vunpack.c.l.b16 %v34
  %v167 = vunpack.c.l.b16 %v35
  %v168 = vunpack.c.l.b16 %v36
  %v169 = vunpack.c.l.b16 %v37
  %v170 = vunpack.c.l.b16 %v38
  %v171 = vunpack.c.l.b16 %v39
  %v172 = vunpack.c.l.b16 %v40
  %v173 = vunpack.c.l.b16 %v41
  %v174 = vunpack.c.l.b16 %v42
  %v175 = vunpack.c.l.b16 %v43
  %v176 = vunpack.c.l.b16 %v44
  %v177 = vunpack.c.l.b16 %v45
  %v178 = vunpack.c.l.b16 %v46
  %v179 = vunpack.c.l.b16 %v47
  %v180 = vunpack.c.l.b16 %v48
  %v181 = vunpack.c.l.b16 %v49
  %v182 = vunpack.c.l.b16 %v50
  %v183 = vunpack.c.l.b16 %v51
  %v184 = vunpack.c.l.b16 %v52
  %v185 = vunpack.c.l.b16 %v53
  %v186 = vunpack.c.l.b16 %v54
  %v187 = vunpack.c.l.b16 %v55
  %v188 = vunpack.c.l.b16 %v56
  %v189 = vunpack.c.l.b16 %v57
  %v190 = vunpack.c.l.b16 %v58
  %v191 = vunpack.c.l.b16 %v59
  %v192 = vunpack.c.l.b16 %v60
  %v193 = vunpack.c.l.b16 %v61
  %v194 = vunpack.c.l.b16 %v62
  %v195 = vunpack.c.l.b16 %v63
  %v196 = vunpack.c.l.b16 %v64
  %v197 = vunpack.c.l.b16 %v65
  %v198 = vunpack.c.l.b16 %v66
  %v199 = vunpack.c.l.b16 %v67
  %v200 = vunpack.c.l.b16 %v68
  %v201 = vunpack.c.l.b16 %v69
  %v202 = vunpack.c.l.b16 %v70
  %v203 = vunpack.c.l.b16 %v71
  %v204 = vunpack.c.l.b16 %v72
  %v205 = vunpack.c.l.b16 %v73
  %v206 = vunpack.c.l.b16 %v74
  %v207 = vunpack.c.l.b16 %v75
  %v208 = vunpack.c.l.b16 %v76
  %v209 = vunpack.c.l.b16 %v77
  %v210 = vunpack.c.l.b16 %v78
  %v211 = vunpack.c.l.b16 %v79
  %v212 = vunpack.c.l.b16 %v80
  %v213 = vunpack.c.l.b16 %v81
  %v214 = vpack.c.b16 %v151, %v150
  %v215 = vpack.c.b16 %v153, %v152
  %v216 = vpack.c.b16 %v155, %v154
  %v217 = vpack.c.b16 %v157, %v156
  %v218 = vpack.c.b16 %v159, %v158
  %v219 = vpack.c.b16 %v161, %v160
  %v220 = vpack.c.b16 %v163, %v162
  %v221 = vpack.c.b16 %v165, %v164
  %v222 = vpack.c.b16 %v167, %v166
  %v223 = vpack.c.b16 %v169, %v168
  %v224 = vpack.c.b16 %v171, %v170
  %v225 = vpack.c.b16 %v173, %v172
  %v226 = vpack.c.b16 %v175, %v174
  %v227 = vpack.c.b16 %v177, %v176
  %v228 = vpack.c.b16 %v179, %v178
  %v229 = vpack.c.b16 %v181, %v180
  %v230 = vpack.c.b16 %v183, %v182
  %v231 = vpack.c.b16 %v185, %v184
  %v232 = vpack.c.b16 %v187, %v186
  %v233 = vpack.c.b16 %v189, %v188
  %v234 = vpack.c.b16 %v191, %v190
  %v235 = vpack.c.b16 %v193, %v192
  %v236 = vpack.c.b16 %v195, %v194
  %v237 = vpack.c.b16 %v197, %v196
  %v238 = vpack.c.b16 %v199, %v198
  %v239 = vpack.c.b16 %v201, %v200
  %v240 = vpack.c.b16 %v203, %v202
  %v241 = vpack.c.b16 %v205, %v204
  %v242 = vpack.c.b16 %v207, %v206
  %v243 = vpack.c.b16 %v209, %v208
  %v244 = vpack.c.b16 %v211, %v210
  %v245 = vpack.c.b16 %v213, %v212
  %v250 = vunpack.c.l.b16 %v82
  %v251 = vunpack.c.l.b16 %v83
  %v252 = vunpack.c.l.b16 %v84
  %v253 = vunpack.c.l.b16 %v85
  %v254 = vpack.c.b16 %v251, %v250
  %v255 = vpack.c.b16 %v253, %v252
  %vm258 = vcmask 261120
  %v260 = vsel %vm258, %v214, 0
  %v263 = vsel %vm258, %v215, 0
  %v266 = vsel %vm258, %v216, 0
  %v269 = vsel %vm258, %v217, 0
  %v272 = vsel %vm258, %v218, 0
  %v275 = vsel %vm258, %v219, 0
  %v278 = vsel %vm258, %v220, 0
  %v281 = vsel %vm258, %v221, 0
  %v284 = vsel %vm258, %v222, 0
  %v287 = vsel %vm258, %v223, 0
  %v290 = vsel %vm258, %v224, 0
  %v293 = vsel %vm258, %v225, 0
  %v296 = vsel %vm258, %v226, 0
  %v299 = vsel %vm258, %v227, 0
  %v302 = vsel %vm258, %v228, 0
  %v305 = vsel %vm258, %v229, 0
  %v308 = vsel %vm258, %v230, 0
  %v311 = vsel %vm258, %v231, 0
  %v314 = vsel %vm258, %v232, 0
  %v317 = vsel %vm258, %v233, 0
  %v320 = vsel %vm258, %v234, 0
  %v323 = vsel %vm258, %v235, 0
  %v326 = vsel %vm258, %v236, 0
  %v329 = vsel %vm258, %v237, 0
  %v332 = vsel %vm258, %v238, 0
  %v335 = vsel %vm258, %v239, 0
  %v338 = vsel %vm258, %v240, 0
  %v341 = vsel %vm258, %v241, 0
  %v344 = vsel %vm258, %v242, 0
  %v347 = vsel %vm258, %v243, 0
  %v350 = vsel %vm258, %v244, 0
  %v353 = vsel %vm258, %v245, 0
  %355 = vmatprep.subr.bf16.mxu0 0
  %356 = vmatpush1.bf16.msra.mxu0 %v254
  %357 = vmatprep.subr.bf16.mxu0 0
  %358 = vmatpush1.bf16.msra.mxu0 %v255
  %359 = vmatprep.subr.bf16.mxu0 0
  %360 = vmatpush1.bf16.msra.mxu0 0
  %361 = vmatprep.subr.bf16.mxu0 0
  %362 = vmatpush1.bf16.msra.mxu0 0
  %363 = vmatprep.subr.bf16.mxu0 0
  %364 = vmatpush1.bf16.msra.mxu0 0
  %365 = vmatprep.subr.bf16.mxu0 0
  %366 = vmatpush1.bf16.msra.mxu0 0
  %367 = vmatprep.subr.bf16.mxu0 0
  %368 = vmatpush1.bf16.msra.mxu0 0
  %369 = vmatprep.subr.bf16.mxu0 0
  %370 = vmatpush1.bf16.msra.mxu0 0
  %371 = vmatprep.subr.bf16.mxu0 0
  %372 = vmatpush1.bf16.msra.mxu0 0
  %373 = vmatprep.subr.bf16.mxu0 0
  %374 = vmatpush1.bf16.msra.mxu0 0
  %375 = vmatprep.subr.bf16.mxu0 0
  %376 = vmatpush1.bf16.msra.mxu0 0
  %377 = vmatprep.subr.bf16.mxu0 0
  %378 = vmatpush1.bf16.msra.mxu0 0
  %379 = vmatprep.subr.bf16.mxu0 0
  %380 = vmatpush1.bf16.msra.mxu0 0
  %381 = vmatprep.subr.bf16.mxu0 0
  %382 = vmatpush1.bf16.msra.mxu0 0
  %383 = vmatprep.subr.bf16.mxu0 0
  %384 = vmatpush1.bf16.msra.mxu0 0
  %385 = vmatprep.subr.bf16.mxu0 0
  %386 = vmatpush1.bf16.msra.mxu0 0
  %387 = vmatprep.mubr.bf16.mxu0 0
  %388 = vmatmul.mubr.bf16.gmra.mrb[0].mxu0 %v260
  %v389 = vpop.f32.mrb[0].mxu0
  %v390 = vadd.f32 0.0, %v389
  %v391 = vpop.f32.mrb[0].mxu0
  %v392 = vpop.f32.mrb[0].mxu0
  %v393 = vadd.f32 0.0, %v392
  %v394 = vpop.f32.mrb[0].mxu0
  %395 = vmatprep.mubr.bf16.mxu0 0
  %396 = vmatmul.mubr.bf16.gmra.mrb[0].mxu0 %v263
  %v397 = vpop.f32.mrb[0].mxu0
  %v398 = vadd.f32 0.0, %v397
  %v399 = vpop.f32.mrb[0].mxu0
  %v400 = vpop.f32.mrb[0].mxu0
  %v401 = vadd.f32 0.0, %v400
  %v402 = vpop.f32.mrb[0].mxu0
  %403 = vmatprep.mubr.bf16.mxu0 0
  %404 = vmatmul.mubr.bf16.gmra.mrb[0].mxu0 %v266
  %v405 = vpop.f32.mrb[0].mxu0
  %v406 = vadd.f32 0.0, %v405
  %v407 = vpop.f32.mrb[0].mxu0
  %v408 = vpop.f32.mrb[0].mxu0
  %v409 = vadd.f32 0.0, %v408
  %v410 = vpop.f32.mrb[0].mxu0
  %411 = vmatprep.mubr.bf16.mxu0 0
  %412 = vmatmul.mubr.bf16.gmra.mrb[0].mxu0 %v269
  %v413 = vpop.f32.mrb[0].mxu0
  %v414 = vadd.f32 0.0, %v413
  %v415 = vpop.f32.mrb[0].mxu0
  %v416 = vpop.f32.mrb[0].mxu0
  %v417 = vadd.f32 0.0, %v416
  %v418 = vpop.f32.mrb[0].mxu0
  %419 = vmatprep.mubr.bf16.mxu0 0
  %420 = vmatmul.mubr.bf16.gmra.mrb[0].mxu0 %v272
  %v421 = vpop.f32.mrb[0].mxu0
  %v422 = vadd.f32 0.0, %v421
  %v423 = vpop.f32.mrb[0].mxu0
  %v424 = vpop.f32.mrb[0].mxu0
  %v425 = vadd.f32 0.0, %v424
  %v426 = vpop.f32.mrb[0].mxu0
  %427 = vmatprep.mubr.bf16.mxu0 0
  %428 = vmatmul.mubr.bf16.gmra.mrb[0].mxu0 %v275
  %v429 = vpop.f32.mrb[0].mxu0
  %v430 = vadd.f32 0.0, %v429
  %v431 = vpop.f32.mrb[0].mxu0
  %v432 = vpop.f32.mrb[0].mxu0
  %v433 = vadd.f32 0.0, %v432
  %v434 = vpop.f32.mrb[0].mxu0
  %435 = vmatprep.mubr.bf16.mxu0 0
  %436 = vmatmul.mubr.bf16.gmra.mrb[0].mxu0 %v278
  %v437 = vpop.f32.mrb[0].mxu0
  %v438 = vadd.f32 0.0, %v437
  %v439 = vpop.f32.mrb[0].mxu0
  %v440 = vpop.f32.mrb[0].mxu0
  %v441 = vadd.f32 0.0, %v440
  %v442 = vpop.f32.mrb[0].mxu0
  %443 = vmatprep.mubr.bf16.mxu0 0
  %444 = vmatmul.mubr.bf16.gmra.mrb[0].mxu0 %v281
  %v445 = vpop.f32.mrb[0].mxu0
  %v446 = vadd.f32 0.0, %v445
  %v447 = vpop.f32.mrb[0].mxu0
  %v448 = vpop.f32.mrb[0].mxu0
  %v449 = vadd.f32 0.0, %v448
  %v450 = vpop.f32.mrb[0].mxu0
  %451 = vmatprep.mubr.bf16.mxu0 0
  %452 = vmatmul.mubr.bf16.gmra.mrb[0].mxu0 %v284
  %v453 = vpop.f32.mrb[0].mxu0
  %v454 = vadd.f32 0.0, %v453
  %v455 = vpop.f32.mrb[0].mxu0
  %v456 = vpop.f32.mrb[0].mxu0
  %v457 = vadd.f32 0.0, %v456
  %v458 = vpop.f32.mrb[0].mxu0
  %459 = vmatprep.mubr.bf16.mxu0 0
  %460 = vmatmul.mubr.bf16.gmra.mrb[0].mxu0 %v287
  %v461 = vpop.f32.mrb[0].mxu0
  %v462 = vadd.f32 0.0, %v461
  %v463 = vpop.f32.mrb[0].mxu0
  %v464 = vpop.f32.mrb[0].mxu0
  %v465 = vadd.f32 0.0, %v464
  %v466 = vpop.f32.mrb[0].mxu0
  %467 = vmatprep.mubr.bf16.mxu0 0
  %468 = vmatmul.mubr.bf16.gmra.mrb[0].mxu0 %v290
  %v469 = vpop.f32.mrb[0].mxu0
  %v470 = vadd.f32 0.0, %v469
  %v471 = vpop.f32.mrb[0].mxu0
  %v472 = vpop.f32.mrb[0].mxu0
  %v473 = vadd.f32 0.0, %v472
  %v474 = vpop.f32.mrb[0].mxu0
  %475 = vmatprep.mubr.bf16.mxu0 0
  %476 = vmatmul.mubr.bf16.gmra.mrb[0].mxu0 %v293
  %v477 = vpop.f32.mrb[0].mxu0
  %v478 = vadd.f32 0.0, %v477
  %v479 = vpop.f32.mrb[0].mxu0
  %v480 = vpop.f32.mrb[0].mxu0
  %v481 = vadd.f32 0.0, %v480
  %v482 = vpop.f32.mrb[0].mxu0
  %483 = vmatprep.mubr.bf16.mxu0 0
  %484 = vmatmul.mubr.bf16.gmra.mrb[0].mxu0 %v296
  %v485 = vpop.f32.mrb[0].mxu0
  %v486 = vadd.f32 0.0, %v485
  %v487 = vpop.f32.mrb[0].mxu0
  %v488 = vpop.f32.mrb[0].mxu0
  %v489 = vadd.f32 0.0, %v488
  %v490 = vpop.f32.mrb[0].mxu0
  %491 = vmatprep.mubr.bf16.mxu0 0
  %492 = vmatmul.mubr.bf16.gmra.mrb[0].mxu0 %v299
  %v493 = vpop.f32.mrb[0].mxu0
  %v494 = vadd.f32 0.0, %v493
  %v495 = vpop.f32.mrb[0].mxu0
  %v496 = vpop.f32.mrb[0].mxu0
  %v497 = vadd.f32 0.0, %v496
  %v498 = vpop.f32.mrb[0].mxu0
  %499 = vmatprep.mubr.bf16.mxu0 0
  %500 = vmatmul.mubr.bf16.gmra.mrb[0].mxu0 %v302
  %v501 = vpop.f32.mrb[0].mxu0
  %v502 = vadd.f32 0.0, %v501
  %v503 = vpop.f32.mrb[0].mxu0
  %v504 = vpop.f32.mrb[0].mxu0
  %v505 = vadd.f32 0.0, %v504
  %v506 = vpop.f32.mrb[0].mxu0
  %507 = vmatprep.mubr.bf16.mxu0 0
  %508 = vmatmul.mubr.bf16.gmra.mrb[0].mxu0 %v305
  %v509 = vpop.f32.mrb[0].mxu0
  %v510 = vadd.f32 0.0, %v509
  %v511 = vpop.f32.mrb[0].mxu0
  %v512 = vpop.f32.mrb[0].mxu0
  %v513 = vadd.f32 0.0, %v512
  %v514 = vpop.f32.mrb[0].mxu0
  %515 = vmatprep.mubr.bf16.mxu0 0
  %516 = vmatmul.mubr.bf16.gmra.mrb[0].mxu0 %v308
  %v517 = vpop.f32.mrb[0].mxu0
  %v518 = vadd.f32 0.0, %v517
  %v519 = vpop.f32.mrb[0].mxu0
  %v520 = vpop.f32.mrb[0].mxu0
  %v521 = vadd.f32 0.0, %v520
  %v522 = vpop.f32.mrb[0].mxu0
  %523 = vmatprep.mubr.bf16.mxu0 0
  %524 = vmatmul.mubr.bf16.gmra.mrb[0].mxu0 %v311
  %v525 = vpop.f32.mrb[0].mxu0
  %v526 = vadd.f32 0.0, %v525
  %v527 = vpop.f32.mrb[0].mxu0
  %v528 = vpop.f32.mrb[0].mxu0
  %v529 = vadd.f32 0.0, %v528
  %v530 = vpop.f32.mrb[0].mxu0
  %531 = vmatprep.mubr.bf16.mxu0 0
  %532 = vmatmul.mubr.bf16.gmra.mrb[0].mxu0 %v314
  %v533 = vpop.f32.mrb[0].mxu0
  %v534 = vadd.f32 0.0, %v533
  %v535 = vpop.f32.mrb[0].mxu0
  %v536 = vpop.f32.mrb[0].mxu0
  %v537 = vadd.f32 0.0, %v536
  %v538 = vpop.f32.mrb[0].mxu0
  %539 = vmatprep.mubr.bf16.mxu0 0
  %540 = vmatmul.mubr.bf16.gmra.mrb[0].mxu0 %v317
  %v541 = vpop.f32.mrb[0].mxu0
  %v542 = vadd.f32 0.0, %v541
  %v543 = vpop.f32.mrb[0].mxu0
  %v544 = vpop.f32.mrb[0].mxu0
  %v545 = vadd.f32 0.0, %v544
  %v546 = vpop.f32.mrb[0].mxu0
  %547 = vmatprep.mubr.bf16.mxu0 0
  %548 = vmatmul.mubr.bf16.gmra.mrb[0].mxu0 %v320
  %v549 = vpop.f32.mrb[0].mxu0
  %v550 = vadd.f32 0.0, %v549
  %v551 = vpop.f32.mrb[0].mxu0
  %v552 = vpop.f32.mrb[0].mxu0
  %v553 = vadd.f32 0.0, %v552
  %v554 = vpop.f32.mrb[0].mxu0
  %555 = vmatprep.mubr.bf16.mxu0 0
  %556 = vmatmul.mubr.bf16.gmra.mrb[0].mxu0 %v323
  %v557 = vpop.f32.mrb[0].mxu0
  %v558 = vadd.f32 0.0, %v557
  %v559 = vpop.f32.mrb[0].mxu0
  %v560 = vpop.f32.mrb[0].mxu0
  %v561 = vadd.f32 0.0, %v560
  %v562 = vpop.f32.mrb[0].mxu0
  %563 = vmatprep.mubr.bf16.mxu0 0
  %564 = vmatmul.mubr.bf16.gmra.mrb[0].mxu0 %v326
  %v565 = vpop.f32.mrb[0].mxu0
  %v566 = vadd.f32 0.0, %v565
  %v567 = vpop.f32.mrb[0].mxu0
  %v568 = vpop.f32.mrb[0].mxu0
  %v569 = vadd.f32 0.0, %v568
  %v570 = vpop.f32.mrb[0].mxu0
  %571 = vmatprep.mubr.bf16.mxu0 0
  %572 = vmatmul.mubr.bf16.gmra.mrb[0].mxu0 %v329
  %v573 = vpop.f32.mrb[0].mxu0
  %v574 = vadd.f32 0.0, %v573
  %v575 = vpop.f32.mrb[0].mxu0
  %v576 = vpop.f32.mrb[0].mxu0
  %v577 = vadd.f32 0.0, %v576
  %v578 = vpop.f32.mrb[0].mxu0
  %579 = vmatprep.mubr.bf16.mxu0 0
  %580 = vmatmul.mubr.bf16.gmra.mrb[0].mxu0 %v332
  %v581 = vpop.f32.mrb[0].mxu0
  %v582 = vadd.f32 0.0, %v581
  %v583 = vpop.f32.mrb[0].mxu0
  %v584 = vpop.f32.mrb[0].mxu0
  %v585 = vadd.f32 0.0, %v584
  %v586 = vpop.f32.mrb[0].mxu0
  %587 = vmatprep.mubr.bf16.mxu0 0
  %588 = vmatmul.mubr.bf16.gmra.mrb[0].mxu0 %v335
  %v589 = vpop.f32.mrb[0].mxu0
  %v590 = vadd.f32 0.0, %v589
  %v591 = vpop.f32.mrb[0].mxu0
  %v592 = vpop.f32.mrb[0].mxu0
  %v593 = vadd.f32 0.0, %v592
  %v594 = vpop.f32.mrb[0].mxu0
  %595 = vmatprep.mubr.bf16.mxu0 0
  %596 = vmatmul.mubr.bf16.gmra.mrb[0].mxu0 %v338
  %v597 = vpop.f32.mrb[0].mxu0
  %v598 = vadd.f32 0.0, %v597
  %v599 = vpop.f32.mrb[0].mxu0
  %v600 = vpop.f32.mrb[0].mxu0
  %v601 = vadd.f32 0.0, %v600
  %v602 = vpop.f32.mrb[0].mxu0
  %603 = vmatprep.mubr.bf16.mxu0 0
  %604 = vmatmul.mubr.bf16.gmra.mrb[0].mxu0 %v341
  %v605 = vpop.f32.mrb[0].mxu0
  %v606 = vadd.f32 0.0, %v605
  %v607 = vpop.f32.mrb[0].mxu0
  %v608 = vpop.f32.mrb[0].mxu0
  %v609 = vadd.f32 0.0, %v608
  %v610 = vpop.f32.mrb[0].mxu0
  %611 = vmatprep.mubr.bf16.mxu0 0
  %612 = vmatmul.mubr.bf16.gmra.mrb[0].mxu0 %v344
  %v613 = vpop.f32.mrb[0].mxu0
  %v614 = vadd.f32 0.0, %v613
  %v615 = vpop.f32.mrb[0].mxu0
  %v616 = vpop.f32.mrb[0].mxu0
  %v617 = vadd.f32 0.0, %v616
  %v618 = vpop.f32.mrb[0].mxu0
  %619 = vmatprep.mubr.bf16.mxu0 0
  %620 = vmatmul.mubr.bf16.gmra.mrb[0].mxu0 %v347
  %v621 = vpop.f32.mrb[0].mxu0
  %v622 = vadd.f32 0.0, %v621
  %v623 = vpop.f32.mrb[0].mxu0
  %v624 = vpop.f32.mrb[0].mxu0
  %v625 = vadd.f32 0.0, %v624
  %v626 = vpop.f32.mrb[0].mxu0
  %627 = vmatprep.mubr.bf16.mxu0 0
  %628 = vmatmul.mubr.bf16.gmra.mrb[0].mxu0 %v350
  %v629 = vpop.f32.mrb[0].mxu0
  %v630 = vadd.f32 0.0, %v629
  %v631 = vpop.f32.mrb[0].mxu0
  %v632 = vpop.f32.mrb[0].mxu0
  %v633 = vadd.f32 0.0, %v632
  %v634 = vpop.f32.mrb[0].mxu0
  %635 = vmatprep.mubr.bf16.mxu0 0
  %636 = vmatmul.mubr.bf16.gmra.mrb[0].mxu0 %v353
  %v637 = vpop.f32.mrb[0].mxu0
  %v638 = vadd.f32 0.0, %v637
  %v639 = vpop.f32.mrb[0].mxu0
  %v640 = vpop.f32.mrb[0].mxu0
  %v641 = vadd.f32 0.0, %v640
  %v642 = vpop.f32.mrb[0].mxu0
  %643 = vdwg.mxu0
  %v644 = vld [vmem:[%s2] sm:$0x1]
  %v646 = vlaneseq
  %v647 = vshrl.u32 %v646, 7
  %v648 = vsub.s32 0, %v647
  %v649 = vrot.slane %v644, %v648
  %v651 = vmul.f32 %v390, %v649
  %v652 = vmul.f32 %v393, %v649
  %v653 = vmul.f32 %v398, %v649
  %v654 = vmul.f32 %v401, %v649
  %v655 = vmul.f32 %v406, %v649
  %v656 = vmul.f32 %v409, %v649
  %v657 = vmul.f32 %v414, %v649
  %v658 = vmul.f32 %v417, %v649
  %v659 = vmul.f32 %v422, %v649
  %v660 = vmul.f32 %v425, %v649
  %v661 = vmul.f32 %v430, %v649
  %v662 = vmul.f32 %v433, %v649
  %v663 = vmul.f32 %v438, %v649
  %v664 = vmul.f32 %v441, %v649
  %v665 = vmul.f32 %v446, %v649
  %v666 = vmul.f32 %v449, %v649
  %v667 = vmul.f32 %v454, %v649
  %v668 = vmul.f32 %v457, %v649
  %v669 = vmul.f32 %v462, %v649
  %v670 = vmul.f32 %v465, %v649
  %v671 = vmul.f32 %v470, %v649
  %v672 = vmul.f32 %v473, %v649
  %v673 = vmul.f32 %v478, %v649
  %v674 = vmul.f32 %v481, %v649
  %v675 = vmul.f32 %v486, %v649
  %v676 = vmul.f32 %v489, %v649
  %v677 = vmul.f32 %v494, %v649
  %v678 = vmul.f32 %v497, %v649
  %v679 = vmul.f32 %v502, %v649
  %v680 = vmul.f32 %v505, %v649
  %v681 = vmul.f32 %v510, %v649
  %v682 = vmul.f32 %v513, %v649
  %v683 = vmul.f32 %v518, %v649
  %v684 = vmul.f32 %v521, %v649
  %v685 = vmul.f32 %v526, %v649
  %v686 = vmul.f32 %v529, %v649
  %v687 = vmul.f32 %v534, %v649
  %v688 = vmul.f32 %v537, %v649
  %v689 = vmul.f32 %v542, %v649
  %v690 = vmul.f32 %v545, %v649
  %v691 = vmul.f32 %v550, %v649
  %v692 = vmul.f32 %v553, %v649
  %v693 = vmul.f32 %v558, %v649
  %v694 = vmul.f32 %v561, %v649
  %v695 = vmul.f32 %v566, %v649
  %v696 = vmul.f32 %v569, %v649
  %v697 = vmul.f32 %v574, %v649
  %v698 = vmul.f32 %v577, %v649
  %v699 = vmul.f32 %v582, %v649
  %v700 = vmul.f32 %v585, %v649
  %v701 = vmul.f32 %v590, %v649
  %v702 = vmul.f32 %v593, %v649
  %v703 = vmul.f32 %v598, %v649
  %v704 = vmul.f32 %v601, %v649
  %v705 = vmul.f32 %v606, %v649
  %v706 = vmul.f32 %v609, %v649
  %v707 = vmul.f32 %v614, %v649
  %v708 = vmul.f32 %v617, %v649
  %v709 = vmul.f32 %v622, %v649
  %v710 = vmul.f32 %v625, %v649
  %v711 = vmul.f32 %v630, %v649
  %v712 = vmul.f32 %v633, %v649
  %v713 = vmul.f32 %v638, %v649
  %v714 = vmul.f32 %v641, %v649
  %v715 = vld [vmem:[%s3] sm:$0x1]
  %v717 = vlaneseq
  %v718 = vshrl.u32 %v717, 7
  %v719 = vsub.s32 0, %v718
  %v720 = vrot.slane %v715, %v719
  %v722 = vadd.f32 %v651, %v720
  %v723 = vadd.f32 %v652, %v720
  %v724 = vadd.f32 %v653, %v720
  %v725 = vadd.f32 %v654, %v720
  %v726 = vadd.f32 %v655, %v720
  %v727 = vadd.f32 %v656, %v720
  %v728 = vadd.f32 %v657, %v720
  %v729 = vadd.f32 %v658, %v720
  %v730 = vadd.f32 %v659, %v720
  %v731 = vadd.f32 %v660, %v720
  %v732 = vadd.f32 %v661, %v720
  %v733 = vadd.f32 %v662, %v720
  %v734 = vadd.f32 %v663, %v720
  %v735 = vadd.f32 %v664, %v720
  %v736 = vadd.f32 %v665, %v720
  %v737 = vadd.f32 %v666, %v720
  %v738 = vadd.f32 %v667, %v720
  %v739 = vadd.f32 %v668, %v720
  %v740 = vadd.f32 %v669, %v720
  %v741 = vadd.f32 %v670, %v720
  %v742 = vadd.f32 %v671, %v720
  %v743 = vadd.f32 %v672, %v720
  %v744 = vadd.f32 %v673, %v720
  %v745 = vadd.f32 %v674, %v720
  %v746 = vadd.f32 %v675, %v720
  %v747 = vadd.f32 %v676, %v720
  %v748 = vadd.f32 %v677, %v720
  %v749 = vadd.f32 %v678, %v720
  %v750 = vadd.f32 %v679, %v720
  %v751 = vadd.f32 %v680, %v720
  %v752 = vadd.f32 %v681, %v720
  %v753 = vadd.f32 %v682, %v720
  %v754 = vadd.f32 %v683, %v720
  %v755 = vadd.f32 %v684, %v720
  %v756 = vadd.f32 %v685, %v720
  %v757 = vadd.f32 %v686, %v720
  %v758 = vadd.f32 %v687, %v720
  %v759 = vadd.f32 %v688, %v720
  %v760 = vadd.f32 %v689, %v720
  %v761 = vadd.f32 %v690, %v720
  %v762 = vadd.f32 %v691, %v720
  %v763 = vadd.f32 %v692, %v720
  %v764 = vadd.f32 %v693, %v720
  %v765 = vadd.f32 %v694, %v720
  %v766 = vadd.f32 %v695, %v720
  %v767 = vadd.f32 %v696, %v720
  %v768 = vadd.f32 %v697, %v720
  %v769 = vadd.f32 %v698, %v720
  %v770 = vadd.f32 %v699, %v720
  %v771 = vadd.f32 %v700, %v720
  %v772 = vadd.f32 %v701, %v720
  %v773 = vadd.f32 %v702, %v720
  %v774 = vadd.f32 %v703, %v720
  %v775 = vadd.f32 %v704, %v720
  %v776 = vadd.f32 %v705, %v720
  %v777 = vadd.f32 %v706, %v720
  %v778 = vadd.f32 %v707, %v720
  %v779 = vadd.f32 %v708, %v720
  %v780 = vadd.f32 %v709, %v720
  %v781 = vadd.f32 %v710, %v720
  %v782 = vadd.f32 %v711, %v720
  %v783 = vadd.f32 %v712, %v720
  %v784 = vadd.f32 %v713, %v720
  %v785 = vadd.f32 %v714, %v720
  %v786 = vmax.f32 %v722, 0.0
  %v787 = vmax.f32 %v723, 0.0
  %v788 = vmax.f32 %v724, 0.0
  %v789 = vmax.f32 %v725, 0.0
  %v790 = vmax.f32 %v726, 0.0
  %v791 = vmax.f32 %v727, 0.0
  %v792 = vmax.f32 %v728, 0.0
  %v793 = vmax.f32 %v729, 0.0
  %v794 = vmax.f32 %v730, 0.0
  %v795 = vmax.f32 %v731, 0.0
  %v796 = vmax.f32 %v732, 0.0
  %v797 = vmax.f32 %v733, 0.0
  %v798 = vmax.f32 %v734, 0.0
  %v799 = vmax.f32 %v735, 0.0
  %v800 = vmax.f32 %v736, 0.0
  %v801 = vmax.f32 %v737, 0.0
  %v802 = vmax.f32 %v738, 0.0
  %v803 = vmax.f32 %v739, 0.0
  %v804 = vmax.f32 %v740, 0.0
  %v805 = vmax.f32 %v741, 0.0
  %v806 = vmax.f32 %v742, 0.0
  %v807 = vmax.f32 %v743, 0.0
  %v808 = vmax.f32 %v744, 0.0
  %v809 = vmax.f32 %v745, 0.0
  %v810 = vmax.f32 %v746, 0.0
  %v811 = vmax.f32 %v747, 0.0
  %v812 = vmax.f32 %v748, 0.0
  %v813 = vmax.f32 %v749, 0.0
  %v814 = vmax.f32 %v750, 0.0
  %v815 = vmax.f32 %v751, 0.0
  %v816 = vmax.f32 %v752, 0.0
  %v817 = vmax.f32 %v753, 0.0
  %v818 = vmax.f32 %v754, 0.0
  %v819 = vmax.f32 %v755, 0.0
  %v820 = vmax.f32 %v756, 0.0
  %v821 = vmax.f32 %v757, 0.0
  %v822 = vmax.f32 %v758, 0.0
  %v823 = vmax.f32 %v759, 0.0
  %v824 = vmax.f32 %v760, 0.0
  %v825 = vmax.f32 %v761, 0.0
  %v826 = vmax.f32 %v762, 0.0
  %v827 = vmax.f32 %v763, 0.0
  %v828 = vmax.f32 %v764, 0.0
  %v829 = vmax.f32 %v765, 0.0
  %v830 = vmax.f32 %v766, 0.0
  %v831 = vmax.f32 %v767, 0.0
  %v832 = vmax.f32 %v768, 0.0
  %v833 = vmax.f32 %v769, 0.0
  %v834 = vmax.f32 %v770, 0.0
  %v835 = vmax.f32 %v771, 0.0
  %v836 = vmax.f32 %v772, 0.0
  %v837 = vmax.f32 %v773, 0.0
  %v838 = vmax.f32 %v774, 0.0
  %v839 = vmax.f32 %v775, 0.0
  %v840 = vmax.f32 %v776, 0.0
  %v841 = vmax.f32 %v777, 0.0
  %v842 = vmax.f32 %v778, 0.0
  %v843 = vmax.f32 %v779, 0.0
  %v844 = vmax.f32 %v780, 0.0
  %v845 = vmax.f32 %v781, 0.0
  %v846 = vmax.f32 %v782, 0.0
  %v847 = vmax.f32 %v783, 0.0
  %v848 = vmax.f32 %v784, 0.0
  %v849 = vmax.f32 %v785, 0.0
  %v850 = vpack.c.bf16 %v787, %v786
  %v851 = vpack.c.bf16 %v789, %v788
  %v852 = vpack.c.bf16 %v791, %v790
  %v853 = vpack.c.bf16 %v793, %v792
  %v854 = vpack.c.bf16 %v795, %v794
  %v855 = vpack.c.bf16 %v797, %v796
  %v856 = vpack.c.bf16 %v799, %v798
  %v857 = vpack.c.bf16 %v801, %v800
  %v858 = vpack.c.bf16 %v803, %v802
  %v859 = vpack.c.bf16 %v805, %v804
  %v860 = vpack.c.bf16 %v807, %v806
  %v861 = vpack.c.bf16 %v809, %v808
  %v862 = vpack.c.bf16 %v811, %v810
  %v863 = vpack.c.bf16 %v813, %v812
  %v864 = vpack.c.bf16 %v815, %v814
  %v865 = vpack.c.bf16 %v817, %v816
  %v866 = vpack.c.bf16 %v819, %v818
  %v867 = vpack.c.bf16 %v821, %v820
  %v868 = vpack.c.bf16 %v823, %v822
  %v869 = vpack.c.bf16 %v825, %v824
  %v870 = vpack.c.bf16 %v827, %v826
  %v871 = vpack.c.bf16 %v829, %v828
  %v872 = vpack.c.bf16 %v831, %v830
  %v873 = vpack.c.bf16 %v833, %v832
  %v874 = vpack.c.bf16 %v835, %v834
  %v875 = vpack.c.bf16 %v837, %v836
  %v876 = vpack.c.bf16 %v839, %v838
  %v877 = vpack.c.bf16 %v841, %v840
  %v878 = vpack.c.bf16 %v843, %v842
  %v879 = vpack.c.bf16 %v845, %v844
  %v880 = vpack.c.bf16 %v847, %v846
  %v881 = vpack.c.bf16 %v849, %v848
  %v914 = vunpack.c.l.b16 %v850
  %v915 = vunpack.c.h.b16 %v850
  %v916 = vunpack.c.l.b16 %v851
  %v917 = vunpack.c.h.b16 %v851
  %v918 = vunpack.c.l.b16 %v852
  %v919 = vunpack.c.h.b16 %v852
  %v920 = vunpack.c.l.b16 %v853
  %v921 = vunpack.c.h.b16 %v853
  %v922 = vunpack.c.l.b16 %v854
  %v923 = vunpack.c.h.b16 %v854
  %v924 = vunpack.c.l.b16 %v855
  %v925 = vunpack.c.h.b16 %v855
  %v926 = vunpack.c.l.b16 %v856
  %v927 = vunpack.c.h.b16 %v856
  %v928 = vunpack.c.l.b16 %v857
  %v929 = vunpack.c.h.b16 %v857
  %v930 = vunpack.c.l.b16 %v858
  %v931 = vunpack.c.h.b16 %v858
  %v932 = vunpack.c.l.b16 %v859
  %v933 = vunpack.c.h.b16 %v859
  %v934 = vunpack.c.l.b16 %v860
  %v935 = vunpack.c.h.b16 %v860
  %v936 = vunpack.c.l.b16 %v861
  %v937 = vunpack.c.h.b16 %v861
  %v938 = vunpack.c.l.b16 %v862
  %v939 = vunpack.c.h.b16 %v862
  %v940 = vunpack.c.l.b16 %v863
  %v941 = vunpack.c.h.b16 %v863
  %v942 = vunpack.c.l.b16 %v864
  %v943 = vunpack.c.h.b16 %v864
  %v944 = vunpack.c.l.b16 %v865
  %v945 = vunpack.c.h.b16 %v865
  %v946 = vunpack.c.l.b16 %v866
  %v947 = vunpack.c.h.b16 %v866
  %v948 = vunpack.c.l.b16 %v867
  %v949 = vunpack.c.h.b16 %v867
  %v950 = vunpack.c.l.b16 %v868
  %v951 = vunpack.c.h.b16 %v868
  %v952 = vunpack.c.l.b16 %v869
  %v953 = vunpack.c.h.b16 %v869
  %v954 = vunpack.c.l.b16 %v870
  %v955 = vunpack.c.h.b16 %v870
  %v956 = vunpack.c.l.b16 %v871
  %v957 = vunpack.c.h.b16 %v871
  %v958 = vunpack.c.l.b16 %v872
  %v959 = vunpack.c.h.b16 %v872
  %v960 = vunpack.c.l.b16 %v873
  %v961 = vunpack.c.h.b16 %v873
  %v962 = vunpack.c.l.b16 %v874
  %v963 = vunpack.c.h.b16 %v874
  %v964 = vunpack.c.l.b16 %v875
  %v965 = vunpack.c.h.b16 %v875
  %v966 = vunpack.c.l.b16 %v876
  %v967 = vunpack.c.h.b16 %v876
  %v968 = vunpack.c.l.b16 %v877
  %v969 = vunpack.c.h.b16 %v877
  %v970 = vunpack.c.l.b16 %v878
  %v971 = vunpack.c.h.b16 %v878
  %v972 = vunpack.c.l.b16 %v879
  %v973 = vunpack.c.h.b16 %v879
  %v974 = vunpack.c.l.b16 %v880
  %v975 = vunpack.c.h.b16 %v880
  %v976 = vunpack.c.l.b16 %v881
  %v977 = vunpack.c.h.b16 %v881
  %v978 = vpack.c.b16 %v914, %v914
  %v979 = vpack.c.b16 %v915, %v915
  %v980 = vpack.c.b16 %v916, %v916
  %v981 = vpack.c.b16 %v917, %v917
  %v982 = vpack.c.b16 %v918, %v918
  %v983 = vpack.c.b16 %v919, %v919
  %v984 = vpack.c.b16 %v920, %v920
  %v985 = vpack.c.b16 %v921, %v921
  %v986 = vpack.c.b16 %v922, %v922
  %v987 = vpack.c.b16 %v923, %v923
  %v988 = vpack.c.b16 %v924, %v924
  %v989 = vpack.c.b16 %v925, %v925
  %v990 = vpack.c.b16 %v926, %v926
  %v991 = vpack.c.b16 %v927, %v927
  %v992 = vpack.c.b16 %v928, %v928
  %v993 = vpack.c.b16 %v929, %v929
  %v994 = vpack.c.b16 %v930, %v930
  %v995 = vpack.c.b16 %v931, %v931
  %v996 = vpack.c.b16 %v932, %v932
  %v997 = vpack.c.b16 %v933, %v933
  %v998 = vpack.c.b16 %v934, %v934
  %v999 = vpack.c.b16 %v935, %v935
  %v1000 = vpack.c.b16 %v936, %v936
  %v1001 = vpack.c.b16 %v937, %v937
  %v1002 = vpack.c.b16 %v938, %v938
  %v1003 = vpack.c.b16 %v939, %v939
  %v1004 = vpack.c.b16 %v940, %v940
  %v1005 = vpack.c.b16 %v941, %v941
  %v1006 = vpack.c.b16 %v942, %v942
  %v1007 = vpack.c.b16 %v943, %v943
  %v1008 = vpack.c.b16 %v944, %v944
  %v1009 = vpack.c.b16 %v945, %v945
  %v1010 = vpack.c.b16 %v946, %v946
  %v1011 = vpack.c.b16 %v947, %v947
  %v1012 = vpack.c.b16 %v948, %v948
  %v1013 = vpack.c.b16 %v949, %v949
  %v1014 = vpack.c.b16 %v950, %v950
  %v1015 = vpack.c.b16 %v951, %v951
  %v1016 = vpack.c.b16 %v952, %v952
  %v1017 = vpack.c.b16 %v953, %v953
  %v1018 = vpack.c.b16 %v954, %v954
  %v1019 = vpack.c.b16 %v955, %v955
  %v1020 = vpack.c.b16 %v956, %v956
  %v1021 = vpack.c.b16 %v957, %v957
  %v1022 = vpack.c.b16 %v958, %v958
  %v1023 = vpack.c.b16 %v959, %v959
  %v1024 = vpack.c.b16 %v960, %v960
  %v1025 = vpack.c.b16 %v961, %v961
  %v1026 = vpack.c.b16 %v962, %v962
  %v1027 = vpack.c.b16 %v963, %v963
  %v1028 = vpack.c.b16 %v964, %v964
  %v1029 = vpack.c.b16 %v965, %v965
  %v1030 = vpack.c.b16 %v966, %v966
  %v1031 = vpack.c.b16 %v967, %v967
  %v1032 = vpack.c.b16 %v968, %v968
  %v1033 = vpack.c.b16 %v969, %v969
  %v1034 = vpack.c.b16 %v970, %v970
  %v1035 = vpack.c.b16 %v971, %v971
  %v1036 = vpack.c.b16 %v972, %v972
  %v1037 = vpack.c.b16 %v973, %v973
  %v1038 = vpack.c.b16 %v974, %v974
  %v1039 = vpack.c.b16 %v975, %v975
  %v1040 = vpack.c.b16 %v976, %v976
  %v1041 = vpack.c.b16 %v977, %v977
  %vm1106 = vcmask 125952
  %1107 = vst.msk [vmem:[%s4] sm:$0xf] %vm1106, %v978
  %1108 = vst.msk [vmem:[%s4 + $0x4] sm:$0xf] %vm1106, %v979
  %1109 = vst.msk [vmem:[%s4 + $0x8] sm:$0xf] %vm1106, %v980
  %1110 = vst.msk [vmem:[%s4 + $0xc] sm:$0xf] %vm1106, %v981
  %1111 = vst.msk [vmem:[%s4 + $0x10] sm:$0xf] %vm1106, %v982
  %1112 = vst.msk [vmem:[%s4 + $0x14] sm:$0xf] %vm1106, %v983
  %1113 = vst.msk [vmem:[%s4 + $0x18] sm:$0xf] %vm1106, %v984
  %1114 = vst.msk [vmem:[%s4 + $0x1c] sm:$0xf] %vm1106, %v985
  %1115 = vst.msk [vmem:[%s4 + $0x20] sm:$0xf] %vm1106, %v986
  %1116 = vst.msk [vmem:[%s4 + $0x24] sm:$0xf] %vm1106, %v987
  %1117 = vst.msk [vmem:[%s4 + $0x28] sm:$0xf] %vm1106, %v988
  %1118 = vst.msk [vmem:[%s4 + $0x2c] sm:$0xf] %vm1106, %v989
  %1119 = vst.msk [vmem:[%s4 + $0x30] sm:$0xf] %vm1106, %v990
  %1120 = vst.msk [vmem:[%s4 + $0x34] sm:$0xf] %vm1106, %v991
  %1121 = vst.msk [vmem:[%s4 + $0x38] sm:$0xf] %vm1106, %v992
  %1122 = vst.msk [vmem:[%s4 + $0x3c] sm:$0xf] %vm1106, %v993
  %1123 = vst.msk [vmem:[%s4 + $0x40] sm:$0xf] %vm1106, %v994
  %1124 = vst.msk [vmem:[%s4 + $0x44] sm:$0xf] %vm1106, %v995
  %1125 = vst.msk [vmem:[%s4 + $0x48] sm:$0xf] %vm1106, %v996
  %1126 = vst.msk [vmem:[%s4 + $0x4c] sm:$0xf] %vm1106, %v997
  %1127 = vst.msk [vmem:[%s4 + $0x50] sm:$0xf] %vm1106, %v998
  %1128 = vst.msk [vmem:[%s4 + $0x54] sm:$0xf] %vm1106, %v999
  %1129 = vst.msk [vmem:[%s4 + $0x58] sm:$0xf] %vm1106, %v1000
  %1130 = vst.msk [vmem:[%s4 + $0x5c] sm:$0xf] %vm1106, %v1001
  %1131 = vst.msk [vmem:[%s4 + $0x60] sm:$0xf] %vm1106, %v1002
  %1132 = vst.msk [vmem:[%s4 + $0x64] sm:$0xf] %vm1106, %v1003
  %1133 = vst.msk [vmem:[%s4 + $0x68] sm:$0xf] %vm1106, %v1004
  %1134 = vst.msk [vmem:[%s4 + $0x6c] sm:$0xf] %vm1106, %v1005
  %1135 = vst.msk [vmem:[%s4 + $0x70] sm:$0xf] %vm1106, %v1006
  %1136 = vst.msk [vmem:[%s4 + $0x74] sm:$0xf] %vm1106, %v1007
  %1137 = vst.msk [vmem:[%s4 + $0x78] sm:$0xf] %vm1106, %v1008
  %1138 = vst.msk [vmem:[%s4 + $0x7c] sm:$0xf] %vm1106, %v1009
  %1139 = vst.msk [vmem:[%s4 + $0x80] sm:$0xf] %vm1106, %v1010
  %1140 = vst.msk [vmem:[%s4 + $0x84] sm:$0xf] %vm1106, %v1011
  %1141 = vst.msk [vmem:[%s4 + $0x88] sm:$0xf] %vm1106, %v1012
  %1142 = vst.msk [vmem:[%s4 + $0x8c] sm:$0xf] %vm1106, %v1013
  %1143 = vst.msk [vmem:[%s4 + $0x90] sm:$0xf] %vm1106, %v1014
  %1144 = vst.msk [vmem:[%s4 + $0x94] sm:$0xf] %vm1106, %v1015
  %1145 = vst.msk [vmem:[%s4 + $0x98] sm:$0xf] %vm1106, %v1016
  %1146 = vst.msk [vmem:[%s4 + $0x9c] sm:$0xf] %vm1106, %v1017
  %1147 = vst.msk [vmem:[%s4 + $0xa0] sm:$0xf] %vm1106, %v1018
  %1148 = vst.msk [vmem:[%s4 + $0xa4] sm:$0xf] %vm1106, %v1019
  %1149 = vst.msk [vmem:[%s4 + $0xa8] sm:$0xf] %vm1106, %v1020
  %1150 = vst.msk [vmem:[%s4 + $0xac] sm:$0xf] %vm1106, %v1021
  %1151 = vst.msk [vmem:[%s4 + $0xb0] sm:$0xf] %vm1106, %v1022
  %1152 = vst.msk [vmem:[%s4 + $0xb4] sm:$0xf] %vm1106, %v1023
  %1153 = vst.msk [vmem:[%s4 + $0xb8] sm:$0xf] %vm1106, %v1024
  %1154 = vst.msk [vmem:[%s4 + $0xbc] sm:$0xf] %vm1106, %v1025
  %1155 = vst.msk [vmem:[%s4 + $0xc0] sm:$0xf] %vm1106, %v1026
  %1156 = vst.msk [vmem:[%s4 + $0xc4] sm:$0xf] %vm1106, %v1027
  %1157 = vst.msk [vmem:[%s4 + $0xc8] sm:$0xf] %vm1106, %v1028
  %1158 = vst.msk [vmem:[%s4 + $0xcc] sm:$0xf] %vm1106, %v1029
  %1159 = vst.msk [vmem:[%s4 + $0xd0] sm:$0xf] %vm1106, %v1030
  %1160 = vst.msk [vmem:[%s4 + $0xd4] sm:$0xf] %vm1106, %v1031
  %1161 = vst.msk [vmem:[%s4 + $0xd8] sm:$0xf] %vm1106, %v1032
  %1162 = vst.msk [vmem:[%s4 + $0xdc] sm:$0xf] %vm1106, %v1033
  %1163 = vst.msk [vmem:[%s4 + $0xe0] sm:$0xf] %vm1106, %v1034
  %1164 = vst.msk [vmem:[%s4 + $0xe4] sm:$0xf] %vm1106, %v1035
  %1165 = vst.msk [vmem:[%s4 + $0xe8] sm:$0xf] %vm1106, %v1036
  %1166 = vst.msk [vmem:[%s4 + $0xec] sm:$0xf] %vm1106, %v1037
  %1167 = vst.msk [vmem:[%s4 + $0xf0] sm:$0xf] %vm1106, %v1038
  %1168 = vst.msk [vmem:[%s4 + $0xf4] sm:$0xf] %vm1106, %v1039
  %1169 = vst.msk [vmem:[%s4 + $0xf8] sm:$0xf] %vm1106, %v1040
  %1170 = vst.msk [vmem:[%s4 + $0xfc] sm:$0xf] %vm1106, %v1041
  // Predicated region
  $region18: #{osblock_forward.14} parent=0 // pred_check
    _
  $region19: #{osblock_forward.14} parent=0 // pred_check_branch
    %1172 = sbr.rel (0) target = $region21
  $region20: #{osblock_forward.14} parent=0 // pred_region
    _
  $region21: #{osblock_forward.14} parent=0 // pred_fallthru
    _
  // Predicated region
  $region22: #{osblock_forward.14} parent=0 // pred_check
    _
  $region23: #{osblock_forward.14} parent=0 // pred_check_branch
    %1174 = sbr.rel (0) target = $region25
  $region24: #{osblock_forward.14} parent=0 // pred_region
    _
  $region25: #{osblock_forward.14} parent=0 // pred_fallthru
    _

// kernel: osblock_forward.21
$region0: #{osblock_forward.21}
  #allocation0 [shape = 'u32[]', space=smem, size = 0x4, offset = 0x4, fixed_abs, tag = 'smem constant byte address 0x4 - core index']
  #allocation1 [shape = 'u32[144,128]{1,0:T(1,128)}', space=vmem, size = 0x12000, scoped, tag = 'internal scratch']
  #allocation2 [shape = 'f32[18,18,16]{2,1,0:T(8,128)}', space=vmem, size = 0x36000, scoped, tag = 'scratch operand']
  %s0 = inlined_call_operand.vmem [shape: bf16[2,256,16], index: 0, kind: input, shape index: {}]
  %s1 = inlined_call_operand.vmem [shape: bf16[16,16], index: 1, kind: input, shape index: {}]
  %s2 = inlined_call_operand.vmem [shape: f32[9,16], index: 2, kind: input, shape index: {}]
  %s3 = inlined_call_operand.vmem [shape: f32[1,1,16], index: 3, kind: input, shape index: {}]
  %s4 = inlined_call_operand.vmem [shape: bf16[2,16,16,16], index: 4, kind: output, shape index: {0}]
  %s5 = inlined_call_operand.hbm [shape: f32[2,1,16], index: 5, kind: output, shape index: {1}]
  %6 = xla_tuple %s4, %s5
  %s7 = sld [smem:[#allocation0]]
  $region65: #{osblock_forward.21} parent=0
    _
  %s9 = ssub.s32 1, %s7
  %s10 = scalar_select 0, %s9, %s7
  $region1: #{osblock_forward.21} parent=0
    #allocation3 [shape = 'u8[1024]{0}', space=vmem, size = 0x400, scoped, tag = 'output window, operand 1']
    #allocation4 [shape = 's32[2]{0}', space=sflag, size = 0x8, scoped, tag = 'scoped memory for osblock_forward.21']
    %11 = vsyncpa [#allocation4], 0
    %s12 = scalar_lea.sflag [#allocation4], 1
    %13 = vsyncpa %s12, 0
    loop: start=0, step=1, limit=6
    $region2: #{osblock_forward.21} parent=1 // loop_pre_header
      _
    $region3: #{osblock_forward.21} parent=1 // loop_header
      %s15 = sphi 0, %s19
      %p16 = scmp.ge.s32.totalorder %s15, 6
      %s22 = sphi 0, %s34
      %s23 = sphi 0, %s30
      %s24 = sphi 0, %s22
      %s25 = sphi 0, %s23
      %s26 = sphi 0, %s24
      %s27 = sphi 0, %s25
      %s37 = sphi 0, %s39
      %s40 = sphi 0, %s37
      %s41 = sphi 0, %s40
      %s57 = sphi 0, %s41
      %s61 = sphi 0, %s61
      %s63 = sphi 0, %s61
      %s64 = sphi 0, %s63
      %s78 = sphi 0, %s64
      %s82 = sphi 0, %s82
      %s84 = sphi 0, %s82
      %s85 = sphi 0, %s84
      %s99 = sphi 0, %s85
      %s103 = sphi 0, %s103
      %s105 = sphi 0, %s103
      %s106 = sphi 0, %s105
      %s120 = sphi 0, %s106
      %s128 = sphi 0, %s130
      %s131 = sphi 0, %s128
      %s132 = sphi 0, %s131
      %s148 = sphi 0, %s132
      %s154 = sphi 0, %s156
      %s157 = sphi 0, %s154
      %s158 = sphi 0, %s157
      %s174 = sphi 0, %s158
    $region4: #{osblock_forward.21} parent=1 // loop_header_branch
      %18 = sbr.rel (%p16) target = $region8
    $region5: #{osblock_forward.21} parent=1 // loop_body
      %s20 = ssub.s32 %s15, 1
      %s21 = ssub.s32 %s15, 2
      %s28 = sadd.s32 1, %s23
      %p29 = scmp.ge.s32.totalorder %s28, 2
      %s30 = scalar_select %p29, 0, %s28
      %s31 = sadd.s32 1, %s22
      %s32 = scalar_select %p29, %s31, %s22
      %p33 = scmp.ge.s32.totalorder %s32, 2
      %s34 = scalar_select %p33, 0, %s32
      %s35 = ssub.s32 %s22, %s34
      %p36 = scmp.eq.s32.totalorder %s35, 0
      %s38 = sadd.s32 %s37, 1
      %s39 = scalar_select %p36, %s37, %s38
      %p42 = pneg %p36
      %p43 = scmp.eq.s32.totalorder %s15, 3
      %p44 = por %p42, %p43
      %p45 = scmp.ne.s32.totalorder %s37, %s40
      %p46 = scmp.eq.s32.totalorder %s15, 0
      %p47 = por %p45, %p46
      %p48 = scmp.ne.s32.totalorder %s37, %s40
      %p49 = scmp.eq.s32.totalorder %s20, 3
      %p50 = por %p48, %p49
      %p51 = scmp.ne.s32.totalorder %s40, %s41
      %p52 = scmp.eq.s32.totalorder %s20, 0
      %p53 = por %p51, %p52
      %p54 = scmp.ne.s32.totalorder %s40, %s41
      %p55 = scmp.eq.s32.totalorder %s21, 3
      %p56 = por %p54, %p55
      %p58 = scmp.ne.s32.totalorder %s41, %s57
      %p59 = scmp.eq.s32.totalorder %s21, 0
      %p60 = por %p58, %p59
      %s62 = sadd.s32 %s61, 1
      %p65 = scmp.eq.s32.totalorder %s15, 3
      %p66 = scmp.ne.s32.totalorder %s61, %s63
      %p67 = scmp.eq.s32.totalorder %s15, 0
      %p68 = por %p66, %p67
      %p69 = scmp.ne.s32.totalorder %s61, %s63
      %p70 = scmp.eq.s32.totalorder %s20, 3
      %p71 = por %p69, %p70
      %p72 = scmp.ne.s32.totalorder %s63, %s64
      %p73 = scmp.eq.s32.totalorder %s20, 0
      %p74 = por %p72, %p73
      %p75 = scmp.ne.s32.totalorder %s63, %s64
      %p76 = scmp.eq.s32.totalorder %s21, 3
      %p77 = por %p75, %p76
      %p79 = scmp.ne.s32.totalorder %s64, %s78
      %p80 = scmp.eq.s32.totalorder %s21, 0
      %p81 = por %p79, %p80
      %s83 = sadd.s32 %s82, 1
      %p86 = scmp.eq.s32.totalorder %s15, 3
      %p87 = scmp.ne.s32.totalorder %s82, %s84
      %p88 = scmp.eq.s32.totalorder %s15, 0
      %p89 = por %p87, %p88
      %p90 = scmp.ne.s32.totalorder %s82, %s84
      %p91 = scmp.eq.s32.totalorder %s20, 3
      %p92 = por %p90, %p91
      %p93 = scmp.ne.s32.totalorder %s84, %s85
      %p94 = scmp.eq.s32.totalorder %s20, 0
      %p95 = por %p93, %p94
      %p96 = scmp.ne.s32.totalorder %s84, %s85
      %p97 = scmp.eq.s32.totalorder %s21, 3
      %p98 = por %p96, %p97
      %p100 = scmp.ne.s32.totalorder %s85, %s99
      %p101 = scmp.eq.s32.totalorder %s21, 0
      %p102 = por %p100, %p101
      %s104 = sadd.s32 %s103, 1
      %p107 = scmp.eq.s32.totalorder %s15, 3
      %p108 = scmp.ne.s32.totalorder %s103, %s105
      %p109 = scmp.eq.s32.totalorder %s15, 0
      %p110 = por %p108, %p109
      %p111 = scmp.ne.s32.totalorder %s103, %s105
      %p112 = scmp.eq.s32.totalorder %s20, 3
      %p113 = por %p111, %p112
      %p114 = scmp.ne.s32.totalorder %s105, %s106
      %p115 = scmp.eq.s32.totalorder %s20, 0
      %p116 = por %p114, %p115
      %p117 = scmp.ne.s32.totalorder %s105, %s106
      %p118 = scmp.eq.s32.totalorder %s21, 3
      %p119 = por %p117, %p118
      %p121 = scmp.ne.s32.totalorder %s106, %s120
      %p122 = scmp.eq.s32.totalorder %s21, 0
      %p123 = por %p121, %p122
      %s124 = ssub.s32 %s22, %s34
      %s125 = ssub.s32 %s23, %s30
      %s126 = sor.u32 %s124, %s125
      %p127 = scmp.eq.s32.totalorder %s126, 0
      %s129 = sadd.s32 %s128, 1
      %s130 = scalar_select %p127, %s128, %s129
      %p133 = pneg %p127
      %p134 = scmp.eq.s32.totalorder %s15, 3
      %p135 = por %p133, %p134
      %p136 = scmp.ne.s32.totalorder %s128, %s131
      %p137 = scmp.eq.s32.totalorder %s15, 0
      %p138 = por %p136, %p137
      %p139 = scmp.ne.s32.totalorder %s128, %s131
      %p140 = scmp.eq.s32.totalorder %s20, 3
      %p141 = por %p139, %p140
      %p142 = scmp.ne.s32.totalorder %s131, %s132
      %p143 = scmp.eq.s32.totalorder %s20, 0
      %p144 = por %p142, %p143
      %p145 = scmp.ne.s32.totalorder %s131, %s132
      %p146 = scmp.eq.s32.totalorder %s21, 3
      %p147 = por %p145, %p146
      %p149 = scmp.ne.s32.totalorder %s132, %s148
      %p150 = scmp.eq.s32.totalorder %s21, 0
      %p151 = por %p149, %p150
      %s152 = ssub.s32 %s22, %s34
      %p153 = scmp.eq.s32.totalorder %s152, 0
      %s155 = sadd.s32 %s154, 1
      %s156 = scalar_select %p153, %s154, %s155
      %p159 = pneg %p153
      %p160 = scmp.eq.s32.totalorder %s15, 3
      %p161 = por %p159, %p160
      %p162 = scmp.ne.s32.totalorder %s154, %s157
      %p163 = scmp.eq.s32.totalorder %s15, 0
      %p164 = por %p162, %p163
      %p165 = scmp.ne.s32.totalorder %s154, %s157
      %p166 = scmp.eq.s32.totalorder %s20, 3
      %p167 = por %p165, %p166
      %p168 = scmp.ne.s32.totalorder %s157, %s158
      %p169 = scmp.eq.s32.totalorder %s20, 0
      %p170 = por %p168, %p169
      %p171 = scmp.ne.s32.totalorder %s157, %s158
      %p172 = scmp.eq.s32.totalorder %s21, 3
      %p173 = por %p171, %p172
      %p175 = scmp.ne.s32.totalorder %s158, %s174
      %p176 = scmp.eq.s32.totalorder %s21, 0
      %p177 = por %p175, %p176
      %p178 = scmp.le.s32.totalorder 1, %s15
      %p179 = scmp.lt.s32.totalorder %s15, 5
      %p180 = pnand %p178, %p179
      %p181 = pneg %p180
      // Predicated region
      $region9: #{osblock_forward.21} parent=5 // pred_check
        _
      $region10: #{osblock_forward.21} parent=5 // pred_check_branch
        %183 = sbr.rel (%p180) target = $region12
      $region11: #{osblock_forward.21} parent=5 // pred_region
        %s184 = ssub.s32 %s15, 1
        // Predicated region
        $region13: #{osblock_forward.21} parent=11 // pred_check
          %p185 = pneg %p74
        $region14: #{osblock_forward.21} parent=11 // pred_check_branch
          %187 = sbr.rel (%p185) target = $region16
        $region15: #{osblock_forward.21} parent=11 // pred_region
          _
        $region16: #{osblock_forward.21} parent=11 // pred_fallthru
          _
        // Predicated region
        $region17: #{osblock_forward.21} parent=11 // pred_check
          %p188 = pneg %p95
        $region18: #{osblock_forward.21} parent=11 // pred_check_branch
          %190 = sbr.rel (%p188) target = $region20
        $region19: #{osblock_forward.21} parent=11 // pred_region
          _
        $region20: #{osblock_forward.21} parent=11 // pred_fallthru
          _
        // Predicated region
        $region21: #{osblock_forward.21} parent=11 // pred_check
          %p191 = pneg %p116
        $region22: #{osblock_forward.21} parent=11 // pred_check_branch
          %193 = sbr.rel (%p191) target = $region24
        $region23: #{osblock_forward.21} parent=11 // pred_region
          _
        $region24: #{osblock_forward.21} parent=11 // pred_fallthru
          _
      $region12: #{osblock_forward.21} parent=5 // pred_fallthru
        _
      %p194 = scmp.lt.s32.totalorder %s15, 4
      // Predicated region
      $region25: #{osblock_forward.21} parent=5 // pred_check
        %p195 = pneg %p194
      $region26: #{osblock_forward.21} parent=5 // pred_check_branch
        %197 = sbr.rel (%p195) target = $region28
      $region27: #{osblock_forward.21} parent=5 // pred_region
        // Predicated region
        $region29: #{osblock_forward.21} parent=27 // pred_check
          %p198 = pneg %p47
        $region30: #{osblock_forward.21} parent=27 // pred_check_branch
          %200 = sbr.rel (%p198) target = $region32
        $region31: #{osblock_forward.21} parent=27 // pred_region
          %p201 = scmp.lt.s32.totalorder %s22, 1
          %s202 = scalar_select %p201, %s22, 1
          %s203 = smul.addr %s202, 32
          %s204 = smul.addr %s203, 4
          %s205 = scalar_lea.vmem %s0, %s204
        $region32: #{osblock_forward.21} parent=27 // pred_fallthru
          _
      $region28: #{osblock_forward.21} parent=5 // pred_fallthru
        _
      %p206 = scmp.le.s32.totalorder 1, %s15
      %p207 = scmp.lt.s32.totalorder %s15, 5
      %p208 = pnand %p206, %p207
      %p209 = pneg %p208
      // Predicated region
      $region33: #{osblock_forward.21} parent=5 // pred_check
        _
      $region34: #{osblock_forward.21} parent=5 // pred_check_branch
        %211 = sbr.rel (%p208) target = $region36
      $region35: #{osblock_forward.21} parent=5 // pred_region
        %s212 = ssub.s32 %s15, 1
        %p213 = scmp.lt.s32.totalorder %s24, 1
        %s214 = scalar_select %p213, %s24, 1
        %s215 = smul.addr %s214, 32
        %s216 = smul.addr %s215, 4
        %s217 = scalar_lea.vmem %s0, %s216
        %p218 = pneg %p53
        %p219 = pneg %p50
        %p220 = pneg %p74
        %p221 = pneg %p71
        %p222 = pneg %p95
        %p223 = pneg %p92
        %p224 = pneg %p116
        %p225 = pneg %p113
        %p226 = pneg %p144
        %p227 = pneg %p141
        %s228 = smul.u32 8, %s25
        %p229 = scmp.lt.s32.totalorder %s24, 1
        %s230 = scalar_select %p229, %s24, 1
        %p231 = scmp.lt.s32.totalorder %s228, 15
        %s232 = scalar_select %p231, %s228, 15
        %s233 = smul.addr %s232, 2
        %s234 = smul.addr %s230, 32
        %s235 = sadd.s32 %s233, %s234
        %s236 = smul.addr %s235, 4
        %s237 = scalar_lea.vmem %s4, %s236
        %p238 = pneg %p170
        %p239 = pneg %p167
        %s240 = sand.u32 %s157, 1
        %s241 = scalar_lea.sflag [#allocation4], %s240
        %s242 = sand.u32 %s157, 1
        %s243 = scalar_lea.vmem [#allocation3], %s242
        %p244 = scmp.lt.s32.totalorder %s24, 1
        %s245 = scalar_select %p244, %s24, 1
        %s246 = smul.addr %s245, 32
        %s247 = smul.addr %s246, 4
        %s248 = scalar_lea.vmem %s0, %s247
        %s249 = smul.u32 8, %s25
        %p250 = scmp.lt.s32.totalorder %s24, 1
        %s251 = scalar_select %p250, %s24, 1
        %p252 = scmp.lt.s32.totalorder %s249, 15
        %s253 = scalar_select %p252, %s249, 15
        %s254 = smul.addr %s253, 2
        %s255 = smul.addr %s251, 32
        %s256 = sadd.s32 %s254, %s255
        %s257 = smul.addr %s256, 4
        %s258 = scalar_lea.vmem %s4, %s257
        %s259 = smul.u32 8, %s25
        %p261 = scmp.eq.s32.totalorder %s25, 0
        // Predicated region
        $region37: #{osblock_forward.21} parent=35 // pred_check
          %p262 = pneg %p261
        $region38: #{osblock_forward.21} parent=35 // pred_check_branch
          %264 = sbr.rel (%p262) target = $region40
        $region39: #{osblock_forward.21} parent=35 // pred_region
          %vm265 = vcmask 130048
          %266 = vst.msk [vmem:[#allocation2] sm:$0xff] %vm265, 0.0
          %267 = vst.msk [vmem:[#allocation2 + $0x8] sm:$0xff] %vm265, 0.0
          %vm268 = vcmask 123904
          %269 = vst.msk [vmem:[#allocation2 + $0x10] sm:$0x3] %vm268, 0.0
          %270 = vst.msk [vmem:[#allocation2 + $0x18] sm:$0xff] %vm265, 0.0
          %271 = vst.msk [vmem:[#allocation2 + $0x20] sm:$0xff] %vm265, 0.0
          %272 = vst.msk [vmem:[#allocation2 + $0x28] sm:$0x3] %vm268, 0.0
          %273 = vst.msk [vmem:[#allocation2 + $0x30] sm:$0xff] %vm265, 0.0
          %274 = vst.msk [vmem:[#allocation2 + $0x38] sm:$0xff] %vm265, 0.0
          %275 = vst.msk [vmem:[#allocation2 + $0x40] sm:$0x3] %vm268, 0.0
          %276 = vst.msk [vmem:[#allocation2 + $0x48] sm:$0xff] %vm265, 0.0
          %277 = vst.msk [vmem:[#allocation2 + $0x50] sm:$0xff] %vm265, 0.0
          %278 = vst.msk [vmem:[#allocation2 + $0x58] sm:$0x3] %vm268, 0.0
          %279 = vst.msk [vmem:[#allocation2 + $0x60] sm:$0xff] %vm265, 0.0
          %280 = vst.msk [vmem:[#allocation2 + $0x68] sm:$0xff] %vm265, 0.0
          %281 = vst.msk [vmem:[#allocation2 + $0x70] sm:$0x3] %vm268, 0.0
          %282 = vst.msk [vmem:[#allocation2 + $0x78] sm:$0xff] %vm265, 0.0
          %283 = vst.msk [vmem:[#allocation2 + $0x80] sm:$0xff] %vm265, 0.0
          %284 = vst.msk [vmem:[#allocation2 + $0x88] sm:$0x3] %vm268, 0.0
          %285 = vst.msk [vmem:[#allocation2 + $0x90] sm:$0xff] %vm265, 0.0
          %286 = vst.msk [vmem:[#allocation2 + $0x98] sm:$0xff] %vm265, 0.0
          %287 = vst.msk [vmem:[#allocation2 + $0xa0] sm:$0x3] %vm268, 0.0
          %288 = vst.msk [vmem:[#allocation2 + $0xa8] sm:$0xff] %vm265, 0.0
          %289 = vst.msk [vmem:[#allocation2 + $0xb0] sm:$0xff] %vm265, 0.0
          %290 = vst.msk [vmem:[#allocation2 + $0xb8] sm:$0x3] %vm268, 0.0
          %291 = vst.msk [vmem:[#allocation2 + $0xc0] sm:$0xff] %vm265, 0.0
          %292 = vst.msk [vmem:[#allocation2 + $0xc8] sm:$0xff] %vm265, 0.0
          %293 = vst.msk [vmem:[#allocation2 + $0xd0] sm:$0x3] %vm268, 0.0
          %294 = vst.msk [vmem:[#allocation2 + $0xd8] sm:$0xff] %vm265, 0.0
          %295 = vst.msk [vmem:[#allocation2 + $0xe0] sm:$0xff] %vm265, 0.0
          %296 = vst.msk [vmem:[#allocation2 + $0xe8] sm:$0x3] %vm268, 0.0
          %297 = vst.msk [vmem:[#allocation2 + $0xf0] sm:$0xff] %vm265, 0.0
          %298 = vst.msk [vmem:[#allocation2 + $0xf8] sm:$0xff] %vm265, 0.0
          %299 = vst.msk [vmem:[#allocation2 + $0x100] sm:$0x3] %vm268, 0.0
          %300 = vst.msk [vmem:[#allocation2 + $0x108] sm:$0xff] %vm265, 0.0
          %301 = vst.msk [vmem:[#allocation2 + $0x110] sm:$0xff] %vm265, 0.0
          %302 = vst.msk [vmem:[#allocation2 + $0x118] sm:$0x3] %vm268, 0.0
          %303 = vst.msk [vmem:[#allocation2 + $0x120] sm:$0xff] %vm265, 0.0
          %304 = vst.msk [vmem:[#allocation2 + $0x128] sm:$0xff] %vm265, 0.0
          %305 = vst.msk [vmem:[#allocation2 + $0x130] sm:$0x3] %vm268, 0.0
          %306 = vst.msk [vmem:[#allocation2 + $0x138] sm:$0xff] %vm265, 0.0
          %307 = vst.msk [vmem:[#allocation2 + $0x140] sm:$0xff] %vm265, 0.0
          %308 = vst.msk [vmem:[#allocation2 + $0x148] sm:$0x3] %vm268, 0.0
          %309 = vst.msk [vmem:[#allocation2 + $0x150] sm:$0xff] %vm265, 0.0
          %310 = vst.msk [vmem:[#allocation2 + $0x158] sm:$0xff] %vm265, 0.0
          %311 = vst.msk [vmem:[#allocation2 + $0x160] sm:$0x3] %vm268, 0.0
          %312 = vst.msk [vmem:[#allocation2 + $0x168] sm:$0xff] %vm265, 0.0
          %313 = vst.msk [vmem:[#allocation2 + $0x170] sm:$0xff] %vm265, 0.0
          %314 = vst.msk [vmem:[#allocation2 + $0x178] sm:$0x3] %vm268, 0.0
          %315 = vst.msk [vmem:[#allocation2 + $0x180] sm:$0xff] %vm265, 0.0
          %316 = vst.msk [vmem:[#allocation2 + $0x188] sm:$0xff] %vm265, 0.0
          %317 = vst.msk [vmem:[#allocation2 + $0x190] sm:$0x3] %vm268, 0.0
          %318 = vst.msk [vmem:[#allocation2 + $0x198] sm:$0xff] %vm265, 0.0
          %319 = vst.msk [vmem:[#allocation2 + $0x1a0] sm:$0xff] %vm265, 0.0
          %320 = vst.msk [vmem:[#allocation2 + $0x1a8] sm:$0x3] %vm268, 0.0
          %v321 = vld [vmem:[%s1] sm:$0xf]
          %v322 = vld [vmem:[%s1 + $0x4] sm:$0xf]
          %v323 = vld [vmem:[%s248] sm:$0xf]
          %v324 = vld [vmem:[%s248 + $0x4] sm:$0xf]
          %v325 = vld [vmem:[%s248 + $0x8] sm:$0xf]
          %v326 = vld [vmem:[%s248 + $0xc] sm:$0xf]
          %v327 = vld [vmem:[%s248 + $0x10] sm:$0xf]
          %v328 = vld [vmem:[%s248 + $0x14] sm:$0xf]
          %v329 = vld [vmem:[%s248 + $0x18] sm:$0xf]
          %v330 = vld [vmem:[%s248 + $0x1c] sm:$0xf]
          %v331 = vld [vmem:[%s248 + $0x20] sm:$0xf]
          %v332 = vld [vmem:[%s248 + $0x24] sm:$0xf]
          %v333 = vld [vmem:[%s248 + $0x28] sm:$0xf]
          %v334 = vld [vmem:[%s248 + $0x2c] sm:$0xf]
          %v335 = vld [vmem:[%s248 + $0x30] sm:$0xf]
          %v336 = vld [vmem:[%s248 + $0x34] sm:$0xf]
          %v337 = vld [vmem:[%s248 + $0x38] sm:$0xf]
          %v338 = vld [vmem:[%s248 + $0x3c] sm:$0xf]
          %v355 = vunpack.c.l.b16 %v323
          %v356 = vunpack.c.l.b16 %v324
          %v357 = vunpack.c.l.b16 %v325
          %v358 = vunpack.c.l.b16 %v326
          %v359 = vunpack.c.l.b16 %v327
          %v360 = vunpack.c.l.b16 %v328
          %v361 = vunpack.c.l.b16 %v329
          %v362 = vunpack.c.l.b16 %v330
          %v363 = vunpack.c.l.b16 %v331
          %v364 = vunpack.c.l.b16 %v332
          %v365 = vunpack.c.l.b16 %v333
          %v366 = vunpack.c.l.b16 %v334
          %v367 = vunpack.c.l.b16 %v335
          %v368 = vunpack.c.l.b16 %v336
          %v369 = vunpack.c.l.b16 %v337
          %v370 = vunpack.c.l.b16 %v338
          %v371 = vpack.c.b16 %v356, %v355
          %v372 = vpack.c.b16 %v358, %v357
          %v373 = vpack.c.b16 %v360, %v359
          %v374 = vpack.c.b16 %v362, %v361
          %v375 = vpack.c.b16 %v364, %v363
          %v376 = vpack.c.b16 %v366, %v365
          %v377 = vpack.c.b16 %v368, %v367
          %v378 = vpack.c.b16 %v370, %v369
          %v381 = vunpack.c.l.b16 %v321
          %v382 = vunpack.c.l.b16 %v322
          %v383 = vpack.c.b16 %v382, %v381
          %v386 = vsel %vm265, %v371, 0
          %v389 = vsel %vm265, %v372, 0
          %v392 = vsel %vm265, %v373, 0
          %v395 = vsel %vm265, %v374, 0
          %v398 = vsel %vm265, %v375, 0
          %v401 = vsel %vm265, %v376, 0
          %v404 = vsel %vm265, %v377, 0
          %v407 = vsel %vm265, %v378, 0
          %409 = vmatprep.subr.bf16.mxu0 0
          %410 = vmatpush1.bf16.msra.mxu0 %v383
          %411 = vmatprep.subr.bf16.mxu0 0
          %412 = vmatpush1.bf16.msra.mxu0 0
          %413 = vmatprep.subr.bf16.mxu0 0
          %414 = vmatpush1.bf16.msra.mxu0 0
          %415 = vmatprep.subr.bf16.mxu0 0
          %416 = vmatpush1.bf16.msra.mxu0 0
          %417 = vmatprep.subr.bf16.mxu0 0
          %418 = vmatpush1.bf16.msra.mxu0 0
          %419 = vmatprep.subr.bf16.mxu0 0
          %420 = vmatpush1.bf16.msra.mxu0 0
          %421 = vmatprep.subr.bf16.mxu0 0
          %422 = vmatpush1.bf16.msra.mxu0 0
          %423 = vmatprep.subr.bf16.mxu0 0
          %424 = vmatpush1.bf16.msra.mxu0 0
          %425 = vmatprep.subr.bf16.mxu0 0
          %426 = vmatpush1.bf16.msra.mxu0 0
          %427 = vmatprep.subr.bf16.mxu0 0
          %428 = vmatpush1.bf16.msra.mxu0 0
          %429 = vmatprep.subr.bf16.mxu0 0
          %430 = vmatpush1.bf16.msra.mxu0 0
          %431 = vmatprep.subr.bf16.mxu0 0
          %432 = vmatpush1.bf16.msra.mxu0 0
          %433 = vmatprep.subr.bf16.mxu0 0
          %434 = vmatpush1.bf16.msra.mxu0 0
          %435 = vmatprep.subr.bf16.mxu0 0
          %436 = vmatpush1.bf16.msra.mxu0 0
          %437 = vmatprep.subr.bf16.mxu0 0
          %438 = vmatpush1.bf16.msra.mxu0 0
          %439 = vmatprep.subr.bf16.mxu0 0
          %440 = vmatpush1.bf16.msra.mxu0 0
          %441 = vmatprep.mubr.bf16.mxu0 0
          %442 = vmatmul.mubr.bf16.gmra.mrb[0].mxu0 %v386
          %v443 = vpop.f32.mrb[0].mxu0
          %v444 = vadd.f32 0.0, %v443
          %v445 = vpop.f32.mrb[0].mxu0
          %v446 = vpop.f32.mrb[0].mxu0
          %v447 = vadd.f32 0.0, %v446
          %v448 = vpop.f32.mrb[0].mxu0
          %449 = vmatprep.mubr.bf16.mxu0 0
          %450 = vmatmul.mubr.bf16.gmra.mrb[0].mxu0 %v389
          %v451 = vpop.f32.mrb[0].mxu0
          %v452 = vadd.f32 0.0, %v451
          %v453 = vpop.f32.mrb[0].mxu0
          %v454 = vpop.f32.mrb[0].mxu0
          %v455 = vadd.f32 0.0, %v454
          %v456 = vpop.f32.mrb[0].mxu0
          %457 = vmatprep.mubr.bf16.mxu0 0
          %458 = vmatmul.mubr.bf16.gmra.mrb[0].mxu0 %v392
          %v459 = vpop.f32.mrb[0].mxu0
          %v460 = vadd.f32 0.0, %v459
          %v461 = vpop.f32.mrb[0].mxu0
          %v462 = vpop.f32.mrb[0].mxu0
          %v463 = vadd.f32 0.0, %v462
          %v464 = vpop.f32.mrb[0].mxu0
          %465 = vmatprep.mubr.bf16.mxu0 0
          %466 = vmatmul.mubr.bf16.gmra.mrb[0].mxu0 %v395
          %v467 = vpop.f32.mrb[0].mxu0
          %v468 = vadd.f32 0.0, %v467
          %v469 = vpop.f32.mrb[0].mxu0
          %v470 = vpop.f32.mrb[0].mxu0
          %v471 = vadd.f32 0.0, %v470
          %v472 = vpop.f32.mrb[0].mxu0
          %473 = vmatprep.mubr.bf16.mxu0 0
          %474 = vmatmul.mubr.bf16.gmra.mrb[0].mxu0 %v398
          %v475 = vpop.f32.mrb[0].mxu0
          %v476 = vadd.f32 0.0, %v475
          %v477 = vpop.f32.mrb[0].mxu0
          %v478 = vpop.f32.mrb[0].mxu0
          %v479 = vadd.f32 0.0, %v478
          %v480 = vpop.f32.mrb[0].mxu0
          %481 = vmatprep.mubr.bf16.mxu0 0
          %482 = vmatmul.mubr.bf16.gmra.mrb[0].mxu0 %v401
          %v483 = vpop.f32.mrb[0].mxu0
          %v484 = vadd.f32 0.0, %v483
          %v485 = vpop.f32.mrb[0].mxu0
          %v486 = vpop.f32.mrb[0].mxu0
          %v487 = vadd.f32 0.0, %v486
          %v488 = vpop.f32.mrb[0].mxu0
          %489 = vmatprep.mubr.bf16.mxu0 0
          %490 = vmatmul.mubr.bf16.gmra.mrb[0].mxu0 %v404
          %v491 = vpop.f32.mrb[0].mxu0
          %v492 = vadd.f32 0.0, %v491
          %v493 = vpop.f32.mrb[0].mxu0
          %v494 = vpop.f32.mrb[0].mxu0
          %v495 = vadd.f32 0.0, %v494
          %v496 = vpop.f32.mrb[0].mxu0
          %497 = vmatprep.mubr.bf16.mxu0 0
          %498 = vmatmul.mubr.bf16.gmra.mrb[0].mxu0 %v407
          %v499 = vpop.f32.mrb[0].mxu0
          %v500 = vadd.f32 0.0, %v499
          %v501 = vpop.f32.mrb[0].mxu0
          %v502 = vpop.f32.mrb[0].mxu0
          %v503 = vadd.f32 0.0, %v502
          %v504 = vpop.f32.mrb[0].mxu0
          %505 = vdwg.mxu0
          %s506 = scalar_lea.vmem [#allocation2], 24
          %507 = vst.msk [vmem:[%s506 + $0x1] sm:$0xff] %vm265, %v444
          %508 = vst.msk [vmem:[%s506 + $0x9] sm:$0xff] %vm265, %v447
          %509 = vst.msk [vmem:[%s506 + $0x19] sm:$0xff] %vm265, %v452
          %510 = vst.msk [vmem:[%s506 + $0x21] sm:$0xff] %vm265, %v455
          %511 = vst.msk [vmem:[%s506 + $0x31] sm:$0xff] %vm265, %v460
          %512 = vst.msk [vmem:[%s506 + $0x39] sm:$0xff] %vm265, %v463
          %513 = vst.msk [vmem:[%s506 + $0x49] sm:$0xff] %vm265, %v468
          %514 = vst.msk [vmem:[%s506 + $0x51] sm:$0xff] %vm265, %v471
          %515 = vst.msk [vmem:[%s506 + $0x61] sm:$0xff] %vm265, %v476
          %516 = vst.msk [vmem:[%s506 + $0x69] sm:$0xff] %vm265, %v479
          %517 = vst.msk [vmem:[%s506 + $0x79] sm:$0xff] %vm265, %v484
          %518 = vst.msk [vmem:[%s506 + $0x81] sm:$0xff] %vm265, %v487
          %519 = vst.msk [vmem:[%s506 + $0x91] sm:$0xff] %vm265, %v492
          %520 = vst.msk [vmem:[%s506 + $0x99] sm:$0xff] %vm265, %v495
          %521 = vst.msk [vmem:[%s506 + $0xa9] sm:$0xff] %vm265, %v500
          %522 = vst.msk [vmem:[%s506 + $0xb1] sm:$0xff] %vm265, %v503
          %v523 = vld [vmem:[%s248 + $0x40] sm:$0xf]
          %v524 = vld [vmem:[%s248 + $0x44] sm:$0xf]
          %v525 = vld [vmem:[%s248 + $0x48] sm:$0xf]
          %v526 = vld [vmem:[%s248 + $0x4c] sm:$0xf]
          %v527 = vld [vmem:[%s248 + $0x50] sm:$0xf]
          %v528 = vld [vmem:[%s248 + $0x54] sm:$0xf]
          %v529 = vld [vmem:[%s248 + $0x58] sm:$0xf]
          %v530 = vld [vmem:[%s248 + $0x5c] sm:$0xf]
          %v531 = vld [vmem:[%s248 + $0x60] sm:$0xf]
          %v532 = vld [vmem:[%s248 + $0x64] sm:$0xf]
          %v533 = vld [vmem:[%s248 + $0x68] sm:$0xf]
          %v534 = vld [vmem:[%s248 + $0x6c] sm:$0xf]
          %v535 = vld [vmem:[%s248 + $0x70] sm:$0xf]
          %v536 = vld [vmem:[%s248 + $0x74] sm:$0xf]
          %v537 = vld [vmem:[%s248 + $0x78] sm:$0xf]
          %v538 = vld [vmem:[%s248 + $0x7c] sm:$0xf]
          %v555 = vunpack.c.l.b16 %v523
          %v556 = vunpack.c.l.b16 %v524
          %v557 = vunpack.c.l.b16 %v525
          %v558 = vunpack.c.l.b16 %v526
          %v559 = vunpack.c.l.b16 %v527
          %v560 = vunpack.c.l.b16 %v528
          %v561 = vunpack.c.l.b16 %v529
          %v562 = vunpack.c.l.b16 %v530
          %v563 = vunpack.c.l.b16 %v531
          %v564 = vunpack.c.l.b16 %v532
          %v565 = vunpack.c.l.b16 %v533
          %v566 = vunpack.c.l.b16 %v534
          %v567 = vunpack.c.l.b16 %v535
          %v568 = vunpack.c.l.b16 %v536
          %v569 = vunpack.c.l.b16 %v537
          %v570 = vunpack.c.l.b16 %v538
          %v571 = vpack.c.b16 %v556, %v555
          %v572 = vpack.c.b16 %v558, %v557
          %v573 = vpack.c.b16 %v560, %v559
          %v574 = vpack.c.b16 %v562, %v561
          %v575 = vpack.c.b16 %v564, %v563
          %v576 = vpack.c.b16 %v566, %v565
          %v577 = vpack.c.b16 %v568, %v567
          %v578 = vpack.c.b16 %v570, %v569
          %v580 = vsel %vm265, %v571, 0
          %v583 = vsel %vm265, %v572, 0
          %v586 = vsel %vm265, %v573, 0
          %v589 = vsel %vm265, %v574, 0
          %v592 = vsel %vm265, %v575, 0
          %v595 = vsel %vm265, %v576, 0
          %v598 = vsel %vm265, %v577, 0
          %v601 = vsel %vm265, %v578, 0
          %603 = vmatprep.subr.bf16.mxu0 0
          %604 = vmatpush1.bf16.msra.mxu0 %v383
          %605 = vmatprep.subr.bf16.mxu0 0
          %606 = vmatpush1.bf16.msra.mxu0 0
          %607 = vmatprep.subr.bf16.mxu0 0
          %608 = vmatpush1.bf16.msra.mxu0 0
          %609 = vmatprep.subr.bf16.mxu0 0
          %610 = vmatpush1.bf16.msra.mxu0 0
          %611 = vmatprep.subr.bf16.mxu0 0
          %612 = vmatpush1.bf16.msra.mxu0 0
          %613 = vmatprep.subr.bf16.mxu0 0
          %614 = vmatpush1.bf16.msra.mxu0 0
          %615 = vmatprep.subr.bf16.mxu0 0
          %616 = vmatpush1.bf16.msra.mxu0 0
          %617 = vmatprep.subr.bf16.mxu0 0
          %618 = vmatpush1.bf16.msra.mxu0 0
          %619 = vmatprep.subr.bf16.mxu0 0
          %620 = vmatpush1.bf16.msra.mxu0 0
          %621 = vmatprep.subr.bf16.mxu0 0
          %622 = vmatpush1.bf16.msra.mxu0 0
          %623 = vmatprep.subr.bf16.mxu0 0
          %624 = vmatpush1.bf16.msra.mxu0 0
          %625 = vmatprep.subr.bf16.mxu0 0
          %626 = vmatpush1.bf16.msra.mxu0 0
          %627 = vmatprep.subr.bf16.mxu0 0
          %628 = vmatpush1.bf16.msra.mxu0 0
          %629 = vmatprep.subr.bf16.mxu0 0
          %630 = vmatpush1.bf16.msra.mxu0 0
          %631 = vmatprep.subr.bf16.mxu0 0
          %632 = vmatpush1.bf16.msra.mxu0 0
          %633 = vmatprep.subr.bf16.mxu0 0
          %634 = vmatpush1.bf16.msra.mxu0 0
          %635 = vmatprep.mubr.bf16.mxu0 0
          %636 = vmatmul.mubr.bf16.gmra.mrb[0].mxu0 %v580
          %v637 = vpop.f32.mrb[0].mxu0
          %v638 = vadd.f32 0.0, %v637
          %v639 = vpop.f32.mrb[0].mxu0
          %v640 = vpop.f32.mrb[0].mxu0
          %v641 = vadd.f32 0.0, %v640
          %v642 = vpop.f32.mrb[0].mxu0
          %643 = vmatprep.mubr.bf16.mxu0 0
          %644 = vmatmul.mubr.bf16.gmra.mrb[0].mxu0 %v583
          %v645 = vpop.f32.mrb[0].mxu0
          %v646 = vadd.f32 0.0, %v645
          %v647 = vpop.f32.mrb[0].mxu0
          %v648 = vpop.f32.mrb[0].mxu0
          %v649 = vadd.f32 0.0, %v648
          %v650 = vpop.f32.mrb[0].mxu0
          %651 = vmatprep.mubr.bf16.mxu0 0
          %652 = vmatmul.mubr.bf16.gmra.mrb[0].mxu0 %v586
          %v653 = vpop.f32.mrb[0].mxu0
          %v654 = vadd.f32 0.0, %v653
          %v655 = vpop.f32.mrb[0].mxu0
          %v656 = vpop.f32.mrb[0].mxu0
          %v657 = vadd.f32 0.0, %v656
          %v658 = vpop.f32.mrb[0].mxu0
          %659 = vmatprep.mubr.bf16.mxu0 0
          %660 = vmatmul.mubr.bf16.gmra.mrb[0].mxu0 %v589
          %v661 = vpop.f32.mrb[0].mxu0
          %v662 = vadd.f32 0.0, %v661
          %v663 = vpop.f32.mrb[0].mxu0
          %v664 = vpop.f32.mrb[0].mxu0
          %v665 = vadd.f32 0.0, %v664
          %v666 = vpop.f32.mrb[0].mxu0
          %667 = vmatprep.mubr.bf16.mxu0 0
          %668 = vmatmul.mubr.bf16.gmra.mrb[0].mxu0 %v592
          %v669 = vpop.f32.mrb[0].mxu0
          %v670 = vadd.f32 0.0, %v669
          %v671 = vpop.f32.mrb[0].mxu0
          %v672 = vpop.f32.mrb[0].mxu0
          %v673 = vadd.f32 0.0, %v672
          %v674 = vpop.f32.mrb[0].mxu0
          %675 = vmatprep.mubr.bf16.mxu0 0
          %676 = vmatmul.mubr.bf16.gmra.mrb[0].mxu0 %v595
          %v677 = vpop.f32.mrb[0].mxu0
          %v678 = vadd.f32 0.0, %v677
          %v679 = vpop.f32.mrb[0].mxu0
          %v680 = vpop.f32.mrb[0].mxu0
          %v681 = vadd.f32 0.0, %v680
          %v682 = vpop.f32.mrb[0].mxu0
          %683 = vmatprep.mubr.bf16.mxu0 0
          %684 = vmatmul.mubr.bf16.gmra.mrb[0].mxu0 %v598
          %v685 = vpop.f32.mrb[0].mxu0
          %v686 = vadd.f32 0.0, %v685
          %v687 = vpop.f32.mrb[0].mxu0
          %v688 = vpop.f32.mrb[0].mxu0
          %v689 = vadd.f32 0.0, %v688
          %v690 = vpop.f32.mrb[0].mxu0
          %691 = vmatprep.mubr.bf16.mxu0 0
          %692 = vmatmul.mubr.bf16.gmra.mrb[0].mxu0 %v601
          %v693 = vpop.f32.mrb[0].mxu0
          %v694 = vadd.f32 0.0, %v693
          %v695 = vpop.f32.mrb[0].mxu0
          %v696 = vpop.f32.mrb[0].mxu0
          %v697 = vadd.f32 0.0, %v696
          %v698 = vpop.f32.mrb[0].mxu0
          %699 = vdwg.mxu0
          %s700 = scalar_lea.vmem [#allocation2], 216
          %701 = vst.msk [vmem:[%s700 + $0x1] sm:$0xff] %vm265, %v638
          %702 = vst.msk [vmem:[%s700 + $0x9] sm:$0xff] %vm265, %v641
          %703 = vst.msk [vmem:[%s700 + $0x19] sm:$0xff] %vm265, %v646
          %704 = vst.msk [vmem:[%s700 + $0x21] sm:$0xff] %vm265, %v649
          %705 = vst.msk [vmem:[%s700 + $0x31] sm:$0xff] %vm265, %v654
          %706 = vst.msk [vmem:[%s700 + $0x39] sm:$0xff] %vm265, %v657
          %707 = vst.msk [vmem:[%s700 + $0x49] sm:$0xff] %vm265, %v662
          %708 = vst.msk [vmem:[%s700 + $0x51] sm:$0xff] %vm265, %v665
          %709 = vst.msk [vmem:[%s700 + $0x61] sm:$0xff] %vm265, %v670
          %710 = vst.msk [vmem:[%s700 + $0x69] sm:$0xff] %vm265, %v673
          %711 = vst.msk [vmem:[%s700 + $0x79] sm:$0xff] %vm265, %v678
          %712 = vst.msk [vmem:[%s700 + $0x81] sm:$0xff] %vm265, %v681
          %713 = vst.msk [vmem:[%s700 + $0x91] sm:$0xff] %vm265, %v686
          %714 = vst.msk [vmem:[%s700 + $0x99] sm:$0xff] %vm265, %v689
          %715 = vst.msk [vmem:[%s700 + $0xa9] sm:$0xff] %vm265, %v694
          %716 = vst.msk [vmem:[%s700 + $0xb1] sm:$0xff] %vm265, %v697
        $region40: #{osblock_forward.21} parent=35 // pred_fallthru
          _
        %s717 = smul.u32 %s25, 8
        %s718 = smul.u32 %s717, 24
        %s719 = scalar_lea.vmem [#allocation2], %s718
        %v720 = vld [vmem:[%s719] sm:$0xff]
        %v721 = vld [vmem:[%s719 + $0x8] sm:$0xff]
        %v722 = vld [vmem:[%s719 + $0x18] sm:$0xff]
        %v723 = vld [vmem:[%s719 + $0x20] sm:$0xff]
        %v724 = vld [vmem:[%s719 + $0x30] sm:$0xff]
        %v725 = vld [vmem:[%s719 + $0x38] sm:$0xff]
        %v726 = vld [vmem:[%s719 + $0x48] sm:$0xff]
        %v727 = vld [vmem:[%s719 + $0x50] sm:$0xff]
        %v728 = vld [vmem:[%s719 + $0x60] sm:$0xff]
        %v729 = vld [vmem:[%s719 + $0x68] sm:$0xff]
        %v730 = vld [vmem:[%s719 + $0x78] sm:$0xff]
        %v731 = vld [vmem:[%s719 + $0x80] sm:$0xff]
        %v732 = vld [vmem:[%s719 + $0x90] sm:$0xff]
        %v733 = vld [vmem:[%s719 + $0x98] sm:$0xff]
        %v734 = vld [vmem:[%s719 + $0xa8] sm:$0xff]
        %v735 = vld [vmem:[%s719 + $0xb0] sm:$0xff]
        %v736 = vld [vmem:[%s2] sm:$0x1]
        %v737 = vlaneseq
        %v738 = vshrl.u32 %v737, 7
        %v739 = vsub.s32 0, %v738
        %v740 = vrot.slane %v736, %v739
        %v741 = vmul.f32 %v720, %v740
        %v742 = vmul.f32 %v721, %v740
        %v743 = vmul.f32 %v722, %v740
        %v744 = vmul.f32 %v723, %v740
        %v745 = vmul.f32 %v724, %v740
        %v746 = vmul.f32 %v725, %v740
        %v747 = vmul.f32 %v726, %v740
        %v748 = vmul.f32 %v727, %v740
        %v749 = vmul.f32 %v728, %v740
        %v750 = vmul.f32 %v729, %v740
        %v751 = vmul.f32 %v730, %v740
        %v752 = vmul.f32 %v731, %v740
        %v753 = vmul.f32 %v732, %v740
        %v754 = vmul.f32 %v733, %v740
        %v755 = vmul.f32 %v734, %v740
        %v756 = vmul.f32 %v735, %v740
        %v757 = vadd.f32 %v741, 0.0
        %v758 = vadd.f32 %v742, 0.0
        %v759 = vadd.f32 %v743, 0.0
        %v760 = vadd.f32 %v744, 0.0
        %v761 = vadd.f32 %v745, 0.0
        %v762 = vadd.f32 %v746, 0.0
        %v763 = vadd.f32 %v747, 0.0
        %v764 = vadd.f32 %v748, 0.0
        %v765 = vadd.f32 %v749, 0.0
        %v766 = vadd.f32 %v750, 0.0
        %v767 = vadd.f32 %v751, 0.0
        %v768 = vadd.f32 %v752, 0.0
        %v769 = vadd.f32 %v753, 0.0
        %v770 = vadd.f32 %v754, 0.0
        %v771 = vadd.f32 %v755, 0.0
        %v772 = vadd.f32 %v756, 0.0
        %v773 = vld [vmem:[%s719 + $0x1] sm:$0xff]
        %v774 = vld [vmem:[%s719 + $0x9] sm:$0xff]
        %v775 = vld [vmem:[%s719 + $0x19] sm:$0xff]
        %v776 = vld [vmem:[%s719 + $0x21] sm:$0xff]
        %v777 = vld [vmem:[%s719 + $0x31] sm:$0xff]
        %v778 = vld [vmem:[%s719 + $0x39] sm:$0xff]
        %v779 = vld [vmem:[%s719 + $0x49] sm:$0xff]
        %v780 = vld [vmem:[%s719 + $0x51] sm:$0xff]
        %v781 = vld [vmem:[%s719 + $0x61] sm:$0xff]
        %v782 = vld [vmem:[%s719 + $0x69] sm:$0xff]
        %v783 = vld [vmem:[%s719 + $0x79] sm:$0xff]
        %v784 = vld [vmem:[%s719 + $0x81] sm:$0xff]
        %v785 = vld [vmem:[%s719 + $0x91] sm:$0xff]
        %v786 = vld [vmem:[%s719 + $0x99] sm:$0xff]
        %v787 = vld [vmem:[%s719 + $0xa9] sm:$0xff]
        %v788 = vld [vmem:[%s719 + $0xb1] sm:$0xff]
        %v789 = vld [vmem:[%s2 + $0x1] sm:$0x1]
        %v790 = vlaneseq
        %v791 = vshrl.u32 %v790, 7
        %v792 = vsub.s32 0, %v791
        %v793 = vrot.slane %v789, %v792
        %v794 = vmul.f32 %v773, %v793
        %v795 = vmul.f32 %v774, %v793
        %v796 = vmul.f32 %v775, %v793
        %v797 = vmul.f32 %v776, %v793
        %v798 = vmul.f32 %v777, %v793
        %v799 = vmul.f32 %v778, %v793
        %v800 = vmul.f32 %v779, %v793
        %v801 = vmul.f32 %v780, %v793
        %v802 = vmul.f32 %v781, %v793
        %v803 = vmul.f32 %v782, %v793
        %v804 = vmul.f32 %v783, %v793
        %v805 = vmul.f32 %v784, %v793
        %v806 = vmul.f32 %v785, %v793
        %v807 = vmul.f32 %v786, %v793
        %v808 = vmul.f32 %v787, %v793
        %v809 = vmul.f32 %v788, %v793
        %v810 = vadd.f32 %v757, %v794
        %v811 = vadd.f32 %v758, %v795
        %v812 = vadd.f32 %v759, %v796
        %v813 = vadd.f32 %v760, %v797
        %v814 = vadd.f32 %v761, %v798
        %v815 = vadd.f32 %v762, %v799
        %v816 = vadd.f32 %v763, %v800
        %v817 = vadd.f32 %v764, %v801
        %v818 = vadd.f32 %v765, %v802
        %v819 = vadd.f32 %v766, %v803
        %v820 = vadd.f32 %v767, %v804
        %v821 = vadd.f32 %v768, %v805
        %v822 = vadd.f32 %v769, %v806
        %v823 = vadd.f32 %v770, %v807
        %v824 = vadd.f32 %v771, %v808
        %v825 = vadd.f32 %v772, %v809
        %v826 = vld [vmem:[%s719 + $0x2] sm:$0xff]
        %v827 = vld [vmem:[%s719 + $0xa] sm:$0xff]
        %v828 = vld [vmem:[%s719 + $0x1a] sm:$0xff]
        %v829 = vld [vmem:[%s719 + $0x22] sm:$0xff]
        %v830 = vld [vmem:[%s719 + $0x32] sm:$0xff]
        %v831 = vld [vmem:[%s719 + $0x3a] sm:$0xff]
        %v832 = vld [vmem:[%s719 + $0x4a] sm:$0xff]
        %v833 = vld [vmem:[%s719 + $0x52] sm:$0xff]
        %v834 = vld [vmem:[%s719 + $0x62] sm:$0xff]
        %v835 = vld [vmem:[%s719 + $0x6a] sm:$0xff]
        %v836 = vld [vmem:[%s719 + $0x7a] sm:$0xff]
        %v837 = vld [vmem:[%s719 + $0x82] sm:$0xff]
        %v838 = vld [vmem:[%s719 + $0x92] sm:$0xff]
        %v839 = vld [vmem:[%s719 + $0x9a] sm:$0xff]
        %v840 = vld [vmem:[%s719 + $0xaa] sm:$0xff]
        %v841 = vld [vmem:[%s719 + $0xb2] sm:$0xff]
        %v842 = vld [vmem:[%s2 + $0x2] sm:$0x1]
        %v843 = vlaneseq
        %v844 = vshrl.u32 %v843, 7
        %v845 = vsub.s32 0, %v844
        %v846 = vrot.slane %v842, %v845
        %v847 = vmul.f32 %v826, %v846
        %v848 = vmul.f32 %v827, %v846
        %v849 = vmul.f32 %v828, %v846
        %v850 = vmul.f32 %v829, %v846
        %v851 = vmul.f32 %v830, %v846
        %v852 = vmul.f32 %v831, %v846
        %v853 = vmul.f32 %v832, %v846
        %v854 = vmul.f32 %v833, %v846
        %v855 = vmul.f32 %v834, %v846
        %v856 = vmul.f32 %v835, %v846
        %v857 = vmul.f32 %v836, %v846
        %v858 = vmul.f32 %v837, %v846
        %v859 = vmul.f32 %v838, %v846
        %v860 = vmul.f32 %v839, %v846
        %v861 = vmul.f32 %v840, %v846
        %v862 = vmul.f32 %v841, %v846
        %v863 = vadd.f32 %v810, %v847
        %v864 = vadd.f32 %v811, %v848
        %v865 = vadd.f32 %v812, %v849
        %v866 = vadd.f32 %v813, %v850
        %v867 = vadd.f32 %v814, %v851
        %v868 = vadd.f32 %v815, %v852
        %v869 = vadd.f32 %v816, %v853
        %v870 = vadd.f32 %v817, %v854
        %v871 = vadd.f32 %v818, %v855
        %v872 = vadd.f32 %v819, %v856
        %v873 = vadd.f32 %v820, %v857
        %v874 = vadd.f32 %v821, %v858
        %v875 = vadd.f32 %v822, %v859
        %v876 = vadd.f32 %v823, %v860
        %v877 = vadd.f32 %v824, %v861
        %v878 = vadd.f32 %v825, %v862
        %s879 = sadd.s32 %s717, 1
        %s880 = smul.u32 %s879, 24
        %s881 = scalar_lea.vmem [#allocation2], %s880
        %v882 = vld [vmem:[%s881] sm:$0xff]
        %v883 = vld [vmem:[%s881 + $0x8] sm:$0xff]
        %v884 = vld [vmem:[%s881 + $0x18] sm:$0xff]
        %v885 = vld [vmem:[%s881 + $0x20] sm:$0xff]
        %v886 = vld [vmem:[%s881 + $0x30] sm:$0xff]
        %v887 = vld [vmem:[%s881 + $0x38] sm:$0xff]
        %v888 = vld [vmem:[%s881 + $0x48] sm:$0xff]
        %v889 = vld [vmem:[%s881 + $0x50] sm:$0xff]
        %v890 = vld [vmem:[%s881 + $0x60] sm:$0xff]
        %v891 = vld [vmem:[%s881 + $0x68] sm:$0xff]
        %v892 = vld [vmem:[%s881 + $0x78] sm:$0xff]
        %v893 = vld [vmem:[%s881 + $0x80] sm:$0xff]
        %v894 = vld [vmem:[%s881 + $0x90] sm:$0xff]
        %v895 = vld [vmem:[%s881 + $0x98] sm:$0xff]
        %v896 = vld [vmem:[%s881 + $0xa8] sm:$0xff]
        %v897 = vld [vmem:[%s881 + $0xb0] sm:$0xff]
        %v898 = vld [vmem:[%s2 + $0x3] sm:$0x1]
        %v899 = vlaneseq
        %v900 = vshrl.u32 %v899, 7
        %v901 = vsub.s32 0, %v900
        %v902 = vrot.slane %v898, %v901
        %v903 = vmul.f32 %v882, %v902
        %v904 = vmul.f32 %v883, %v902
        %v905 = vmul.f32 %v884, %v902
        %v906 = vmul.f32 %v885, %v902
        %v907 = vmul.f32 %v886, %v902
        %v908 = vmul.f32 %v887, %v902
        %v909 = vmul.f32 %v888, %v902
        %v910 = vmul.f32 %v889, %v902
        %v911 = vmul.f32 %v890, %v902
        %v912 = vmul.f32 %v891, %v902
        %v913 = vmul.f32 %v892, %v902
        %v914 = vmul.f32 %v893, %v902
        %v915 = vmul.f32 %v894, %v902
        %v916 = vmul.f32 %v895, %v902
        %v917 = vmul.f32 %v896, %v902
        %v918 = vmul.f32 %v897, %v902
        %v919 = vadd.f32 %v863, %v903
        %v920 = vadd.f32 %v864, %v904
        %v921 = vadd.f32 %v865, %v905
        %v922 = vadd.f32 %v866, %v906
        %v923 = vadd.f32 %v867, %v907
        %v924 = vadd.f32 %v868, %v908
        %v925 = vadd.f32 %v869, %v909
        %v926 = vadd.f32 %v870, %v910
        %v927 = vadd.f32 %v871, %v911
        %v928 = vadd.f32 %v872, %v912
        %v929 = vadd.f32 %v873, %v913
        %v930 = vadd.f32 %v874, %v914
        %v931 = vadd.f32 %v875, %v915
        %v932 = vadd.f32 %v876, %v916
        %v933 = vadd.f32 %v877, %v917
        %v934 = vadd.f32 %v878, %v918
        %v935 = vld [vmem:[%s881 + $0x1] sm:$0xff]
        %v936 = vld [vmem:[%s881 + $0x9] sm:$0xff]
        %v937 = vld [vmem:[%s881 + $0x19] sm:$0xff]
        %v938 = vld [vmem:[%s881 + $0x21] sm:$0xff]
        %v939 = vld [vmem:[%s881 + $0x31] sm:$0xff]
        %v940 = vld [vmem:[%s881 + $0x39] sm:$0xff]
        %v941 = vld [vmem:[%s881 + $0x49] sm:$0xff]
        %v942 = vld [vmem:[%s881 + $0x51] sm:$0xff]
        %v943 = vld [vmem:[%s881 + $0x61] sm:$0xff]
        %v944 = vld [vmem:[%s881 + $0x69] sm:$0xff]
        %v945 = vld [vmem:[%s881 + $0x79] sm:$0xff]
        %v946 = vld [vmem:[%s881 + $0x81] sm:$0xff]
        %v947 = vld [vmem:[%s881 + $0x91] sm:$0xff]
        %v948 = vld [vmem:[%s881 + $0x99] sm:$0xff]
        %v949 = vld [vmem:[%s881 + $0xa9] sm:$0xff]
        %v950 = vld [vmem:[%s881 + $0xb1] sm:$0xff]
        %v951 = vld [vmem:[%s2 + $0x4] sm:$0x1]
        %v952 = vlaneseq
        %v953 = vshrl.u32 %v952, 7
        %v954 = vsub.s32 0, %v953
        %v955 = vrot.slane %v951, %v954
        %v956 = vmul.f32 %v935, %v955
        %v957 = vmul.f32 %v936, %v955
        %v958 = vmul.f32 %v937, %v955
        %v959 = vmul.f32 %v938, %v955
        %v960 = vmul.f32 %v939, %v955
        %v961 = vmul.f32 %v940, %v955
        %v962 = vmul.f32 %v941, %v955
        %v963 = vmul.f32 %v942, %v955
        %v964 = vmul.f32 %v943, %v955
        %v965 = vmul.f32 %v944, %v955
        %v966 = vmul.f32 %v945, %v955
        %v967 = vmul.f32 %v946, %v955
        %v968 = vmul.f32 %v947, %v955
        %v969 = vmul.f32 %v948, %v955
        %v970 = vmul.f32 %v949, %v955
        %v971 = vmul.f32 %v950, %v955
        %v972 = vadd.f32 %v919, %v956
        %v973 = vadd.f32 %v920, %v957
        %v974 = vadd.f32 %v921, %v958
        %v975 = vadd.f32 %v922, %v959
        %v976 = vadd.f32 %v923, %v960
        %v977 = vadd.f32 %v924, %v961
        %v978 = vadd.f32 %v925, %v962
        %v979 = vadd.f32 %v926, %v963
        %v980 = vadd.f32 %v927, %v964
        %v981 = vadd.f32 %v928, %v965
        %v982 = vadd.f32 %v929, %v966
        %v983 = vadd.f32 %v930, %v967
        %v984 = vadd.f32 %v931, %v968
        %v985 = vadd.f32 %v932, %v969
        %v986 = vadd.f32 %v933, %v970
        %v987 = vadd.f32 %v934, %v971
        %v988 = vld [vmem:[%s881 + $0x2] sm:$0xff]
        %v989 = vld [vmem:[%s881 + $0xa] sm:$0xff]
        %v990 = vld [vmem:[%s881 + $0x1a] sm:$0xff]
        %v991 = vld [vmem:[%s881 + $0x22] sm:$0xff]
        %v992 = vld [vmem:[%s881 + $0x32] sm:$0xff]
        %v993 = vld [vmem:[%s881 + $0x3a] sm:$0xff]
        %v994 = vld [vmem:[%s881 + $0x4a] sm:$0xff]
        %v995 = vld [vmem:[%s881 + $0x52] sm:$0xff]
        %v996 = vld [vmem:[%s881 + $0x62] sm:$0xff]
        %v997 = vld [vmem:[%s881 + $0x6a] sm:$0xff]
        %v998 = vld [vmem:[%s881 + $0x7a] sm:$0xff]
        %v999 = vld [vmem:[%s881 + $0x82] sm:$0xff]
        %v1000 = vld [vmem:[%s881 + $0x92] sm:$0xff]
        %v1001 = vld [vmem:[%s881 + $0x9a] sm:$0xff]
        %v1002 = vld [vmem:[%s881 + $0xaa] sm:$0xff]
        %v1003 = vld [vmem:[%s881 + $0xb2] sm:$0xff]
        %v1004 = vld [vmem:[%s2 + $0x5] sm:$0x1]
        %v1005 = vlaneseq
        %v1006 = vshrl.u32 %v1005, 7
        %v1007 = vsub.s32 0, %v1006
        %v1008 = vrot.slane %v1004, %v1007
        %v1009 = vmul.f32 %v988, %v1008
        %v1010 = vmul.f32 %v989, %v1008
        %v1011 = vmul.f32 %v990, %v1008
        %v1012 = vmul.f32 %v991, %v1008
        %v1013 = vmul.f32 %v992, %v1008
        %v1014 = vmul.f32 %v993, %v1008
        %v1015 = vmul.f32 %v994, %v1008
        %v1016 = vmul.f32 %v995, %v1008
        %v1017 = vmul.f32 %v996, %v1008
        %v1018 = vmul.f32 %v997, %v1008
        %v1019 = vmul.f32 %v998, %v1008
        %v1020 = vmul.f32 %v999, %v1008
        %v1021 = vmul.f32 %v1000, %v1008
        %v1022 = vmul.f32 %v1001, %v1008
        %v1023 = vmul.f32 %v1002, %v1008
        %v1024 = vmul.f32 %v1003, %v1008
        %v1025 = vadd.f32 %v972, %v1009
        %v1026 = vadd.f32 %v973, %v1010
        %v1027 = vadd.f32 %v974, %v1011
        %v1028 = vadd.f32 %v975, %v1012
        %v1029 = vadd.f32 %v976, %v1013
        %v1030 = vadd.f32 %v977, %v1014
        %v1031 = vadd.f32 %v978, %v1015
        %v1032 = vadd.f32 %v979, %v1016
        %v1033 = vadd.f32 %v980, %v1017
        %v1034 = vadd.f32 %v981, %v1018
        %v1035 = vadd.f32 %v982, %v1019
        %v1036 = vadd.f32 %v983, %v1020
        %v1037 = vadd.f32 %v984, %v1021
        %v1038 = vadd.f32 %v985, %v1022
        %v1039 = vadd.f32 %v986, %v1023
        %v1040 = vadd.f32 %v987, %v1024
        %s1041 = sadd.s32 %s717, 2
        %s1042 = smul.u32 %s1041, 24
        %s1043 = scalar_lea.vmem [#allocation2], %s1042
        %v1044 = vld [vmem:[%s1043] sm:$0xff]
        %v1045 = vld [vmem:[%s1043 + $0x8] sm:$0xff]
        %v1046 = vld [vmem:[%s1043 + $0x18] sm:$0xff]
        %v1047 = vld [vmem:[%s1043 + $0x20] sm:$0xff]
        %v1048 = vld [vmem:[%s1043 + $0x30] sm:$0xff]
        %v1049 = vld [vmem:[%s1043 + $0x38] sm:$0xff]
        %v1050 = vld [vmem:[%s1043 + $0x48] sm:$0xff]
        %v1051 = vld [vmem:[%s1043 + $0x50] sm:$0xff]
        %v1052 = vld [vmem:[%s1043 + $0x60] sm:$0xff]
        %v1053 = vld [vmem:[%s1043 + $0x68] sm:$0xff]
        %v1054 = vld [vmem:[%s1043 + $0x78] sm:$0xff]
        %v1055 = vld [vmem:[%s1043 + $0x80] sm:$0xff]
        %v1056 = vld [vmem:[%s1043 + $0x90] sm:$0xff]
        %v1057 = vld [vmem:[%s1043 + $0x98] sm:$0xff]
        %v1058 = vld [vmem:[%s1043 + $0xa8] sm:$0xff]
        %v1059 = vld [vmem:[%s1043 + $0xb0] sm:$0xff]
        %v1060 = vld [vmem:[%s2 + $0x6] sm:$0x1]
        %v1061 = vlaneseq
        %v1062 = vshrl.u32 %v1061, 7
        %v1063 = vsub.s32 0, %v1062
        %v1064 = vrot.slane %v1060, %v1063
        %v1065 = vmul.f32 %v1044, %v1064
        %v1066 = vmul.f32 %v1045, %v1064
        %v1067 = vmul.f32 %v1046, %v1064
        %v1068 = vmul.f32 %v1047, %v1064
        %v1069 = vmul.f32 %v1048, %v1064
        %v1070 = vmul.f32 %v1049, %v1064
        %v1071 = vmul.f32 %v1050, %v1064
        %v1072 = vmul.f32 %v1051, %v1064
        %v1073 = vmul.f32 %v1052, %v1064
        %v1074 = vmul.f32 %v1053, %v1064
        %v1075 = vmul.f32 %v1054, %v1064
        %v1076 = vmul.f32 %v1055, %v1064
        %v1077 = vmul.f32 %v1056, %v1064
        %v1078 = vmul.f32 %v1057, %v1064
        %v1079 = vmul.f32 %v1058, %v1064
        %v1080 = vmul.f32 %v1059, %v1064
        %v1081 = vadd.f32 %v1025, %v1065
        %v1082 = vadd.f32 %v1026, %v1066
        %v1083 = vadd.f32 %v1027, %v1067
        %v1084 = vadd.f32 %v1028, %v1068
        %v1085 = vadd.f32 %v1029, %v1069
        %v1086 = vadd.f32 %v1030, %v1070
        %v1087 = vadd.f32 %v1031, %v1071
        %v1088 = vadd.f32 %v1032, %v1072
        %v1089 = vadd.f32 %v1033, %v1073
        %v1090 = vadd.f32 %v1034, %v1074
        %v1091 = vadd.f32 %v1035, %v1075
        %v1092 = vadd.f32 %v1036, %v1076
        %v1093 = vadd.f32 %v1037, %v1077
        %v1094 = vadd.f32 %v1038, %v1078
        %v1095 = vadd.f32 %v1039, %v1079
        %v1096 = vadd.f32 %v1040, %v1080
        %v1097 = vld [vmem:[%s1043 + $0x1] sm:$0xff]
        %v1098 = vld [vmem:[%s1043 + $0x9] sm:$0xff]
        %v1099 = vld [vmem:[%s1043 + $0x19] sm:$0xff]
        %v1100 = vld [vmem:[%s1043 + $0x21] sm:$0xff]
        %v1101 = vld [vmem:[%s1043 + $0x31] sm:$0xff]
        %v1102 = vld [vmem:[%s1043 + $0x39] sm:$0xff]
        %v1103 = vld [vmem:[%s1043 + $0x49] sm:$0xff]
        %v1104 = vld [vmem:[%s1043 + $0x51] sm:$0xff]
        %v1105 = vld [vmem:[%s1043 + $0x61] sm:$0xff]
        %v1106 = vld [vmem:[%s1043 + $0x69] sm:$0xff]
        %v1107 = vld [vmem:[%s1043 + $0x79] sm:$0xff]
        %v1108 = vld [vmem:[%s1043 + $0x81] sm:$0xff]
        %v1109 = vld [vmem:[%s1043 + $0x91] sm:$0xff]
        %v1110 = vld [vmem:[%s1043 + $0x99] sm:$0xff]
        %v1111 = vld [vmem:[%s1043 + $0xa9] sm:$0xff]
        %v1112 = vld [vmem:[%s1043 + $0xb1] sm:$0xff]
        %v1113 = vld [vmem:[%s2 + $0x7] sm:$0x1]
        %v1114 = vlaneseq
        %v1115 = vshrl.u32 %v1114, 7
        %v1116 = vsub.s32 0, %v1115
        %v1117 = vrot.slane %v1113, %v1116
        %v1118 = vmul.f32 %v1097, %v1117
        %v1119 = vmul.f32 %v1098, %v1117
        %v1120 = vmul.f32 %v1099, %v1117
        %v1121 = vmul.f32 %v1100, %v1117
        %v1122 = vmul.f32 %v1101, %v1117
        %v1123 = vmul.f32 %v1102, %v1117
        %v1124 = vmul.f32 %v1103, %v1117
        %v1125 = vmul.f32 %v1104, %v1117
        %v1126 = vmul.f32 %v1105, %v1117
        %v1127 = vmul.f32 %v1106, %v1117
        %v1128 = vmul.f32 %v1107, %v1117
        %v1129 = vmul.f32 %v1108, %v1117
        %v1130 = vmul.f32 %v1109, %v1117
        %v1131 = vmul.f32 %v1110, %v1117
        %v1132 = vmul.f32 %v1111, %v1117
        %v1133 = vmul.f32 %v1112, %v1117
        %v1134 = vadd.f32 %v1081, %v1118
        %v1135 = vadd.f32 %v1082, %v1119
        %v1136 = vadd.f32 %v1083, %v1120
        %v1137 = vadd.f32 %v1084, %v1121
        %v1138 = vadd.f32 %v1085, %v1122
        %v1139 = vadd.f32 %v1086, %v1123
        %v1140 = vadd.f32 %v1087, %v1124
        %v1141 = vadd.f32 %v1088, %v1125
        %v1142 = vadd.f32 %v1089, %v1126
        %v1143 = vadd.f32 %v1090, %v1127
        %v1144 = vadd.f32 %v1091, %v1128
        %v1145 = vadd.f32 %v1092, %v1129
        %v1146 = vadd.f32 %v1093, %v1130
        %v1147 = vadd.f32 %v1094, %v1131
        %v1148 = vadd.f32 %v1095, %v1132
        %v1149 = vadd.f32 %v1096, %v1133
        %v1150 = vld [vmem:[%s1043 + $0x2] sm:$0xff]
        %v1151 = vld [vmem:[%s1043 + $0xa] sm:$0xff]
        %v1152 = vld [vmem:[%s1043 + $0x1a] sm:$0xff]
        %v1153 = vld [vmem:[%s1043 + $0x22] sm:$0xff]
        %v1154 = vld [vmem:[%s1043 + $0x32] sm:$0xff]
        %v1155 = vld [vmem:[%s1043 + $0x3a] sm:$0xff]
        %v1156 = vld [vmem:[%s1043 + $0x4a] sm:$0xff]
        %v1157 = vld [vmem:[%s1043 + $0x52] sm:$0xff]
        %v1158 = vld [vmem:[%s1043 + $0x62] sm:$0xff]
        %v1159 = vld [vmem:[%s1043 + $0x6a] sm:$0xff]
        %v1160 = vld [vmem:[%s1043 + $0x7a] sm:$0xff]
        %v1161 = vld [vmem:[%s1043 + $0x82] sm:$0xff]
        %v1162 = vld [vmem:[%s1043 + $0x92] sm:$0xff]
        %v1163 = vld [vmem:[%s1043 + $0x9a] sm:$0xff]
        %v1164 = vld [vmem:[%s1043 + $0xaa] sm:$0xff]
        %v1165 = vld [vmem:[%s1043 + $0xb2] sm:$0xff]
        %v1166 = vld [vmem:[%s2 + $0x8] sm:$0x1]
        %v1167 = vlaneseq
        %v1168 = vshrl.u32 %v1167, 7
        %v1169 = vsub.s32 0, %v1168
        %v1170 = vrot.slane %v1166, %v1169
        %v1171 = vmul.f32 %v1150, %v1170
        %v1172 = vmul.f32 %v1151, %v1170
        %v1173 = vmul.f32 %v1152, %v1170
        %v1174 = vmul.f32 %v1153, %v1170
        %v1175 = vmul.f32 %v1154, %v1170
        %v1176 = vmul.f32 %v1155, %v1170
        %v1177 = vmul.f32 %v1156, %v1170
        %v1178 = vmul.f32 %v1157, %v1170
        %v1179 = vmul.f32 %v1158, %v1170
        %v1180 = vmul.f32 %v1159, %v1170
        %v1181 = vmul.f32 %v1160, %v1170
        %v1182 = vmul.f32 %v1161, %v1170
        %v1183 = vmul.f32 %v1162, %v1170
        %v1184 = vmul.f32 %v1163, %v1170
        %v1185 = vmul.f32 %v1164, %v1170
        %v1186 = vmul.f32 %v1165, %v1170
        %v1187 = vadd.f32 %v1134, %v1171
        %v1188 = vadd.f32 %v1135, %v1172
        %v1189 = vadd.f32 %v1136, %v1173
        %v1190 = vadd.f32 %v1137, %v1174
        %v1191 = vadd.f32 %v1138, %v1175
        %v1192 = vadd.f32 %v1139, %v1176
        %v1193 = vadd.f32 %v1140, %v1177
        %v1194 = vadd.f32 %v1141, %v1178
        %v1195 = vadd.f32 %v1142, %v1179
        %v1196 = vadd.f32 %v1143, %v1180
        %v1197 = vadd.f32 %v1144, %v1181
        %v1198 = vadd.f32 %v1145, %v1182
        %v1199 = vadd.f32 %v1146, %v1183
        %v1200 = vadd.f32 %v1147, %v1184
        %v1201 = vadd.f32 %v1148, %v1185
        %v1202 = vadd.f32 %v1149, %v1186
        %v1203 = vld [vmem:[%s3] sm:$0x1]
        %v1205 = vlaneseq
        %v1206 = vshrl.u32 %v1205, 7
        %v1207 = vsub.s32 0, %v1206
        %v1208 = vrot.slane %v1203, %v1207
        %v1210 = vadd.f32 %v1187, %v1208
        %v1211 = vadd.f32 %v1188, %v1208
        %v1212 = vadd.f32 %v1189, %v1208
        %v1213 = vadd.f32 %v1190, %v1208
        %v1214 = vadd.f32 %v1191, %v1208
        %v1215 = vadd.f32 %v1192, %v1208
        %v1216 = vadd.f32 %v1193, %v1208
        %v1217 = vadd.f32 %v1194, %v1208
        %v1218 = vadd.f32 %v1195, %v1208
        %v1219 = vadd.f32 %v1196, %v1208
        %v1220 = vadd.f32 %v1197, %v1208
        %v1221 = vadd.f32 %v1198, %v1208
        %v1222 = vadd.f32 %v1199, %v1208
        %v1223 = vadd.f32 %v1200, %v1208
        %v1224 = vadd.f32 %v1201, %v1208
        %v1225 = vadd.f32 %v1202, %v1208
        %v1226 = vmax.f32 %v1210, 0.0
        %v1227 = vmax.f32 %v1211, 0.0
        %v1228 = vmax.f32 %v1212, 0.0
        %v1229 = vmax.f32 %v1213, 0.0
        %v1230 = vmax.f32 %v1214, 0.0
        %v1231 = vmax.f32 %v1215, 0.0
        %v1232 = vmax.f32 %v1216, 0.0
        %v1233 = vmax.f32 %v1217, 0.0
        %v1234 = vmax.f32 %v1218, 0.0
        %v1235 = vmax.f32 %v1219, 0.0
        %v1236 = vmax.f32 %v1220, 0.0
        %v1237 = vmax.f32 %v1221, 0.0
        %v1238 = vmax.f32 %v1222, 0.0
        %v1239 = vmax.f32 %v1223, 0.0
        %v1240 = vmax.f32 %v1224, 0.0
        %v1241 = vmax.f32 %v1225, 0.0
        %v1242 = vpack.c.bf16 %v1227, %v1226
        %v1243 = vpack.c.bf16 %v1229, %v1228
        %v1244 = vpack.c.bf16 %v1231, %v1230
        %v1245 = vpack.c.bf16 %v1233, %v1232
        %v1246 = vpack.c.bf16 %v1235, %v1234
        %v1247 = vpack.c.bf16 %v1237, %v1236
        %v1248 = vpack.c.bf16 %v1239, %v1238
        %v1249 = vpack.c.bf16 %v1241, %v1240
        %v1258 = vunpack.c.l.b16 %v1242
        %v1259 = vunpack.c.h.b16 %v1242
        %v1260 = vunpack.c.l.b16 %v1243
        %v1261 = vunpack.c.h.b16 %v1243
        %v1262 = vunpack.c.l.b16 %v1244
        %v1263 = vunpack.c.h.b16 %v1244
        %v1264 = vunpack.c.l.b16 %v1245
        %v1265 = vunpack.c.h.b16 %v1245
        %v1266 = vunpack.c.l.b16 %v1246
        %v1267 = vunpack.c.h.b16 %v1246
        %v1268 = vunpack.c.l.b16 %v1247
        %v1269 = vunpack.c.h.b16 %v1247
        %v1270 = vunpack.c.l.b16 %v1248
        %v1271 = vunpack.c.h.b16 %v1248
        %v1272 = vunpack.c.l.b16 %v1249
        %v1273 = vunpack.c.h.b16 %v1249
        %v1274 = vpack.c.b16 %v1258, %v1258
        %v1275 = vpack.c.b16 %v1259, %v1259
        %v1276 = vpack.c.b16 %v1260, %v1260
        %v1277 = vpack.c.b16 %v1261, %v1261
        %v1278 = vpack.c.b16 %v1262, %v1262
        %v1279 = vpack.c.b16 %v1263, %v1263
        %v1280 = vpack.c.b16 %v1264, %v1264
        %v1281 = vpack.c.b16 %v1265, %v1265
        %v1282 = vpack.c.b16 %v1266, %v1266
        %v1283 = vpack.c.b16 %v1267, %v1267
        %v1284 = vpack.c.b16 %v1268, %v1268
        %v1285 = vpack.c.b16 %v1269, %v1269
        %v1286 = vpack.c.b16 %v1270, %v1270
        %v1287 = vpack.c.b16 %v1271, %v1271
        %v1288 = vpack.c.b16 %v1272, %v1272
        %v1289 = vpack.c.b16 %v1273, %v1273
        %vm1306 = vcmask 125952
        %1307 = vst.msk [vmem:[%s258] sm:$0xf] %vm1306, %v1274
        %1308 = vst.msk [vmem:[%s258 + $0x4] sm:$0xf] %vm1306, %v1275
        %1309 = vst.msk [vmem:[%s258 + $0x8] sm:$0xf] %vm1306, %v1276
        %1310 = vst.msk [vmem:[%s258 + $0xc] sm:$0xf] %vm1306, %v1277
        %1311 = vst.msk [vmem:[%s258 + $0x10] sm:$0xf] %vm1306, %v1278
        %1312 = vst.msk [vmem:[%s258 + $0x14] sm:$0xf] %vm1306, %v1279
        %1313 = vst.msk [vmem:[%s258 + $0x18] sm:$0xf] %vm1306, %v1280
        %1314 = vst.msk [vmem:[%s258 + $0x1c] sm:$0xf] %vm1306, %v1281
        %1315 = vst.msk [vmem:[%s258 + $0x20] sm:$0xf] %vm1306, %v1282
        %1316 = vst.msk [vmem:[%s258 + $0x24] sm:$0xf] %vm1306, %v1283
        %1317 = vst.msk [vmem:[%s258 + $0x28] sm:$0xf] %vm1306, %v1284
        %1318 = vst.msk [vmem:[%s258 + $0x2c] sm:$0xf] %vm1306, %v1285
        %1319 = vst.msk [vmem:[%s258 + $0x30] sm:$0xf] %vm1306, %v1286
        %1320 = vst.msk [vmem:[%s258 + $0x34] sm:$0xf] %vm1306, %v1287
        %1321 = vst.msk [vmem:[%s258 + $0x38] sm:$0xf] %vm1306, %v1288
        %1322 = vst.msk [vmem:[%s258 + $0x3c] sm:$0xf] %vm1306, %v1289
        // Predicated region
        $region41: #{osblock_forward.21} parent=35 // pred_check
          %p1323 = pneg %p261
        $region42: #{osblock_forward.21} parent=35 // pred_check_branch
          %1325 = sbr.rel (%p1323) target = $region44
        $region43: #{osblock_forward.21} parent=35 // pred_region
          %vm1326 = vcmask 122880
          %1327 = vst.msk [vmem:[%s243] sm:$0x1] %vm1326, 0.0
        $region44: #{osblock_forward.21} parent=35 // pred_fallthru
          _
        %v1328 = vld [vmem:[%s243] sm:$0x1]
        %vm1329 = vcmask 130048
        %v1330 = vsel %vm1329, %v1226, 0.0
        %v1331 = vsel %vm1329, %v1227, 0.0
        %v1332 = vadd.f32 %v1330, %v1331
        %v1333 = vsel %vm1329, %v1228, 0.0
        %v1334 = vadd.f32 %v1332, %v1333
        %v1335 = vsel %vm1329, %v1229, 0.0
        %v1336 = vadd.f32 %v1334, %v1335
        %v1337 = vsel %vm1329, %v1230, 0.0
        %v1338 = vadd.f32 %v1336, %v1337
        %v1339 = vsel %vm1329, %v1231, 0.0
        %v1340 = vadd.f32 %v1338, %v1339
        %v1341 = vsel %vm1329, %v1232, 0.0
        %v1342 = vadd.f32 %v1340, %v1341
        %v1343 = vsel %vm1329, %v1233, 0.0
        %v1344 = vadd.f32 %v1342, %v1343
        %v1345 = vsel %vm1329, %v1234, 0.0
        %v1346 = vadd.f32 %v1344, %v1345
        %v1347 = vsel %vm1329, %v1235, 0.0
        %v1348 = vadd.f32 %v1346, %v1347
        %v1349 = vsel %vm1329, %v1236, 0.0
        %v1350 = vadd.f32 %v1348, %v1349
        %v1351 = vsel %vm1329, %v1237, 0.0
        %v1352 = vadd.f32 %v1350, %v1351
        %v1353 = vsel %vm1329, %v1238, 0.0
        %v1354 = vadd.f32 %v1352, %v1353
        %v1355 = vsel %vm1329, %v1239, 0.0
        %v1356 = vadd.f32 %v1354, %v1355
        %v1357 = vsel %vm1329, %v1240, 0.0
        %v1358 = vadd.f32 %v1356, %v1357
        %v1359 = vsel %vm1329, %v1241, 0.0
        %v1360 = vadd.f32 %v1358, %v1359
        %v1361 = vrot.slane %v1360, 4
        %v1362 = vadd.f32 %v1360, %v1361
        %v1363 = vrot.slane %v1362, 2
        %v1364 = vadd.f32 %v1362, %v1363
        %v1365 = vrot.slane %v1364, 1
        %v1366 = vadd.f32 %v1364, %v1365
        %v1367 = vadd.f32 %v1328, %v1366
        %vm1368 = vcmask 122880
        %1369 = vst.msk [vmem:[%s243] sm:$0x1] %vm1368, %v1367
        %s1370 = smul.u32 8, %s25
        %p1371 = scmp.lt.s32.totalorder %s24, 1
        %s1372 = scalar_select %p1371, %s24, 1
        %p1373 = scmp.lt.s32.totalorder %s1370, 15
        %s1374 = scalar_select %p1373, %s1370, 15
        %s1375 = smul.addr %s1374, 2
        %s1376 = smul.addr %s1372, 32
        %s1377 = sadd.s32 %s1375, %s1376
        %s1378 = smul.addr %s1377, 4
        %s1379 = scalar_lea.vmem %s4, %s1378
        %s1380 = sand.u32 %s157, 1
        %s1381 = scalar_lea.sflag [#allocation4], %s1380
        %s1382 = sand.u32 %s157, 1
        %s1383 = scalar_lea.vmem [#allocation3], %s1382
        // Predicated region
        $region45: #{osblock_forward.21} parent=35 // pred_check
          %p1384 = pneg %p141
        $region46: #{osblock_forward.21} parent=35 // pred_check_branch
          %1386 = sbr.rel (%p1384) target = $region48
        $region47: #{osblock_forward.21} parent=35 // pred_region
          %s1387 = smul.u32 8, %s25
        $region48: #{osblock_forward.21} parent=35 // pred_fallthru
          _
        // Predicated region
        $region49: #{osblock_forward.21} parent=35 // pred_check
          %p1388 = pneg %p167
        $region50: #{osblock_forward.21} parent=35 // pred_check_branch
          %1390 = sbr.rel (%p1388) target = $region52
        $region51: #{osblock_forward.21} parent=35 // pred_region
          %s1392 = ssub.s32 16, 16
          %1393 = vsyncadd %s1381, %s1392
          %s1394 = smul.addr %s24, 16
          %s1395 = scalar_lea.hbm %s5, %s1394
          %s1397 = sshll.u32 %s1383, 4
          %s1398 = int_to_ptr.vmem [resolvable:$true] %s1397
          %1400 = dma.vmem_to_hbm [thread:$0]  %s1398, 16, %s1395, %s1381
        $region52: #{osblock_forward.21} parent=35 // pred_fallthru
          _
      $region36: #{osblock_forward.21} parent=5 // pred_fallthru
        _
      %p1401 = scmp.le.s32.totalorder 2, %s15
      // Predicated region
      $region53: #{osblock_forward.21} parent=5 // pred_check
        %p1402 = pneg %p1401
      $region54: #{osblock_forward.21} parent=5 // pred_check_branch
        %1404 = sbr.rel (%p1402) target = $region56
      $region55: #{osblock_forward.21} parent=5 // pred_region
        %s1405 = ssub.s32 %s15, 2
        // Predicated region
        $region57: #{osblock_forward.21} parent=55 // pred_check
          %p1406 = pneg %p147
        $region58: #{osblock_forward.21} parent=55 // pred_check_branch
          %1408 = sbr.rel (%p1406) target = $region60
        $region59: #{osblock_forward.21} parent=55 // pred_region
          %s1409 = smul.u32 8, %s27
          %p1410 = scmp.lt.s32.totalorder %s26, 1
          %s1411 = scalar_select %p1410, %s26, 1
          %p1412 = scmp.lt.s32.totalorder %s1409, 15
          %s1413 = scalar_select %p1412, %s1409, 15
          %s1414 = smul.addr %s1413, 2
          %s1415 = smul.addr %s1411, 32
          %s1416 = sadd.s32 %s1414, %s1415
          %s1417 = smul.addr %s1416, 4
          %s1418 = scalar_lea.vmem %s4, %s1417
        $region60: #{osblock_forward.21} parent=55 // pred_fallthru
          _
        // Predicated region
        $region61: #{osblock_forward.21} parent=55 // pred_check
          %p1419 = pneg %p173
        $region62: #{osblock_forward.21} parent=55 // pred_check_branch
          %1421 = sbr.rel (%p1419) target = $region64
        $region63: #{osblock_forward.21} parent=55 // pred_region
          %s1422 = sand.u32 %s158, 1
          %s1423 = scalar_lea.sflag [#allocation4], %s1422
          %s1424 = sand.u32 %s158, 1
          %s1425 = scalar_lea.vmem [#allocation3], %s1424
          %1426 = dma.done %s1423, 16
        $region64: #{osblock_forward.21} parent=55 // pred_fallthru
          _
      $region56: #{osblock_forward.21} parent=5 // pred_fallthru
        _
    $region6: #{osblock_forward.21} parent=1 // loop_footer
      %s19 = sadd.s32 1, %s15
    $region7: #{osblock_forward.21} parent=1 // loop_footer_branch
      %14 = sbr.rel target = $region3
    $region8: #{osblock_forward.21} parent=1 // loop_exit
      _
    %1427 = vsyncpa [#allocation4], 1
    %s1428 = scalar_lea.sflag [#allocation4], 1
    %1429 = vsyncpa %s1428, 1

// kernel: osblock_forward.25
$region0: #{osblock_forward.25}
  #allocation0 [shape = 'u32[]', space=smem, size = 0x4, offset = 0x4, fixed_abs, tag = 'smem constant byte address 0x4 - core index']
  #allocation1 [shape = 'u32[144,128]{1,0:T(1,128)}', space=vmem, size = 0x12000, scoped, tag = 'internal scratch']
  %s0 = inlined_call_operand.vmem [shape: f32[8,16], index: 0, kind: input, shape index: {}]
  %s1 = inlined_call_operand.vmem [shape: f32[16,128], index: 1, kind: input, shape index: {}]
  %s2 = inlined_call_operand.vmem [shape: f32[1,128], index: 2, kind: input, shape index: {}]
  %s3 = inlined_call_operand.vmem [shape: f32[128,16], index: 3, kind: input, shape index: {}]
  %s4 = inlined_call_operand.vmem [shape: f32[1,16], index: 4, kind: input, shape index: {}]
  %s5 = inlined_call_operand.vmem [shape: f32[8,16], index: 5, kind: output, shape index: {}]
  %s6 = sld [smem:[#allocation0]]
  $region30: #{osblock_forward.25} parent=0
    _
  %s8 = ssub.s32 1, %s6
  %s9 = scalar_select 0, %s8, %s6
  // Predicated region
  $region2: #{osblock_forward.25} parent=0 // pred_check
    _
  $region3: #{osblock_forward.25} parent=0 // pred_check_branch
    %11 = sbr.rel (0) target = $region5
  $region4: #{osblock_forward.25} parent=0 // pred_region
    _
  $region5: #{osblock_forward.25} parent=0 // pred_fallthru
    _
  // Predicated region
  $region6: #{osblock_forward.25} parent=0 // pred_check
    _
  $region7: #{osblock_forward.25} parent=0 // pred_check_branch
    %13 = sbr.rel (0) target = $region9
  $region8: #{osblock_forward.25} parent=0 // pred_region
    _
  $region9: #{osblock_forward.25} parent=0 // pred_fallthru
    _
  // Predicated region
  $region10: #{osblock_forward.25} parent=0 // pred_check
    _
  $region11: #{osblock_forward.25} parent=0 // pred_check_branch
    %15 = sbr.rel (0) target = $region13
  $region12: #{osblock_forward.25} parent=0 // pred_region
    _
  $region13: #{osblock_forward.25} parent=0 // pred_fallthru
    _
  // Predicated region
  $region14: #{osblock_forward.25} parent=0 // pred_check
    _
  $region15: #{osblock_forward.25} parent=0 // pred_check_branch
    %17 = sbr.rel (0) target = $region17
  $region16: #{osblock_forward.25} parent=0 // pred_region
    _
  $region17: #{osblock_forward.25} parent=0 // pred_fallthru
    _
  // Predicated region
  $region18: #{osblock_forward.25} parent=0 // pred_check
    _
  $region19: #{osblock_forward.25} parent=0 // pred_check_branch
    %19 = sbr.rel (0) target = $region21
  $region20: #{osblock_forward.25} parent=0 // pred_region
    _
  $region21: #{osblock_forward.25} parent=0 // pred_fallthru
    _
  %v20 = vld [vmem:[%s0] sm:$0xff]
  %v21 = vld [vmem:[%s1] sm:$0xff]
  %v22 = vld [vmem:[%s1 + $0x8] sm:$0xff]
  %v23 = vld [vmem:[%s2] sm:$0x1]
  %v25 = vlaneseq
  %v26 = vshrl.u32 %v25, 7
  %v27 = vsub.s32 0, %v26
  %v28 = vrot.slane %v23, %v27
  %vm30 = vcmask 130048
  %v32 = vsel %vm30, %v20, 0
  %34 = vmatprep.subr.mxu0 0.0
  %35 = vmatpush1.msra.mxu0 %v21
  %36 = vmatprep.subr.mxu0 0.0
  %37 = vmatpush1.msra.mxu0 %v22
  %38 = vmatprep.subr.mxu0 0.0
  %39 = vmatpush1.msra.mxu0 0.0
  %40 = vmatprep.subr.mxu0 0.0
  %41 = vmatpush1.msra.mxu0 0.0
  %42 = vmatprep.subr.mxu0 0.0
  %43 = vmatpush1.msra.mxu0 0.0
  %44 = vmatprep.subr.mxu0 0.0
  %45 = vmatpush1.msra.mxu0 0.0
  %46 = vmatprep.subr.mxu0 0.0
  %47 = vmatpush1.msra.mxu0 0.0
  %48 = vmatprep.subr.mxu0 0.0
  %49 = vmatpush1.msra.mxu0 0.0
  %50 = vmatprep.subr.mxu0 0.0
  %51 = vmatpush1.msra.mxu0 0.0
  %52 = vmatprep.subr.mxu0 0.0
  %53 = vmatpush1.msra.mxu0 0.0
  %54 = vmatprep.subr.mxu0 0.0
  %55 = vmatpush1.msra.mxu0 0.0
  %56 = vmatprep.subr.mxu0 0.0
  %57 = vmatpush1.msra.mxu0 0.0
  %58 = vmatprep.subr.mxu0 0.0
  %59 = vmatpush1.msra.mxu0 0.0
  %60 = vmatprep.subr.mxu0 0.0
  %61 = vmatpush1.msra.mxu0 0.0
  %62 = vmatprep.subr.mxu0 0.0
  %63 = vmatpush1.msra.mxu0 0.0
  %64 = vmatprep.subr.mxu0 0.0
  %65 = vmatpush1.msra.mxu0 0.0
  %66 = vmatprep.subr.mxu0 0.0
  %67 = vmatpush1.msra.mxu0 0.0
  %68 = vmatprep.subr.mxu0 0.0
  %69 = vmatpush1.msra.mxu0 0.0
  %70 = vmatprep.subr.mxu0 0.0
  %71 = vmatpush1.msra.mxu0 0.0
  %72 = vmatprep.subr.mxu0 0.0
  %73 = vmatpush1.msra.mxu0 0.0
  %74 = vmatprep.subr.mxu0 0.0
  %75 = vmatpush1.msra.mxu0 0.0
  %76 = vmatprep.subr.mxu0 0.0
  %77 = vmatpush1.msra.mxu0 0.0
  %78 = vmatprep.subr.mxu0 0.0
  %79 = vmatpush1.msra.mxu0 0.0
  %80 = vmatprep.subr.mxu0 0.0
  %81 = vmatpush1.msra.mxu0 0.0
  %82 = vmatprep.subr.mxu0 0.0
  %83 = vmatpush1.msra.mxu0 0.0
  %84 = vmatprep.subr.mxu0 0.0
  %85 = vmatpush1.msra.mxu0 0.0
  %86 = vmatprep.subr.mxu0 0.0
  %87 = vmatpush1.msra.mxu0 0.0
  %88 = vmatprep.subr.mxu0 0.0
  %89 = vmatpush1.msra.mxu0 0.0
  %90 = vmatprep.subr.mxu0 0.0
  %91 = vmatpush1.msra.mxu0 0.0
  %92 = vmatprep.subr.mxu0 0.0
  %93 = vmatpush1.msra.mxu0 0.0
  %94 = vmatprep.subr.mxu0 0.0
  %95 = vmatpush1.msra.mxu0 0.0
  %96 = vmatprep.subr.mxu0 0.0
  %97 = vmatpush1.msra.mxu0 0.0
  %98 = vmatprep.mubr.f32.mxu0 0.0
  %99 = vmatmul.mubr.f32.gmra.mrb[0].mxu0 %v32
  %v100 = vpop.f32.mrb[0].mxu0
  %v101 = vadd.f32 %v28, %v100
  %v102 = vpop.f32.mrb[0].mxu0
  %103 = vdwg.mxu0
  %v104 = vmax.f32 %v101, 0.0
  %v105 = vld [vmem:[%s3] sm:$0xff]
  %v106 = vld [vmem:[%s3 + $0x8] sm:$0xff]
  %v107 = vld [vmem:[%s3 + $0x10] sm:$0xff]
  %v108 = vld [vmem:[%s3 + $0x18] sm:$0xff]
  %v109 = vld [vmem:[%s3 + $0x20] sm:$0xff]
  %v110 = vld [vmem:[%s3 + $0x28] sm:$0xff]
  %v111 = vld [vmem:[%s3 + $0x30] sm:$0xff]
  %v112 = vld [vmem:[%s3 + $0x38] sm:$0xff]
  %v113 = vld [vmem:[%s3 + $0x40] sm:$0xff]
  %v114 = vld [vmem:[%s3 + $0x48] sm:$0xff]
  %v115 = vld [vmem:[%s3 + $0x50] sm:$0xff]
  %v116 = vld [vmem:[%s3 + $0x58] sm:$0xff]
  %v117 = vld [vmem:[%s3 + $0x60] sm:$0xff]
  %v118 = vld [vmem:[%s3 + $0x68] sm:$0xff]
  %v119 = vld [vmem:[%s3 + $0x70] sm:$0xff]
  %v120 = vld [vmem:[%s3 + $0x78] sm:$0xff]
  %v121 = vld [vmem:[%s4] sm:$0x1]
  %v123 = vlaneseq
  %v124 = vshrl.u32 %v123, 7
  %v125 = vsub.s32 0, %v124
  %v126 = vrot.slane %v121, %v125
  %128 = vmatprep.subr.mxu0 0.0
  %129 = vmatpush1.msra.mxu0 %v105
  %130 = vmatprep.subr.mxu0 0.0
  %131 = vmatpush1.msra.mxu0 %v106
  %132 = vmatprep.subr.mxu0 0.0
  %133 = vmatpush1.msra.mxu0 %v107
  %134 = vmatprep.subr.mxu0 0.0
  %135 = vmatpush1.msra.mxu0 %v108
  %136 = vmatprep.subr.mxu0 0.0
  %137 = vmatpush1.msra.mxu0 %v109
  %138 = vmatprep.subr.mxu0 0.0
  %139 = vmatpush1.msra.mxu0 %v110
  %140 = vmatprep.subr.mxu0 0.0
  %141 = vmatpush1.msra.mxu0 %v111
  %142 = vmatprep.subr.mxu0 0.0
  %143 = vmatpush1.msra.mxu0 %v112
  %144 = vmatprep.subr.mxu0 0.0
  %145 = vmatpush1.msra.mxu0 %v113
  %146 = vmatprep.subr.mxu0 0.0
  %147 = vmatpush1.msra.mxu0 %v114
  %148 = vmatprep.subr.mxu0 0.0
  %149 = vmatpush1.msra.mxu0 %v115
  %150 = vmatprep.subr.mxu0 0.0
  %151 = vmatpush1.msra.mxu0 %v116
  %152 = vmatprep.subr.mxu0 0.0
  %153 = vmatpush1.msra.mxu0 %v117
  %154 = vmatprep.subr.mxu0 0.0
  %155 = vmatpush1.msra.mxu0 %v118
  %156 = vmatprep.subr.mxu0 0.0
  %157 = vmatpush1.msra.mxu0 %v119
  %158 = vmatprep.subr.mxu0 0.0
  %159 = vmatpush1.msra.mxu0 %v120
  %160 = vmatprep.subr.mxu0 0.0
  %161 = vmatpush1.msra.mxu0 0.0
  %162 = vmatprep.subr.mxu0 0.0
  %163 = vmatpush1.msra.mxu0 0.0
  %164 = vmatprep.subr.mxu0 0.0
  %165 = vmatpush1.msra.mxu0 0.0
  %166 = vmatprep.subr.mxu0 0.0
  %167 = vmatpush1.msra.mxu0 0.0
  %168 = vmatprep.subr.mxu0 0.0
  %169 = vmatpush1.msra.mxu0 0.0
  %170 = vmatprep.subr.mxu0 0.0
  %171 = vmatpush1.msra.mxu0 0.0
  %172 = vmatprep.subr.mxu0 0.0
  %173 = vmatpush1.msra.mxu0 0.0
  %174 = vmatprep.subr.mxu0 0.0
  %175 = vmatpush1.msra.mxu0 0.0
  %176 = vmatprep.subr.mxu0 0.0
  %177 = vmatpush1.msra.mxu0 0.0
  %178 = vmatprep.subr.mxu0 0.0
  %179 = vmatpush1.msra.mxu0 0.0
  %180 = vmatprep.subr.mxu0 0.0
  %181 = vmatpush1.msra.mxu0 0.0
  %182 = vmatprep.subr.mxu0 0.0
  %183 = vmatpush1.msra.mxu0 0.0
  %184 = vmatprep.subr.mxu0 0.0
  %185 = vmatpush1.msra.mxu0 0.0
  %186 = vmatprep.subr.mxu0 0.0
  %187 = vmatpush1.msra.mxu0 0.0
  %188 = vmatprep.subr.mxu0 0.0
  %189 = vmatpush1.msra.mxu0 0.0
  %190 = vmatprep.subr.mxu0 0.0
  %191 = vmatpush1.msra.mxu0 0.0
  %192 = vmatprep.mubr.f32.mxu0 0.0
  %193 = vmatmul.mubr.f32.gmra.mrb[0].mxu0 %v104
  %v194 = vpop.f32.mrb[0].mxu0
  %v195 = vadd.f32 %v126, %v194
  %v196 = vpop.f32.mrb[0].mxu0
  %197 = vdwg.mxu0
  %v198 = vsub.f32 0.0, %v195
  %v199 = vmul.f32 %v198, 1.442695
  %v200 = vpow.pop %v199
  %v201 = vadd.f32 %v200, 1.0
  %v202 = vrcp.pop %v201
  %v203 = vmul.f32 1.0, %v202
  %204 = vst.msk [vmem:[%s5] sm:$0xff] %vm30, %v203
  // Predicated region
  $region22: #{osblock_forward.25} parent=0 // pred_check
    _
  $region23: #{osblock_forward.25} parent=0 // pred_check_branch
    %206 = sbr.rel (0) target = $region25
  $region24: #{osblock_forward.25} parent=0 // pred_region
    _
  $region25: #{osblock_forward.25} parent=0 // pred_fallthru
    _
  // Predicated region
  $region26: #{osblock_forward.25} parent=0 // pred_check
    _
  $region27: #{osblock_forward.25} parent=0 // pred_check_branch
    %208 = sbr.rel (0) target = $region29
  $region28: #{osblock_forward.25} parent=0 // pred_region
    _
  $region29: #{osblock_forward.25} parent=0 // pred_fallthru
    _

// kernel: osblock_forward.24
$region0: #{osblock_forward.24}
  #allocation0 [shape = 'u32[]', space=smem, size = 0x4, offset = 0x4, fixed_abs, tag = 'smem constant byte address 0x4 - core index']
  #allocation1 [shape = 'u32[144,128]{1,0:T(1,128)}', space=vmem, size = 0x12000, scoped, tag = 'internal scratch']
  #allocation2 [shape = 'f32[18,18,16]{2,1,0:T(8,128)}', space=vmem, size = 0x36000, scoped, tag = 'scratch operand']
  %s0 = inlined_call_operand.vmem [shape: bf16[2,256,16], index: 0, kind: input, shape index: {}]
  %s1 = inlined_call_operand.vmem [shape: bf16[16,16], index: 1, kind: input, shape index: {}]
  %s2 = inlined_call_operand.vmem [shape: f32[9,16], index: 2, kind: input, shape index: {}]
  %s3 = inlined_call_operand.vmem [shape: f32[1,1,16], index: 3, kind: input, shape index: {}]
  %s4 = inlined_call_operand.vmem [shape: bf16[2,16,16,16], index: 4, kind: output, shape index: {0}]
  %s5 = inlined_call_operand.vmem [shape: f32[2,1,16], index: 5, kind: output, shape index: {1}]
  %6 = xla_tuple %s4, %s5
  %s7 = sld [smem:[#allocation0]]
  $region65: #{osblock_forward.24} parent=0
    _
  %s9 = ssub.s32 1, %s7
  %s10 = scalar_select 0, %s9, %s7
  loop: start=0, step=1, limit=6
  $region2: #{osblock_forward.24} parent=0 // loop_pre_header
    _
  $region3: #{osblock_forward.24} parent=0 // loop_header
    %s12 = sphi 0, %s16
    %p13 = scmp.ge.s32.totalorder %s12, 6
    %s19 = sphi 0, %s31
    %s20 = sphi 0, %s27
    %s21 = sphi 0, %s19
    %s22 = sphi 0, %s20
    %s23 = sphi 0, %s21
    %s24 = sphi 0, %s22
    %s34 = sphi 0, %s36
    %s37 = sphi 0, %s34
    %s38 = sphi 0, %s37
    %s54 = sphi 0, %s38
    %s58 = sphi 0, %s58
    %s60 = sphi 0, %s58
    %s61 = sphi 0, %s60
    %s75 = sphi 0, %s61
    %s79 = sphi 0, %s79
    %s81 = sphi 0, %s79
    %s82 = sphi 0, %s81
    %s96 = sphi 0, %s82
    %s100 = sphi 0, %s100
    %s102 = sphi 0, %s100
    %s103 = sphi 0, %s102
    %s117 = sphi 0, %s103
    %s125 = sphi 0, %s127
    %s128 = sphi 0, %s125
    %s129 = sphi 0, %s128
    %s145 = sphi 0, %s129
    %s151 = sphi 0, %s153
    %s154 = sphi 0, %s151
    %s155 = sphi 0, %s154
    %s171 = sphi 0, %s155
  $region4: #{osblock_forward.24} parent=0 // loop_header_branch
    %15 = sbr.rel (%p13) target = $region8
  $region5: #{osblock_forward.24} parent=0 // loop_body
    %s17 = ssub.s32 %s12, 1
    %s18 = ssub.s32 %s12, 2
    %s25 = sadd.s32 1, %s20
    %p26 = scmp.ge.s32.totalorder %s25, 2
    %s27 = scalar_select %p26, 0, %s25
    %s28 = sadd.s32 1, %s19
    %s29 = scalar_select %p26, %s28, %s19
    %p30 = scmp.ge.s32.totalorder %s29, 2
    %s31 = scalar_select %p30, 0, %s29
    %s32 = ssub.s32 %s19, %s31
    %p33 = scmp.eq.s32.totalorder %s32, 0
    %s35 = sadd.s32 %s34, 1
    %s36 = scalar_select %p33, %s34, %s35
    %p39 = pneg %p33
    %p40 = scmp.eq.s32.totalorder %s12, 3
    %p41 = por %p39, %p40
    %p42 = scmp.ne.s32.totalorder %s34, %s37
    %p43 = scmp.eq.s32.totalorder %s12, 0
    %p44 = por %p42, %p43
    %p45 = scmp.ne.s32.totalorder %s34, %s37
    %p46 = scmp.eq.s32.totalorder %s17, 3
    %p47 = por %p45, %p46
    %p48 = scmp.ne.s32.totalorder %s37, %s38
    %p49 = scmp.eq.s32.totalorder %s17, 0
    %p50 = por %p48, %p49
    %p51 = scmp.ne.s32.totalorder %s37, %s38
    %p52 = scmp.eq.s32.totalorder %s18, 3
    %p53 = por %p51, %p52
    %p55 = scmp.ne.s32.totalorder %s38, %s54
    %p56 = scmp.eq.s32.totalorder %s18, 0
    %p57 = por %p55, %p56
    %s59 = sadd.s32 %s58, 1
    %p62 = scmp.eq.s32.totalorder %s12, 3
    %p63 = scmp.ne.s32.totalorder %s58, %s60
    %p64 = scmp.eq.s32.totalorder %s12, 0
    %p65 = por %p63, %p64
    %p66 = scmp.ne.s32.totalorder %s58, %s60
    %p67 = scmp.eq.s32.totalorder %s17, 3
    %p68 = por %p66, %p67
    %p69 = scmp.ne.s32.totalorder %s60, %s61
    %p70 = scmp.eq.s32.totalorder %s17, 0
    %p71 = por %p69, %p70
    %p72 = scmp.ne.s32.totalorder %s60, %s61
    %p73 = scmp.eq.s32.totalorder %s18, 3
    %p74 = por %p72, %p73
    %p76 = scmp.ne.s32.totalorder %s61, %s75
    %p77 = scmp.eq.s32.totalorder %s18, 0
    %p78 = por %p76, %p77
    %s80 = sadd.s32 %s79, 1
    %p83 = scmp.eq.s32.totalorder %s12, 3
    %p84 = scmp.ne.s32.totalorder %s79, %s81
    %p85 = scmp.eq.s32.totalorder %s12, 0
    %p86 = por %p84, %p85
    %p87 = scmp.ne.s32.totalorder %s79, %s81
    %p88 = scmp.eq.s32.totalorder %s17, 3
    %p89 = por %p87, %p88
    %p90 = scmp.ne.s32.totalorder %s81, %s82
    %p91 = scmp.eq.s32.totalorder %s17, 0
    %p92 = por %p90, %p91
    %p93 = scmp.ne.s32.totalorder %s81, %s82
    %p94 = scmp.eq.s32.totalorder %s18, 3
    %p95 = por %p93, %p94
    %p97 = scmp.ne.s32.totalorder %s82, %s96
    %p98 = scmp.eq.s32.totalorder %s18, 0
    %p99 = por %p97, %p98
    %s101 = sadd.s32 %s100, 1
    %p104 = scmp.eq.s32.totalorder %s12, 3
    %p105 = scmp.ne.s32.totalorder %s100, %s102
    %p106 = scmp.eq.s32.totalorder %s12, 0
    %p107 = por %p105, %p106
    %p108 = scmp.ne.s32.totalorder %s100, %s102
    %p109 = scmp.eq.s32.totalorder %s17, 3
    %p110 = por %p108, %p109
    %p111 = scmp.ne.s32.totalorder %s102, %s103
    %p112 = scmp.eq.s32.totalorder %s17, 0
    %p113 = por %p111, %p112
    %p114 = scmp.ne.s32.totalorder %s102, %s103
    %p115 = scmp.eq.s32.totalorder %s18, 3
    %p116 = por %p114, %p115
    %p118 = scmp.ne.s32.totalorder %s103, %s117
    %p119 = scmp.eq.s32.totalorder %s18, 0
    %p120 = por %p118, %p119
    %s121 = ssub.s32 %s19, %s31
    %s122 = ssub.s32 %s20, %s27
    %s123 = sor.u32 %s121, %s122
    %p124 = scmp.eq.s32.totalorder %s123, 0
    %s126 = sadd.s32 %s125, 1
    %s127 = scalar_select %p124, %s125, %s126
    %p130 = pneg %p124
    %p131 = scmp.eq.s32.totalorder %s12, 3
    %p132 = por %p130, %p131
    %p133 = scmp.ne.s32.totalorder %s125, %s128
    %p134 = scmp.eq.s32.totalorder %s12, 0
    %p135 = por %p133, %p134
    %p136 = scmp.ne.s32.totalorder %s125, %s128
    %p137 = scmp.eq.s32.totalorder %s17, 3
    %p138 = por %p136, %p137
    %p139 = scmp.ne.s32.totalorder %s128, %s129
    %p140 = scmp.eq.s32.totalorder %s17, 0
    %p141 = por %p139, %p140
    %p142 = scmp.ne.s32.totalorder %s128, %s129
    %p143 = scmp.eq.s32.totalorder %s18, 3
    %p144 = por %p142, %p143
    %p146 = scmp.ne.s32.totalorder %s129, %s145
    %p147 = scmp.eq.s32.totalorder %s18, 0
    %p148 = por %p146, %p147
    %s149 = ssub.s32 %s19, %s31
    %p150 = scmp.eq.s32.totalorder %s149, 0
    %s152 = sadd.s32 %s151, 1
    %s153 = scalar_select %p150, %s151, %s152
    %p156 = pneg %p150
    %p157 = scmp.eq.s32.totalorder %s12, 3
    %p158 = por %p156, %p157
    %p159 = scmp.ne.s32.totalorder %s151, %s154
    %p160 = scmp.eq.s32.totalorder %s12, 0
    %p161 = por %p159, %p160
    %p162 = scmp.ne.s32.totalorder %s151, %s154
    %p163 = scmp.eq.s32.totalorder %s17, 3
    %p164 = por %p162, %p163
    %p165 = scmp.ne.s32.totalorder %s154, %s155
    %p166 = scmp.eq.s32.totalorder %s17, 0
    %p167 = por %p165, %p166
    %p168 = scmp.ne.s32.totalorder %s154, %s155
    %p169 = scmp.eq.s32.totalorder %s18, 3
    %p170 = por %p168, %p169
    %p172 = scmp.ne.s32.totalorder %s155, %s171
    %p173 = scmp.eq.s32.totalorder %s18, 0
    %p174 = por %p172, %p173
    %p175 = scmp.le.s32.totalorder 1, %s12
    %p176 = scmp.lt.s32.totalorder %s12, 5
    %p177 = pnand %p175, %p176
    %p178 = pneg %p177
    // Predicated region
    $region9: #{osblock_forward.24} parent=5 // pred_check
      _
    $region10: #{osblock_forward.24} parent=5 // pred_check_branch
      %180 = sbr.rel (%p177) target = $region12
    $region11: #{osblock_forward.24} parent=5 // pred_region
      %s181 = ssub.s32 %s12, 1
      // Predicated region
      $region13: #{osblock_forward.24} parent=11 // pred_check
        %p182 = pneg %p71
      $region14: #{osblock_forward.24} parent=11 // pred_check_branch
        %184 = sbr.rel (%p182) target = $region16
      $region15: #{osblock_forward.24} parent=11 // pred_region
        _
      $region16: #{osblock_forward.24} parent=11 // pred_fallthru
        _
      // Predicated region
      $region17: #{osblock_forward.24} parent=11 // pred_check
        %p185 = pneg %p92
      $region18: #{osblock_forward.24} parent=11 // pred_check_branch
        %187 = sbr.rel (%p185) target = $region20
      $region19: #{osblock_forward.24} parent=11 // pred_region
        _
      $region20: #{osblock_forward.24} parent=11 // pred_fallthru
        _
      // Predicated region
      $region21: #{osblock_forward.24} parent=11 // pred_check
        %p188 = pneg %p113
      $region22: #{osblock_forward.24} parent=11 // pred_check_branch
        %190 = sbr.rel (%p188) target = $region24
      $region23: #{osblock_forward.24} parent=11 // pred_region
        _
      $region24: #{osblock_forward.24} parent=11 // pred_fallthru
        _
    $region12: #{osblock_forward.24} parent=5 // pred_fallthru
      _
    %p191 = scmp.lt.s32.totalorder %s12, 4
    // Predicated region
    $region25: #{osblock_forward.24} parent=5 // pred_check
      %p192 = pneg %p191
    $region26: #{osblock_forward.24} parent=5 // pred_check_branch
      %194 = sbr.rel (%p192) target = $region28
    $region27: #{osblock_forward.24} parent=5 // pred_region
      // Predicated region
      $region29: #{osblock_forward.24} parent=27 // pred_check
        %p195 = pneg %p44
      $region30: #{osblock_forward.24} parent=27 // pred_check_branch
        %197 = sbr.rel (%p195) target = $region32
      $region31: #{osblock_forward.24} parent=27 // pred_region
        %p198 = scmp.lt.s32.totalorder %s19, 1
        %s199 = scalar_select %p198, %s19, 1
        %s200 = smul.addr %s199, 32
        %s201 = smul.addr %s200, 4
        %s202 = scalar_lea.vmem %s0, %s201
      $region32: #{osblock_forward.24} parent=27 // pred_fallthru
        _
    $region28: #{osblock_forward.24} parent=5 // pred_fallthru
      _
    %p203 = scmp.le.s32.totalorder 1, %s12
    %p204 = scmp.lt.s32.totalorder %s12, 5
    %p205 = pnand %p203, %p204
    %p206 = pneg %p205
    // Predicated region
    $region33: #{osblock_forward.24} parent=5 // pred_check
      _
    $region34: #{osblock_forward.24} parent=5 // pred_check_branch
      %208 = sbr.rel (%p205) target = $region36
    $region35: #{osblock_forward.24} parent=5 // pred_region
      %s209 = ssub.s32 %s12, 1
      %p210 = scmp.lt.s32.totalorder %s21, 1
      %s211 = scalar_select %p210, %s21, 1
      %s212 = smul.addr %s211, 32
      %s213 = smul.addr %s212, 4
      %s214 = scalar_lea.vmem %s0, %s213
      %p215 = pneg %p50
      %p216 = pneg %p47
      %p217 = pneg %p71
      %p218 = pneg %p68
      %p219 = pneg %p92
      %p220 = pneg %p89
      %p221 = pneg %p113
      %p222 = pneg %p110
      %p223 = pneg %p141
      %p224 = pneg %p138
      %s225 = smul.u32 8, %s22
      %p226 = scmp.lt.s32.totalorder %s21, 1
      %s227 = scalar_select %p226, %s21, 1
      %p228 = scmp.lt.s32.totalorder %s225, 15
      %s229 = scalar_select %p228, %s225, 15
      %s230 = smul.addr %s229, 2
      %s231 = smul.addr %s227, 32
      %s232 = sadd.s32 %s230, %s231
      %s233 = smul.addr %s232, 4
      %s234 = scalar_lea.vmem %s4, %s233
      %p235 = pneg %p167
      %p236 = pneg %p164
      %p237 = scmp.lt.s32.totalorder %s21, 1
      %s238 = scalar_select %p237, %s21, 1
      %s239 = scalar_lea.vmem %s5, %s238
      %p240 = scmp.lt.s32.totalorder %s21, 1
      %s241 = scalar_select %p240, %s21, 1
      %s242 = smul.addr %s241, 32
      %s243 = smul.addr %s242, 4
      %s244 = scalar_lea.vmem %s0, %s243
      %s245 = smul.u32 8, %s22
      %p246 = scmp.lt.s32.totalorder %s21, 1
      %s247 = scalar_select %p246, %s21, 1
      %p248 = scmp.lt.s32.totalorder %s245, 15
      %s249 = scalar_select %p248, %s245, 15
      %s250 = smul.addr %s249, 2
      %s251 = smul.addr %s247, 32
      %s252 = sadd.s32 %s250, %s251
      %s253 = smul.addr %s252, 4
      %s254 = scalar_lea.vmem %s4, %s253
      %s255 = smul.u32 8, %s22
      %p256 = scmp.lt.s32.totalorder %s21, 1
      %s257 = scalar_select %p256, %s21, 1
      %s258 = scalar_lea.vmem %s5, %s257
      %p260 = scmp.eq.s32.totalorder %s22, 0
      // Predicated region
      $region37: #{osblock_forward.24} parent=35 // pred_check
        %p261 = pneg %p260
      $region38: #{osblock_forward.24} parent=35 // pred_check_branch
        %263 = sbr.rel (%p261) target = $region40
      $region39: #{osblock_forward.24} parent=35 // pred_region
        %vm264 = vcmask 130048
        %265 = vst.msk [vmem:[#allocation2] sm:$0xff] %vm264, 0.0
        %266 = vst.msk [vmem:[#allocation2 + $0x8] sm:$0xff] %vm264, 0.0
        %vm267 = vcmask 123904
        %268 = vst.msk [vmem:[#allocation2 + $0x10] sm:$0x3] %vm267, 0.0
        %269 = vst.msk [vmem:[#allocation2 + $0x18] sm:$0xff] %vm264, 0.0
        %270 = vst.msk [vmem:[#allocation2 + $0x20] sm:$0xff] %vm264, 0.0
        %271 = vst.msk [vmem:[#allocation2 + $0x28] sm:$0x3] %vm267, 0.0
        %272 = vst.msk [vmem:[#allocation2 + $0x30] sm:$0xff] %vm264, 0.0
        %273 = vst.msk [vmem:[#allocation2 + $0x38] sm:$0xff] %vm264, 0.0
        %274 = vst.msk [vmem:[#allocation2 + $0x40] sm:$0x3] %vm267, 0.0
        %275 = vst.msk [vmem:[#allocation2 + $0x48] sm:$0xff] %vm264, 0.0
        %276 = vst.msk [vmem:[#allocation2 + $0x50] sm:$0xff] %vm264, 0.0
        %277 = vst.msk [vmem:[#allocation2 + $0x58] sm:$0x3] %vm267, 0.0
        %278 = vst.msk [vmem:[#allocation2 + $0x60] sm:$0xff] %vm264, 0.0
        %279 = vst.msk [vmem:[#allocation2 + $0x68] sm:$0xff] %vm264, 0.0
        %280 = vst.msk [vmem:[#allocation2 + $0x70] sm:$0x3] %vm267, 0.0
        %281 = vst.msk [vmem:[#allocation2 + $0x78] sm:$0xff] %vm264, 0.0
        %282 = vst.msk [vmem:[#allocation2 + $0x80] sm:$0xff] %vm264, 0.0
        %283 = vst.msk [vmem:[#allocation2 + $0x88] sm:$0x3] %vm267, 0.0
        %284 = vst.msk [vmem:[#allocation2 + $0x90] sm:$0xff] %vm264, 0.0
        %285 = vst.msk [vmem:[#allocation2 + $0x98] sm:$0xff] %vm264, 0.0
        %286 = vst.msk [vmem:[#allocation2 + $0xa0] sm:$0x3] %vm267, 0.0
        %287 = vst.msk [vmem:[#allocation2 + $0xa8] sm:$0xff] %vm264, 0.0
        %288 = vst.msk [vmem:[#allocation2 + $0xb0] sm:$0xff] %vm264, 0.0
        %289 = vst.msk [vmem:[#allocation2 + $0xb8] sm:$0x3] %vm267, 0.0
        %290 = vst.msk [vmem:[#allocation2 + $0xc0] sm:$0xff] %vm264, 0.0
        %291 = vst.msk [vmem:[#allocation2 + $0xc8] sm:$0xff] %vm264, 0.0
        %292 = vst.msk [vmem:[#allocation2 + $0xd0] sm:$0x3] %vm267, 0.0
        %293 = vst.msk [vmem:[#allocation2 + $0xd8] sm:$0xff] %vm264, 0.0
        %294 = vst.msk [vmem:[#allocation2 + $0xe0] sm:$0xff] %vm264, 0.0
        %295 = vst.msk [vmem:[#allocation2 + $0xe8] sm:$0x3] %vm267, 0.0
        %296 = vst.msk [vmem:[#allocation2 + $0xf0] sm:$0xff] %vm264, 0.0
        %297 = vst.msk [vmem:[#allocation2 + $0xf8] sm:$0xff] %vm264, 0.0
        %298 = vst.msk [vmem:[#allocation2 + $0x100] sm:$0x3] %vm267, 0.0
        %299 = vst.msk [vmem:[#allocation2 + $0x108] sm:$0xff] %vm264, 0.0
        %300 = vst.msk [vmem:[#allocation2 + $0x110] sm:$0xff] %vm264, 0.0
        %301 = vst.msk [vmem:[#allocation2 + $0x118] sm:$0x3] %vm267, 0.0
        %302 = vst.msk [vmem:[#allocation2 + $0x120] sm:$0xff] %vm264, 0.0
        %303 = vst.msk [vmem:[#allocation2 + $0x128] sm:$0xff] %vm264, 0.0
        %304 = vst.msk [vmem:[#allocation2 + $0x130] sm:$0x3] %vm267, 0.0
        %305 = vst.msk [vmem:[#allocation2 + $0x138] sm:$0xff] %vm264, 0.0
        %306 = vst.msk [vmem:[#allocation2 + $0x140] sm:$0xff] %vm264, 0.0
        %307 = vst.msk [vmem:[#allocation2 + $0x148] sm:$0x3] %vm267, 0.0
        %308 = vst.msk [vmem:[#allocation2 + $0x150] sm:$0xff] %vm264, 0.0
        %309 = vst.msk [vmem:[#allocation2 + $0x158] sm:$0xff] %vm264, 0.0
        %310 = vst.msk [vmem:[#allocation2 + $0x160] sm:$0x3] %vm267, 0.0
        %311 = vst.msk [vmem:[#allocation2 + $0x168] sm:$0xff] %vm264, 0.0
        %312 = vst.msk [vmem:[#allocation2 + $0x170] sm:$0xff] %vm264, 0.0
        %313 = vst.msk [vmem:[#allocation2 + $0x178] sm:$0x3] %vm267, 0.0
        %314 = vst.msk [vmem:[#allocation2 + $0x180] sm:$0xff] %vm264, 0.0
        %315 = vst.msk [vmem:[#allocation2 + $0x188] sm:$0xff] %vm264, 0.0
        %316 = vst.msk [vmem:[#allocation2 + $0x190] sm:$0x3] %vm267, 0.0
        %317 = vst.msk [vmem:[#allocation2 + $0x198] sm:$0xff] %vm264, 0.0
        %318 = vst.msk [vmem:[#allocation2 + $0x1a0] sm:$0xff] %vm264, 0.0
        %319 = vst.msk [vmem:[#allocation2 + $0x1a8] sm:$0x3] %vm267, 0.0
        %v320 = vld [vmem:[%s1] sm:$0xf]
        %v321 = vld [vmem:[%s1 + $0x4] sm:$0xf]
        %v322 = vld [vmem:[%s244] sm:$0xf]
        %v323 = vld [vmem:[%s244 + $0x4] sm:$0xf]
        %v324 = vld [vmem:[%s244 + $0x8] sm:$0xf]
        %v325 = vld [vmem:[%s244 + $0xc] sm:$0xf]
        %v326 = vld [vmem:[%s244 + $0x10] sm:$0xf]
        %v327 = vld [vmem:[%s244 + $0x14] sm:$0xf]
        %v328 = vld [vmem:[%s244 + $0x18] sm:$0xf]
        %v329 = vld [vmem:[%s244 + $0x1c] sm:$0xf]
        %v330 = vld [vmem:[%s244 + $0x20] sm:$0xf]
        %v331 = vld [vmem:[%s244 + $0x24] sm:$0xf]
        %v332 = vld [vmem:[%s244 + $0x28] sm:$0xf]
        %v333 = vld [vmem:[%s244 + $0x2c] sm:$0xf]
        %v334 = vld [vmem:[%s244 + $0x30] sm:$0xf]
        %v335 = vld [vmem:[%s244 + $0x34] sm:$0xf]
        %v336 = vld [vmem:[%s244 + $0x38] sm:$0xf]
        %v337 = vld [vmem:[%s244 + $0x3c] sm:$0xf]
        %v354 = vunpack.c.l.b16 %v322
        %v355 = vunpack.c.l.b16 %v323
        %v356 = vunpack.c.l.b16 %v324
        %v357 = vunpack.c.l.b16 %v325
        %v358 = vunpack.c.l.b16 %v326
        %v359 = vunpack.c.l.b16 %v327
        %v360 = vunpack.c.l.b16 %v328
        %v361 = vunpack.c.l.b16 %v329
        %v362 = vunpack.c.l.b16 %v330
        %v363 = vunpack.c.l.b16 %v331
        %v364 = vunpack.c.l.b16 %v332
        %v365 = vunpack.c.l.b16 %v333
        %v366 = vunpack.c.l.b16 %v334
        %v367 = vunpack.c.l.b16 %v335
        %v368 = vunpack.c.l.b16 %v336
        %v369 = vunpack.c.l.b16 %v337
        %v370 = vpack.c.b16 %v355, %v354
        %v371 = vpack.c.b16 %v357, %v356
        %v372 = vpack.c.b16 %v359, %v358
        %v373 = vpack.c.b16 %v361, %v360
        %v374 = vpack.c.b16 %v363, %v362
        %v375 = vpack.c.b16 %v365, %v364
        %v376 = vpack.c.b16 %v367, %v366
        %v377 = vpack.c.b16 %v369, %v368
        %v380 = vunpack.c.l.b16 %v320
        %v381 = vunpack.c.l.b16 %v321
        %v382 = vpack.c.b16 %v381, %v380
        %v385 = vsel %vm264, %v370, 0
        %v388 = vsel %vm264, %v371, 0
        %v391 = vsel %vm264, %v372, 0
        %v394 = vsel %vm264, %v373, 0
        %v397 = vsel %vm264, %v374, 0
        %v400 = vsel %vm264, %v375, 0
        %v403 = vsel %vm264, %v376, 0
        %v406 = vsel %vm264, %v377, 0
        %408 = vmatprep.subr.bf16.mxu0 0
        %409 = vmatpush1.bf16.msra.mxu0 %v382
        %410 = vmatprep.subr.bf16.mxu0 0
        %411 = vmatpush1.bf16.msra.mxu0 0
        %412 = vmatprep.subr.bf16.mxu0 0
        %413 = vmatpush1.bf16.msra.mxu0 0
        %414 = vmatprep.subr.bf16.mxu0 0
        %415 = vmatpush1.bf16.msra.mxu0 0
        %416 = vmatprep.subr.bf16.mxu0 0
        %417 = vmatpush1.bf16.msra.mxu0 0
        %418 = vmatprep.subr.bf16.mxu0 0
        %419 = vmatpush1.bf16.msra.mxu0 0
        %420 = vmatprep.subr.bf16.mxu0 0
        %421 = vmatpush1.bf16.msra.mxu0 0
        %422 = vmatprep.subr.bf16.mxu0 0
        %423 = vmatpush1.bf16.msra.mxu0 0
        %424 = vmatprep.subr.bf16.mxu0 0
        %425 = vmatpush1.bf16.msra.mxu0 0
        %426 = vmatprep.subr.bf16.mxu0 0
        %427 = vmatpush1.bf16.msra.mxu0 0
        %428 = vmatprep.subr.bf16.mxu0 0
        %429 = vmatpush1.bf16.msra.mxu0 0
        %430 = vmatprep.subr.bf16.mxu0 0
        %431 = vmatpush1.bf16.msra.mxu0 0
        %432 = vmatprep.subr.bf16.mxu0 0
        %433 = vmatpush1.bf16.msra.mxu0 0
        %434 = vmatprep.subr.bf16.mxu0 0
        %435 = vmatpush1.bf16.msra.mxu0 0
        %436 = vmatprep.subr.bf16.mxu0 0
        %437 = vmatpush1.bf16.msra.mxu0 0
        %438 = vmatprep.subr.bf16.mxu0 0
        %439 = vmatpush1.bf16.msra.mxu0 0
        %440 = vmatprep.mubr.bf16.mxu0 0
        %441 = vmatmul.mubr.bf16.gmra.mrb[0].mxu0 %v385
        %v442 = vpop.f32.mrb[0].mxu0
        %v443 = vadd.f32 0.0, %v442
        %v444 = vpop.f32.mrb[0].mxu0
        %v445 = vpop.f32.mrb[0].mxu0
        %v446 = vadd.f32 0.0, %v445
        %v447 = vpop.f32.mrb[0].mxu0
        %448 = vmatprep.mubr.bf16.mxu0 0
        %449 = vmatmul.mubr.bf16.gmra.mrb[0].mxu0 %v388
        %v450 = vpop.f32.mrb[0].mxu0
        %v451 = vadd.f32 0.0, %v450
        %v452 = vpop.f32.mrb[0].mxu0
        %v453 = vpop.f32.mrb[0].mxu0
        %v454 = vadd.f32 0.0, %v453
        %v455 = vpop.f32.mrb[0].mxu0
        %456 = vmatprep.mubr.bf16.mxu0 0
        %457 = vmatmul.mubr.bf16.gmra.mrb[0].mxu0 %v391
        %v458 = vpop.f32.mrb[0].mxu0
        %v459 = vadd.f32 0.0, %v458
        %v460 = vpop.f32.mrb[0].mxu0
        %v461 = vpop.f32.mrb[0].mxu0
        %v462 = vadd.f32 0.0, %v461
        %v463 = vpop.f32.mrb[0].mxu0
        %464 = vmatprep.mubr.bf16.mxu0 0
        %465 = vmatmul.mubr.bf16.gmra.mrb[0].mxu0 %v394
        %v466 = vpop.f32.mrb[0].mxu0
        %v467 = vadd.f32 0.0, %v466
        %v468 = vpop.f32.mrb[0].mxu0
        %v469 = vpop.f32.mrb[0].mxu0
        %v470 = vadd.f32 0.0, %v469
        %v471 = vpop.f32.mrb[0].mxu0
        %472 = vmatprep.mubr.bf16.mxu0 0
        %473 = vmatmul.mubr.bf16.gmra.mrb[0].mxu0 %v397
        %v474 = vpop.f32.mrb[0].mxu0
        %v475 = vadd.f32 0.0, %v474
        %v476 = vpop.f32.mrb[0].mxu0
        %v477 = vpop.f32.mrb[0].mxu0
        %v478 = vadd.f32 0.0, %v477
        %v479 = vpop.f32.mrb[0].mxu0
        %480 = vmatprep.mubr.bf16.mxu0 0
        %481 = vmatmul.mubr.bf16.gmra.mrb[0].mxu0 %v400
        %v482 = vpop.f32.mrb[0].mxu0
        %v483 = vadd.f32 0.0, %v482
        %v484 = vpop.f32.mrb[0].mxu0
        %v485 = vpop.f32.mrb[0].mxu0
        %v486 = vadd.f32 0.0, %v485
        %v487 = vpop.f32.mrb[0].mxu0
        %488 = vmatprep.mubr.bf16.mxu0 0
        %489 = vmatmul.mubr.bf16.gmra.mrb[0].mxu0 %v403
        %v490 = vpop.f32.mrb[0].mxu0
        %v491 = vadd.f32 0.0, %v490
        %v492 = vpop.f32.mrb[0].mxu0
        %v493 = vpop.f32.mrb[0].mxu0
        %v494 = vadd.f32 0.0, %v493
        %v495 = vpop.f32.mrb[0].mxu0
        %496 = vmatprep.mubr.bf16.mxu0 0
        %497 = vmatmul.mubr.bf16.gmra.mrb[0].mxu0 %v406
        %v498 = vpop.f32.mrb[0].mxu0
        %v499 = vadd.f32 0.0, %v498
        %v500 = vpop.f32.mrb[0].mxu0
        %v501 = vpop.f32.mrb[0].mxu0
        %v502 = vadd.f32 0.0, %v501
        %v503 = vpop.f32.mrb[0].mxu0
        %504 = vdwg.mxu0
        %s505 = scalar_lea.vmem [#allocation2], 24
        %506 = vst.msk [vmem:[%s505 + $0x1] sm:$0xff] %vm264, %v443
        %507 = vst.msk [vmem:[%s505 + $0x9] sm:$0xff] %vm264, %v446
        %508 = vst.msk [vmem:[%s505 + $0x19] sm:$0xff] %vm264, %v451
        %509 = vst.msk [vmem:[%s505 + $0x21] sm:$0xff] %vm264, %v454
        %510 = vst.msk [vmem:[%s505 + $0x31] sm:$0xff] %vm264, %v459
        %511 = vst.msk [vmem:[%s505 + $0x39] sm:$0xff] %vm264, %v462
        %512 = vst.msk [vmem:[%s505 + $0x49] sm:$0xff] %vm264, %v467
        %513 = vst.msk [vmem:[%s505 + $0x51] sm:$0xff] %vm264, %v470
        %514 = vst.msk [vmem:[%s505 + $0x61] sm:$0xff] %vm264, %v475
        %515 = vst.msk [vmem:[%s505 + $0x69] sm:$0xff] %vm264, %v478
        %516 = vst.msk [vmem:[%s505 + $0x79] sm:$0xff] %vm264, %v483
        %517 = vst.msk [vmem:[%s505 + $0x81] sm:$0xff] %vm264, %v486
        %518 = vst.msk [vmem:[%s505 + $0x91] sm:$0xff] %vm264, %v491
        %519 = vst.msk [vmem:[%s505 + $0x99] sm:$0xff] %vm264, %v494
        %520 = vst.msk [vmem:[%s505 + $0xa9] sm:$0xff] %vm264, %v499
        %521 = vst.msk [vmem:[%s505 + $0xb1] sm:$0xff] %vm264, %v502
        %v522 = vld [vmem:[%s244 + $0x40] sm:$0xf]
        %v523 = vld [vmem:[%s244 + $0x44] sm:$0xf]
        %v524 = vld [vmem:[%s244 + $0x48] sm:$0xf]
        %v525 = vld [vmem:[%s244 + $0x4c] sm:$0xf]
        %v526 = vld [vmem:[%s244 + $0x50] sm:$0xf]
        %v527 = vld [vmem:[%s244 + $0x54] sm:$0xf]
        %v528 = vld [vmem:[%s244 + $0x58] sm:$0xf]
        %v529 = vld [vmem:[%s244 + $0x5c] sm:$0xf]
        %v530 = vld [vmem:[%s244 + $0x60] sm:$0xf]
        %v531 = vld [vmem:[%s244 + $0x64] sm:$0xf]
        %v532 = vld [vmem:[%s244 + $0x68] sm:$0xf]
        %v533 = vld [vmem:[%s244 + $0x6c] sm:$0xf]
        %v534 = vld [vmem:[%s244 + $0x70] sm:$0xf]
        %v535 = vld [vmem:[%s244 + $0x74] sm:$0xf]
        %v536 = vld [vmem:[%s244 + $0x78] sm:$0xf]
        %v537 = vld [vmem:[%s244 + $0x7c] sm:$0xf]
        %v554 = vunpack.c.l.b16 %v522
        %v555 = vunpack.c.l.b16 %v523
        %v556 = vunpack.c.l.b16 %v524
        %v557 = vunpack.c.l.b16 %v525
        %v558 = vunpack.c.l.b16 %v526
        %v559 = vunpack.c.l.b16 %v527
        %v560 = vunpack.c.l.b16 %v528
        %v561 = vunpack.c.l.b16 %v529
        %v562 = vunpack.c.l.b16 %v530
        %v563 = vunpack.c.l.b16 %v531
        %v564 = vunpack.c.l.b16 %v532
        %v565 = vunpack.c.l.b16 %v533
        %v566 = vunpack.c.l.b16 %v534
        %v567 = vunpack.c.l.b16 %v535
        %v568 = vunpack.c.l.b16 %v536
        %v569 = vunpack.c.l.b16 %v537
        %v570 = vpack.c.b16 %v555, %v554
        %v571 = vpack.c.b16 %v557, %v556
        %v572 = vpack.c.b16 %v559, %v558
        %v573 = vpack.c.b16 %v561, %v560
        %v574 = vpack.c.b16 %v563, %v562
        %v575 = vpack.c.b16 %v565, %v564
        %v576 = vpack.c.b16 %v567, %v566
        %v577 = vpack.c.b16 %v569, %v568
        %v579 = vsel %vm264, %v570, 0
        %v582 = vsel %vm264, %v571, 0
        %v585 = vsel %vm264, %v572, 0
        %v588 = vsel %vm264, %v573, 0
        %v591 = vsel %vm264, %v574, 0
        %v594 = vsel %vm264, %v575, 0
        %v597 = vsel %vm264, %v576, 0
        %v600 = vsel %vm264, %v577, 0
        %602 = vmatprep.subr.bf16.mxu0 0
        %603 = vmatpush1.bf16.msra.mxu0 %v382
        %604 = vmatprep.subr.bf16.mxu0 0
        %605 = vmatpush1.bf16.msra.mxu0 0
        %606 = vmatprep.subr.bf16.mxu0 0
        %607 = vmatpush1.bf16.msra.mxu0 0
        %608 = vmatprep.subr.bf16.mxu0 0
        %609 = vmatpush1.bf16.msra.mxu0 0
        %610 = vmatprep.subr.bf16.mxu0 0
        %611 = vmatpush1.bf16.msra.mxu0 0
        %612 = vmatprep.subr.bf16.mxu0 0
        %613 = vmatpush1.bf16.msra.mxu0 0
        %614 = vmatprep.subr.bf16.mxu0 0
        %615 = vmatpush1.bf16.msra.mxu0 0
        %616 = vmatprep.subr.bf16.mxu0 0
        %617 = vmatpush1.bf16.msra.mxu0 0
        %618 = vmatprep.subr.bf16.mxu0 0
        %619 = vmatpush1.bf16.msra.mxu0 0
        %620 = vmatprep.subr.bf16.mxu0 0
        %621 = vmatpush1.bf16.msra.mxu0 0
        %622 = vmatprep.subr.bf16.mxu0 0
        %623 = vmatpush1.bf16.msra.mxu0 0
        %624 = vmatprep.subr.bf16.mxu0 0
        %625 = vmatpush1.bf16.msra.mxu0 0
        %626 = vmatprep.subr.bf16.mxu0 0
        %627 = vmatpush1.bf16.msra.mxu0 0
        %628 = vmatprep.subr.bf16.mxu0 0
        %629 = vmatpush1.bf16.msra.mxu0 0
        %630 = vmatprep.subr.bf16.mxu0 0
        %631 = vmatpush1.bf16.msra.mxu0 0
        %632 = vmatprep.subr.bf16.mxu0 0
        %633 = vmatpush1.bf16.msra.mxu0 0
        %634 = vmatprep.mubr.bf16.mxu0 0
        %635 = vmatmul.mubr.bf16.gmra.mrb[0].mxu0 %v579
        %v636 = vpop.f32.mrb[0].mxu0
        %v637 = vadd.f32 0.0, %v636
        %v638 = vpop.f32.mrb[0].mxu0
        %v639 = vpop.f32.mrb[0].mxu0
        %v640 = vadd.f32 0.0, %v639
        %v641 = vpop.f32.mrb[0].mxu0
        %642 = vmatprep.mubr.bf16.mxu0 0
        %643 = vmatmul.mubr.bf16.gmra.mrb[0].mxu0 %v582
        %v644 = vpop.f32.mrb[0].mxu0
        %v645 = vadd.f32 0.0, %v644
        %v646 = vpop.f32.mrb[0].mxu0
        %v647 = vpop.f32.mrb[0].mxu0
        %v648 = vadd.f32 0.0, %v647
        %v649 = vpop.f32.mrb[0].mxu0
        %650 = vmatprep.mubr.bf16.mxu0 0
        %651 = vmatmul.mubr.bf16.gmra.mrb[0].mxu0 %v585
        %v652 = vpop.f32.mrb[0].mxu0
        %v653 = vadd.f32 0.0, %v652
        %v654 = vpop.f32.mrb[0].mxu0
        %v655 = vpop.f32.mrb[0].mxu0
        %v656 = vadd.f32 0.0, %v655
        %v657 = vpop.f32.mrb[0].mxu0
        %658 = vmatprep.mubr.bf16.mxu0 0
        %659 = vmatmul.mubr.bf16.gmra.mrb[0].mxu0 %v588
        %v660 = vpop.f32.mrb[0].mxu0
        %v661 = vadd.f32 0.0, %v660
        %v662 = vpop.f32.mrb[0].mxu0
        %v663 = vpop.f32.mrb[0].mxu0
        %v664 = vadd.f32 0.0, %v663
        %v665 = vpop.f32.mrb[0].mxu0
        %666 = vmatprep.mubr.bf16.mxu0 0
        %667 = vmatmul.mubr.bf16.gmra.mrb[0].mxu0 %v591
        %v668 = vpop.f32.mrb[0].mxu0
        %v669 = vadd.f32 0.0, %v668
        %v670 = vpop.f32.mrb[0].mxu0
        %v671 = vpop.f32.mrb[0].mxu0
        %v672 = vadd.f32 0.0, %v671
        %v673 = vpop.f32.mrb[0].mxu0
        %674 = vmatprep.mubr.bf16.mxu0 0
        %675 = vmatmul.mubr.bf16.gmra.mrb[0].mxu0 %v594
        %v676 = vpop.f32.mrb[0].mxu0
        %v677 = vadd.f32 0.0, %v676
        %v678 = vpop.f32.mrb[0].mxu0
        %v679 = vpop.f32.mrb[0].mxu0
        %v680 = vadd.f32 0.0, %v679
        %v681 = vpop.f32.mrb[0].mxu0
        %682 = vmatprep.mubr.bf16.mxu0 0
        %683 = vmatmul.mubr.bf16.gmra.mrb[0].mxu0 %v597
        %v684 = vpop.f32.mrb[0].mxu0
        %v685 = vadd.f32 0.0, %v684
        %v686 = vpop.f32.mrb[0].mxu0
        %v687 = vpop.f32.mrb[0].mxu0
        %v688 = vadd.f32 0.0, %v687
        %v689 = vpop.f32.mrb[0].mxu0
        %690 = vmatprep.mubr.bf16.mxu0 0
        %691 = vmatmul.mubr.bf16.gmra.mrb[0].mxu0 %v600
        %v692 = vpop.f32.mrb[0].mxu0
        %v693 = vadd.f32 0.0, %v692
        %v694 = vpop.f32.mrb[0].mxu0
        %v695 = vpop.f32.mrb[0].mxu0
        %v696 = vadd.f32 0.0, %v695
        %v697 = vpop.f32.mrb[0].mxu0
        %698 = vdwg.mxu0
        %s699 = scalar_lea.vmem [#allocation2], 216
        %700 = vst.msk [vmem:[%s699 + $0x1] sm:$0xff] %vm264, %v637
        %701 = vst.msk [vmem:[%s699 + $0x9] sm:$0xff] %vm264, %v640
        %702 = vst.msk [vmem:[%s699 + $0x19] sm:$0xff] %vm264, %v645
        %703 = vst.msk [vmem:[%s699 + $0x21] sm:$0xff] %vm264, %v648
        %704 = vst.msk [vmem:[%s699 + $0x31] sm:$0xff] %vm264, %v653
        %705 = vst.msk [vmem:[%s699 + $0x39] sm:$0xff] %vm264, %v656
        %706 = vst.msk [vmem:[%s699 + $0x49] sm:$0xff] %vm264, %v661
        %707 = vst.msk [vmem:[%s699 + $0x51] sm:$0xff] %vm264, %v664
        %708 = vst.msk [vmem:[%s699 + $0x61] sm:$0xff] %vm264, %v669
        %709 = vst.msk [vmem:[%s699 + $0x69] sm:$0xff] %vm264, %v672
        %710 = vst.msk [vmem:[%s699 + $0x79] sm:$0xff] %vm264, %v677
        %711 = vst.msk [vmem:[%s699 + $0x81] sm:$0xff] %vm264, %v680
        %712 = vst.msk [vmem:[%s699 + $0x91] sm:$0xff] %vm264, %v685
        %713 = vst.msk [vmem:[%s699 + $0x99] sm:$0xff] %vm264, %v688
        %714 = vst.msk [vmem:[%s699 + $0xa9] sm:$0xff] %vm264, %v693
        %715 = vst.msk [vmem:[%s699 + $0xb1] sm:$0xff] %vm264, %v696
      $region40: #{osblock_forward.24} parent=35 // pred_fallthru
        _
      %s716 = smul.u32 %s22, 8
      %s717 = smul.u32 %s716, 24
      %s718 = scalar_lea.vmem [#allocation2], %s717
      %v719 = vld [vmem:[%s718] sm:$0xff]
      %v720 = vld [vmem:[%s718 + $0x8] sm:$0xff]
      %v721 = vld [vmem:[%s718 + $0x18] sm:$0xff]
      %v722 = vld [vmem:[%s718 + $0x20] sm:$0xff]
      %v723 = vld [vmem:[%s718 + $0x30] sm:$0xff]
      %v724 = vld [vmem:[%s718 + $0x38] sm:$0xff]
      %v725 = vld [vmem:[%s718 + $0x48] sm:$0xff]
      %v726 = vld [vmem:[%s718 + $0x50] sm:$0xff]
      %v727 = vld [vmem:[%s718 + $0x60] sm:$0xff]
      %v728 = vld [vmem:[%s718 + $0x68] sm:$0xff]
      %v729 = vld [vmem:[%s718 + $0x78] sm:$0xff]
      %v730 = vld [vmem:[%s718 + $0x80] sm:$0xff]
      %v731 = vld [vmem:[%s718 + $0x90] sm:$0xff]
      %v732 = vld [vmem:[%s718 + $0x98] sm:$0xff]
      %v733 = vld [vmem:[%s718 + $0xa8] sm:$0xff]
      %v734 = vld [vmem:[%s718 + $0xb0] sm:$0xff]
      %v735 = vld [vmem:[%s2] sm:$0x1]
      %v736 = vlaneseq
      %v737 = vshrl.u32 %v736, 7
      %v738 = vsub.s32 0, %v737
      %v739 = vrot.slane %v735, %v738
      %v740 = vmul.f32 %v719, %v739
      %v741 = vmul.f32 %v720, %v739
      %v742 = vmul.f32 %v721, %v739
      %v743 = vmul.f32 %v722, %v739
      %v744 = vmul.f32 %v723, %v739
      %v745 = vmul.f32 %v724, %v739
      %v746 = vmul.f32 %v725, %v739
      %v747 = vmul.f32 %v726, %v739
      %v748 = vmul.f32 %v727, %v739
      %v749 = vmul.f32 %v728, %v739
      %v750 = vmul.f32 %v729, %v739
      %v751 = vmul.f32 %v730, %v739
      %v752 = vmul.f32 %v731, %v739
      %v753 = vmul.f32 %v732, %v739
      %v754 = vmul.f32 %v733, %v739
      %v755 = vmul.f32 %v734, %v739
      %v756 = vadd.f32 %v740, 0.0
      %v757 = vadd.f32 %v741, 0.0
      %v758 = vadd.f32 %v742, 0.0
      %v759 = vadd.f32 %v743, 0.0
      %v760 = vadd.f32 %v744, 0.0
      %v761 = vadd.f32 %v745, 0.0
      %v762 = vadd.f32 %v746, 0.0
      %v763 = vadd.f32 %v747, 0.0
      %v764 = vadd.f32 %v748, 0.0
      %v765 = vadd.f32 %v749, 0.0
      %v766 = vadd.f32 %v750, 0.0
      %v767 = vadd.f32 %v751, 0.0
      %v768 = vadd.f32 %v752, 0.0
      %v769 = vadd.f32 %v753, 0.0
      %v770 = vadd.f32 %v754, 0.0
      %v771 = vadd.f32 %v755, 0.0
      %v772 = vld [vmem:[%s718 + $0x1] sm:$0xff]
      %v773 = vld [vmem:[%s718 + $0x9] sm:$0xff]
      %v774 = vld [vmem:[%s718 + $0x19] sm:$0xff]
      %v775 = vld [vmem:[%s718 + $0x21] sm:$0xff]
      %v776 = vld [vmem:[%s718 + $0x31] sm:$0xff]
      %v777 = vld [vmem:[%s718 + $0x39] sm:$0xff]
      %v778 = vld [vmem:[%s718 + $0x49] sm:$0xff]
      %v779 = vld [vmem:[%s718 + $0x51] sm:$0xff]
      %v780 = vld [vmem:[%s718 + $0x61] sm:$0xff]
      %v781 = vld [vmem:[%s718 + $0x69] sm:$0xff]
      %v782 = vld [vmem:[%s718 + $0x79] sm:$0xff]
      %v783 = vld [vmem:[%s718 + $0x81] sm:$0xff]
      %v784 = vld [vmem:[%s718 + $0x91] sm:$0xff]
      %v785 = vld [vmem:[%s718 + $0x99] sm:$0xff]
      %v786 = vld [vmem:[%s718 + $0xa9] sm:$0xff]
      %v787 = vld [vmem:[%s718 + $0xb1] sm:$0xff]
      %v788 = vld [vmem:[%s2 + $0x1] sm:$0x1]
      %v789 = vlaneseq
      %v790 = vshrl.u32 %v789, 7
      %v791 = vsub.s32 0, %v790
      %v792 = vrot.slane %v788, %v791
      %v793 = vmul.f32 %v772, %v792
      %v794 = vmul.f32 %v773, %v792
      %v795 = vmul.f32 %v774, %v792
      %v796 = vmul.f32 %v775, %v792
      %v797 = vmul.f32 %v776, %v792
      %v798 = vmul.f32 %v777, %v792
      %v799 = vmul.f32 %v778, %v792
      %v800 = vmul.f32 %v779, %v792
      %v801 = vmul.f32 %v780, %v792
      %v802 = vmul.f32 %v781, %v792
      %v803 = vmul.f32 %v782, %v792
      %v804 = vmul.f32 %v783, %v792
      %v805 = vmul.f32 %v784, %v792
      %v806 = vmul.f32 %v785, %v792
      %v807 = vmul.f32 %v786, %v792
      %v808 = vmul.f32 %v787, %v792
      %v809 = vadd.f32 %v756, %v793
      %v810 = vadd.f32 %v757, %v794
      %v811 = vadd.f32 %v758, %v795
      %v812 = vadd.f32 %v759, %v796
      %v813 = vadd.f32 %v760, %v797
      %v814 = vadd.f32 %v761, %v798
      %v815 = vadd.f32 %v762, %v799
      %v816 = vadd.f32 %v763, %v800
      %v817 = vadd.f32 %v764, %v801
      %v818 = vadd.f32 %v765, %v802
      %v819 = vadd.f32 %v766, %v803
      %v820 = vadd.f32 %v767, %v804
      %v821 = vadd.f32 %v768, %v805
      %v822 = vadd.f32 %v769, %v806
      %v823 = vadd.f32 %v770, %v807
      %v824 = vadd.f32 %v771, %v808
      %v825 = vld [vmem:[%s718 + $0x2] sm:$0xff]
      %v826 = vld [vmem:[%s718 + $0xa] sm:$0xff]
      %v827 = vld [vmem:[%s718 + $0x1a] sm:$0xff]
      %v828 = vld [vmem:[%s718 + $0x22] sm:$0xff]
      %v829 = vld [vmem:[%s718 + $0x32] sm:$0xff]
      %v830 = vld [vmem:[%s718 + $0x3a] sm:$0xff]
      %v831 = vld [vmem:[%s718 + $0x4a] sm:$0xff]
      %v832 = vld [vmem:[%s718 + $0x52] sm:$0xff]
      %v833 = vld [vmem:[%s718 + $0x62] sm:$0xff]
      %v834 = vld [vmem:[%s718 + $0x6a] sm:$0xff]
      %v835 = vld [vmem:[%s718 + $0x7a] sm:$0xff]
      %v836 = vld [vmem:[%s718 + $0x82] sm:$0xff]
      %v837 = vld [vmem:[%s718 + $0x92] sm:$0xff]
      %v838 = vld [vmem:[%s718 + $0x9a] sm:$0xff]
      %v839 = vld [vmem:[%s718 + $0xaa] sm:$0xff]
      %v840 = vld [vmem:[%s718 + $0xb2] sm:$0xff]
      %v841 = vld [vmem:[%s2 + $0x2] sm:$0x1]
      %v842 = vlaneseq
      %v843 = vshrl.u32 %v842, 7
      %v844 = vsub.s32 0, %v843
      %v845 = vrot.slane %v841, %v844
      %v846 = vmul.f32 %v825, %v845
      %v847 = vmul.f32 %v826, %v845
      %v848 = vmul.f32 %v827, %v845
      %v849 = vmul.f32 %v828, %v845
      %v850 = vmul.f32 %v829, %v845
      %v851 = vmul.f32 %v830, %v845
      %v852 = vmul.f32 %v831, %v845
      %v853 = vmul.f32 %v832, %v845
      %v854 = vmul.f32 %v833, %v845
      %v855 = vmul.f32 %v834, %v845
      %v856 = vmul.f32 %v835, %v845
      %v857 = vmul.f32 %v836, %v845
      %v858 = vmul.f32 %v837, %v845
      %v859 = vmul.f32 %v838, %v845
      %v860 = vmul.f32 %v839, %v845
      %v861 = vmul.f32 %v840, %v845
      %v862 = vadd.f32 %v809, %v846
      %v863 = vadd.f32 %v810, %v847
      %v864 = vadd.f32 %v811, %v848
      %v865 = vadd.f32 %v812, %v849
      %v866 = vadd.f32 %v813, %v850
      %v867 = vadd.f32 %v814, %v851
      %v868 = vadd.f32 %v815, %v852
      %v869 = vadd.f32 %v816, %v853
      %v870 = vadd.f32 %v817, %v854
      %v871 = vadd.f32 %v818, %v855
      %v872 = vadd.f32 %v819, %v856
      %v873 = vadd.f32 %v820, %v857
      %v874 = vadd.f32 %v821, %v858
      %v875 = vadd.f32 %v822, %v859
      %v876 = vadd.f32 %v823, %v860
      %v877 = vadd.f32 %v824, %v861
      %s878 = sadd.s32 %s716, 1
      %s879 = smul.u32 %s878, 24
      %s880 = scalar_lea.vmem [#allocation2], %s879
      %v881 = vld [vmem:[%s880] sm:$0xff]
      %v882 = vld [vmem:[%s880 + $0x8] sm:$0xff]
      %v883 = vld [vmem:[%s880 + $0x18] sm:$0xff]
      %v884 = vld [vmem:[%s880 + $0x20] sm:$0xff]
      %v885 = vld [vmem:[%s880 + $0x30] sm:$0xff]
      %v886 = vld [vmem:[%s880 + $0x38] sm:$0xff]
      %v887 = vld [vmem:[%s880 + $0x48] sm:$0xff]
      %v888 = vld [vmem:[%s880 + $0x50] sm:$0xff]
      %v889 = vld [vmem:[%s880 + $0x60] sm:$0xff]
      %v890 = vld [vmem:[%s880 + $0x68] sm:$0xff]
      %v891 = vld [vmem:[%s880 + $0x78] sm:$0xff]
      %v892 = vld [vmem:[%s880 + $0x80] sm:$0xff]
      %v893 = vld [vmem:[%s880 + $0x90] sm:$0xff]
      %v894 = vld [vmem:[%s880 + $0x98] sm:$0xff]
      %v895 = vld [vmem:[%s880 + $0xa8] sm:$0xff]
      %v896 = vld [vmem:[%s880 + $0xb0] sm:$0xff]
      %v897 = vld [vmem:[%s2 + $0x3] sm:$0x1]
      %v898 = vlaneseq
      %v899 = vshrl.u32 %v898, 7
      %v900 = vsub.s32 0, %v899
      %v901 = vrot.slane %v897, %v900
      %v902 = vmul.f32 %v881, %v901
      %v903 = vmul.f32 %v882, %v901
      %v904 = vmul.f32 %v883, %v901
      %v905 = vmul.f32 %v884, %v901
      %v906 = vmul.f32 %v885, %v901
      %v907 = vmul.f32 %v886, %v901
      %v908 = vmul.f32 %v887, %v901
      %v909 = vmul.f32 %v888, %v901
      %v910 = vmul.f32 %v889, %v901
      %v911 = vmul.f32 %v890, %v901
      %v912 = vmul.f32 %v891, %v901
      %v913 = vmul.f32 %v892, %v901
      %v914 = vmul.f32 %v893, %v901
      %v915 = vmul.f32 %v894, %v901
      %v916 = vmul.f32 %v895, %v901
      %v917 = vmul.f32 %v896, %v901
      %v918 = vadd.f32 %v862, %v902
      %v919 = vadd.f32 %v863, %v903
      %v920 = vadd.f32 %v864, %v904
      %v921 = vadd.f32 %v865, %v905
      %v922 = vadd.f32 %v866, %v906
      %v923 = vadd.f32 %v867, %v907
      %v924 = vadd.f32 %v868, %v908
      %v925 = vadd.f32 %v869, %v909
      %v926 = vadd.f32 %v870, %v910
      %v927 = vadd.f32 %v871, %v911
      %v928 = vadd.f32 %v872, %v912
      %v929 = vadd.f32 %v873, %v913
      %v930 = vadd.f32 %v874, %v914
      %v931 = vadd.f32 %v875, %v915
      %v932 = vadd.f32 %v876, %v916
      %v933 = vadd.f32 %v877, %v917
      %v934 = vld [vmem:[%s880 + $0x1] sm:$0xff]
      %v935 = vld [vmem:[%s880 + $0x9] sm:$0xff]
      %v936 = vld [vmem:[%s880 + $0x19] sm:$0xff]
      %v937 = vld [vmem:[%s880 + $0x21] sm:$0xff]
      %v938 = vld [vmem:[%s880 + $0x31] sm:$0xff]
      %v939 = vld [vmem:[%s880 + $0x39] sm:$0xff]
      %v940 = vld [vmem:[%s880 + $0x49] sm:$0xff]
      %v941 = vld [vmem:[%s880 + $0x51] sm:$0xff]
      %v942 = vld [vmem:[%s880 + $0x61] sm:$0xff]
      %v943 = vld [vmem:[%s880 + $0x69] sm:$0xff]
      %v944 = vld [vmem:[%s880 + $0x79] sm:$0xff]
      %v945 = vld [vmem:[%s880 + $0x81] sm:$0xff]
      %v946 = vld [vmem:[%s880 + $0x91] sm:$0xff]
      %v947 = vld [vmem:[%s880 + $0x99] sm:$0xff]
      %v948 = vld [vmem:[%s880 + $0xa9] sm:$0xff]
      %v949 = vld [vmem:[%s880 + $0xb1] sm:$0xff]
      %v950 = vld [vmem:[%s2 + $0x4] sm:$0x1]
      %v951 = vlaneseq
      %v952 = vshrl.u32 %v951, 7
      %v953 = vsub.s32 0, %v952
      %v954 = vrot.slane %v950, %v953
      %v955 = vmul.f32 %v934, %v954
      %v956 = vmul.f32 %v935, %v954
      %v957 = vmul.f32 %v936, %v954
      %v958 = vmul.f32 %v937, %v954
      %v959 = vmul.f32 %v938, %v954
      %v960 = vmul.f32 %v939, %v954
      %v961 = vmul.f32 %v940, %v954
      %v962 = vmul.f32 %v941, %v954
      %v963 = vmul.f32 %v942, %v954
      %v964 = vmul.f32 %v943, %v954
      %v965 = vmul.f32 %v944, %v954
      %v966 = vmul.f32 %v945, %v954
      %v967 = vmul.f32 %v946, %v954
      %v968 = vmul.f32 %v947, %v954
      %v969 = vmul.f32 %v948, %v954
      %v970 = vmul.f32 %v949, %v954
      %v971 = vadd.f32 %v918, %v955
      %v972 = vadd.f32 %v919, %v956
      %v973 = vadd.f32 %v920, %v957
      %v974 = vadd.f32 %v921, %v958
      %v975 = vadd.f32 %v922, %v959
      %v976 = vadd.f32 %v923, %v960
      %v977 = vadd.f32 %v924, %v961
      %v978 = vadd.f32 %v925, %v962
      %v979 = vadd.f32 %v926, %v963
      %v980 = vadd.f32 %v927, %v964
      %v981 = vadd.f32 %v928, %v965
      %v982 = vadd.f32 %v929, %v966
      %v983 = vadd.f32 %v930, %v967
      %v984 = vadd.f32 %v931, %v968
      %v985 = vadd.f32 %v932, %v969
      %v986 = vadd.f32 %v933, %v970
      %v987 = vld [vmem:[%s880 + $0x2] sm:$0xff]
      %v988 = vld [vmem:[%s880 + $0xa] sm:$0xff]
      %v989 = vld [vmem:[%s880 + $0x1a] sm:$0xff]
      %v990 = vld [vmem:[%s880 + $0x22] sm:$0xff]
      %v991 = vld [vmem:[%s880 + $0x32] sm:$0xff]
      %v992 = vld [vmem:[%s880 + $0x3a] sm:$0xff]
      %v993 = vld [vmem:[%s880 + $0x4a] sm:$0xff]
      %v994 = vld [vmem:[%s880 + $0x52] sm:$0xff]
      %v995 = vld [vmem:[%s880 + $0x62] sm:$0xff]
      %v996 = vld [vmem:[%s880 + $0x6a] sm:$0xff]
      %v997 = vld [vmem:[%s880 + $0x7a] sm:$0xff]
      %v998 = vld [vmem:[%s880 + $0x82] sm:$0xff]
      %v999 = vld [vmem:[%s880 + $0x92] sm:$0xff]
      %v1000 = vld [vmem:[%s880 + $0x9a] sm:$0xff]
      %v1001 = vld [vmem:[%s880 + $0xaa] sm:$0xff]
      %v1002 = vld [vmem:[%s880 + $0xb2] sm:$0xff]
      %v1003 = vld [vmem:[%s2 + $0x5] sm:$0x1]
      %v1004 = vlaneseq
      %v1005 = vshrl.u32 %v1004, 7
      %v1006 = vsub.s32 0, %v1005
      %v1007 = vrot.slane %v1003, %v1006
      %v1008 = vmul.f32 %v987, %v1007
      %v1009 = vmul.f32 %v988, %v1007
      %v1010 = vmul.f32 %v989, %v1007
      %v1011 = vmul.f32 %v990, %v1007
      %v1012 = vmul.f32 %v991, %v1007
      %v1013 = vmul.f32 %v992, %v1007
      %v1014 = vmul.f32 %v993, %v1007
      %v1015 = vmul.f32 %v994, %v1007
      %v1016 = vmul.f32 %v995, %v1007
      %v1017 = vmul.f32 %v996, %v1007
      %v1018 = vmul.f32 %v997, %v1007
      %v1019 = vmul.f32 %v998, %v1007
      %v1020 = vmul.f32 %v999, %v1007
      %v1021 = vmul.f32 %v1000, %v1007
      %v1022 = vmul.f32 %v1001, %v1007
      %v1023 = vmul.f32 %v1002, %v1007
      %v1024 = vadd.f32 %v971, %v1008
      %v1025 = vadd.f32 %v972, %v1009
      %v1026 = vadd.f32 %v973, %v1010
      %v1027 = vadd.f32 %v974, %v1011
      %v1028 = vadd.f32 %v975, %v1012
      %v1029 = vadd.f32 %v976, %v1013
      %v1030 = vadd.f32 %v977, %v1014
      %v1031 = vadd.f32 %v978, %v1015
      %v1032 = vadd.f32 %v979, %v1016
      %v1033 = vadd.f32 %v980, %v1017
      %v1034 = vadd.f32 %v981, %v1018
      %v1035 = vadd.f32 %v982, %v1019
      %v1036 = vadd.f32 %v983, %v1020
      %v1037 = vadd.f32 %v984, %v1021
      %v1038 = vadd.f32 %v985, %v1022
      %v1039 = vadd.f32 %v986, %v1023
      %s1040 = sadd.s32 %s716, 2
      %s1041 = smul.u32 %s1040, 24
      %s1042 = scalar_lea.vmem [#allocation2], %s1041
      %v1043 = vld [vmem:[%s1042] sm:$0xff]
      %v1044 = vld [vmem:[%s1042 + $0x8] sm:$0xff]
      %v1045 = vld [vmem:[%s1042 + $0x18] sm:$0xff]
      %v1046 = vld [vmem:[%s1042 + $0x20] sm:$0xff]
      %v1047 = vld [vmem:[%s1042 + $0x30] sm:$0xff]
      %v1048 = vld [vmem:[%s1042 + $0x38] sm:$0xff]
      %v1049 = vld [vmem:[%s1042 + $0x48] sm:$0xff]
      %v1050 = vld [vmem:[%s1042 + $0x50] sm:$0xff]
      %v1051 = vld [vmem:[%s1042 + $0x60] sm:$0xff]
      %v1052 = vld [vmem:[%s1042 + $0x68] sm:$0xff]
      %v1053 = vld [vmem:[%s1042 + $0x78] sm:$0xff]
      %v1054 = vld [vmem:[%s1042 + $0x80] sm:$0xff]
      %v1055 = vld [vmem:[%s1042 + $0x90] sm:$0xff]
      %v1056 = vld [vmem:[%s1042 + $0x98] sm:$0xff]
      %v1057 = vld [vmem:[%s1042 + $0xa8] sm:$0xff]
      %v1058 = vld [vmem:[%s1042 + $0xb0] sm:$0xff]
      %v1059 = vld [vmem:[%s2 + $0x6] sm:$0x1]
      %v1060 = vlaneseq
      %v1061 = vshrl.u32 %v1060, 7
      %v1062 = vsub.s32 0, %v1061
      %v1063 = vrot.slane %v1059, %v1062
      %v1064 = vmul.f32 %v1043, %v1063
      %v1065 = vmul.f32 %v1044, %v1063
      %v1066 = vmul.f32 %v1045, %v1063
      %v1067 = vmul.f32 %v1046, %v1063
      %v1068 = vmul.f32 %v1047, %v1063
      %v1069 = vmul.f32 %v1048, %v1063
      %v1070 = vmul.f32 %v1049, %v1063
      %v1071 = vmul.f32 %v1050, %v1063
      %v1072 = vmul.f32 %v1051, %v1063
      %v1073 = vmul.f32 %v1052, %v1063
      %v1074 = vmul.f32 %v1053, %v1063
      %v1075 = vmul.f32 %v1054, %v1063
      %v1076 = vmul.f32 %v1055, %v1063
      %v1077 = vmul.f32 %v1056, %v1063
      %v1078 = vmul.f32 %v1057, %v1063
      %v1079 = vmul.f32 %v1058, %v1063
      %v1080 = vadd.f32 %v1024, %v1064
      %v1081 = vadd.f32 %v1025, %v1065
      %v1082 = vadd.f32 %v1026, %v1066
      %v1083 = vadd.f32 %v1027, %v1067
      %v1084 = vadd.f32 %v1028, %v1068
      %v1085 = vadd.f32 %v1029, %v1069
      %v1086 = vadd.f32 %v1030, %v1070
      %v1087 = vadd.f32 %v1031, %v1071
      %v1088 = vadd.f32 %v1032, %v1072
      %v1089 = vadd.f32 %v1033, %v1073
      %v1090 = vadd.f32 %v1034, %v1074
      %v1091 = vadd.f32 %v1035, %v1075
      %v1092 = vadd.f32 %v1036, %v1076
      %v1093 = vadd.f32 %v1037, %v1077
      %v1094 = vadd.f32 %v1038, %v1078
      %v1095 = vadd.f32 %v1039, %v1079
      %v1096 = vld [vmem:[%s1042 + $0x1] sm:$0xff]
      %v1097 = vld [vmem:[%s1042 + $0x9] sm:$0xff]
      %v1098 = vld [vmem:[%s1042 + $0x19] sm:$0xff]
      %v1099 = vld [vmem:[%s1042 + $0x21] sm:$0xff]
      %v1100 = vld [vmem:[%s1042 + $0x31] sm:$0xff]
      %v1101 = vld [vmem:[%s1042 + $0x39] sm:$0xff]
      %v1102 = vld [vmem:[%s1042 + $0x49] sm:$0xff]
      %v1103 = vld [vmem:[%s1042 + $0x51] sm:$0xff]
      %v1104 = vld [vmem:[%s1042 + $0x61] sm:$0xff]
      %v1105 = vld [vmem:[%s1042 + $0x69] sm:$0xff]
      %v1106 = vld [vmem:[%s1042 + $0x79] sm:$0xff]
      %v1107 = vld [vmem:[%s1042 + $0x81] sm:$0xff]
      %v1108 = vld [vmem:[%s1042 + $0x91] sm:$0xff]
      %v1109 = vld [vmem:[%s1042 + $0x99] sm:$0xff]
      %v1110 = vld [vmem:[%s1042 + $0xa9] sm:$0xff]
      %v1111 = vld [vmem:[%s1042 + $0xb1] sm:$0xff]
      %v1112 = vld [vmem:[%s2 + $0x7] sm:$0x1]
      %v1113 = vlaneseq
      %v1114 = vshrl.u32 %v1113, 7
      %v1115 = vsub.s32 0, %v1114
      %v1116 = vrot.slane %v1112, %v1115
      %v1117 = vmul.f32 %v1096, %v1116
      %v1118 = vmul.f32 %v1097, %v1116
      %v1119 = vmul.f32 %v1098, %v1116
      %v1120 = vmul.f32 %v1099, %v1116
      %v1121 = vmul.f32 %v1100, %v1116
      %v1122 = vmul.f32 %v1101, %v1116
      %v1123 = vmul.f32 %v1102, %v1116
      %v1124 = vmul.f32 %v1103, %v1116
      %v1125 = vmul.f32 %v1104, %v1116
      %v1126 = vmul.f32 %v1105, %v1116
      %v1127 = vmul.f32 %v1106, %v1116
      %v1128 = vmul.f32 %v1107, %v1116
      %v1129 = vmul.f32 %v1108, %v1116
      %v1130 = vmul.f32 %v1109, %v1116
      %v1131 = vmul.f32 %v1110, %v1116
      %v1132 = vmul.f32 %v1111, %v1116
      %v1133 = vadd.f32 %v1080, %v1117
      %v1134 = vadd.f32 %v1081, %v1118
      %v1135 = vadd.f32 %v1082, %v1119
      %v1136 = vadd.f32 %v1083, %v1120
      %v1137 = vadd.f32 %v1084, %v1121
      %v1138 = vadd.f32 %v1085, %v1122
      %v1139 = vadd.f32 %v1086, %v1123
      %v1140 = vadd.f32 %v1087, %v1124
      %v1141 = vadd.f32 %v1088, %v1125
      %v1142 = vadd.f32 %v1089, %v1126
      %v1143 = vadd.f32 %v1090, %v1127
      %v1144 = vadd.f32 %v1091, %v1128
      %v1145 = vadd.f32 %v1092, %v1129
      %v1146 = vadd.f32 %v1093, %v1130
      %v1147 = vadd.f32 %v1094, %v1131
      %v1148 = vadd.f32 %v1095, %v1132
      %v1149 = vld [vmem:[%s1042 + $0x2] sm:$0xff]
      %v1150 = vld [vmem:[%s1042 + $0xa] sm:$0xff]
      %v1151 = vld [vmem:[%s1042 + $0x1a] sm:$0xff]
      %v1152 = vld [vmem:[%s1042 + $0x22] sm:$0xff]
      %v1153 = vld [vmem:[%s1042 + $0x32] sm:$0xff]
      %v1154 = vld [vmem:[%s1042 + $0x3a] sm:$0xff]
      %v1155 = vld [vmem:[%s1042 + $0x4a] sm:$0xff]
      %v1156 = vld [vmem:[%s1042 + $0x52] sm:$0xff]
      %v1157 = vld [vmem:[%s1042 + $0x62] sm:$0xff]
      %v1158 = vld [vmem:[%s1042 + $0x6a] sm:$0xff]
      %v1159 = vld [vmem:[%s1042 + $0x7a] sm:$0xff]
      %v1160 = vld [vmem:[%s1042 + $0x82] sm:$0xff]
      %v1161 = vld [vmem:[%s1042 + $0x92] sm:$0xff]
      %v1162 = vld [vmem:[%s1042 + $0x9a] sm:$0xff]
      %v1163 = vld [vmem:[%s1042 + $0xaa] sm:$0xff]
      %v1164 = vld [vmem:[%s1042 + $0xb2] sm:$0xff]
      %v1165 = vld [vmem:[%s2 + $0x8] sm:$0x1]
      %v1166 = vlaneseq
      %v1167 = vshrl.u32 %v1166, 7
      %v1168 = vsub.s32 0, %v1167
      %v1169 = vrot.slane %v1165, %v1168
      %v1170 = vmul.f32 %v1149, %v1169
      %v1171 = vmul.f32 %v1150, %v1169
      %v1172 = vmul.f32 %v1151, %v1169
      %v1173 = vmul.f32 %v1152, %v1169
      %v1174 = vmul.f32 %v1153, %v1169
      %v1175 = vmul.f32 %v1154, %v1169
      %v1176 = vmul.f32 %v1155, %v1169
      %v1177 = vmul.f32 %v1156, %v1169
      %v1178 = vmul.f32 %v1157, %v1169
      %v1179 = vmul.f32 %v1158, %v1169
      %v1180 = vmul.f32 %v1159, %v1169
      %v1181 = vmul.f32 %v1160, %v1169
      %v1182 = vmul.f32 %v1161, %v1169
      %v1183 = vmul.f32 %v1162, %v1169
      %v1184 = vmul.f32 %v1163, %v1169
      %v1185 = vmul.f32 %v1164, %v1169
      %v1186 = vadd.f32 %v1133, %v1170
      %v1187 = vadd.f32 %v1134, %v1171
      %v1188 = vadd.f32 %v1135, %v1172
      %v1189 = vadd.f32 %v1136, %v1173
      %v1190 = vadd.f32 %v1137, %v1174
      %v1191 = vadd.f32 %v1138, %v1175
      %v1192 = vadd.f32 %v1139, %v1176
      %v1193 = vadd.f32 %v1140, %v1177
      %v1194 = vadd.f32 %v1141, %v1178
      %v1195 = vadd.f32 %v1142, %v1179
      %v1196 = vadd.f32 %v1143, %v1180
      %v1197 = vadd.f32 %v1144, %v1181
      %v1198 = vadd.f32 %v1145, %v1182
      %v1199 = vadd.f32 %v1146, %v1183
      %v1200 = vadd.f32 %v1147, %v1184
      %v1201 = vadd.f32 %v1148, %v1185
      %v1202 = vld [vmem:[%s3] sm:$0x1]
      %v1204 = vlaneseq
      %v1205 = vshrl.u32 %v1204, 7
      %v1206 = vsub.s32 0, %v1205
      %v1207 = vrot.slane %v1202, %v1206
      %v1209 = vadd.f32 %v1186, %v1207
      %v1210 = vadd.f32 %v1187, %v1207
      %v1211 = vadd.f32 %v1188, %v1207
      %v1212 = vadd.f32 %v1189, %v1207
      %v1213 = vadd.f32 %v1190, %v1207
      %v1214 = vadd.f32 %v1191, %v1207
      %v1215 = vadd.f32 %v1192, %v1207
      %v1216 = vadd.f32 %v1193, %v1207
      %v1217 = vadd.f32 %v1194, %v1207
      %v1218 = vadd.f32 %v1195, %v1207
      %v1219 = vadd.f32 %v1196, %v1207
      %v1220 = vadd.f32 %v1197, %v1207
      %v1221 = vadd.f32 %v1198, %v1207
      %v1222 = vadd.f32 %v1199, %v1207
      %v1223 = vadd.f32 %v1200, %v1207
      %v1224 = vadd.f32 %v1201, %v1207
      %v1225 = vmax.f32 %v1209, 0.0
      %v1226 = vmax.f32 %v1210, 0.0
      %v1227 = vmax.f32 %v1211, 0.0
      %v1228 = vmax.f32 %v1212, 0.0
      %v1229 = vmax.f32 %v1213, 0.0
      %v1230 = vmax.f32 %v1214, 0.0
      %v1231 = vmax.f32 %v1215, 0.0
      %v1232 = vmax.f32 %v1216, 0.0
      %v1233 = vmax.f32 %v1217, 0.0
      %v1234 = vmax.f32 %v1218, 0.0
      %v1235 = vmax.f32 %v1219, 0.0
      %v1236 = vmax.f32 %v1220, 0.0
      %v1237 = vmax.f32 %v1221, 0.0
      %v1238 = vmax.f32 %v1222, 0.0
      %v1239 = vmax.f32 %v1223, 0.0
      %v1240 = vmax.f32 %v1224, 0.0
      %v1241 = vpack.c.bf16 %v1226, %v1225
      %v1242 = vpack.c.bf16 %v1228, %v1227
      %v1243 = vpack.c.bf16 %v1230, %v1229
      %v1244 = vpack.c.bf16 %v1232, %v1231
      %v1245 = vpack.c.bf16 %v1234, %v1233
      %v1246 = vpack.c.bf16 %v1236, %v1235
      %v1247 = vpack.c.bf16 %v1238, %v1237
      %v1248 = vpack.c.bf16 %v1240, %v1239
      %v1257 = vunpack.c.l.b16 %v1241
      %v1258 = vunpack.c.h.b16 %v1241
      %v1259 = vunpack.c.l.b16 %v1242
      %v1260 = vunpack.c.h.b16 %v1242
      %v1261 = vunpack.c.l.b16 %v1243
      %v1262 = vunpack.c.h.b16 %v1243
      %v1263 = vunpack.c.l.b16 %v1244
      %v1264 = vunpack.c.h.b16 %v1244
      %v1265 = vunpack.c.l.b16 %v1245
      %v1266 = vunpack.c.h.b16 %v1245
      %v1267 = vunpack.c.l.b16 %v1246
      %v1268 = vunpack.c.h.b16 %v1246
      %v1269 = vunpack.c.l.b16 %v1247
      %v1270 = vunpack.c.h.b16 %v1247
      %v1271 = vunpack.c.l.b16 %v1248
      %v1272 = vunpack.c.h.b16 %v1248
      %v1273 = vpack.c.b16 %v1257, %v1257
      %v1274 = vpack.c.b16 %v1258, %v1258
      %v1275 = vpack.c.b16 %v1259, %v1259
      %v1276 = vpack.c.b16 %v1260, %v1260
      %v1277 = vpack.c.b16 %v1261, %v1261
      %v1278 = vpack.c.b16 %v1262, %v1262
      %v1279 = vpack.c.b16 %v1263, %v1263
      %v1280 = vpack.c.b16 %v1264, %v1264
      %v1281 = vpack.c.b16 %v1265, %v1265
      %v1282 = vpack.c.b16 %v1266, %v1266
      %v1283 = vpack.c.b16 %v1267, %v1267
      %v1284 = vpack.c.b16 %v1268, %v1268
      %v1285 = vpack.c.b16 %v1269, %v1269
      %v1286 = vpack.c.b16 %v1270, %v1270
      %v1287 = vpack.c.b16 %v1271, %v1271
      %v1288 = vpack.c.b16 %v1272, %v1272
      %vm1305 = vcmask 125952
      %1306 = vst.msk [vmem:[%s254] sm:$0xf] %vm1305, %v1273
      %1307 = vst.msk [vmem:[%s254 + $0x4] sm:$0xf] %vm1305, %v1274
      %1308 = vst.msk [vmem:[%s254 + $0x8] sm:$0xf] %vm1305, %v1275
      %1309 = vst.msk [vmem:[%s254 + $0xc] sm:$0xf] %vm1305, %v1276
      %1310 = vst.msk [vmem:[%s254 + $0x10] sm:$0xf] %vm1305, %v1277
      %1311 = vst.msk [vmem:[%s254 + $0x14] sm:$0xf] %vm1305, %v1278
      %1312 = vst.msk [vmem:[%s254 + $0x18] sm:$0xf] %vm1305, %v1279
      %1313 = vst.msk [vmem:[%s254 + $0x1c] sm:$0xf] %vm1305, %v1280
      %1314 = vst.msk [vmem:[%s254 + $0x20] sm:$0xf] %vm1305, %v1281
      %1315 = vst.msk [vmem:[%s254 + $0x24] sm:$0xf] %vm1305, %v1282
      %1316 = vst.msk [vmem:[%s254 + $0x28] sm:$0xf] %vm1305, %v1283
      %1317 = vst.msk [vmem:[%s254 + $0x2c] sm:$0xf] %vm1305, %v1284
      %1318 = vst.msk [vmem:[%s254 + $0x30] sm:$0xf] %vm1305, %v1285
      %1319 = vst.msk [vmem:[%s254 + $0x34] sm:$0xf] %vm1305, %v1286
      %1320 = vst.msk [vmem:[%s254 + $0x38] sm:$0xf] %vm1305, %v1287
      %1321 = vst.msk [vmem:[%s254 + $0x3c] sm:$0xf] %vm1305, %v1288
      // Predicated region
      $region41: #{osblock_forward.24} parent=35 // pred_check
        %p1322 = pneg %p260
      $region42: #{osblock_forward.24} parent=35 // pred_check_branch
        %1324 = sbr.rel (%p1322) target = $region44
      $region43: #{osblock_forward.24} parent=35 // pred_region
        %vm1325 = vcmask 122880
        %1326 = vst.msk [vmem:[%s258] sm:$0x1] %vm1325, 0.0
      $region44: #{osblock_forward.24} parent=35 // pred_fallthru
        _
      %v1327 = vld [vmem:[%s258] sm:$0x1]
      %vm1328 = vcmask 130048
      %v1329 = vsel %vm1328, %v1225, 0.0
      %v1330 = vsel %vm1328, %v1226, 0.0
      %v1331 = vadd.f32 %v1329, %v1330
      %v1332 = vsel %vm1328, %v1227, 0.0
      %v1333 = vadd.f32 %v1331, %v1332
      %v1334 = vsel %vm1328, %v1228, 0.0
      %v1335 = vadd.f32 %v1333, %v1334
      %v1336 = vsel %vm1328, %v1229, 0.0
      %v1337 = vadd.f32 %v1335, %v1336
      %v1338 = vsel %vm1328, %v1230, 0.0
      %v1339 = vadd.f32 %v1337, %v1338
      %v1340 = vsel %vm1328, %v1231, 0.0
      %v1341 = vadd.f32 %v1339, %v1340
      %v1342 = vsel %vm1328, %v1232, 0.0
      %v1343 = vadd.f32 %v1341, %v1342
      %v1344 = vsel %vm1328, %v1233, 0.0
      %v1345 = vadd.f32 %v1343, %v1344
      %v1346 = vsel %vm1328, %v1234, 0.0
      %v1347 = vadd.f32 %v1345, %v1346
      %v1348 = vsel %vm1328, %v1235, 0.0
      %v1349 = vadd.f32 %v1347, %v1348
      %v1350 = vsel %vm1328, %v1236, 0.0
      %v1351 = vadd.f32 %v1349, %v1350
      %v1352 = vsel %vm1328, %v1237, 0.0
      %v1353 = vadd.f32 %v1351, %v1352
      %v1354 = vsel %vm1328, %v1238, 0.0
      %v1355 = vadd.f32 %v1353, %v1354
      %v1356 = vsel %vm1328, %v1239, 0.0
      %v1357 = vadd.f32 %v1355, %v1356
      %v1358 = vsel %vm1328, %v1240, 0.0
      %v1359 = vadd.f32 %v1357, %v1358
      %v1360 = vrot.slane %v1359, 4
      %v1361 = vadd.f32 %v1359, %v1360
      %v1362 = vrot.slane %v1361, 2
      %v1363 = vadd.f32 %v1361, %v1362
      %v1364 = vrot.slane %v1363, 1
      %v1365 = vadd.f32 %v1363, %v1364
      %v1366 = vadd.f32 %v1327, %v1365
      %vm1367 = vcmask 122880
      %1368 = vst.msk [vmem:[%s258] sm:$0x1] %vm1367, %v1366
      %s1369 = smul.u32 8, %s22
      %p1370 = scmp.lt.s32.totalorder %s21, 1
      %s1371 = scalar_select %p1370, %s21, 1
      %p1372 = scmp.lt.s32.totalorder %s1369, 15
      %s1373 = scalar_select %p1372, %s1369, 15
      %s1374 = smul.addr %s1373, 2
      %s1375 = smul.addr %s1371, 32
      %s1376 = sadd.s32 %s1374, %s1375
      %s1377 = smul.addr %s1376, 4
      %s1378 = scalar_lea.vmem %s4, %s1377
      %p1379 = scmp.lt.s32.totalorder %s21, 1
      %s1380 = scalar_select %p1379, %s21, 1
      %s1381 = scalar_lea.vmem %s5, %s1380
      // Predicated region
      $region45: #{osblock_forward.24} parent=35 // pred_check
        %p1382 = pneg %p138
      $region46: #{osblock_forward.24} parent=35 // pred_check_branch
        %1384 = sbr.rel (%p1382) target = $region48
      $region47: #{osblock_forward.24} parent=35 // pred_region
        %s1385 = smul.u32 8, %s22
      $region48: #{osblock_forward.24} parent=35 // pred_fallthru
        _
      // Predicated region
      $region49: #{osblock_forward.24} parent=35 // pred_check
        %p1386 = pneg %p164
      $region50: #{osblock_forward.24} parent=35 // pred_check_branch
        %1388 = sbr.rel (%p1386) target = $region52
      $region51: #{osblock_forward.24} parent=35 // pred_region
        _
      $region52: #{osblock_forward.24} parent=35 // pred_fallthru
        _
    $region36: #{osblock_forward.24} parent=5 // pred_fallthru
      _
    %p1389 = scmp.le.s32.totalorder 2, %s12
    // Predicated region
    $region53: #{osblock_forward.24} parent=5 // pred_check
      %p1390 = pneg %p1389
    $region54: #{osblock_forward.24} parent=5 // pred_check_branch
      %1392 = sbr.rel (%p1390) target = $region56
    $region55: #{osblock_forward.24} parent=5 // pred_region
      %s1393 = ssub.s32 %s12, 2
      // Predicated region
      $region57: #{osblock_forward.24} parent=55 // pred_check
        %p1394 = pneg %p144
      $region58: #{osblock_forward.24} parent=55 // pred_check_branch
        %1396 = sbr.rel (%p1394) target = $region60
      $region59: #{osblock_forward.24} parent=55 // pred_region
        %s1397 = smul.u32 8, %s24
        %p1398 = scmp.lt.s32.totalorder %s23, 1
        %s1399 = scalar_select %p1398, %s23, 1
        %p1400 = scmp.lt.s32.totalorder %s1397, 15
        %s1401 = scalar_select %p1400, %s1397, 15
        %s1402 = smul.addr %s1401, 2
        %s1403 = smul.addr %s1399, 32
        %s1404 = sadd.s32 %s1402, %s1403
        %s1405 = smul.addr %s1404, 4
        %s1406 = scalar_lea.vmem %s4, %s1405
      $region60: #{osblock_forward.24} parent=55 // pred_fallthru
        _
      // Predicated region
      $region61: #{osblock_forward.24} parent=55 // pred_check
        %p1407 = pneg %p170
      $region62: #{osblock_forward.24} parent=55 // pred_check_branch
        %1409 = sbr.rel (%p1407) target = $region64
      $region63: #{osblock_forward.24} parent=55 // pred_region
        %p1410 = scmp.lt.s32.totalorder %s23, 1
        %s1411 = scalar_select %p1410, %s23, 1
        %s1412 = scalar_lea.vmem %s5, %s1411
      $region64: #{osblock_forward.24} parent=55 // pred_fallthru
        _
    $region56: #{osblock_forward.24} parent=5 // pred_fallthru
      _
  $region6: #{osblock_forward.24} parent=0 // loop_footer
    %s16 = sadd.s32 1, %s12
  $region7: #{osblock_forward.24} parent=0 // loop_footer_branch
    %11 = sbr.rel target = $region3
  $region8: #{osblock_forward.24} parent=0 // loop_exit
    _

// kernel: osblock_forward.26
$region0: #{osblock_forward.26}
  #allocation0 [shape = 'u32[]', space=smem, size = 0x4, offset = 0x4, fixed_abs, tag = 'smem constant byte address 0x4 - core index']
  #allocation1 [shape = 'u32[144,128]{1,0:T(1,128)}', space=vmem, size = 0x12000, scoped, tag = 'internal scratch']
  %s0 = inlined_call_operand.vmem [shape: f32[2,4,16], index: 0, kind: input, shape index: {}]
  %s1 = inlined_call_operand.vmem [shape: bf16[2,16,16,16], index: 1, kind: input, shape index: {}]
  %s2 = inlined_call_operand.vmem [shape: bf16[2,16,16,16], index: 2, kind: input, shape index: {}]
  %s3 = inlined_call_operand.vmem [shape: bf16[2,16,16,16], index: 3, kind: input, shape index: {}]
  %s4 = inlined_call_operand.vmem [shape: bf16[2,16,16,16], index: 4, kind: input, shape index: {}]
  %s5 = inlined_call_operand.vmem [shape: bf16[2,16,16,16], index: 5, kind: output, shape index: {}]
  %s6 = sld [smem:[#allocation0]]
  $region53: #{osblock_forward.26} parent=0
    _
  %s8 = ssub.s32 1, %s6
  %s9 = scalar_select 0, %s8, %s6
  loop: start=0, step=1, limit=6
  $region2: #{osblock_forward.26} parent=0 // loop_pre_header
    _
  $region3: #{osblock_forward.26} parent=0 // loop_header
    %s11 = sphi 0, %s15
    %p12 = scmp.ge.s32.totalorder %s11, 6
    %s18 = sphi 0, %s30
    %s19 = sphi 0, %s26
    %s20 = sphi 0, %s18
    %s21 = sphi 0, %s19
    %s22 = sphi 0, %s20
    %s23 = sphi 0, %s21
    %s33 = sphi 0, %s35
    %s36 = sphi 0, %s33
    %s37 = sphi 0, %s36
    %s53 = sphi 0, %s37
    %s61 = sphi 0, %s63
    %s64 = sphi 0, %s61
    %s65 = sphi 0, %s64
    %s81 = sphi 0, %s65
    %s89 = sphi 0, %s91
    %s92 = sphi 0, %s89
    %s93 = sphi 0, %s92
    %s109 = sphi 0, %s93
    %s117 = sphi 0, %s119
    %s120 = sphi 0, %s117
    %s121 = sphi 0, %s120
    %s137 = sphi 0, %s121
    %s145 = sphi 0, %s147
    %s148 = sphi 0, %s145
    %s149 = sphi 0, %s148
    %s165 = sphi 0, %s149
    %s173 = sphi 0, %s175
    %s176 = sphi 0, %s173
    %s177 = sphi 0, %s176
    %s193 = sphi 0, %s177
  $region4: #{osblock_forward.26} parent=0 // loop_header_branch
    %14 = sbr.rel (%p12) target = $region8
  $region5: #{osblock_forward.26} parent=0 // loop_body
    %s16 = ssub.s32 %s11, 1
    %s17 = ssub.s32 %s11, 2
    %s24 = sadd.s32 1, %s19
    %p25 = scmp.ge.s32.totalorder %s24, 2
    %s26 = scalar_select %p25, 0, %s24
    %s27 = sadd.s32 1, %s18
    %s28 = scalar_select %p25, %s27, %s18
    %p29 = scmp.ge.s32.totalorder %s28, 2
    %s30 = scalar_select %p29, 0, %s28
    %s31 = ssub.s32 %s18, %s30
    %p32 = scmp.eq.s32.totalorder %s31, 0
    %s34 = sadd.s32 %s33, 1
    %s35 = scalar_select %p32, %s33, %s34
    %p38 = pneg %p32
    %p39 = scmp.eq.s32.totalorder %s11, 3
    %p40 = por %p38, %p39
    %p41 = scmp.ne.s32.totalorder %s33, %s36
    %p42 = scmp.eq.s32.totalorder %s11, 0
    %p43 = por %p41, %p42
    %p44 = scmp.ne.s32.totalorder %s33, %s36
    %p45 = scmp.eq.s32.totalorder %s16, 3
    %p46 = por %p44, %p45
    %p47 = scmp.ne.s32.totalorder %s36, %s37
    %p48 = scmp.eq.s32.totalorder %s16, 0
    %p49 = por %p47, %p48
    %p50 = scmp.ne.s32.totalorder %s36, %s37
    %p51 = scmp.eq.s32.totalorder %s17, 3
    %p52 = por %p50, %p51
    %p54 = scmp.ne.s32.totalorder %s37, %s53
    %p55 = scmp.eq.s32.totalorder %s17, 0
    %p56 = por %p54, %p55
    %s57 = ssub.s32 %s18, %s30
    %s58 = ssub.s32 %s19, %s26
    %s59 = sor.u32 %s57, %s58
    %p60 = scmp.eq.s32.totalorder %s59, 0
    %s62 = sadd.s32 %s61, 1
    %s63 = scalar_select %p60, %s61, %s62
    %p66 = pneg %p60
    %p67 = scmp.eq.s32.totalorder %s11, 3
    %p68 = por %p66, %p67
    %p69 = scmp.ne.s32.totalorder %s61, %s64
    %p70 = scmp.eq.s32.totalorder %s11, 0
    %p71 = por %p69, %p70
    %p72 = scmp.ne.s32.totalorder %s61, %s64
    %p73 = scmp.eq.s32.totalorder %s16, 3
    %p74 = por %p72, %p73
    %p75 = scmp.ne.s32.totalorder %s64, %s65
    %p76 = scmp.eq.s32.totalorder %s16, 0
    %p77 = por %p75, %p76
    %p78 = scmp.ne.s32.totalorder %s64, %s65
    %p79 = scmp.eq.s32.totalorder %s17, 3
    %p80 = por %p78, %p79
    %p82 = scmp.ne.s32.totalorder %s65, %s81
    %p83 = scmp.eq.s32.totalorder %s17, 0
    %p84 = por %p82, %p83
    %s85 = ssub.s32 %s18, %s30
    %s86 = ssub.s32 %s19, %s26
    %s87 = sor.u32 %s85, %s86
    %p88 = scmp.eq.s32.totalorder %s87, 0
    %s90 = sadd.s32 %s89, 1
    %s91 = scalar_select %p88, %s89, %s90
    %p94 = pneg %p88
    %p95 = scmp.eq.s32.totalorder %s11, 3
    %p96 = por %p94, %p95
    %p97 = scmp.ne.s32.totalorder %s89, %s92
    %p98 = scmp.eq.s32.totalorder %s11, 0
    %p99 = por %p97, %p98
    %p100 = scmp.ne.s32.totalorder %s89, %s92
    %p101 = scmp.eq.s32.totalorder %s16, 3
    %p102 = por %p100, %p101
    %p103 = scmp.ne.s32.totalorder %s92, %s93
    %p104 = scmp.eq.s32.totalorder %s16, 0
    %p105 = por %p103, %p104
    %p106 = scmp.ne.s32.totalorder %s92, %s93
    %p107 = scmp.eq.s32.totalorder %s17, 3
    %p108 = por %p106, %p107
    %p110 = scmp.ne.s32.totalorder %s93, %s109
    %p111 = scmp.eq.s32.totalorder %s17, 0
    %p112 = por %p110, %p111
    %s113 = ssub.s32 %s18, %s30
    %s114 = ssub.s32 %s19, %s26
    %s115 = sor.u32 %s113, %s114
    %p116 = scmp.eq.s32.totalorder %s115, 0
    %s118 = sadd.s32 %s117, 1
    %s119 = scalar_select %p116, %s117, %s118
    %p122 = pneg %p116
    %p123 = scmp.eq.s32.totalorder %s11, 3
    %p124 = por %p122, %p123
    %p125 = scmp.ne.s32.totalorder %s117, %s120
    %p126 = scmp.eq.s32.totalorder %s11, 0
    %p127 = por %p125, %p126
    %p128 = scmp.ne.s32.totalorder %s117, %s120
    %p129 = scmp.eq.s32.totalorder %s16, 3
    %p130 = por %p128, %p129
    %p131 = scmp.ne.s32.totalorder %s120, %s121
    %p132 = scmp.eq.s32.totalorder %s16, 0
    %p133 = por %p131, %p132
    %p134 = scmp.ne.s32.totalorder %s120, %s121
    %p135 = scmp.eq.s32.totalorder %s17, 3
    %p136 = por %p134, %p135
    %p138 = scmp.ne.s32.totalorder %s121, %s137
    %p139 = scmp.eq.s32.totalorder %s17, 0
    %p140 = por %p138, %p139
    %s141 = ssub.s32 %s18, %s30
    %s142 = ssub.s32 %s19, %s26
    %s143 = sor.u32 %s141, %s142
    %p144 = scmp.eq.s32.totalorder %s143, 0
    %s146 = sadd.s32 %s145, 1
    %s147 = scalar_select %p144, %s145, %s146
    %p150 = pneg %p144
    %p151 = scmp.eq.s32.totalorder %s11, 3
    %p152 = por %p150, %p151
    %p153 = scmp.ne.s32.totalorder %s145, %s148
    %p154 = scmp.eq.s32.totalorder %s11, 0
    %p155 = por %p153, %p154
    %p156 = scmp.ne.s32.totalorder %s145, %s148
    %p157 = scmp.eq.s32.totalorder %s16, 3
    %p158 = por %p156, %p157
    %p159 = scmp.ne.s32.totalorder %s148, %s149
    %p160 = scmp.eq.s32.totalorder %s16, 0
    %p161 = por %p159, %p160
    %p162 = scmp.ne.s32.totalorder %s148, %s149
    %p163 = scmp.eq.s32.totalorder %s17, 3
    %p164 = por %p162, %p163
    %p166 = scmp.ne.s32.totalorder %s149, %s165
    %p167 = scmp.eq.s32.totalorder %s17, 0
    %p168 = por %p166, %p167
    %s169 = ssub.s32 %s18, %s30
    %s170 = ssub.s32 %s19, %s26
    %s171 = sor.u32 %s169, %s170
    %p172 = scmp.eq.s32.totalorder %s171, 0
    %s174 = sadd.s32 %s173, 1
    %s175 = scalar_select %p172, %s173, %s174
    %p178 = pneg %p172
    %p179 = scmp.eq.s32.totalorder %s11, 3
    %p180 = por %p178, %p179
    %p181 = scmp.ne.s32.totalorder %s173, %s176
    %p182 = scmp.eq.s32.totalorder %s11, 0
    %p183 = por %p181, %p182
    %p184 = scmp.ne.s32.totalorder %s173, %s176
    %p185 = scmp.eq.s32.totalorder %s16, 3
    %p186 = por %p184, %p185
    %p187 = scmp.ne.s32.totalorder %s176, %s177
    %p188 = scmp.eq.s32.totalorder %s16, 0
    %p189 = por %p187, %p188
    %p190 = scmp.ne.s32.totalorder %s176, %s177
    %p191 = scmp.eq.s32.totalorder %s17, 3
    %p192 = por %p190, %p191
    %p194 = scmp.ne.s32.totalorder %s177, %s193
    %p195 = scmp.eq.s32.totalorder %s17, 0
    %p196 = por %p194, %p195
    %p197 = scmp.le.s32.totalorder 1, %s11
    %p198 = scmp.lt.s32.totalorder %s11, 5
    %p199 = pnand %p197, %p198
    %p200 = pneg %p199
    // Predicated region
    $region9: #{osblock_forward.26} parent=5 // pred_check
      _
    $region10: #{osblock_forward.26} parent=5 // pred_check_branch
      %202 = sbr.rel (%p199) target = $region12
    $region11: #{osblock_forward.26} parent=5 // pred_region
      %s203 = ssub.s32 %s11, 1
    $region12: #{osblock_forward.26} parent=5 // pred_fallthru
      _
    %p204 = scmp.lt.s32.totalorder %s11, 4
    // Predicated region
    $region13: #{osblock_forward.26} parent=5 // pred_check
      %p205 = pneg %p204
    $region14: #{osblock_forward.26} parent=5 // pred_check_branch
      %207 = sbr.rel (%p205) target = $region16
    $region15: #{osblock_forward.26} parent=5 // pred_region
      // Predicated region
      $region17: #{osblock_forward.26} parent=15 // pred_check
        %p208 = pneg %p43
      $region18: #{osblock_forward.26} parent=15 // pred_check_branch
        %210 = sbr.rel (%p208) target = $region20
      $region19: #{osblock_forward.26} parent=15 // pred_region
        %p211 = scmp.lt.s32.totalorder %s18, 1
        %s212 = scalar_select %p211, %s18, 1
        %s213 = smul.addr %s212, 4
        %s214 = scalar_lea.vmem %s0, %s213
      $region20: #{osblock_forward.26} parent=15 // pred_fallthru
        _
      // Predicated region
      $region21: #{osblock_forward.26} parent=15 // pred_check
        %p215 = pneg %p71
      $region22: #{osblock_forward.26} parent=15 // pred_check_branch
        %217 = sbr.rel (%p215) target = $region24
      $region23: #{osblock_forward.26} parent=15 // pred_region
        %s218 = smul.u32 8, %s19
        %p219 = scmp.lt.s32.totalorder %s18, 1
        %s220 = scalar_select %p219, %s18, 1
        %p221 = scmp.lt.s32.totalorder %s218, 15
        %s222 = scalar_select %p221, %s218, 15
        %s223 = smul.addr %s222, 2
        %s224 = smul.addr %s220, 32
        %s225 = sadd.s32 %s223, %s224
        %s226 = smul.addr %s225, 4
        %s227 = scalar_lea.vmem %s1, %s226
        %s228 = smul.u32 8, %s19
      $region24: #{osblock_forward.26} parent=15 // pred_fallthru
        _
      // Predicated region
      $region25: #{osblock_forward.26} parent=15 // pred_check
        %p229 = pneg %p99
      $region26: #{osblock_forward.26} parent=15 // pred_check_branch
        %231 = sbr.rel (%p229) target = $region28
      $region27: #{osblock_forward.26} parent=15 // pred_region
        %s232 = smul.u32 8, %s19
        %p233 = scmp.lt.s32.totalorder %s18, 1
        %s234 = scalar_select %p233, %s18, 1
        %p235 = scmp.lt.s32.totalorder %s232, 15
        %s236 = scalar_select %p235, %s232, 15
        %s237 = smul.addr %s236, 2
        %s238 = smul.addr %s234, 32
        %s239 = sadd.s32 %s237, %s238
        %s240 = smul.addr %s239, 4
        %s241 = scalar_lea.vmem %s2, %s240
        %s242 = smul.u32 8, %s19
      $region28: #{osblock_forward.26} parent=15 // pred_fallthru
        _
      // Predicated region
      $region29: #{osblock_forward.26} parent=15 // pred_check
        %p243 = pneg %p127
      $region30: #{osblock_forward.26} parent=15 // pred_check_branch
        %245 = sbr.rel (%p243) target = $region32
      $region31: #{osblock_forward.26} parent=15 // pred_region
        %s246 = smul.u32 8, %s19
        %p247 = scmp.lt.s32.totalorder %s18, 1
        %s248 = scalar_select %p247, %s18, 1
        %p249 = scmp.lt.s32.totalorder %s246, 15
        %s250 = scalar_select %p249, %s246, 15
        %s251 = smul.addr %s250, 2
        %s252 = smul.addr %s248, 32
        %s253 = sadd.s32 %s251, %s252
        %s254 = smul.addr %s253, 4
        %s255 = scalar_lea.vmem %s3, %s254
        %s256 = smul.u32 8, %s19
      $region32: #{osblock_forward.26} parent=15 // pred_fallthru
        _
      // Predicated region
      $region33: #{osblock_forward.26} parent=15 // pred_check
        %p257 = pneg %p155
      $region34: #{osblock_forward.26} parent=15 // pred_check_branch
        %259 = sbr.rel (%p257) target = $region36
      $region35: #{osblock_forward.26} parent=15 // pred_region
        %s260 = smul.u32 8, %s19
        %p261 = scmp.lt.s32.totalorder %s18, 1
        %s262 = scalar_select %p261, %s18, 1
        %p263 = scmp.lt.s32.totalorder %s260, 15
        %s264 = scalar_select %p263, %s260, 15
        %s265 = smul.addr %s264, 2
        %s266 = smul.addr %s262, 32
        %s267 = sadd.s32 %s265, %s266
        %s268 = smul.addr %s267, 4
        %s269 = scalar_lea.vmem %s4, %s268
        %s270 = smul.u32 8, %s19
      $region36: #{osblock_forward.26} parent=15 // pred_fallthru
        _
    $region16: #{osblock_forward.26} parent=5 // pred_fallthru
      _
    %p271 = scmp.le.s32.totalorder 1, %s11
    %p272 = scmp.lt.s32.totalorder %s11, 5
    %p273 = pnand %p271, %p272
    %p274 = pneg %p273
    // Predicated region
    $region37: #{osblock_forward.26} parent=5 // pred_check
      _
    $region38: #{osblock_forward.26} parent=5 // pred_check_branch
      %276 = sbr.rel (%p273) target = $region40
    $region39: #{osblock_forward.26} parent=5 // pred_region
      %s277 = ssub.s32 %s11, 1
      %p278 = scmp.lt.s32.totalorder %s20, 1
      %s279 = scalar_select %p278, %s20, 1
      %s280 = smul.addr %s279, 4
      %s281 = scalar_lea.vmem %s0, %s280
      %p282 = pneg %p49
      %p283 = pneg %p46
      %s284 = smul.u32 8, %s21
      %p285 = scmp.lt.s32.totalorder %s20, 1
      %s286 = scalar_select %p285, %s20, 1
      %p287 = scmp.lt.s32.totalorder %s284, 15
      %s288 = scalar_select %p287, %s284, 15
      %s289 = smul.addr %s288, 2
      %s290 = smul.addr %s286, 32
      %s291 = sadd.s32 %s289, %s290
      %s292 = smul.addr %s291, 4
      %s293 = scalar_lea.vmem %s1, %s292
      %p294 = pneg %p77
      %p295 = pneg %p74
      %s296 = smul.u32 8, %s21
      %p297 = scmp.lt.s32.totalorder %s20, 1
      %s298 = scalar_select %p297, %s20, 1
      %p299 = scmp.lt.s32.totalorder %s296, 15
      %s300 = scalar_select %p299, %s296, 15
      %s301 = smul.addr %s300, 2
      %s302 = smul.addr %s298, 32
      %s303 = sadd.s32 %s301, %s302
      %s304 = smul.addr %s303, 4
      %s305 = scalar_lea.vmem %s2, %s304
      %p306 = pneg %p105
      %p307 = pneg %p102
      %s308 = smul.u32 8, %s21
      %p309 = scmp.lt.s32.totalorder %s20, 1
      %s310 = scalar_select %p309, %s20, 1
      %p311 = scmp.lt.s32.totalorder %s308, 15
      %s312 = scalar_select %p311, %s308, 15
      %s313 = smul.addr %s312, 2
      %s314 = smul.addr %s310, 32
      %s315 = sadd.s32 %s313, %s314
      %s316 = smul.addr %s315, 4
      %s317 = scalar_lea.vmem %s3, %s316
      %p318 = pneg %p133
      %p319 = pneg %p130
      %s320 = smul.u32 8, %s21
      %p321 = scmp.lt.s32.totalorder %s20, 1
      %s322 = scalar_select %p321, %s20, 1
      %p323 = scmp.lt.s32.totalorder %s320, 15
      %s324 = scalar_select %p323, %s320, 15
      %s325 = smul.addr %s324, 2
      %s326 = smul.addr %s322, 32
      %s327 = sadd.s32 %s325, %s326
      %s328 = smul.addr %s327, 4
      %s329 = scalar_lea.vmem %s4, %s328
      %p330 = pneg %p161
      %p331 = pneg %p158
      %p332 = pneg %p189
      %p333 = pneg %p186
      %s334 = smul.u32 8, %s21
      %p335 = scmp.lt.s32.totalorder %s20, 1
      %s336 = scalar_select %p335, %s20, 1
      %p337 = scmp.lt.s32.totalorder %s334, 15
      %s338 = scalar_select %p337, %s334, 15
      %s339 = smul.addr %s338, 2
      %s340 = smul.addr %s336, 32
      %s341 = sadd.s32 %s339, %s340
      %s342 = smul.addr %s341, 4
      %s343 = scalar_lea.vmem %s5, %s342
      %p344 = scmp.lt.s32.totalorder %s20, 1
      %s345 = scalar_select %p344, %s20, 1
      %s346 = smul.addr %s345, 4
      %s347 = scalar_lea.vmem %s0, %s346
      %s348 = smul.u32 8, %s21
      %p349 = scmp.lt.s32.totalorder %s20, 1
      %s350 = scalar_select %p349, %s20, 1
      %p351 = scmp.lt.s32.totalorder %s348, 15
      %s352 = scalar_select %p351, %s348, 15
      %s353 = smul.addr %s352, 2
      %s354 = smul.addr %s350, 32
      %s355 = sadd.s32 %s353, %s354
      %s356 = smul.addr %s355, 4
      %s357 = scalar_lea.vmem %s1, %s356
      %s358 = smul.u32 8, %s21
      %s359 = smul.u32 8, %s21
      %p360 = scmp.lt.s32.totalorder %s20, 1
      %s361 = scalar_select %p360, %s20, 1
      %p362 = scmp.lt.s32.totalorder %s359, 15
      %s363 = scalar_select %p362, %s359, 15
      %s364 = smul.addr %s363, 2
      %s365 = smul.addr %s361, 32
      %s366 = sadd.s32 %s364, %s365
      %s367 = smul.addr %s366, 4
      %s368 = scalar_lea.vmem %s2, %s367
      %s369 = smul.u32 8, %s21
      %s370 = smul.u32 8, %s21
      %p371 = scmp.lt.s32.totalorder %s20, 1
      %s372 = scalar_select %p371, %s20, 1
      %p373 = scmp.lt.s32.totalorder %s370, 15
      %s374 = scalar_select %p373, %s370, 15
      %s375 = smul.addr %s374, 2
      %s376 = smul.addr %s372, 32
      %s377 = sadd.s32 %s375, %s376
      %s378 = smul.addr %s377, 4
      %s379 = scalar_lea.vmem %s3, %s378
      %s380 = smul.u32 8, %s21
      %s381 = smul.u32 8, %s21
      %p382 = scmp.lt.s32.totalorder %s20, 1
      %s383 = scalar_select %p382, %s20, 1
      %p384 = scmp.lt.s32.totalorder %s381, 15
      %s385 = scalar_select %p384, %s381, 15
      %s386 = smul.addr %s385, 2
      %s387 = smul.addr %s383, 32
      %s388 = sadd.s32 %s386, %s387
      %s389 = smul.addr %s388, 4
      %s390 = scalar_lea.vmem %s4, %s389
      %s391 = smul.u32 8, %s21
      %s392 = smul.u32 8, %s21
      %p393 = scmp.lt.s32.totalorder %s20, 1
      %s394 = scalar_select %p393, %s20, 1
      %p395 = scmp.lt.s32.totalorder %s392, 15
      %s396 = scalar_select %p395, %s392, 15
      %s397 = smul.addr %s396, 2
      %s398 = smul.addr %s394, 32
      %s399 = sadd.s32 %s397, %s398
      %s400 = smul.addr %s399, 4
      %s401 = scalar_lea.vmem %s5, %s400
      %s402 = smul.u32 8, %s21
      %v403 = vld [vmem:[%s347] sm:$0x1]
      %v404 = vld [vmem:[%s357] sm:$0xf]
      %v405 = vld [vmem:[%s357 + $0x4] sm:$0xf]
      %v406 = vld [vmem:[%s357 + $0x8] sm:$0xf]
      %v407 = vld [vmem:[%s357 + $0xc] sm:$0xf]
      %v408 = vld [vmem:[%s357 + $0x10] sm:$0xf]
      %v409 = vld [vmem:[%s357 + $0x14] sm:$0xf]
      %v410 = vld [vmem:[%s357 + $0x18] sm:$0xf]
      %v411 = vld [vmem:[%s357 + $0x1c] sm:$0xf]
      %v412 = vld [vmem:[%s357 + $0x20] sm:$0xf]
      %v413 = vld [vmem:[%s357 + $0x24] sm:$0xf]
      %v414 = vld [vmem:[%s357 + $0x28] sm:$0xf]
      %v415 = vld [vmem:[%s357 + $0x2c] sm:$0xf]
      %v416 = vld [vmem:[%s357 + $0x30] sm:$0xf]
      %v417 = vld [vmem:[%s357 + $0x34] sm:$0xf]
      %v418 = vld [vmem:[%s357 + $0x38] sm:$0xf]
      %v419 = vld [vmem:[%s357 + $0x3c] sm:$0xf]
      %v420 = vunpack.c.l.bf16 %v404
      %v421 = vunpack.c.l.bf16 %v405
      %v422 = vunpack.c.l.bf16 %v406
      %v423 = vunpack.c.l.bf16 %v407
      %v424 = vunpack.c.l.bf16 %v408
      %v425 = vunpack.c.l.bf16 %v409
      %v426 = vunpack.c.l.bf16 %v410
      %v427 = vunpack.c.l.bf16 %v411
      %v428 = vunpack.c.l.bf16 %v412
      %v429 = vunpack.c.l.bf16 %v413
      %v430 = vunpack.c.l.bf16 %v414
      %v431 = vunpack.c.l.bf16 %v415
      %v432 = vunpack.c.l.bf16 %v416
      %v433 = vunpack.c.l.bf16 %v417
      %v434 = vunpack.c.l.bf16 %v418
      %v435 = vunpack.c.l.bf16 %v419
      %v436 = vlaneseq
      %v437 = vshrl.u32 %v436, 7
      %v438 = vsub.s32 0, %v437
      %v439 = vrot.slane %v403, %v438
      %v440 = vmul.f32 %v420, %v439
      %v441 = vmul.f32 %v421, %v439
      %v442 = vmul.f32 %v422, %v439
      %v443 = vmul.f32 %v423, %v439
      %v444 = vmul.f32 %v424, %v439
      %v445 = vmul.f32 %v425, %v439
      %v446 = vmul.f32 %v426, %v439
      %v447 = vmul.f32 %v427, %v439
      %v448 = vmul.f32 %v428, %v439
      %v449 = vmul.f32 %v429, %v439
      %v450 = vmul.f32 %v430, %v439
      %v451 = vmul.f32 %v431, %v439
      %v452 = vmul.f32 %v432, %v439
      %v453 = vmul.f32 %v433, %v439
      %v454 = vmul.f32 %v434, %v439
      %v455 = vmul.f32 %v435, %v439
      %v456 = vld [vmem:[%s347 + $0x1] sm:$0x1]
      %v457 = vld [vmem:[%s368] sm:$0xf]
      %v458 = vld [vmem:[%s368 + $0x4] sm:$0xf]
      %v459 = vld [vmem:[%s368 + $0x8] sm:$0xf]
      %v460 = vld [vmem:[%s368 + $0xc] sm:$0xf]
      %v461 = vld [vmem:[%s368 + $0x10] sm:$0xf]
      %v462 = vld [vmem:[%s368 + $0x14] sm:$0xf]
      %v463 = vld [vmem:[%s368 + $0x18] sm:$0xf]
      %v464 = vld [vmem:[%s368 + $0x1c] sm:$0xf]
      %v465 = vld [vmem:[%s368 + $0x20] sm:$0xf]
      %v466 = vld [vmem:[%s368 + $0x24] sm:$0xf]
      %v467 = vld [vmem:[%s368 + $0x28] sm:$0xf]
      %v468 = vld [vmem:[%s368 + $0x2c] sm:$0xf]
      %v469 = vld [vmem:[%s368 + $0x30] sm:$0xf]
      %v470 = vld [vmem:[%s368 + $0x34] sm:$0xf]
      %v471 = vld [vmem:[%s368 + $0x38] sm:$0xf]
      %v472 = vld [vmem:[%s368 + $0x3c] sm:$0xf]
      %v473 = vunpack.c.l.bf16 %v457
      %v474 = vunpack.c.l.bf16 %v458
      %v475 = vunpack.c.l.bf16 %v459
      %v476 = vunpack.c.l.bf16 %v460
      %v477 = vunpack.c.l.bf16 %v461
      %v478 = vunpack.c.l.bf16 %v462
      %v479 = vunpack.c.l.bf16 %v463
      %v480 = vunpack.c.l.bf16 %v464
      %v481 = vunpack.c.l.bf16 %v465
      %v482 = vunpack.c.l.bf16 %v466
      %v483 = vunpack.c.l.bf16 %v467
      %v484 = vunpack.c.l.bf16 %v468
      %v485 = vunpack.c.l.bf16 %v469
      %v486 = vunpack.c.l.bf16 %v470
      %v487 = vunpack.c.l.bf16 %v471
      %v488 = vunpack.c.l.bf16 %v472
      %v489 = vlaneseq
      %v490 = vshrl.u32 %v489, 7
      %v491 = vsub.s32 0, %v490
      %v492 = vrot.slane %v456, %v491
      %v493 = vmul.f32 %v473, %v492
      %v494 = vmul.f32 %v474, %v492
      %v495 = vmul.f32 %v475, %v492
      %v496 = vmul.f32 %v476, %v492
      %v497 = vmul.f32 %v477, %v492
      %v498 = vmul.f32 %v478, %v492
      %v499 = vmul.f32 %v479, %v492
      %v500 = vmul.f32 %v480, %v492
      %v501 = vmul.f32 %v481, %v492
      %v502 = vmul.f32 %v482, %v492
      %v503 = vmul.f32 %v483, %v492
      %v504 = vmul.f32 %v484, %v492
      %v505 = vmul.f32 %v485, %v492
      %v506 = vmul.f32 %v486, %v492
      %v507 = vmul.f32 %v487, %v492
      %v508 = vmul.f32 %v488, %v492
      %v509 = vadd.f32 %v440, %v493
      %v510 = vadd.f32 %v441, %v494
      %v511 = vadd.f32 %v442, %v495
      %v512 = vadd.f32 %v443, %v496
      %v513 = vadd.f32 %v444, %v497
      %v514 = vadd.f32 %v445, %v498
      %v515 = vadd.f32 %v446, %v499
      %v516 = vadd.f32 %v447, %v500
      %v517 = vadd.f32 %v448, %v501
      %v518 = vadd.f32 %v449, %v502
      %v519 = vadd.f32 %v450, %v503
      %v520 = vadd.f32 %v451, %v504
      %v521 = vadd.f32 %v452, %v505
      %v522 = vadd.f32 %v453, %v506
      %v523 = vadd.f32 %v454, %v507
      %v524 = vadd.f32 %v455, %v508
      %v525 = vld [vmem:[%s347 + $0x2] sm:$0x1]
      %v526 = vld [vmem:[%s379] sm:$0xf]
      %v527 = vld [vmem:[%s379 + $0x4] sm:$0xf]
      %v528 = vld [vmem:[%s379 + $0x8] sm:$0xf]
      %v529 = vld [vmem:[%s379 + $0xc] sm:$0xf]
      %v530 = vld [vmem:[%s379 + $0x10] sm:$0xf]
      %v531 = vld [vmem:[%s379 + $0x14] sm:$0xf]
      %v532 = vld [vmem:[%s379 + $0x18] sm:$0xf]
      %v533 = vld [vmem:[%s379 + $0x1c] sm:$0xf]
      %v534 = vld [vmem:[%s379 + $0x20] sm:$0xf]
      %v535 = vld [vmem:[%s379 + $0x24] sm:$0xf]
      %v536 = vld [vmem:[%s379 + $0x28] sm:$0xf]
      %v537 = vld [vmem:[%s379 + $0x2c] sm:$0xf]
      %v538 = vld [vmem:[%s379 + $0x30] sm:$0xf]
      %v539 = vld [vmem:[%s379 + $0x34] sm:$0xf]
      %v540 = vld [vmem:[%s379 + $0x38] sm:$0xf]
      %v541 = vld [vmem:[%s379 + $0x3c] sm:$0xf]
      %v542 = vunpack.c.l.bf16 %v526
      %v543 = vunpack.c.l.bf16 %v527
      %v544 = vunpack.c.l.bf16 %v528
      %v545 = vunpack.c.l.bf16 %v529
      %v546 = vunpack.c.l.bf16 %v530
      %v547 = vunpack.c.l.bf16 %v531
      %v548 = vunpack.c.l.bf16 %v532
      %v549 = vunpack.c.l.bf16 %v533
      %v550 = vunpack.c.l.bf16 %v534
      %v551 = vunpack.c.l.bf16 %v535
      %v552 = vunpack.c.l.bf16 %v536
      %v553 = vunpack.c.l.bf16 %v537
      %v554 = vunpack.c.l.bf16 %v538
      %v555 = vunpack.c.l.bf16 %v539
      %v556 = vunpack.c.l.bf16 %v540
      %v557 = vunpack.c.l.bf16 %v541
      %v558 = vlaneseq
      %v559 = vshrl.u32 %v558, 7
      %v560 = vsub.s32 0, %v559
      %v561 = vrot.slane %v525, %v560
      %v562 = vmul.f32 %v542, %v561
      %v563 = vmul.f32 %v543, %v561
      %v564 = vmul.f32 %v544, %v561
      %v565 = vmul.f32 %v545, %v561
      %v566 = vmul.f32 %v546, %v561
      %v567 = vmul.f32 %v547, %v561
      %v568 = vmul.f32 %v548, %v561
      %v569 = vmul.f32 %v549, %v561
      %v570 = vmul.f32 %v550, %v561
      %v571 = vmul.f32 %v551, %v561
      %v572 = vmul.f32 %v552, %v561
      %v573 = vmul.f32 %v553, %v561
      %v574 = vmul.f32 %v554, %v561
      %v575 = vmul.f32 %v555, %v561
      %v576 = vmul.f32 %v556, %v561
      %v577 = vmul.f32 %v557, %v561
      %v578 = vadd.f32 %v509, %v562
      %v579 = vadd.f32 %v510, %v563
      %v580 = vadd.f32 %v511, %v564
      %v581 = vadd.f32 %v512, %v565
      %v582 = vadd.f32 %v513, %v566
      %v583 = vadd.f32 %v514, %v567
      %v584 = vadd.f32 %v515, %v568
      %v585 = vadd.f32 %v516, %v569
      %v586 = vadd.f32 %v517, %v570
      %v587 = vadd.f32 %v518, %v571
      %v588 = vadd.f32 %v519, %v572
      %v589 = vadd.f32 %v520, %v573
      %v590 = vadd.f32 %v521, %v574
      %v591 = vadd.f32 %v522, %v575
      %v592 = vadd.f32 %v523, %v576
      %v593 = vadd.f32 %v524, %v577
      %v594 = vld [vmem:[%s347 + $0x3] sm:$0x1]
      %v595 = vld [vmem:[%s390] sm:$0xf]
      %v596 = vld [vmem:[%s390 + $0x4] sm:$0xf]
      %v597 = vld [vmem:[%s390 + $0x8] sm:$0xf]
      %v598 = vld [vmem:[%s390 + $0xc] sm:$0xf]
      %v599 = vld [vmem:[%s390 + $0x10] sm:$0xf]
      %v600 = vld [vmem:[%s390 + $0x14] sm:$0xf]
      %v601 = vld [vmem:[%s390 + $0x18] sm:$0xf]
      %v602 = vld [vmem:[%s390 + $0x1c] sm:$0xf]
      %v603 = vld [vmem:[%s390 + $0x20] sm:$0xf]
      %v604 = vld [vmem:[%s390 + $0x24] sm:$0xf]
      %v605 = vld [vmem:[%s390 + $0x28] sm:$0xf]
      %v606 = vld [vmem:[%s390 + $0x2c] sm:$0xf]
      %v607 = vld [vmem:[%s390 + $0x30] sm:$0xf]
      %v608 = vld [vmem:[%s390 + $0x34] sm:$0xf]
      %v609 = vld [vmem:[%s390 + $0x38] sm:$0xf]
      %v610 = vld [vmem:[%s390 + $0x3c] sm:$0xf]
      %v611 = vunpack.c.l.bf16 %v595
      %v612 = vunpack.c.l.bf16 %v596
      %v613 = vunpack.c.l.bf16 %v597
      %v614 = vunpack.c.l.bf16 %v598
      %v615 = vunpack.c.l.bf16 %v599
      %v616 = vunpack.c.l.bf16 %v600
      %v617 = vunpack.c.l.bf16 %v601
      %v618 = vunpack.c.l.bf16 %v602
      %v619 = vunpack.c.l.bf16 %v603
      %v620 = vunpack.c.l.bf16 %v604
      %v621 = vunpack.c.l.bf16 %v605
      %v622 = vunpack.c.l.bf16 %v606
      %v623 = vunpack.c.l.bf16 %v607
      %v624 = vunpack.c.l.bf16 %v608
      %v625 = vunpack.c.l.bf16 %v609
      %v626 = vunpack.c.l.bf16 %v610
      %v627 = vlaneseq
      %v628 = vshrl.u32 %v627, 7
      %v629 = vsub.s32 0, %v628
      %v630 = vrot.slane %v594, %v629
      %v631 = vmul.f32 %v611, %v630
      %v632 = vmul.f32 %v612, %v630
      %v633 = vmul.f32 %v613, %v630
      %v634 = vmul.f32 %v614, %v630
      %v635 = vmul.f32 %v615, %v630
      %v636 = vmul.f32 %v616, %v630
      %v637 = vmul.f32 %v617, %v630
      %v638 = vmul.f32 %v618, %v630
      %v639 = vmul.f32 %v619, %v630
      %v640 = vmul.f32 %v620, %v630
      %v641 = vmul.f32 %v621, %v630
      %v642 = vmul.f32 %v622, %v630
      %v643 = vmul.f32 %v623, %v630
      %v644 = vmul.f32 %v624, %v630
      %v645 = vmul.f32 %v625, %v630
      %v646 = vmul.f32 %v626, %v630
      %v647 = vadd.f32 %v578, %v631
      %v648 = vadd.f32 %v579, %v632
      %v649 = vadd.f32 %v580, %v633
      %v650 = vadd.f32 %v581, %v634
      %v651 = vadd.f32 %v582, %v635
      %v652 = vadd.f32 %v583, %v636
      %v653 = vadd.f32 %v584, %v637
      %v654 = vadd.f32 %v585, %v638
      %v655 = vadd.f32 %v586, %v639
      %v656 = vadd.f32 %v587, %v640
      %v657 = vadd.f32 %v588, %v641
      %v658 = vadd.f32 %v589, %v642
      %v659 = vadd.f32 %v590, %v643
      %v660 = vadd.f32 %v591, %v644
      %v661 = vadd.f32 %v592, %v645
      %v662 = vadd.f32 %v593, %v646
      %v663 = vpack.c.bf16 %v648, %v647
      %v664 = vpack.c.bf16 %v650, %v649
      %v665 = vpack.c.bf16 %v652, %v651
      %v666 = vpack.c.bf16 %v654, %v653
      %v667 = vpack.c.bf16 %v656, %v655
      %v668 = vpack.c.bf16 %v658, %v657
      %v669 = vpack.c.bf16 %v660, %v659
      %v670 = vpack.c.bf16 %v662, %v661
      %v679 = vunpack.c.l.b16 %v663
      %v680 = vunpack.c.h.b16 %v663
      %v681 = vunpack.c.l.b16 %v664
      %v682 = vunpack.c.h.b16 %v664
      %v683 = vunpack.c.l.b16 %v665
      %v684 = vunpack.c.h.b16 %v665
      %v685 = vunpack.c.l.b16 %v666
      %v686 = vunpack.c.h.b16 %v666
      %v687 = vunpack.c.l.b16 %v667
      %v688 = vunpack.c.h.b16 %v667
      %v689 = vunpack.c.l.b16 %v668
      %v690 = vunpack.c.h.b16 %v668
      %v691 = vunpack.c.l.b16 %v669
      %v692 = vunpack.c.h.b16 %v669
      %v693 = vunpack.c.l.b16 %v670
      %v694 = vunpack.c.h.b16 %v670
      %v695 = vpack.c.b16 %v679, %v679
      %v696 = vpack.c.b16 %v680, %v680
      %v697 = vpack.c.b16 %v681, %v681
      %v698 = vpack.c.b16 %v682, %v682
      %v699 = vpack.c.b16 %v683, %v683
      %v700 = vpack.c.b16 %v684, %v684
      %v701 = vpack.c.b16 %v685, %v685
      %v702 = vpack.c.b16 %v686, %v686
      %v703 = vpack.c.b16 %v687, %v687
      %v704 = vpack.c.b16 %v688, %v688
      %v705 = vpack.c.b16 %v689, %v689
      %v706 = vpack.c.b16 %v690, %v690
      %v707 = vpack.c.b16 %v691, %v691
      %v708 = vpack.c.b16 %v692, %v692
      %v709 = vpack.c.b16 %v693, %v693
      %v710 = vpack.c.b16 %v694, %v694
      %vm727 = vcmask 125952
      %728 = vst.msk [vmem:[%s401] sm:$0xf] %vm727, %v695
      %729 = vst.msk [vmem:[%s401 + $0x4] sm:$0xf] %vm727, %v696
      %730 = vst.msk [vmem:[%s401 + $0x8] sm:$0xf] %vm727, %v697
      %731 = vst.msk [vmem:[%s401 + $0xc] sm:$0xf] %vm727, %v698
      %732 = vst.msk [vmem:[%s401 + $0x10] sm:$0xf] %vm727, %v699
      %733 = vst.msk [vmem:[%s401 + $0x14] sm:$0xf] %vm727, %v700
      %734 = vst.msk [vmem:[%s401 + $0x18] sm:$0xf] %vm727, %v701
      %735 = vst.msk [vmem:[%s401 + $0x1c] sm:$0xf] %vm727, %v702
      %736 = vst.msk [vmem:[%s401 + $0x20] sm:$0xf] %vm727, %v703
      %737 = vst.msk [vmem:[%s401 + $0x24] sm:$0xf] %vm727, %v704
      %738 = vst.msk [vmem:[%s401 + $0x28] sm:$0xf] %vm727, %v705
      %739 = vst.msk [vmem:[%s401 + $0x2c] sm:$0xf] %vm727, %v706
      %740 = vst.msk [vmem:[%s401 + $0x30] sm:$0xf] %vm727, %v707
      %741 = vst.msk [vmem:[%s401 + $0x34] sm:$0xf] %vm727, %v708
      %742 = vst.msk [vmem:[%s401 + $0x38] sm:$0xf] %vm727, %v709
      %743 = vst.msk [vmem:[%s401 + $0x3c] sm:$0xf] %vm727, %v710
      %s744 = smul.u32 8, %s21
      %p745 = scmp.lt.s32.totalorder %s20, 1
      %s746 = scalar_select %p745, %s20, 1
      %p747 = scmp.lt.s32.totalorder %s744, 15
      %s748 = scalar_select %p747, %s744, 15
      %s749 = smul.addr %s748, 2
      %s750 = smul.addr %s746, 32
      %s751 = sadd.s32 %s749, %s750
      %s752 = smul.addr %s751, 4
      %s753 = scalar_lea.vmem %s5, %s752
      // Predicated region
      $region41: #{osblock_forward.26} parent=39 // pred_check
        %p754 = pneg %p186
      $region42: #{osblock_forward.26} parent=39 // pred_check_branch
        %756 = sbr.rel (%p754) target = $region44
      $region43: #{osblock_forward.26} parent=39 // pred_region
        %s757 = smul.u32 8, %s21
      $region44: #{osblock_forward.26} parent=39 // pred_fallthru
        _
    $region40: #{osblock_forward.26} parent=5 // pred_fallthru
      _
    %p758 = scmp.le.s32.totalorder 2, %s11
    // Predicated region
    $region45: #{osblock_forward.26} parent=5 // pred_check
      %p759 = pneg %p758
    $region46: #{osblock_forward.26} parent=5 // pred_check_branch
      %761 = sbr.rel (%p759) target = $region48
    $region47: #{osblock_forward.26} parent=5 // pred_region
      %s762 = ssub.s32 %s11, 2
      // Predicated region
      $region49: #{osblock_forward.26} parent=47 // pred_check
        %p763 = pneg %p192
      $region50: #{osblock_forward.26} parent=47 // pred_check_branch
        %765 = sbr.rel (%p763) target = $region52
      $region51: #{osblock_forward.26} parent=47 // pred_region
        %s766 = smul.u32 8, %s23
        %p767 = scmp.lt.s32.totalorder %s22, 1
        %s768 = scalar_select %p767, %s22, 1
        %p769 = scmp.lt.s32.totalorder %s766, 15
        %s770 = scalar_select %p769, %s766, 15
        %s771 = smul.addr %s770, 2
        %s772 = smul.addr %s768, 32
        %s773 = sadd.s32 %s771, %s772
        %s774 = smul.addr %s773, 4
        %s775 = scalar_lea.vmem %s5, %s774
      $region52: #{osblock_forward.26} parent=47 // pred_fallthru
        _
    $region48: #{osblock_forward.26} parent=5 // pred_fallthru
      _
  $region6: #{osblock_forward.26} parent=0 // loop_footer
    %s15 = sadd.s32 1, %s11
  $region7: #{osblock_forward.26} parent=0 // loop_footer_branch
    %10 = sbr.rel target = $region3
  $region8: #{osblock_forward.26} parent=0 // loop_exit
    _

// kernel: osblock_forward.27
$region0: #{osblock_forward.27}
  #allocation0 [shape = 'u32[]', space=smem, size = 0x4, offset = 0x4, fixed_abs, tag = 'smem constant byte address 0x4 - core index']
  #allocation1 [shape = 'u32[144,128]{1,0:T(1,128)}', space=vmem, size = 0x12000, scoped, tag = 'internal scratch']
  %s0 = inlined_call_operand.vmem [shape: bf16[512,16], index: 0, kind: input, shape index: {}]
  %s1 = inlined_call_operand.vmem [shape: bf16[16,64], index: 1, kind: input, shape index: {}]
  %s2 = inlined_call_operand.vmem [shape: f32[1,64], index: 2, kind: input, shape index: {}]
  %s3 = inlined_call_operand.vmem [shape: f32[1,64], index: 3, kind: input, shape index: {}]
  %s4 = inlined_call_operand.vmem [shape: bf16[512,32], index: 4, kind: input, shape index: {}]
  %s5 = inlined_call_operand.vmem [shape: bf16[32,64], index: 5, kind: input, shape index: {}]
  %s6 = inlined_call_operand.vmem [shape: f32[1,64], index: 6, kind: input, shape index: {}]
  %s7 = inlined_call_operand.vmem [shape: f32[1,64], index: 7, kind: input, shape index: {}]
  %s8 = inlined_call_operand.hbm [shape: f32[512,64], index: 8, kind: output, shape index: {}]
  %s9 = sld [smem:[#allocation0]]
  $region42: #{osblock_forward.27} parent=0
    _
  %s11 = ssub.s32 1, %s9
  %s12 = scalar_select 0, %s11, %s9
  $region1: #{osblock_forward.27} parent=0
    #allocation2 [shape = 'u8[262144]{0}', space=vmem, size = 0x40000, scoped, tag = 'output window, operand 0, single buffered']
    #allocation3 [shape = 's32[1]{0}', space=sflag, size = 0x4, scoped, tag = 'scoped memory for osblock_forward.27']
    %13 = vsyncpa [#allocation3], 0
    // Predicated region
    $region2: #{osblock_forward.27} parent=1 // pred_check
      _
    $region3: #{osblock_forward.27} parent=1 // pred_check_branch
      %15 = sbr.rel (0) target = $region5
    $region4: #{osblock_forward.27} parent=1 // pred_region
      _
    $region5: #{osblock_forward.27} parent=1 // pred_fallthru
      _
    // Predicated region
    $region6: #{osblock_forward.27} parent=1 // pred_check
      _
    $region7: #{osblock_forward.27} parent=1 // pred_check_branch
      %17 = sbr.rel (0) target = $region9
    $region8: #{osblock_forward.27} parent=1 // pred_region
      _
    $region9: #{osblock_forward.27} parent=1 // pred_fallthru
      _
    // Predicated region
    $region10: #{osblock_forward.27} parent=1 // pred_check
      _
    $region11: #{osblock_forward.27} parent=1 // pred_check_branch
      %19 = sbr.rel (0) target = $region13
    $region12: #{osblock_forward.27} parent=1 // pred_region
      _
    $region13: #{osblock_forward.27} parent=1 // pred_fallthru
      _
    // Predicated region
    $region14: #{osblock_forward.27} parent=1 // pred_check
      _
    $region15: #{osblock_forward.27} parent=1 // pred_check_branch
      %21 = sbr.rel (0) target = $region17
    $region16: #{osblock_forward.27} parent=1 // pred_region
      _
    $region17: #{osblock_forward.27} parent=1 // pred_fallthru
      _
    // Predicated region
    $region18: #{osblock_forward.27} parent=1 // pred_check
      _
    $region19: #{osblock_forward.27} parent=1 // pred_check_branch
      %23 = sbr.rel (0) target = $region21
    $region20: #{osblock_forward.27} parent=1 // pred_region
      _
    $region21: #{osblock_forward.27} parent=1 // pred_fallthru
      _
    // Predicated region
    $region22: #{osblock_forward.27} parent=1 // pred_check
      _
    $region23: #{osblock_forward.27} parent=1 // pred_check_branch
      %25 = sbr.rel (0) target = $region25
    $region24: #{osblock_forward.27} parent=1 // pred_region
      _
    $region25: #{osblock_forward.27} parent=1 // pred_fallthru
      _
    // Predicated region
    $region26: #{osblock_forward.27} parent=1 // pred_check
      _
    $region27: #{osblock_forward.27} parent=1 // pred_check_branch
      %27 = sbr.rel (0) target = $region29
    $region28: #{osblock_forward.27} parent=1 // pred_region
      _
    $region29: #{osblock_forward.27} parent=1 // pred_fallthru
      _
    // Predicated region
    $region30: #{osblock_forward.27} parent=1 // pred_check
      _
    $region31: #{osblock_forward.27} parent=1 // pred_check_branch
      %29 = sbr.rel (0) target = $region33
    $region32: #{osblock_forward.27} parent=1 // pred_region
      _
    $region33: #{osblock_forward.27} parent=1 // pred_fallthru
      _
    %v31 = vld [vmem:[%s0] sm:$0xf]
    %v32 = vld [vmem:[%s0 + $0x4] sm:$0xf]
    %v33 = vld [vmem:[%s0 + $0x8] sm:$0xf]
    %v34 = vld [vmem:[%s0 + $0xc] sm:$0xf]
    %v35 = vld [vmem:[%s0 + $0x10] sm:$0xf]
    %v36 = vld [vmem:[%s0 + $0x14] sm:$0xf]
    %v37 = vld [vmem:[%s0 + $0x18] sm:$0xf]
    %v38 = vld [vmem:[%s0 + $0x1c] sm:$0xf]
    %v39 = vld [vmem:[%s0 + $0x20] sm:$0xf]
    %v40 = vld [vmem:[%s0 + $0x24] sm:$0xf]
    %v41 = vld [vmem:[%s0 + $0x28] sm:$0xf]
    %v42 = vld [vmem:[%s0 + $0x2c] sm:$0xf]
    %v43 = vld [vmem:[%s0 + $0x30] sm:$0xf]
    %v44 = vld [vmem:[%s0 + $0x34] sm:$0xf]
    %v45 = vld [vmem:[%s0 + $0x38] sm:$0xf]
    %v46 = vld [vmem:[%s0 + $0x3c] sm:$0xf]
    %v47 = vld [vmem:[%s0 + $0x40] sm:$0xf]
    %v48 = vld [vmem:[%s0 + $0x44] sm:$0xf]
    %v49 = vld [vmem:[%s0 + $0x48] sm:$0xf]
    %v50 = vld [vmem:[%s0 + $0x4c] sm:$0xf]
    %v51 = vld [vmem:[%s0 + $0x50] sm:$0xf]
    %v52 = vld [vmem:[%s0 + $0x54] sm:$0xf]
    %v53 = vld [vmem:[%s0 + $0x58] sm:$0xf]
    %v54 = vld [vmem:[%s0 + $0x5c] sm:$0xf]
    %v55 = vld [vmem:[%s0 + $0x60] sm:$0xf]
    %v56 = vld [vmem:[%s0 + $0x64] sm:$0xf]
    %v57 = vld [vmem:[%s0 + $0x68] sm:$0xf]
    %v58 = vld [vmem:[%s0 + $0x6c] sm:$0xf]
    %v59 = vld [vmem:[%s0 + $0x70] sm:$0xf]
    %v60 = vld [vmem:[%s0 + $0x74] sm:$0xf]
    %v61 = vld [vmem:[%s0 + $0x78] sm:$0xf]
    %v62 = vld [vmem:[%s0 + $0x7c] sm:$0xf]
    %v63 = vld [vmem:[%s0 + $0x80] sm:$0xf]
    %v64 = vld [vmem:[%s0 + $0x84] sm:$0xf]
    %v65 = vld [vmem:[%s0 + $0x88] sm:$0xf]
    %v66 = vld [vmem:[%s0 + $0x8c] sm:$0xf]
    %v67 = vld [vmem:[%s0 + $0x90] sm:$0xf]
    %v68 = vld [vmem:[%s0 + $0x94] sm:$0xf]
    %v69 = vld [vmem:[%s0 + $0x98] sm:$0xf]
    %v70 = vld [vmem:[%s0 + $0x9c] sm:$0xf]
    %v71 = vld [vmem:[%s0 + $0xa0] sm:$0xf]
    %v72 = vld [vmem:[%s0 + $0xa4] sm:$0xf]
    %v73 = vld [vmem:[%s0 + $0xa8] sm:$0xf]
    %v74 = vld [vmem:[%s0 + $0xac] sm:$0xf]
    %v75 = vld [vmem:[%s0 + $0xb0] sm:$0xf]
    %v76 = vld [vmem:[%s0 + $0xb4] sm:$0xf]
    %v77 = vld [vmem:[%s0 + $0xb8] sm:$0xf]
    %v78 = vld [vmem:[%s0 + $0xbc] sm:$0xf]
    %v79 = vld [vmem:[%s0 + $0xc0] sm:$0xf]
    %v80 = vld [vmem:[%s0 + $0xc4] sm:$0xf]
    %v81 = vld [vmem:[%s0 + $0xc8] sm:$0xf]
    %v82 = vld [vmem:[%s0 + $0xcc] sm:$0xf]
    %v83 = vld [vmem:[%s0 + $0xd0] sm:$0xf]
    %v84 = vld [vmem:[%s0 + $0xd4] sm:$0xf]
    %v85 = vld [vmem:[%s0 + $0xd8] sm:$0xf]
    %v86 = vld [vmem:[%s0 + $0xdc] sm:$0xf]
    %v87 = vld [vmem:[%s0 + $0xe0] sm:$0xf]
    %v88 = vld [vmem:[%s0 + $0xe4] sm:$0xf]
    %v89 = vld [vmem:[%s0 + $0xe8] sm:$0xf]
    %v90 = vld [vmem:[%s0 + $0xec] sm:$0xf]
    %v91 = vld [vmem:[%s0 + $0xf0] sm:$0xf]
    %v92 = vld [vmem:[%s0 + $0xf4] sm:$0xf]
    %v93 = vld [vmem:[%s0 + $0xf8] sm:$0xf]
    %v94 = vld [vmem:[%s0 + $0xfc] sm:$0xf]
    %v95 = vld [vmem:[%s1] sm:$0xf]
    %v96 = vld [vmem:[%s1 + $0x4] sm:$0xf]
    %v161 = vunpack.c.l.b16 %v31
    %v162 = vunpack.c.l.b16 %v32
    %v163 = vunpack.c.l.b16 %v33
    %v164 = vunpack.c.l.b16 %v34
    %v165 = vunpack.c.l.b16 %v35
    %v166 = vunpack.c.l.b16 %v36
    %v167 = vunpack.c.l.b16 %v37
    %v168 = vunpack.c.l.b16 %v38
    %v169 = vunpack.c.l.b16 %v39
    %v170 = vunpack.c.l.b16 %v40
    %v171 = vunpack.c.l.b16 %v41
    %v172 = vunpack.c.l.b16 %v42
    %v173 = vunpack.c.l.b16 %v43
    %v174 = vunpack.c.l.b16 %v44
    %v175 = vunpack.c.l.b16 %v45
    %v176 = vunpack.c.l.b16 %v46
    %v177 = vunpack.c.l.b16 %v47
    %v178 = vunpack.c.l.b16 %v48
    %v179 = vunpack.c.l.b16 %v49
    %v180 = vunpack.c.l.b16 %v50
    %v181 = vunpack.c.l.b16 %v51
    %v182 = vunpack.c.l.b16 %v52
    %v183 = vunpack.c.l.b16 %v53
    %v184 = vunpack.c.l.b16 %v54
    %v185 = vunpack.c.l.b16 %v55
    %v186 = vunpack.c.l.b16 %v56
    %v187 = vunpack.c.l.b16 %v57
    %v188 = vunpack.c.l.b16 %v58
    %v189 = vunpack.c.l.b16 %v59
    %v190 = vunpack.c.l.b16 %v60
    %v191 = vunpack.c.l.b16 %v61
    %v192 = vunpack.c.l.b16 %v62
    %v193 = vunpack.c.l.b16 %v63
    %v194 = vunpack.c.l.b16 %v64
    %v195 = vunpack.c.l.b16 %v65
    %v196 = vunpack.c.l.b16 %v66
    %v197 = vunpack.c.l.b16 %v67
    %v198 = vunpack.c.l.b16 %v68
    %v199 = vunpack.c.l.b16 %v69
    %v200 = vunpack.c.l.b16 %v70
    %v201 = vunpack.c.l.b16 %v71
    %v202 = vunpack.c.l.b16 %v72
    %v203 = vunpack.c.l.b16 %v73
    %v204 = vunpack.c.l.b16 %v74
    %v205 = vunpack.c.l.b16 %v75
    %v206 = vunpack.c.l.b16 %v76
    %v207 = vunpack.c.l.b16 %v77
    %v208 = vunpack.c.l.b16 %v78
    %v209 = vunpack.c.l.b16 %v79
    %v210 = vunpack.c.l.b16 %v80
    %v211 = vunpack.c.l.b16 %v81
    %v212 = vunpack.c.l.b16 %v82
    %v213 = vunpack.c.l.b16 %v83
    %v214 = vunpack.c.l.b16 %v84
    %v215 = vunpack.c.l.b16 %v85
    %v216 = vunpack.c.l.b16 %v86
    %v217 = vunpack.c.l.b16 %v87
    %v218 = vunpack.c.l.b16 %v88
    %v219 = vunpack.c.l.b16 %v89
    %v220 = vunpack.c.l.b16 %v90
    %v221 = vunpack.c.l.b16 %v91
    %v222 = vunpack.c.l.b16 %v92
    %v223 = vunpack.c.l.b16 %v93
    %v224 = vunpack.c.l.b16 %v94
    %v225 = vpack.c.b16 %v162, %v161
    %v226 = vpack.c.b16 %v164, %v163
    %v227 = vpack.c.b16 %v166, %v165
    %v228 = vpack.c.b16 %v168, %v167
    %v229 = vpack.c.b16 %v170, %v169
    %v230 = vpack.c.b16 %v172, %v171
    %v231 = vpack.c.b16 %v174, %v173
    %v232 = vpack.c.b16 %v176, %v175
    %v233 = vpack.c.b16 %v178, %v177
    %v234 = vpack.c.b16 %v180, %v179
    %v235 = vpack.c.b16 %v182, %v181
    %v236 = vpack.c.b16 %v184, %v183
    %v237 = vpack.c.b16 %v186, %v185
    %v238 = vpack.c.b16 %v188, %v187
    %v239 = vpack.c.b16 %v190, %v189
    %v240 = vpack.c.b16 %v192, %v191
    %v241 = vpack.c.b16 %v194, %v193
    %v242 = vpack.c.b16 %v196, %v195
    %v243 = vpack.c.b16 %v198, %v197
    %v244 = vpack.c.b16 %v200, %v199
    %v245 = vpack.c.b16 %v202, %v201
    %v246 = vpack.c.b16 %v204, %v203
    %v247 = vpack.c.b16 %v206, %v205
    %v248 = vpack.c.b16 %v208, %v207
    %v249 = vpack.c.b16 %v210, %v209
    %v250 = vpack.c.b16 %v212, %v211
    %v251 = vpack.c.b16 %v214, %v213
    %v252 = vpack.c.b16 %v216, %v215
    %v253 = vpack.c.b16 %v218, %v217
    %v254 = vpack.c.b16 %v220, %v219
    %v255 = vpack.c.b16 %v222, %v221
    %v256 = vpack.c.b16 %v224, %v223
    %v259 = vunpack.c.l.b16 %v95
    %v260 = vunpack.c.l.b16 %v96
    %v261 = vpack.c.b16 %v260, %v259
    %vm263 = vcmask 130048
    %v265 = vsel %vm263, %v225, 0
    %v268 = vsel %vm263, %v226, 0
    %v271 = vsel %vm263, %v227, 0
    %v274 = vsel %vm263, %v228, 0
    %v277 = vsel %vm263, %v229, 0
    %v280 = vsel %vm263, %v230, 0
    %v283 = vsel %vm263, %v231, 0
    %v286 = vsel %vm263, %v232, 0
    %v289 = vsel %vm263, %v233, 0
    %v292 = vsel %vm263, %v234, 0
    %v295 = vsel %vm263, %v235, 0
    %v298 = vsel %vm263, %v236, 0
    %v301 = vsel %vm263, %v237, 0
    %v304 = vsel %vm263, %v238, 0
    %v307 = vsel %vm263, %v239, 0
    %v310 = vsel %vm263, %v240, 0
    %v313 = vsel %vm263, %v241, 0
    %v316 = vsel %vm263, %v242, 0
    %v319 = vsel %vm263, %v243, 0
    %v322 = vsel %vm263, %v244, 0
    %v325 = vsel %vm263, %v245, 0
    %v328 = vsel %vm263, %v246, 0
    %v331 = vsel %vm263, %v247, 0
    %v334 = vsel %vm263, %v248, 0
    %v337 = vsel %vm263, %v249, 0
    %v340 = vsel %vm263, %v250, 0
    %v343 = vsel %vm263, %v251, 0
    %v346 = vsel %vm263, %v252, 0
    %v349 = vsel %vm263, %v253, 0
    %v352 = vsel %vm263, %v254, 0
    %v355 = vsel %vm263, %v255, 0
    %v358 = vsel %vm263, %v256, 0
    %360 = vmatprep.subr.bf16.mxu0 0
    %361 = vmatpush1.bf16.msra.mxu0 %v261
    %362 = vmatprep.subr.bf16.mxu0 0
    %363 = vmatpush1.bf16.msra.mxu0 0
    %364 = vmatprep.subr.bf16.mxu0 0
    %365 = vmatpush1.bf16.msra.mxu0 0
    %366 = vmatprep.subr.bf16.mxu0 0
    %367 = vmatpush1.bf16.msra.mxu0 0
    %368 = vmatprep.subr.bf16.mxu0 0
    %369 = vmatpush1.bf16.msra.mxu0 0
    %370 = vmatprep.subr.bf16.mxu0 0
    %371 = vmatpush1.bf16.msra.mxu0 0
    %372 = vmatprep.subr.bf16.mxu0 0
    %373 = vmatpush1.bf16.msra.mxu0 0
    %374 = vmatprep.subr.bf16.mxu0 0
    %375 = vmatpush1.bf16.msra.mxu0 0
    %376 = vmatprep.subr.bf16.mxu0 0
    %377 = vmatpush1.bf16.msra.mxu0 0
    %378 = vmatprep.subr.bf16.mxu0 0
    %379 = vmatpush1.bf16.msra.mxu0 0
    %380 = vmatprep.subr.bf16.mxu0 0
    %381 = vmatpush1.bf16.msra.mxu0 0
    %382 = vmatprep.subr.bf16.mxu0 0
    %383 = vmatpush1.bf16.msra.mxu0 0
    %384 = vmatprep.subr.bf16.mxu0 0
    %385 = vmatpush1.bf16.msra.mxu0 0
    %386 = vmatprep.subr.bf16.mxu0 0
    %387 = vmatpush1.bf16.msra.mxu0 0
    %388 = vmatprep.subr.bf16.mxu0 0
    %389 = vmatpush1.bf16.msra.mxu0 0
    %390 = vmatprep.subr.bf16.mxu0 0
    %391 = vmatpush1.bf16.msra.mxu0 0
    %392 = vmatprep.mubr.bf16.mxu0 0
    %393 = vmatmul.mubr.bf16.gmra.mrb[0].mxu0 %v265
    %v394 = vpop.f32.mrb[0].mxu0
    %v395 = vadd.f32 0.0, %v394
    %v396 = vpop.f32.mrb[0].mxu0
    %v397 = vpop.f32.mrb[0].mxu0
    %v398 = vadd.f32 0.0, %v397
    %v399 = vpop.f32.mrb[0].mxu0
    %400 = vmatprep.mubr.bf16.mxu0 0
    %401 = vmatmul.mubr.bf16.gmra.mrb[0].mxu0 %v268
    %v402 = vpop.f32.mrb[0].mxu0
    %v403 = vadd.f32 0.0, %v402
    %v404 = vpop.f32.mrb[0].mxu0
    %v405 = vpop.f32.mrb[0].mxu0
    %v406 = vadd.f32 0.0, %v405
    %v407 = vpop.f32.mrb[0].mxu0
    %408 = vmatprep.mubr.bf16.mxu0 0
    %409 = vmatmul.mubr.bf16.gmra.mrb[0].mxu0 %v271
    %v410 = vpop.f32.mrb[0].mxu0
    %v411 = vadd.f32 0.0, %v410
    %v412 = vpop.f32.mrb[0].mxu0
    %v413 = vpop.f32.mrb[0].mxu0
    %v414 = vadd.f32 0.0, %v413
    %v415 = vpop.f32.mrb[0].mxu0
    %416 = vmatprep.mubr.bf16.mxu0 0
    %417 = vmatmul.mubr.bf16.gmra.mrb[0].mxu0 %v274
    %v418 = vpop.f32.mrb[0].mxu0
    %v419 = vadd.f32 0.0, %v418
    %v420 = vpop.f32.mrb[0].mxu0
    %v421 = vpop.f32.mrb[0].mxu0
    %v422 = vadd.f32 0.0, %v421
    %v423 = vpop.f32.mrb[0].mxu0
    %424 = vmatprep.mubr.bf16.mxu0 0
    %425 = vmatmul.mubr.bf16.gmra.mrb[0].mxu0 %v277
    %v426 = vpop.f32.mrb[0].mxu0
    %v427 = vadd.f32 0.0, %v426
    %v428 = vpop.f32.mrb[0].mxu0
    %v429 = vpop.f32.mrb[0].mxu0
    %v430 = vadd.f32 0.0, %v429
    %v431 = vpop.f32.mrb[0].mxu0
    %432 = vmatprep.mubr.bf16.mxu0 0
    %433 = vmatmul.mubr.bf16.gmra.mrb[0].mxu0 %v280
    %v434 = vpop.f32.mrb[0].mxu0
    %v435 = vadd.f32 0.0, %v434
    %v436 = vpop.f32.mrb[0].mxu0
    %v437 = vpop.f32.mrb[0].mxu0
    %v438 = vadd.f32 0.0, %v437
    %v439 = vpop.f32.mrb[0].mxu0
    %440 = vmatprep.mubr.bf16.mxu0 0
    %441 = vmatmul.mubr.bf16.gmra.mrb[0].mxu0 %v283
    %v442 = vpop.f32.mrb[0].mxu0
    %v443 = vadd.f32 0.0, %v442
    %v444 = vpop.f32.mrb[0].mxu0
    %v445 = vpop.f32.mrb[0].mxu0
    %v446 = vadd.f32 0.0, %v445
    %v447 = vpop.f32.mrb[0].mxu0
    %448 = vmatprep.mubr.bf16.mxu0 0
    %449 = vmatmul.mubr.bf16.gmra.mrb[0].mxu0 %v286
    %v450 = vpop.f32.mrb[0].mxu0
    %v451 = vadd.f32 0.0, %v450
    %v452 = vpop.f32.mrb[0].mxu0
    %v453 = vpop.f32.mrb[0].mxu0
    %v454 = vadd.f32 0.0, %v453
    %v455 = vpop.f32.mrb[0].mxu0
    %456 = vmatprep.mubr.bf16.mxu0 0
    %457 = vmatmul.mubr.bf16.gmra.mrb[0].mxu0 %v289
    %v458 = vpop.f32.mrb[0].mxu0
    %v459 = vadd.f32 0.0, %v458
    %v460 = vpop.f32.mrb[0].mxu0
    %v461 = vpop.f32.mrb[0].mxu0
    %v462 = vadd.f32 0.0, %v461
    %v463 = vpop.f32.mrb[0].mxu0
    %464 = vmatprep.mubr.bf16.mxu0 0
    %465 = vmatmul.mubr.bf16.gmra.mrb[0].mxu0 %v292
    %v466 = vpop.f32.mrb[0].mxu0
    %v467 = vadd.f32 0.0, %v466
    %v468 = vpop.f32.mrb[0].mxu0
    %v469 = vpop.f32.mrb[0].mxu0
    %v470 = vadd.f32 0.0, %v469
    %v471 = vpop.f32.mrb[0].mxu0
    %472 = vmatprep.mubr.bf16.mxu0 0
    %473 = vmatmul.mubr.bf16.gmra.mrb[0].mxu0 %v295
    %v474 = vpop.f32.mrb[0].mxu0
    %v475 = vadd.f32 0.0, %v474
    %v476 = vpop.f32.mrb[0].mxu0
    %v477 = vpop.f32.mrb[0].mxu0
    %v478 = vadd.f32 0.0, %v477
    %v479 = vpop.f32.mrb[0].mxu0
    %480 = vmatprep.mubr.bf16.mxu0 0
    %481 = vmatmul.mubr.bf16.gmra.mrb[0].mxu0 %v298
    %v482 = vpop.f32.mrb[0].mxu0
    %v483 = vadd.f32 0.0, %v482
    %v484 = vpop.f32.mrb[0].mxu0
    %v485 = vpop.f32.mrb[0].mxu0
    %v486 = vadd.f32 0.0, %v485
    %v487 = vpop.f32.mrb[0].mxu0
    %488 = vmatprep.mubr.bf16.mxu0 0
    %489 = vmatmul.mubr.bf16.gmra.mrb[0].mxu0 %v301
    %v490 = vpop.f32.mrb[0].mxu0
    %v491 = vadd.f32 0.0, %v490
    %v492 = vpop.f32.mrb[0].mxu0
    %v493 = vpop.f32.mrb[0].mxu0
    %v494 = vadd.f32 0.0, %v493
    %v495 = vpop.f32.mrb[0].mxu0
    %496 = vmatprep.mubr.bf16.mxu0 0
    %497 = vmatmul.mubr.bf16.gmra.mrb[0].mxu0 %v304
    %v498 = vpop.f32.mrb[0].mxu0
    %v499 = vadd.f32 0.0, %v498
    %v500 = vpop.f32.mrb[0].mxu0
    %v501 = vpop.f32.mrb[0].mxu0
    %v502 = vadd.f32 0.0, %v501
    %v503 = vpop.f32.mrb[0].mxu0
    %504 = vmatprep.mubr.bf16.mxu0 0
    %505 = vmatmul.mubr.bf16.gmra.mrb[0].mxu0 %v307
    %v506 = vpop.f32.mrb[0].mxu0
    %v507 = vadd.f32 0.0, %v506
    %v508 = vpop.f32.mrb[0].mxu0
    %v509 = vpop.f32.mrb[0].mxu0
    %v510 = vadd.f32 0.0, %v509
    %v511 = vpop.f32.mrb[0].mxu0
    %512 = vmatprep.mubr.bf16.mxu0 0
    %513 = vmatmul.mubr.bf16.gmra.mrb[0].mxu0 %v310
    %v514 = vpop.f32.mrb[0].mxu0
    %v515 = vadd.f32 0.0, %v514
    %v516 = vpop.f32.mrb[0].mxu0
    %v517 = vpop.f32.mrb[0].mxu0
    %v518 = vadd.f32 0.0, %v517
    %v519 = vpop.f32.mrb[0].mxu0
    %520 = vmatprep.mubr.bf16.mxu0 0
    %521 = vmatmul.mubr.bf16.gmra.mrb[0].mxu0 %v313
    %v522 = vpop.f32.mrb[0].mxu0
    %v523 = vadd.f32 0.0, %v522
    %v524 = vpop.f32.mrb[0].mxu0
    %v525 = vpop.f32.mrb[0].mxu0
    %v526 = vadd.f32 0.0, %v525
    %v527 = vpop.f32.mrb[0].mxu0
    %528 = vmatprep.mubr.bf16.mxu0 0
    %529 = vmatmul.mubr.bf16.gmra.mrb[0].mxu0 %v316
    %v530 = vpop.f32.mrb[0].mxu0
    %v531 = vadd.f32 0.0, %v530
    %v532 = vpop.f32.mrb[0].mxu0
    %v533 = vpop.f32.mrb[0].mxu0
    %v534 = vadd.f32 0.0, %v533
    %v535 = vpop.f32.mrb[0].mxu0
    %536 = vmatprep.mubr.bf16.mxu0 0
    %537 = vmatmul.mubr.bf16.gmra.mrb[0].mxu0 %v319
    %v538 = vpop.f32.mrb[0].mxu0
    %v539 = vadd.f32 0.0, %v538
    %v540 = vpop.f32.mrb[0].mxu0
    %v541 = vpop.f32.mrb[0].mxu0
    %v542 = vadd.f32 0.0, %v541
    %v543 = vpop.f32.mrb[0].mxu0
    %544 = vmatprep.mubr.bf16.mxu0 0
    %545 = vmatmul.mubr.bf16.gmra.mrb[0].mxu0 %v322
    %v546 = vpop.f32.mrb[0].mxu0
    %v547 = vadd.f32 0.0, %v546
    %v548 = vpop.f32.mrb[0].mxu0
    %v549 = vpop.f32.mrb[0].mxu0
    %v550 = vadd.f32 0.0, %v549
    %v551 = vpop.f32.mrb[0].mxu0
    %552 = vmatprep.mubr.bf16.mxu0 0
    %553 = vmatmul.mubr.bf16.gmra.mrb[0].mxu0 %v325
    %v554 = vpop.f32.mrb[0].mxu0
    %v555 = vadd.f32 0.0, %v554
    %v556 = vpop.f32.mrb[0].mxu0
    %v557 = vpop.f32.mrb[0].mxu0
    %v558 = vadd.f32 0.0, %v557
    %v559 = vpop.f32.mrb[0].mxu0
    %560 = vmatprep.mubr.bf16.mxu0 0
    %561 = vmatmul.mubr.bf16.gmra.mrb[0].mxu0 %v328
    %v562 = vpop.f32.mrb[0].mxu0
    %v563 = vadd.f32 0.0, %v562
    %v564 = vpop.f32.mrb[0].mxu0
    %v565 = vpop.f32.mrb[0].mxu0
    %v566 = vadd.f32 0.0, %v565
    %v567 = vpop.f32.mrb[0].mxu0
    %568 = vmatprep.mubr.bf16.mxu0 0
    %569 = vmatmul.mubr.bf16.gmra.mrb[0].mxu0 %v331
    %v570 = vpop.f32.mrb[0].mxu0
    %v571 = vadd.f32 0.0, %v570
    %v572 = vpop.f32.mrb[0].mxu0
    %v573 = vpop.f32.mrb[0].mxu0
    %v574 = vadd.f32 0.0, %v573
    %v575 = vpop.f32.mrb[0].mxu0
    %576 = vmatprep.mubr.bf16.mxu0 0
    %577 = vmatmul.mubr.bf16.gmra.mrb[0].mxu0 %v334
    %v578 = vpop.f32.mrb[0].mxu0
    %v579 = vadd.f32 0.0, %v578
    %v580 = vpop.f32.mrb[0].mxu0
    %v581 = vpop.f32.mrb[0].mxu0
    %v582 = vadd.f32 0.0, %v581
    %v583 = vpop.f32.mrb[0].mxu0
    %584 = vmatprep.mubr.bf16.mxu0 0
    %585 = vmatmul.mubr.bf16.gmra.mrb[0].mxu0 %v337
    %v586 = vpop.f32.mrb[0].mxu0
    %v587 = vadd.f32 0.0, %v586
    %v588 = vpop.f32.mrb[0].mxu0
    %v589 = vpop.f32.mrb[0].mxu0
    %v590 = vadd.f32 0.0, %v589
    %v591 = vpop.f32.mrb[0].mxu0
    %592 = vmatprep.mubr.bf16.mxu0 0
    %593 = vmatmul.mubr.bf16.gmra.mrb[0].mxu0 %v340
    %v594 = vpop.f32.mrb[0].mxu0
    %v595 = vadd.f32 0.0, %v594
    %v596 = vpop.f32.mrb[0].mxu0
    %v597 = vpop.f32.mrb[0].mxu0
    %v598 = vadd.f32 0.0, %v597
    %v599 = vpop.f32.mrb[0].mxu0
    %600 = vmatprep.mubr.bf16.mxu0 0
    %601 = vmatmul.mubr.bf16.gmra.mrb[0].mxu0 %v343
    %v602 = vpop.f32.mrb[0].mxu0
    %v603 = vadd.f32 0.0, %v602
    %v604 = vpop.f32.mrb[0].mxu0
    %v605 = vpop.f32.mrb[0].mxu0
    %v606 = vadd.f32 0.0, %v605
    %v607 = vpop.f32.mrb[0].mxu0
    %608 = vmatprep.mubr.bf16.mxu0 0
    %609 = vmatmul.mubr.bf16.gmra.mrb[0].mxu0 %v346
    %v610 = vpop.f32.mrb[0].mxu0
    %v611 = vadd.f32 0.0, %v610
    %v612 = vpop.f32.mrb[0].mxu0
    %v613 = vpop.f32.mrb[0].mxu0
    %v614 = vadd.f32 0.0, %v613
    %v615 = vpop.f32.mrb[0].mxu0
    %616 = vmatprep.mubr.bf16.mxu0 0
    %617 = vmatmul.mubr.bf16.gmra.mrb[0].mxu0 %v349
    %v618 = vpop.f32.mrb[0].mxu0
    %v619 = vadd.f32 0.0, %v618
    %v620 = vpop.f32.mrb[0].mxu0
    %v621 = vpop.f32.mrb[0].mxu0
    %v622 = vadd.f32 0.0, %v621
    %v623 = vpop.f32.mrb[0].mxu0
    %624 = vmatprep.mubr.bf16.mxu0 0
    %625 = vmatmul.mubr.bf16.gmra.mrb[0].mxu0 %v352
    %v626 = vpop.f32.mrb[0].mxu0
    %v627 = vadd.f32 0.0, %v626
    %v628 = vpop.f32.mrb[0].mxu0
    %v629 = vpop.f32.mrb[0].mxu0
    %v630 = vadd.f32 0.0, %v629
    %v631 = vpop.f32.mrb[0].mxu0
    %632 = vmatprep.mubr.bf16.mxu0 0
    %633 = vmatmul.mubr.bf16.gmra.mrb[0].mxu0 %v355
    %v634 = vpop.f32.mrb[0].mxu0
    %v635 = vadd.f32 0.0, %v634
    %v636 = vpop.f32.mrb[0].mxu0
    %v637 = vpop.f32.mrb[0].mxu0
    %v638 = vadd.f32 0.0, %v637
    %v639 = vpop.f32.mrb[0].mxu0
    %640 = vmatprep.mubr.bf16.mxu0 0
    %641 = vmatmul.mubr.bf16.gmra.mrb[0].mxu0 %v358
    %v642 = vpop.f32.mrb[0].mxu0
    %v643 = vadd.f32 0.0, %v642
    %v644 = vpop.f32.mrb[0].mxu0
    %v645 = vpop.f32.mrb[0].mxu0
    %v646 = vadd.f32 0.0, %v645
    %v647 = vpop.f32.mrb[0].mxu0
    %648 = vdwg.mxu0
    %v649 = vld [vmem:[%s2] sm:$0x1]
    %v651 = vlaneseq
    %v652 = vshrl.u32 %v651, 7
    %v653 = vsub.s32 0, %v652
    %v654 = vrot.slane %v649, %v653
    %v656 = vmul.f32 %v395, %v654
    %v657 = vmul.f32 %v398, %v654
    %v658 = vmul.f32 %v403, %v654
    %v659 = vmul.f32 %v406, %v654
    %v660 = vmul.f32 %v411, %v654
    %v661 = vmul.f32 %v414, %v654
    %v662 = vmul.f32 %v419, %v654
    %v663 = vmul.f32 %v422, %v654
    %v664 = vmul.f32 %v427, %v654
    %v665 = vmul.f32 %v430, %v654
    %v666 = vmul.f32 %v435, %v654
    %v667 = vmul.f32 %v438, %v654
    %v668 = vmul.f32 %v443, %v654
    %v669 = vmul.f32 %v446, %v654
    %v670 = vmul.f32 %v451, %v654
    %v671 = vmul.f32 %v454, %v654
    %v672 = vmul.f32 %v459, %v654
    %v673 = vmul.f32 %v462, %v654
    %v674 = vmul.f32 %v467, %v654
    %v675 = vmul.f32 %v470, %v654
    %v676 = vmul.f32 %v475, %v654
    %v677 = vmul.f32 %v478, %v654
    %v678 = vmul.f32 %v483, %v654
    %v679 = vmul.f32 %v486, %v654
    %v680 = vmul.f32 %v491, %v654
    %v681 = vmul.f32 %v494, %v654
    %v682 = vmul.f32 %v499, %v654
    %v683 = vmul.f32 %v502, %v654
    %v684 = vmul.f32 %v507, %v654
    %v685 = vmul.f32 %v510, %v654
    %v686 = vmul.f32 %v515, %v654
    %v687 = vmul.f32 %v518, %v654
    %v688 = vmul.f32 %v523, %v654
    %v689 = vmul.f32 %v526, %v654
    %v690 = vmul.f32 %v531, %v654
    %v691 = vmul.f32 %v534, %v654
    %v692 = vmul.f32 %v539, %v654
    %v693 = vmul.f32 %v542, %v654
    %v694 = vmul.f32 %v547, %v654
    %v695 = vmul.f32 %v550, %v654
    %v696 = vmul.f32 %v555, %v654
    %v697 = vmul.f32 %v558, %v654
    %v698 = vmul.f32 %v563, %v654
    %v699 = vmul.f32 %v566, %v654
    %v700 = vmul.f32 %v571, %v654
    %v701 = vmul.f32 %v574, %v654
    %v702 = vmul.f32 %v579, %v654
    %v703 = vmul.f32 %v582, %v654
    %v704 = vmul.f32 %v587, %v654
    %v705 = vmul.f32 %v590, %v654
    %v706 = vmul.f32 %v595, %v654
    %v707 = vmul.f32 %v598, %v654
    %v708 = vmul.f32 %v603, %v654
    %v709 = vmul.f32 %v606, %v654
    %v710 = vmul.f32 %v611, %v654
    %v711 = vmul.f32 %v614, %v654
    %v712 = vmul.f32 %v619, %v654
    %v713 = vmul.f32 %v622, %v654
    %v714 = vmul.f32 %v627, %v654
    %v715 = vmul.f32 %v630, %v654
    %v716 = vmul.f32 %v635, %v654
    %v717 = vmul.f32 %v638, %v654
    %v718 = vmul.f32 %v643, %v654
    %v719 = vmul.f32 %v646, %v654
    %v720 = vld [vmem:[%s3] sm:$0x1]
    %v722 = vlaneseq
    %v723 = vshrl.u32 %v722, 7
    %v724 = vsub.s32 0, %v723
    %v725 = vrot.slane %v720, %v724
    %v727 = vadd.f32 %v656, %v725
    %v728 = vadd.f32 %v657, %v725
    %v729 = vadd.f32 %v658, %v725
    %v730 = vadd.f32 %v659, %v725
    %v731 = vadd.f32 %v660, %v725
    %v732 = vadd.f32 %v661, %v725
    %v733 = vadd.f32 %v662, %v725
    %v734 = vadd.f32 %v663, %v725
    %v735 = vadd.f32 %v664, %v725
    %v736 = vadd.f32 %v665, %v725
    %v737 = vadd.f32 %v666, %v725
    %v738 = vadd.f32 %v667, %v725
    %v739 = vadd.f32 %v668, %v725
    %v740 = vadd.f32 %v669, %v725
    %v741 = vadd.f32 %v670, %v725
    %v742 = vadd.f32 %v671, %v725
    %v743 = vadd.f32 %v672, %v725
    %v744 = vadd.f32 %v673, %v725
    %v745 = vadd.f32 %v674, %v725
    %v746 = vadd.f32 %v675, %v725
    %v747 = vadd.f32 %v676, %v725
    %v748 = vadd.f32 %v677, %v725
    %v749 = vadd.f32 %v678, %v725
    %v750 = vadd.f32 %v679, %v725
    %v751 = vadd.f32 %v680, %v725
    %v752 = vadd.f32 %v681, %v725
    %v753 = vadd.f32 %v682, %v725
    %v754 = vadd.f32 %v683, %v725
    %v755 = vadd.f32 %v684, %v725
    %v756 = vadd.f32 %v685, %v725
    %v757 = vadd.f32 %v686, %v725
    %v758 = vadd.f32 %v687, %v725
    %v759 = vadd.f32 %v688, %v725
    %v760 = vadd.f32 %v689, %v725
    %v761 = vadd.f32 %v690, %v725
    %v762 = vadd.f32 %v691, %v725
    %v763 = vadd.f32 %v692, %v725
    %v764 = vadd.f32 %v693, %v725
    %v765 = vadd.f32 %v694, %v725
    %v766 = vadd.f32 %v695, %v725
    %v767 = vadd.f32 %v696, %v725
    %v768 = vadd.f32 %v697, %v725
    %v769 = vadd.f32 %v698, %v725
    %v770 = vadd.f32 %v699, %v725
    %v771 = vadd.f32 %v700, %v725
    %v772 = vadd.f32 %v701, %v725
    %v773 = vadd.f32 %v702, %v725
    %v774 = vadd.f32 %v703, %v725
    %v775 = vadd.f32 %v704, %v725
    %v776 = vadd.f32 %v705, %v725
    %v777 = vadd.f32 %v706, %v725
    %v778 = vadd.f32 %v707, %v725
    %v779 = vadd.f32 %v708, %v725
    %v780 = vadd.f32 %v709, %v725
    %v781 = vadd.f32 %v710, %v725
    %v782 = vadd.f32 %v711, %v725
    %v783 = vadd.f32 %v712, %v725
    %v784 = vadd.f32 %v713, %v725
    %v785 = vadd.f32 %v714, %v725
    %v786 = vadd.f32 %v715, %v725
    %v787 = vadd.f32 %v716, %v725
    %v788 = vadd.f32 %v717, %v725
    %v789 = vadd.f32 %v718, %v725
    %v790 = vadd.f32 %v719, %v725
    %v791 = vld [vmem:[%s4] sm:$0xf]
    %v792 = vld [vmem:[%s4 + $0x4] sm:$0xf]
    %v793 = vld [vmem:[%s4 + $0x8] sm:$0xf]
    %v794 = vld [vmem:[%s4 + $0xc] sm:$0xf]
    %v795 = vld [vmem:[%s4 + $0x10] sm:$0xf]
    %v796 = vld [vmem:[%s4 + $0x14] sm:$0xf]
    %v797 = vld [vmem:[%s4 + $0x18] sm:$0xf]
    %v798 = vld [vmem:[%s4 + $0x1c] sm:$0xf]
    %v799 = vld [vmem:[%s4 + $0x20] sm:$0xf]
    %v800 = vld [vmem:[%s4 + $0x24] sm:$0xf]
    %v801 = vld [vmem:[%s4 + $0x28] sm:$0xf]
    %v802 = vld [vmem:[%s4 + $0x2c] sm:$0xf]
    %v803 = vld [vmem:[%s4 + $0x30] sm:$0xf]
    %v804 = vld [vmem:[%s4 + $0x34] sm:$0xf]
    %v805 = vld [vmem:[%s4 + $0x38] sm:$0xf]
    %v806 = vld [vmem:[%s4 + $0x3c] sm:$0xf]
    %v807 = vld [vmem:[%s4 + $0x40] sm:$0xf]
    %v808 = vld [vmem:[%s4 + $0x44] sm:$0xf]
    %v809 = vld [vmem:[%s4 + $0x48] sm:$0xf]
    %v810 = vld [vmem:[%s4 + $0x4c] sm:$0xf]
    %v811 = vld [vmem:[%s4 + $0x50] sm:$0xf]
    %v812 = vld [vmem:[%s4 + $0x54] sm:$0xf]
    %v813 = vld [vmem:[%s4 + $0x58] sm:$0xf]
    %v814 = vld [vmem:[%s4 + $0x5c] sm:$0xf]
    %v815 = vld [vmem:[%s4 + $0x60] sm:$0xf]
    %v816 = vld [vmem:[%s4 + $0x64] sm:$0xf]
    %v817 = vld [vmem:[%s4 + $0x68] sm:$0xf]
    %v818 = vld [vmem:[%s4 + $0x6c] sm:$0xf]
    %v819 = vld [vmem:[%s4 + $0x70] sm:$0xf]
    %v820 = vld [vmem:[%s4 + $0x74] sm:$0xf]
    %v821 = vld [vmem:[%s4 + $0x78] sm:$0xf]
    %v822 = vld [vmem:[%s4 + $0x7c] sm:$0xf]
    %v823 = vld [vmem:[%s4 + $0x80] sm:$0xf]
    %v824 = vld [vmem:[%s4 + $0x84] sm:$0xf]
    %v825 = vld [vmem:[%s4 + $0x88] sm:$0xf]
    %v826 = vld [vmem:[%s4 + $0x8c] sm:$0xf]
    %v827 = vld [vmem:[%s4 + $0x90] sm:$0xf]
    %v828 = vld [vmem:[%s4 + $0x94] sm:$0xf]
    %v829 = vld [vmem:[%s4 + $0x98] sm:$0xf]
    %v830 = vld [vmem:[%s4 + $0x9c] sm:$0xf]
    %v831 = vld [vmem:[%s4 + $0xa0] sm:$0xf]
    %v832 = vld [vmem:[%s4 + $0xa4] sm:$0xf]
    %v833 = vld [vmem:[%s4 + $0xa8] sm:$0xf]
    %v834 = vld [vmem:[%s4 + $0xac] sm:$0xf]
    %v835 = vld [vmem:[%s4 + $0xb0] sm:$0xf]
    %v836 = vld [vmem:[%s4 + $0xb4] sm:$0xf]
    %v837 = vld [vmem:[%s4 + $0xb8] sm:$0xf]
    %v838 = vld [vmem:[%s4 + $0xbc] sm:$0xf]
    %v839 = vld [vmem:[%s4 + $0xc0] sm:$0xf]
    %v840 = vld [vmem:[%s4 + $0xc4] sm:$0xf]
    %v841 = vld [vmem:[%s4 + $0xc8] sm:$0xf]
    %v842 = vld [vmem:[%s4 + $0xcc] sm:$0xf]
    %v843 = vld [vmem:[%s4 + $0xd0] sm:$0xf]
    %v844 = vld [vmem:[%s4 + $0xd4] sm:$0xf]
    %v845 = vld [vmem:[%s4 + $0xd8] sm:$0xf]
    %v846 = vld [vmem:[%s4 + $0xdc] sm:$0xf]
    %v847 = vld [vmem:[%s4 + $0xe0] sm:$0xf]
    %v848 = vld [vmem:[%s4 + $0xe4] sm:$0xf]
    %v849 = vld [vmem:[%s4 + $0xe8] sm:$0xf]
    %v850 = vld [vmem:[%s4 + $0xec] sm:$0xf]
    %v851 = vld [vmem:[%s4 + $0xf0] sm:$0xf]
    %v852 = vld [vmem:[%s4 + $0xf4] sm:$0xf]
    %v853 = vld [vmem:[%s4 + $0xf8] sm:$0xf]
    %v854 = vld [vmem:[%s4 + $0xfc] sm:$0xf]
    %v855 = vld [vmem:[%s5] sm:$0xf]
    %v856 = vld [vmem:[%s5 + $0x4] sm:$0xf]
    %v857 = vld [vmem:[%s5 + $0x8] sm:$0xf]
    %v858 = vld [vmem:[%s5 + $0xc] sm:$0xf]
    %v923 = vunpack.c.l.b16 %v791
    %v924 = vunpack.c.l.b16 %v792
    %v925 = vunpack.c.l.b16 %v793
    %v926 = vunpack.c.l.b16 %v794
    %v927 = vunpack.c.l.b16 %v795
    %v928 = vunpack.c.l.b16 %v796
    %v929 = vunpack.c.l.b16 %v797
    %v930 = vunpack.c.l.b16 %v798
    %v931 = vunpack.c.l.b16 %v799
    %v932 = vunpack.c.l.b16 %v800
    %v933 = vunpack.c.l.b16 %v801
    %v934 = vunpack.c.l.b16 %v802
    %v935 = vunpack.c.l.b16 %v803
    %v936 = vunpack.c.l.b16 %v804
    %v937 = vunpack.c.l.b16 %v805
    %v938 = vunpack.c.l.b16 %v806
    %v939 = vunpack.c.l.b16 %v807
    %v940 = vunpack.c.l.b16 %v808
    %v941 = vunpack.c.l.b16 %v809
    %v942 = vunpack.c.l.b16 %v810
    %v943 = vunpack.c.l.b16 %v811
    %v944 = vunpack.c.l.b16 %v812
    %v945 = vunpack.c.l.b16 %v813
    %v946 = vunpack.c.l.b16 %v814
    %v947 = vunpack.c.l.b16 %v815
    %v948 = vunpack.c.l.b16 %v816
    %v949 = vunpack.c.l.b16 %v817
    %v950 = vunpack.c.l.b16 %v818
    %v951 = vunpack.c.l.b16 %v819
    %v952 = vunpack.c.l.b16 %v820
    %v953 = vunpack.c.l.b16 %v821
    %v954 = vunpack.c.l.b16 %v822
    %v955 = vunpack.c.l.b16 %v823
    %v956 = vunpack.c.l.b16 %v824
    %v957 = vunpack.c.l.b16 %v825
    %v958 = vunpack.c.l.b16 %v826
    %v959 = vunpack.c.l.b16 %v827
    %v960 = vunpack.c.l.b16 %v828
    %v961 = vunpack.c.l.b16 %v829
    %v962 = vunpack.c.l.b16 %v830
    %v963 = vunpack.c.l.b16 %v831
    %v964 = vunpack.c.l.b16 %v832
    %v965 = vunpack.c.l.b16 %v833
    %v966 = vunpack.c.l.b16 %v834
    %v967 = vunpack.c.l.b16 %v835
    %v968 = vunpack.c.l.b16 %v836
    %v969 = vunpack.c.l.b16 %v837
    %v970 = vunpack.c.l.b16 %v838
    %v971 = vunpack.c.l.b16 %v839
    %v972 = vunpack.c.l.b16 %v840
    %v973 = vunpack.c.l.b16 %v841
    %v974 = vunpack.c.l.b16 %v842
    %v975 = vunpack.c.l.b16 %v843
    %v976 = vunpack.c.l.b16 %v844
    %v977 = vunpack.c.l.b16 %v845
    %v978 = vunpack.c.l.b16 %v846
    %v979 = vunpack.c.l.b16 %v847
    %v980 = vunpack.c.l.b16 %v848
    %v981 = vunpack.c.l.b16 %v849
    %v982 = vunpack.c.l.b16 %v850
    %v983 = vunpack.c.l.b16 %v851
    %v984 = vunpack.c.l.b16 %v852
    %v985 = vunpack.c.l.b16 %v853
    %v986 = vunpack.c.l.b16 %v854
    %v987 = vpack.c.b16 %v924, %v923
    %v988 = vpack.c.b16 %v926, %v925
    %v989 = vpack.c.b16 %v928, %v927
    %v990 = vpack.c.b16 %v930, %v929
    %v991 = vpack.c.b16 %v932, %v931
    %v992 = vpack.c.b16 %v934, %v933
    %v993 = vpack.c.b16 %v936, %v935
    %v994 = vpack.c.b16 %v938, %v937
    %v995 = vpack.c.b16 %v940, %v939
    %v996 = vpack.c.b16 %v942, %v941
    %v997 = vpack.c.b16 %v944, %v943
    %v998 = vpack.c.b16 %v946, %v945
    %v999 = vpack.c.b16 %v948, %v947
    %v1000 = vpack.c.b16 %v950, %v949
    %v1001 = vpack.c.b16 %v952, %v951
    %v1002 = vpack.c.b16 %v954, %v953
    %v1003 = vpack.c.b16 %v956, %v955
    %v1004 = vpack.c.b16 %v958, %v957
    %v1005 = vpack.c.b16 %v960, %v959
    %v1006 = vpack.c.b16 %v962, %v961
    %v1007 = vpack.c.b16 %v964, %v963
    %v1008 = vpack.c.b16 %v966, %v965
    %v1009 = vpack.c.b16 %v968, %v967
    %v1010 = vpack.c.b16 %v970, %v969
    %v1011 = vpack.c.b16 %v972, %v971
    %v1012 = vpack.c.b16 %v974, %v973
    %v1013 = vpack.c.b16 %v976, %v975
    %v1014 = vpack.c.b16 %v978, %v977
    %v1015 = vpack.c.b16 %v980, %v979
    %v1016 = vpack.c.b16 %v982, %v981
    %v1017 = vpack.c.b16 %v984, %v983
    %v1018 = vpack.c.b16 %v986, %v985
    %v1023 = vunpack.c.l.b16 %v855
    %v1024 = vunpack.c.l.b16 %v856
    %v1025 = vunpack.c.l.b16 %v857
    %v1026 = vunpack.c.l.b16 %v858
    %v1027 = vpack.c.b16 %v1024, %v1023
    %v1028 = vpack.c.b16 %v1026, %v1025
    %vm1031 = vcmask 261120
    %v1033 = vsel %vm1031, %v987, 0
    %v1036 = vsel %vm1031, %v988, 0
    %v1039 = vsel %vm1031, %v989, 0
    %v1042 = vsel %vm1031, %v990, 0
    %v1045 = vsel %vm1031, %v991, 0
    %v1048 = vsel %vm1031, %v992, 0
    %v1051 = vsel %vm1031, %v993, 0
    %v1054 = vsel %vm1031, %v994, 0
    %v1057 = vsel %vm1031, %v995, 0
    %v1060 = vsel %vm1031, %v996, 0
    %v1063 = vsel %vm1031, %v997, 0
    %v1066 = vsel %vm1031, %v998, 0
    %v1069 = vsel %vm1031, %v999, 0
    %v1072 = vsel %vm1031, %v1000, 0
    %v1075 = vsel %vm1031, %v1001, 0
    %v1078 = vsel %vm1031, %v1002, 0
    %v1081 = vsel %vm1031, %v1003, 0
    %v1084 = vsel %vm1031, %v1004, 0
    %v1087 = vsel %vm1031, %v1005, 0
    %v1090 = vsel %vm1031, %v1006, 0
    %v1093 = vsel %vm1031, %v1007, 0
    %v1096 = vsel %vm1031, %v1008, 0
    %v1099 = vsel %vm1031, %v1009, 0
    %v1102 = vsel %vm1031, %v1010, 0
    %v1105 = vsel %vm1031, %v1011, 0
    %v1108 = vsel %vm1031, %v1012, 0
    %v1111 = vsel %vm1031, %v1013, 0
    %v1114 = vsel %vm1031, %v1014, 0
    %v1117 = vsel %vm1031, %v1015, 0
    %v1120 = vsel %vm1031, %v1016, 0
    %v1123 = vsel %vm1031, %v1017, 0
    %v1126 = vsel %vm1031, %v1018, 0
    %1128 = vmatprep.subr.bf16.mxu0 0
    %1129 = vmatpush1.bf16.msra.mxu0 %v1027
    %1130 = vmatprep.subr.bf16.mxu0 0
    %1131 = vmatpush1.bf16.msra.mxu0 %v1028
    %1132 = vmatprep.subr.bf16.mxu0 0
    %1133 = vmatpush1.bf16.msra.mxu0 0
    %1134 = vmatprep.subr.bf16.mxu0 0
    %1135 = vmatpush1.bf16.msra.mxu0 0
    %1136 = vmatprep.subr.bf16.mxu0 0
    %1137 = vmatpush1.bf16.msra.mxu0 0
    %1138 = vmatprep.subr.bf16.mxu0 0
    %1139 = vmatpush1.bf16.msra.mxu0 0
    %1140 = vmatprep.subr.bf16.mxu0 0
    %1141 = vmatpush1.bf16.msra.mxu0 0
    %1142 = vmatprep.subr.bf16.mxu0 0
    %1143 = vmatpush1.bf16.msra.mxu0 0
    %1144 = vmatprep.subr.bf16.mxu0 0
    %1145 = vmatpush1.bf16.msra.mxu0 0
    %1146 = vmatprep.subr.bf16.mxu0 0
    %1147 = vmatpush1.bf16.msra.mxu0 0
    %1148 = vmatprep.subr.bf16.mxu0 0
    %1149 = vmatpush1.bf16.msra.mxu0 0
    %1150 = vmatprep.subr.bf16.mxu0 0
    %1151 = vmatpush1.bf16.msra.mxu0 0
    %1152 = vmatprep.subr.bf16.mxu0 0
    %1153 = vmatpush1.bf16.msra.mxu0 0
    %1154 = vmatprep.subr.bf16.mxu0 0
    %1155 = vmatpush1.bf16.msra.mxu0 0
    %1156 = vmatprep.subr.bf16.mxu0 0
    %1157 = vmatpush1.bf16.msra.mxu0 0
    %1158 = vmatprep.subr.bf16.mxu0 0
    %1159 = vmatpush1.bf16.msra.mxu0 0
    %1160 = vmatprep.mubr.bf16.mxu0 0
    %1161 = vmatmul.mubr.bf16.gmra.mrb[0].mxu0 %v1033
    %v1162 = vpop.f32.mrb[0].mxu0
    %v1163 = vadd.f32 0.0, %v1162
    %v1164 = vpop.f32.mrb[0].mxu0
    %v1165 = vpop.f32.mrb[0].mxu0
    %v1166 = vadd.f32 0.0, %v1165
    %v1167 = vpop.f32.mrb[0].mxu0
    %1168 = vmatprep.mubr.bf16.mxu0 0
    %1169 = vmatmul.mubr.bf16.gmra.mrb[0].mxu0 %v1036
    %v1170 = vpop.f32.mrb[0].mxu0
    %v1171 = vadd.f32 0.0, %v1170
    %v1172 = vpop.f32.mrb[0].mxu0
    %v1173 = vpop.f32.mrb[0].mxu0
    %v1174 = vadd.f32 0.0, %v1173
    %v1175 = vpop.f32.mrb[0].mxu0
    %1176 = vmatprep.mubr.bf16.mxu0 0
    %1177 = vmatmul.mubr.bf16.gmra.mrb[0].mxu0 %v1039
    %v1178 = vpop.f32.mrb[0].mxu0
    %v1179 = vadd.f32 0.0, %v1178
    %v1180 = vpop.f32.mrb[0].mxu0
    %v1181 = vpop.f32.mrb[0].mxu0
    %v1182 = vadd.f32 0.0, %v1181
    %v1183 = vpop.f32.mrb[0].mxu0
    %1184 = vmatprep.mubr.bf16.mxu0 0
    %1185 = vmatmul.mubr.bf16.gmra.mrb[0].mxu0 %v1042
    %v1186 = vpop.f32.mrb[0].mxu0
    %v1187 = vadd.f32 0.0, %v1186
    %v1188 = vpop.f32.mrb[0].mxu0
    %v1189 = vpop.f32.mrb[0].mxu0
    %v1190 = vadd.f32 0.0, %v1189
    %v1191 = vpop.f32.mrb[0].mxu0
    %1192 = vmatprep.mubr.bf16.mxu0 0
    %1193 = vmatmul.mubr.bf16.gmra.mrb[0].mxu0 %v1045
    %v1194 = vpop.f32.mrb[0].mxu0
    %v1195 = vadd.f32 0.0, %v1194
    %v1196 = vpop.f32.mrb[0].mxu0
    %v1197 = vpop.f32.mrb[0].mxu0
    %v1198 = vadd.f32 0.0, %v1197
    %v1199 = vpop.f32.mrb[0].mxu0
    %1200 = vmatprep.mubr.bf16.mxu0 0
    %1201 = vmatmul.mubr.bf16.gmra.mrb[0].mxu0 %v1048
    %v1202 = vpop.f32.mrb[0].mxu0
    %v1203 = vadd.f32 0.0, %v1202
    %v1204 = vpop.f32.mrb[0].mxu0
    %v1205 = vpop.f32.mrb[0].mxu0
    %v1206 = vadd.f32 0.0, %v1205
    %v1207 = vpop.f32.mrb[0].mxu0
    %1208 = vmatprep.mubr.bf16.mxu0 0
    %1209 = vmatmul.mubr.bf16.gmra.mrb[0].mxu0 %v1051
    %v1210 = vpop.f32.mrb[0].mxu0
    %v1211 = vadd.f32 0.0, %v1210
    %v1212 = vpop.f32.mrb[0].mxu0
    %v1213 = vpop.f32.mrb[0].mxu0
    %v1214 = vadd.f32 0.0, %v1213
    %v1215 = vpop.f32.mrb[0].mxu0
    %1216 = vmatprep.mubr.bf16.mxu0 0
    %1217 = vmatmul.mubr.bf16.gmra.mrb[0].mxu0 %v1054
    %v1218 = vpop.f32.mrb[0].mxu0
    %v1219 = vadd.f32 0.0, %v1218
    %v1220 = vpop.f32.mrb[0].mxu0
    %v1221 = vpop.f32.mrb[0].mxu0
    %v1222 = vadd.f32 0.0, %v1221
    %v1223 = vpop.f32.mrb[0].mxu0
    %1224 = vmatprep.mubr.bf16.mxu0 0
    %1225 = vmatmul.mubr.bf16.gmra.mrb[0].mxu0 %v1057
    %v1226 = vpop.f32.mrb[0].mxu0
    %v1227 = vadd.f32 0.0, %v1226
    %v1228 = vpop.f32.mrb[0].mxu0
    %v1229 = vpop.f32.mrb[0].mxu0
    %v1230 = vadd.f32 0.0, %v1229
    %v1231 = vpop.f32.mrb[0].mxu0
    %1232 = vmatprep.mubr.bf16.mxu0 0
    %1233 = vmatmul.mubr.bf16.gmra.mrb[0].mxu0 %v1060
    %v1234 = vpop.f32.mrb[0].mxu0
    %v1235 = vadd.f32 0.0, %v1234
    %v1236 = vpop.f32.mrb[0].mxu0
    %v1237 = vpop.f32.mrb[0].mxu0
    %v1238 = vadd.f32 0.0, %v1237
    %v1239 = vpop.f32.mrb[0].mxu0
    %1240 = vmatprep.mubr.bf16.mxu0 0
    %1241 = vmatmul.mubr.bf16.gmra.mrb[0].mxu0 %v1063
    %v1242 = vpop.f32.mrb[0].mxu0
    %v1243 = vadd.f32 0.0, %v1242
    %v1244 = vpop.f32.mrb[0].mxu0
    %v1245 = vpop.f32.mrb[0].mxu0
    %v1246 = vadd.f32 0.0, %v1245
    %v1247 = vpop.f32.mrb[0].mxu0
    %1248 = vmatprep.mubr.bf16.mxu0 0
    %1249 = vmatmul.mubr.bf16.gmra.mrb[0].mxu0 %v1066
    %v1250 = vpop.f32.mrb[0].mxu0
    %v1251 = vadd.f32 0.0, %v1250
    %v1252 = vpop.f32.mrb[0].mxu0
    %v1253 = vpop.f32.mrb[0].mxu0
    %v1254 = vadd.f32 0.0, %v1253
    %v1255 = vpop.f32.mrb[0].mxu0
    %1256 = vmatprep.mubr.bf16.mxu0 0
    %1257 = vmatmul.mubr.bf16.gmra.mrb[0].mxu0 %v1069
    %v1258 = vpop.f32.mrb[0].mxu0
    %v1259 = vadd.f32 0.0, %v1258
    %v1260 = vpop.f32.mrb[0].mxu0
    %v1261 = vpop.f32.mrb[0].mxu0
    %v1262 = vadd.f32 0.0, %v1261
    %v1263 = vpop.f32.mrb[0].mxu0
    %1264 = vmatprep.mubr.bf16.mxu0 0
    %1265 = vmatmul.mubr.bf16.gmra.mrb[0].mxu0 %v1072
    %v1266 = vpop.f32.mrb[0].mxu0
    %v1267 = vadd.f32 0.0, %v1266
    %v1268 = vpop.f32.mrb[0].mxu0
    %v1269 = vpop.f32.mrb[0].mxu0
    %v1270 = vadd.f32 0.0, %v1269
    %v1271 = vpop.f32.mrb[0].mxu0
    %1272 = vmatprep.mubr.bf16.mxu0 0
    %1273 = vmatmul.mubr.bf16.gmra.mrb[0].mxu0 %v1075
    %v1274 = vpop.f32.mrb[0].mxu0
    %v1275 = vadd.f32 0.0, %v1274
    %v1276 = vpop.f32.mrb[0].mxu0
    %v1277 = vpop.f32.mrb[0].mxu0
    %v1278 = vadd.f32 0.0, %v1277
    %v1279 = vpop.f32.mrb[0].mxu0
    %1280 = vmatprep.mubr.bf16.mxu0 0
    %1281 = vmatmul.mubr.bf16.gmra.mrb[0].mxu0 %v1078
    %v1282 = vpop.f32.mrb[0].mxu0
    %v1283 = vadd.f32 0.0, %v1282
    %v1284 = vpop.f32.mrb[0].mxu0
    %v1285 = vpop.f32.mrb[0].mxu0
    %v1286 = vadd.f32 0.0, %v1285
    %v1287 = vpop.f32.mrb[0].mxu0
    %1288 = vmatprep.mubr.bf16.mxu0 0
    %1289 = vmatmul.mubr.bf16.gmra.mrb[0].mxu0 %v1081
    %v1290 = vpop.f32.mrb[0].mxu0
    %v1291 = vadd.f32 0.0, %v1290
    %v1292 = vpop.f32.mrb[0].mxu0
    %v1293 = vpop.f32.mrb[0].mxu0
    %v1294 = vadd.f32 0.0, %v1293
    %v1295 = vpop.f32.mrb[0].mxu0
    %1296 = vmatprep.mubr.bf16.mxu0 0
    %1297 = vmatmul.mubr.bf16.gmra.mrb[0].mxu0 %v1084
    %v1298 = vpop.f32.mrb[0].mxu0
    %v1299 = vadd.f32 0.0, %v1298
    %v1300 = vpop.f32.mrb[0].mxu0
    %v1301 = vpop.f32.mrb[0].mxu0
    %v1302 = vadd.f32 0.0, %v1301
    %v1303 = vpop.f32.mrb[0].mxu0
    %1304 = vmatprep.mubr.bf16.mxu0 0
    %1305 = vmatmul.mubr.bf16.gmra.mrb[0].mxu0 %v1087
    %v1306 = vpop.f32.mrb[0].mxu0
    %v1307 = vadd.f32 0.0, %v1306
    %v1308 = vpop.f32.mrb[0].mxu0
    %v1309 = vpop.f32.mrb[0].mxu0
    %v1310 = vadd.f32 0.0, %v1309
    %v1311 = vpop.f32.mrb[0].mxu0
    %1312 = vmatprep.mubr.bf16.mxu0 0
    %1313 = vmatmul.mubr.bf16.gmra.mrb[0].mxu0 %v1090
    %v1314 = vpop.f32.mrb[0].mxu0
    %v1315 = vadd.f32 0.0, %v1314
    %v1316 = vpop.f32.mrb[0].mxu0
    %v1317 = vpop.f32.mrb[0].mxu0
    %v1318 = vadd.f32 0.0, %v1317
    %v1319 = vpop.f32.mrb[0].mxu0
    %1320 = vmatprep.mubr.bf16.mxu0 0
    %1321 = vmatmul.mubr.bf16.gmra.mrb[0].mxu0 %v1093
    %v1322 = vpop.f32.mrb[0].mxu0
    %v1323 = vadd.f32 0.0, %v1322
    %v1324 = vpop.f32.mrb[0].mxu0
    %v1325 = vpop.f32.mrb[0].mxu0
    %v1326 = vadd.f32 0.0, %v1325
    %v1327 = vpop.f32.mrb[0].mxu0
    %1328 = vmatprep.mubr.bf16.mxu0 0
    %1329 = vmatmul.mubr.bf16.gmra.mrb[0].mxu0 %v1096
    %v1330 = vpop.f32.mrb[0].mxu0
    %v1331 = vadd.f32 0.0, %v1330
    %v1332 = vpop.f32.mrb[0].mxu0
    %v1333 = vpop.f32.mrb[0].mxu0
    %v1334 = vadd.f32 0.0, %v1333
    %v1335 = vpop.f32.mrb[0].mxu0
    %1336 = vmatprep.mubr.bf16.mxu0 0
    %1337 = vmatmul.mubr.bf16.gmra.mrb[0].mxu0 %v1099
    %v1338 = vpop.f32.mrb[0].mxu0
    %v1339 = vadd.f32 0.0, %v1338
    %v1340 = vpop.f32.mrb[0].mxu0
    %v1341 = vpop.f32.mrb[0].mxu0
    %v1342 = vadd.f32 0.0, %v1341
    %v1343 = vpop.f32.mrb[0].mxu0
    %1344 = vmatprep.mubr.bf16.mxu0 0
    %1345 = vmatmul.mubr.bf16.gmra.mrb[0].mxu0 %v1102
    %v1346 = vpop.f32.mrb[0].mxu0
    %v1347 = vadd.f32 0.0, %v1346
    %v1348 = vpop.f32.mrb[0].mxu0
    %v1349 = vpop.f32.mrb[0].mxu0
    %v1350 = vadd.f32 0.0, %v1349
    %v1351 = vpop.f32.mrb[0].mxu0
    %1352 = vmatprep.mubr.bf16.mxu0 0
    %1353 = vmatmul.mubr.bf16.gmra.mrb[0].mxu0 %v1105
    %v1354 = vpop.f32.mrb[0].mxu0
    %v1355 = vadd.f32 0.0, %v1354
    %v1356 = vpop.f32.mrb[0].mxu0
    %v1357 = vpop.f32.mrb[0].mxu0
    %v1358 = vadd.f32 0.0, %v1357
    %v1359 = vpop.f32.mrb[0].mxu0
    %1360 = vmatprep.mubr.bf16.mxu0 0
    %1361 = vmatmul.mubr.bf16.gmra.mrb[0].mxu0 %v1108
    %v1362 = vpop.f32.mrb[0].mxu0
    %v1363 = vadd.f32 0.0, %v1362
    %v1364 = vpop.f32.mrb[0].mxu0
    %v1365 = vpop.f32.mrb[0].mxu0
    %v1366 = vadd.f32 0.0, %v1365
    %v1367 = vpop.f32.mrb[0].mxu0
    %1368 = vmatprep.mubr.bf16.mxu0 0
    %1369 = vmatmul.mubr.bf16.gmra.mrb[0].mxu0 %v1111
    %v1370 = vpop.f32.mrb[0].mxu0
    %v1371 = vadd.f32 0.0, %v1370
    %v1372 = vpop.f32.mrb[0].mxu0
    %v1373 = vpop.f32.mrb[0].mxu0
    %v1374 = vadd.f32 0.0, %v1373
    %v1375 = vpop.f32.mrb[0].mxu0
    %1376 = vmatprep.mubr.bf16.mxu0 0
    %1377 = vmatmul.mubr.bf16.gmra.mrb[0].mxu0 %v1114
    %v1378 = vpop.f32.mrb[0].mxu0
    %v1379 = vadd.f32 0.0, %v1378
    %v1380 = vpop.f32.mrb[0].mxu0
    %v1381 = vpop.f32.mrb[0].mxu0
    %v1382 = vadd.f32 0.0, %v1381
    %v1383 = vpop.f32.mrb[0].mxu0
    %1384 = vmatprep.mubr.bf16.mxu0 0
    %1385 = vmatmul.mubr.bf16.gmra.mrb[0].mxu0 %v1117
    %v1386 = vpop.f32.mrb[0].mxu0
    %v1387 = vadd.f32 0.0, %v1386
    %v1388 = vpop.f32.mrb[0].mxu0
    %v1389 = vpop.f32.mrb[0].mxu0
    %v1390 = vadd.f32 0.0, %v1389
    %v1391 = vpop.f32.mrb[0].mxu0
    %1392 = vmatprep.mubr.bf16.mxu0 0
    %1393 = vmatmul.mubr.bf16.gmra.mrb[0].mxu0 %v1120
    %v1394 = vpop.f32.mrb[0].mxu0
    %v1395 = vadd.f32 0.0, %v1394
    %v1396 = vpop.f32.mrb[0].mxu0
    %v1397 = vpop.f32.mrb[0].mxu0
    %v1398 = vadd.f32 0.0, %v1397
    %v1399 = vpop.f32.mrb[0].mxu0
    %1400 = vmatprep.mubr.bf16.mxu0 0
    %1401 = vmatmul.mubr.bf16.gmra.mrb[0].mxu0 %v1123
    %v1402 = vpop.f32.mrb[0].mxu0
    %v1403 = vadd.f32 0.0, %v1402
    %v1404 = vpop.f32.mrb[0].mxu0
    %v1405 = vpop.f32.mrb[0].mxu0
    %v1406 = vadd.f32 0.0, %v1405
    %v1407 = vpop.f32.mrb[0].mxu0
    %1408 = vmatprep.mubr.bf16.mxu0 0
    %1409 = vmatmul.mubr.bf16.gmra.mrb[0].mxu0 %v1126
    %v1410 = vpop.f32.mrb[0].mxu0
    %v1411 = vadd.f32 0.0, %v1410
    %v1412 = vpop.f32.mrb[0].mxu0
    %v1413 = vpop.f32.mrb[0].mxu0
    %v1414 = vadd.f32 0.0, %v1413
    %v1415 = vpop.f32.mrb[0].mxu0
    %1416 = vdwg.mxu0
    %v1417 = vld [vmem:[%s6] sm:$0x1]
    %v1419 = vlaneseq
    %v1420 = vshrl.u32 %v1419, 7
    %v1421 = vsub.s32 0, %v1420
    %v1422 = vrot.slane %v1417, %v1421
    %v1424 = vmul.f32 %v1163, %v1422
    %v1425 = vmul.f32 %v1166, %v1422
    %v1426 = vmul.f32 %v1171, %v1422
    %v1427 = vmul.f32 %v1174, %v1422
    %v1428 = vmul.f32 %v1179, %v1422
    %v1429 = vmul.f32 %v1182, %v1422
    %v1430 = vmul.f32 %v1187, %v1422
    %v1431 = vmul.f32 %v1190, %v1422
    %v1432 = vmul.f32 %v1195, %v1422
    %v1433 = vmul.f32 %v1198, %v1422
    %v1434 = vmul.f32 %v1203, %v1422
    %v1435 = vmul.f32 %v1206, %v1422
    %v1436 = vmul.f32 %v1211, %v1422
    %v1437 = vmul.f32 %v1214, %v1422
    %v1438 = vmul.f32 %v1219, %v1422
    %v1439 = vmul.f32 %v1222, %v1422
    %v1440 = vmul.f32 %v1227, %v1422
    %v1441 = vmul.f32 %v1230, %v1422
    %v1442 = vmul.f32 %v1235, %v1422
    %v1443 = vmul.f32 %v1238, %v1422
    %v1444 = vmul.f32 %v1243, %v1422
    %v1445 = vmul.f32 %v1246, %v1422
    %v1446 = vmul.f32 %v1251, %v1422
    %v1447 = vmul.f32 %v1254, %v1422
    %v1448 = vmul.f32 %v1259, %v1422
    %v1449 = vmul.f32 %v1262, %v1422
    %v1450 = vmul.f32 %v1267, %v1422
    %v1451 = vmul.f32 %v1270, %v1422
    %v1452 = vmul.f32 %v1275, %v1422
    %v1453 = vmul.f32 %v1278, %v1422
    %v1454 = vmul.f32 %v1283, %v1422
    %v1455 = vmul.f32 %v1286, %v1422
    %v1456 = vmul.f32 %v1291, %v1422
    %v1457 = vmul.f32 %v1294, %v1422
    %v1458 = vmul.f32 %v1299, %v1422
    %v1459 = vmul.f32 %v1302, %v1422
    %v1460 = vmul.f32 %v1307, %v1422
    %v1461 = vmul.f32 %v1310, %v1422
    %v1462 = vmul.f32 %v1315, %v1422
    %v1463 = vmul.f32 %v1318, %v1422
    %v1464 = vmul.f32 %v1323, %v1422
    %v1465 = vmul.f32 %v1326, %v1422
    %v1466 = vmul.f32 %v1331, %v1422
    %v1467 = vmul.f32 %v1334, %v1422
    %v1468 = vmul.f32 %v1339, %v1422
    %v1469 = vmul.f32 %v1342, %v1422
    %v1470 = vmul.f32 %v1347, %v1422
    %v1471 = vmul.f32 %v1350, %v1422
    %v1472 = vmul.f32 %v1355, %v1422
    %v1473 = vmul.f32 %v1358, %v1422
    %v1474 = vmul.f32 %v1363, %v1422
    %v1475 = vmul.f32 %v1366, %v1422
    %v1476 = vmul.f32 %v1371, %v1422
    %v1477 = vmul.f32 %v1374, %v1422
    %v1478 = vmul.f32 %v1379, %v1422
    %v1479 = vmul.f32 %v1382, %v1422
    %v1480 = vmul.f32 %v1387, %v1422
    %v1481 = vmul.f32 %v1390, %v1422
    %v1482 = vmul.f32 %v1395, %v1422
    %v1483 = vmul.f32 %v1398, %v1422
    %v1484 = vmul.f32 %v1403, %v1422
    %v1485 = vmul.f32 %v1406, %v1422
    %v1486 = vmul.f32 %v1411, %v1422
    %v1487 = vmul.f32 %v1414, %v1422
    %v1488 = vld [vmem:[%s7] sm:$0x1]
    %v1490 = vlaneseq
    %v1491 = vshrl.u32 %v1490, 7
    %v1492 = vsub.s32 0, %v1491
    %v1493 = vrot.slane %v1488, %v1492
    %v1495 = vadd.f32 %v1424, %v1493
    %v1496 = vadd.f32 %v1425, %v1493
    %v1497 = vadd.f32 %v1426, %v1493
    %v1498 = vadd.f32 %v1427, %v1493
    %v1499 = vadd.f32 %v1428, %v1493
    %v1500 = vadd.f32 %v1429, %v1493
    %v1501 = vadd.f32 %v1430, %v1493
    %v1502 = vadd.f32 %v1431, %v1493
    %v1503 = vadd.f32 %v1432, %v1493
    %v1504 = vadd.f32 %v1433, %v1493
    %v1505 = vadd.f32 %v1434, %v1493
    %v1506 = vadd.f32 %v1435, %v1493
    %v1507 = vadd.f32 %v1436, %v1493
    %v1508 = vadd.f32 %v1437, %v1493
    %v1509 = vadd.f32 %v1438, %v1493
    %v1510 = vadd.f32 %v1439, %v1493
    %v1511 = vadd.f32 %v1440, %v1493
    %v1512 = vadd.f32 %v1441, %v1493
    %v1513 = vadd.f32 %v1442, %v1493
    %v1514 = vadd.f32 %v1443, %v1493
    %v1515 = vadd.f32 %v1444, %v1493
    %v1516 = vadd.f32 %v1445, %v1493
    %v1517 = vadd.f32 %v1446, %v1493
    %v1518 = vadd.f32 %v1447, %v1493
    %v1519 = vadd.f32 %v1448, %v1493
    %v1520 = vadd.f32 %v1449, %v1493
    %v1521 = vadd.f32 %v1450, %v1493
    %v1522 = vadd.f32 %v1451, %v1493
    %v1523 = vadd.f32 %v1452, %v1493
    %v1524 = vadd.f32 %v1453, %v1493
    %v1525 = vadd.f32 %v1454, %v1493
    %v1526 = vadd.f32 %v1455, %v1493
    %v1527 = vadd.f32 %v1456, %v1493
    %v1528 = vadd.f32 %v1457, %v1493
    %v1529 = vadd.f32 %v1458, %v1493
    %v1530 = vadd.f32 %v1459, %v1493
    %v1531 = vadd.f32 %v1460, %v1493
    %v1532 = vadd.f32 %v1461, %v1493
    %v1533 = vadd.f32 %v1462, %v1493
    %v1534 = vadd.f32 %v1463, %v1493
    %v1535 = vadd.f32 %v1464, %v1493
    %v1536 = vadd.f32 %v1465, %v1493
    %v1537 = vadd.f32 %v1466, %v1493
    %v1538 = vadd.f32 %v1467, %v1493
    %v1539 = vadd.f32 %v1468, %v1493
    %v1540 = vadd.f32 %v1469, %v1493
    %v1541 = vadd.f32 %v1470, %v1493
    %v1542 = vadd.f32 %v1471, %v1493
    %v1543 = vadd.f32 %v1472, %v1493
    %v1544 = vadd.f32 %v1473, %v1493
    %v1545 = vadd.f32 %v1474, %v1493
    %v1546 = vadd.f32 %v1475, %v1493
    %v1547 = vadd.f32 %v1476, %v1493
    %v1548 = vadd.f32 %v1477, %v1493
    %v1549 = vadd.f32 %v1478, %v1493
    %v1550 = vadd.f32 %v1479, %v1493
    %v1551 = vadd.f32 %v1480, %v1493
    %v1552 = vadd.f32 %v1481, %v1493
    %v1553 = vadd.f32 %v1482, %v1493
    %v1554 = vadd.f32 %v1483, %v1493
    %v1555 = vadd.f32 %v1484, %v1493
    %v1556 = vadd.f32 %v1485, %v1493
    %v1557 = vadd.f32 %v1486, %v1493
    %v1558 = vadd.f32 %v1487, %v1493
    %v1559 = vadd.f32 %v727, %v1495
    %v1560 = vadd.f32 %v728, %v1496
    %v1561 = vadd.f32 %v729, %v1497
    %v1562 = vadd.f32 %v730, %v1498
    %v1563 = vadd.f32 %v731, %v1499
    %v1564 = vadd.f32 %v732, %v1500
    %v1565 = vadd.f32 %v733, %v1501
    %v1566 = vadd.f32 %v734, %v1502
    %v1567 = vadd.f32 %v735, %v1503
    %v1568 = vadd.f32 %v736, %v1504
    %v1569 = vadd.f32 %v737, %v1505
    %v1570 = vadd.f32 %v738, %v1506
    %v1571 = vadd.f32 %v739, %v1507
    %v1572 = vadd.f32 %v740, %v1508
    %v1573 = vadd.f32 %v741, %v1509
    %v1574 = vadd.f32 %v742, %v1510
    %v1575 = vadd.f32 %v743, %v1511
    %v1576 = vadd.f32 %v744, %v1512
    %v1577 = vadd.f32 %v745, %v1513
    %v1578 = vadd.f32 %v746, %v1514
    %v1579 = vadd.f32 %v747, %v1515
    %v1580 = vadd.f32 %v748, %v1516
    %v1581 = vadd.f32 %v749, %v1517
    %v1582 = vadd.f32 %v750, %v1518
    %v1583 = vadd.f32 %v751, %v1519
    %v1584 = vadd.f32 %v752, %v1520
    %v1585 = vadd.f32 %v753, %v1521
    %v1586 = vadd.f32 %v754, %v1522
    %v1587 = vadd.f32 %v755, %v1523
    %v1588 = vadd.f32 %v756, %v1524
    %v1589 = vadd.f32 %v757, %v1525
    %v1590 = vadd.f32 %v758, %v1526
    %v1591 = vadd.f32 %v759, %v1527
    %v1592 = vadd.f32 %v760, %v1528
    %v1593 = vadd.f32 %v761, %v1529
    %v1594 = vadd.f32 %v762, %v1530
    %v1595 = vadd.f32 %v763, %v1531
    %v1596 = vadd.f32 %v764, %v1532
    %v1597 = vadd.f32 %v765, %v1533
    %v1598 = vadd.f32 %v766, %v1534
    %v1599 = vadd.f32 %v767, %v1535
    %v1600 = vadd.f32 %v768, %v1536
    %v1601 = vadd.f32 %v769, %v1537
    %v1602 = vadd.f32 %v770, %v1538
    %v1603 = vadd.f32 %v771, %v1539
    %v1604 = vadd.f32 %v772, %v1540
    %v1605 = vadd.f32 %v773, %v1541
    %v1606 = vadd.f32 %v774, %v1542
    %v1607 = vadd.f32 %v775, %v1543
    %v1608 = vadd.f32 %v776, %v1544
    %v1609 = vadd.f32 %v777, %v1545
    %v1610 = vadd.f32 %v778, %v1546
    %v1611 = vadd.f32 %v779, %v1547
    %v1612 = vadd.f32 %v780, %v1548
    %v1613 = vadd.f32 %v781, %v1549
    %v1614 = vadd.f32 %v782, %v1550
    %v1615 = vadd.f32 %v783, %v1551
    %v1616 = vadd.f32 %v784, %v1552
    %v1617 = vadd.f32 %v785, %v1553
    %v1618 = vadd.f32 %v786, %v1554
    %v1619 = vadd.f32 %v787, %v1555
    %v1620 = vadd.f32 %v788, %v1556
    %v1621 = vadd.f32 %v789, %v1557
    %v1622 = vadd.f32 %v790, %v1558
    %v1623 = vmax.f32 %v1559, 0.0
    %v1624 = vmax.f32 %v1560, 0.0
    %v1625 = vmax.f32 %v1561, 0.0
    %v1626 = vmax.f32 %v1562, 0.0
    %v1627 = vmax.f32 %v1563, 0.0
    %v1628 = vmax.f32 %v1564, 0.0
    %v1629 = vmax.f32 %v1565, 0.0
    %v1630 = vmax.f32 %v1566, 0.0
    %v1631 = vmax.f32 %v1567, 0.0
    %v1632 = vmax.f32 %v1568, 0.0
    %v1633 = vmax.f32 %v1569, 0.0
    %v1634 = vmax.f32 %v1570, 0.0
    %v1635 = vmax.f32 %v1571, 0.0
    %v1636 = vmax.f32 %v1572, 0.0
    %v1637 = vmax.f32 %v1573, 0.0
    %v1638 = vmax.f32 %v1574, 0.0
    %v1639 = vmax.f32 %v1575, 0.0
    %v1640 = vmax.f32 %v1576, 0.0
    %v1641 = vmax.f32 %v1577, 0.0
    %v1642 = vmax.f32 %v1578, 0.0
    %v1643 = vmax.f32 %v1579, 0.0
    %v1644 = vmax.f32 %v1580, 0.0
    %v1645 = vmax.f32 %v1581, 0.0
    %v1646 = vmax.f32 %v1582, 0.0
    %v1647 = vmax.f32 %v1583, 0.0
    %v1648 = vmax.f32 %v1584, 0.0
    %v1649 = vmax.f32 %v1585, 0.0
    %v1650 = vmax.f32 %v1586, 0.0
    %v1651 = vmax.f32 %v1587, 0.0
    %v1652 = vmax.f32 %v1588, 0.0
    %v1653 = vmax.f32 %v1589, 0.0
    %v1654 = vmax.f32 %v1590, 0.0
    %v1655 = vmax.f32 %v1591, 0.0
    %v1656 = vmax.f32 %v1592, 0.0
    %v1657 = vmax.f32 %v1593, 0.0
    %v1658 = vmax.f32 %v1594, 0.0
    %v1659 = vmax.f32 %v1595, 0.0
    %v1660 = vmax.f32 %v1596, 0.0
    %v1661 = vmax.f32 %v1597, 0.0
    %v1662 = vmax.f32 %v1598, 0.0
    %v1663 = vmax.f32 %v1599, 0.0
    %v1664 = vmax.f32 %v1600, 0.0
    %v1665 = vmax.f32 %v1601, 0.0
    %v1666 = vmax.f32 %v1602, 0.0
    %v1667 = vmax.f32 %v1603, 0.0
    %v1668 = vmax.f32 %v1604, 0.0
    %v1669 = vmax.f32 %v1605, 0.0
    %v1670 = vmax.f32 %v1606, 0.0
    %v1671 = vmax.f32 %v1607, 0.0
    %v1672 = vmax.f32 %v1608, 0.0
    %v1673 = vmax.f32 %v1609, 0.0
    %v1674 = vmax.f32 %v1610, 0.0
    %v1675 = vmax.f32 %v1611, 0.0
    %v1676 = vmax.f32 %v1612, 0.0
    %v1677 = vmax.f32 %v1613, 0.0
    %v1678 = vmax.f32 %v1614, 0.0
    %v1679 = vmax.f32 %v1615, 0.0
    %v1680 = vmax.f32 %v1616, 0.0
    %v1681 = vmax.f32 %v1617, 0.0
    %v1682 = vmax.f32 %v1618, 0.0
    %v1683 = vmax.f32 %v1619, 0.0
    %v1684 = vmax.f32 %v1620, 0.0
    %v1685 = vmax.f32 %v1621, 0.0
    %v1686 = vmax.f32 %v1622, 0.0
    %vm1687 = vcmask 523264
    %1688 = vst.msk [vmem:[#allocation2] sm:$0xff] %vm1687, %v1623
    %1689 = vst.msk [vmem:[#allocation2 + $0x8] sm:$0xff] %vm1687, %v1624
    %1690 = vst.msk [vmem:[#allocation2 + $0x10] sm:$0xff] %vm1687, %v1625
    %1691 = vst.msk [vmem:[#allocation2 + $0x18] sm:$0xff] %vm1687, %v1626
    %1692 = vst.msk [vmem:[#allocation2 + $0x20] sm:$0xff] %vm1687, %v1627
    %1693 = vst.msk [vmem:[#allocation2 + $0x28] sm:$0xff] %vm1687, %v1628
    %1694 = vst.msk [vmem:[#allocation2 + $0x30] sm:$0xff] %vm1687, %v1629
    %1695 = vst.msk [vmem:[#allocation2 + $0x38] sm:$0xff] %vm1687, %v1630
    %1696 = vst.msk [vmem:[#allocation2 + $0x40] sm:$0xff] %vm1687, %v1631
    %1697 = vst.msk [vmem:[#allocation2 + $0x48] sm:$0xff] %vm1687, %v1632
    %1698 = vst.msk [vmem:[#allocation2 + $0x50] sm:$0xff] %vm1687, %v1633
    %1699 = vst.msk [vmem:[#allocation2 + $0x58] sm:$0xff] %vm1687, %v1634
    %1700 = vst.msk [vmem:[#allocation2 + $0x60] sm:$0xff] %vm1687, %v1635
    %1701 = vst.msk [vmem:[#allocation2 + $0x68] sm:$0xff] %vm1687, %v1636
    %1702 = vst.msk [vmem:[#allocation2 + $0x70] sm:$0xff] %vm1687, %v1637
    %1703 = vst.msk [vmem:[#allocation2 + $0x78] sm:$0xff] %vm1687, %v1638
    %1704 = vst.msk [vmem:[#allocation2 + $0x80] sm:$0xff] %vm1687, %v1639
    %1705 = vst.msk [vmem:[#allocation2 + $0x88] sm:$0xff] %vm1687, %v1640
    %1706 = vst.msk [vmem:[#allocation2 + $0x90] sm:$0xff] %vm1687, %v1641
    %1707 = vst.msk [vmem:[#allocation2 + $0x98] sm:$0xff] %vm1687, %v1642
    %1708 = vst.msk [vmem:[#allocation2 + $0xa0] sm:$0xff] %vm1687, %v1643
    %1709 = vst.msk [vmem:[#allocation2 + $0xa8] sm:$0xff] %vm1687, %v1644
    %1710 = vst.msk [vmem:[#allocation2 + $0xb0] sm:$0xff] %vm1687, %v1645
    %1711 = vst.msk [vmem:[#allocation2 + $0xb8] sm:$0xff] %vm1687, %v1646
    %1712 = vst.msk [vmem:[#allocation2 + $0xc0] sm:$0xff] %vm1687, %v1647
    %1713 = vst.msk [vmem:[#allocation2 + $0xc8] sm:$0xff] %vm1687, %v1648
    %1714 = vst.msk [vmem:[#allocation2 + $0xd0] sm:$0xff] %vm1687, %v1649
    %1715 = vst.msk [vmem:[#allocation2 + $0xd8] sm:$0xff] %vm1687, %v1650
    %1716 = vst.msk [vmem:[#allocation2 + $0xe0] sm:$0xff] %vm1687, %v1651
    %1717 = vst.msk [vmem:[#allocation2 + $0xe8] sm:$0xff] %vm1687, %v1652
    %1718 = vst.msk [vmem:[#allocation2 + $0xf0] sm:$0xff] %vm1687, %v1653
    %1719 = vst.msk [vmem:[#allocation2 + $0xf8] sm:$0xff] %vm1687, %v1654
    %1720 = vst.msk [vmem:[#allocation2 + $0x100] sm:$0xff] %vm1687, %v1655
    %1721 = vst.msk [vmem:[#allocation2 + $0x108] sm:$0xff] %vm1687, %v1656
    %1722 = vst.msk [vmem:[#allocation2 + $0x110] sm:$0xff] %vm1687, %v1657
    %1723 = vst.msk [vmem:[#allocation2 + $0x118] sm:$0xff] %vm1687, %v1658
    %1724 = vst.msk [vmem:[#allocation2 + $0x120] sm:$0xff] %vm1687, %v1659
    %1725 = vst.msk [vmem:[#allocation2 + $0x128] sm:$0xff] %vm1687, %v1660
    %1726 = vst.msk [vmem:[#allocation2 + $0x130] sm:$0xff] %vm1687, %v1661
    %1727 = vst.msk [vmem:[#allocation2 + $0x138] sm:$0xff] %vm1687, %v1662
    %1728 = vst.msk [vmem:[#allocation2 + $0x140] sm:$0xff] %vm1687, %v1663
    %1729 = vst.msk [vmem:[#allocation2 + $0x148] sm:$0xff] %vm1687, %v1664
    %1730 = vst.msk [vmem:[#allocation2 + $0x150] sm:$0xff] %vm1687, %v1665
    %1731 = vst.msk [vmem:[#allocation2 + $0x158] sm:$0xff] %vm1687, %v1666
    %1732 = vst.msk [vmem:[#allocation2 + $0x160] sm:$0xff] %vm1687, %v1667
    %1733 = vst.msk [vmem:[#allocation2 + $0x168] sm:$0xff] %vm1687, %v1668
    %1734 = vst.msk [vmem:[#allocation2 + $0x170] sm:$0xff] %vm1687, %v1669
    %1735 = vst.msk [vmem:[#allocation2 + $0x178] sm:$0xff] %vm1687, %v1670
    %1736 = vst.msk [vmem:[#allocation2 + $0x180] sm:$0xff] %vm1687, %v1671
    %1737 = vst.msk [vmem:[#allocation2 + $0x188] sm:$0xff] %vm1687, %v1672
    %1738 = vst.msk [vmem:[#allocation2 + $0x190] sm:$0xff] %vm1687, %v1673
    %1739 = vst.msk [vmem:[#allocation2 + $0x198] sm:$0xff] %vm1687, %v1674
    %1740 = vst.msk [vmem:[#allocation2 + $0x1a0] sm:$0xff] %vm1687, %v1675
    %1741 = vst.msk [vmem:[#allocation2 + $0x1a8] sm:$0xff] %vm1687, %v1676
    %1742 = vst.msk [vmem:[#allocation2 + $0x1b0] sm:$0xff] %vm1687, %v1677
    %1743 = vst.msk [vmem:[#allocation2 + $0x1b8] sm:$0xff] %vm1687, %v1678
    %1744 = vst.msk [vmem:[#allocation2 + $0x1c0] sm:$0xff] %vm1687, %v1679
    %1745 = vst.msk [vmem:[#allocation2 + $0x1c8] sm:$0xff] %vm1687, %v1680
    %1746 = vst.msk [vmem:[#allocation2 + $0x1d0] sm:$0xff] %vm1687, %v1681
    %1747 = vst.msk [vmem:[#allocation2 + $0x1d8] sm:$0xff] %vm1687, %v1682
    %1748 = vst.msk [vmem:[#allocation2 + $0x1e0] sm:$0xff] %vm1687, %v1683
    %1749 = vst.msk [vmem:[#allocation2 + $0x1e8] sm:$0xff] %vm1687, %v1684
    %1750 = vst.msk [vmem:[#allocation2 + $0x1f0] sm:$0xff] %vm1687, %v1685
    %1751 = vst.msk [vmem:[#allocation2 + $0x1f8] sm:$0xff] %vm1687, %v1686
    // Predicated region
    $region34: #{osblock_forward.27} parent=1 // pred_check
      _
    $region35: #{osblock_forward.27} parent=1 // pred_check_branch
      %1753 = sbr.rel (0) target = $region37
    $region36: #{osblock_forward.27} parent=1 // pred_region
      %s1755 = ssub.s32 8192, 8192
      %1756 = vsyncadd [#allocation3], %s1755
      %s1757 = sshll.u32 [#allocation2], 4
      %s1758 = int_to_ptr.vmem [resolvable:$true] %s1757
      %1763 = dma.vmem_to_hbm [thread:$0]  %s1758, 8192, %s8, [#allocation3], 128, 128, 8
    $region37: #{osblock_forward.27} parent=1 // pred_fallthru
      _
    // Predicated region
    $region38: #{osblock_forward.27} parent=1 // pred_check
      _
    $region39: #{osblock_forward.27} parent=1 // pred_check_branch
      %1765 = sbr.rel (0) target = $region41
    $region40: #{osblock_forward.27} parent=1 // pred_region
      %1766 = dma.done [#allocation3], 8192
    $region41: #{osblock_forward.27} parent=1 // pred_fallthru
      _
    %1767 = vsyncpa [#allocation3], 1

</llo_original>
